<compile_context>
chip_gen: v6e
topology: v6e:2x2x1
jax: 0.10.0
libtpu: 0.0.40
codegen_flags: <defaults>
</compile_context>

<pallas_src>
import functools

import jax
import jax.numpy as jnp
from jax.experimental import pallas as pl
from jax.experimental.pallas import tpu as pltpu


# ----------------------------------------------------------------------------
# VMEM budget / tiling helpers
# ----------------------------------------------------------------------------
def _round_up(v, m):
    return (v + m - 1) // m * m


@functools.lru_cache(maxsize=None)
def _vmem_capacity_bytes():
    try:
        return int(pltpu.get_tpu_info().vmem_capacity_bytes)
    except Exception:
        return 64 * 1024 * 1024  # conservative (v7x per-TC VMEM)


def _vmem_limit_bytes():
    return int(0.75 * _vmem_capacity_bytes())


def _tile_budget_bytes():
    return int(0.40 * _vmem_capacity_bytes())


def _vreg_bytes(rows, cols, itemsize):
    """VMEM footprint of a (rows, cols) tile with (8, 128) native padding."""
    return _round_up(max(int(rows), 1), 8) * _round_up(max(int(cols), 1), 128) * itemsize


def _conv_tile_bytes(th, W, cin, cout):
    b = 2 * _vreg_bytes(th * W, cin, 2)            # input block, double-buffered
    b += 2 * _vreg_bytes(th * W, cout, 2)          # output block, double-buffered
    b += 4 * _vreg_bytes(W, cin, 2)                # halo rows
    b += _vreg_bytes((th + 2) * (W + 2), cin, 4)   # padded staging scratch (f32)
    b += _vreg_bytes(th * W, cout, 4)              # f32 accumulator
    b += 2 * _vreg_bytes(th * W, cin, 4)           # slab temporaries
    b += 18 * _vreg_bytes(cin, cout, 2)            # weights
    return b


def _att_tile_bytes(th, W, cout, chid):
    b = 2 * 2 * _vreg_bytes(th * W, cout, 2)             # low/high blocks, dbl-buffered
    b += 2 * _vreg_bytes(th * W, cout, 4)                # f32 output block, dbl-buffered
    b += 8 * _vreg_bytes(2 * W, cout, 2)                 # halos
    b += 2 * _vreg_bytes((th + 4) * (W + 2), cout, 4)    # lowpad / highpad
    b += _vreg_bytes((th + 2) * (W + 2), chid, 4)        # hpad
    b += 2 * _vreg_bytes((th + 2) * W, chid, 4)          # h + conv1 accumulator
    b += 2 * _vreg_bytes((th + 2) * W, cout, 4)          # conv1 slab temps
    b += 3 * _vreg_bytes(th * W, cout, 4)                # merge temps
    return b


def _pick_tile_h(H, W, bytes_fn, budget):
    """Largest H-divisor tile that fits the VMEM budget (prefer >=2 tiles)."""
    divs = [d for d in range(1, H + 1) if H % d == 0]

    def ok(d):
        if d < H and (d * W) % 8 != 0:   # flattened (th*W, C) out block alignment
            return False
        if d < min(4, H):
            return False
        return bytes_fn(d) <= budget

    cand = [d for d in divs if ok(d)]
    if not cand:
        legal = [d for d in divs if d >= min(4, H) and (d == H or (d * W) % 8 == 0)]
        return min(legal) if legal else H
    multi = [d for d in cand if H // d >= 2]
    return max(multi) if multi else max(cand)


def _make_halos(x, th, n):
    """Per-tile top/bottom n-row halos (zeros outside the image).

    x: (B, H, W, C) -> top, bot: (B, nH*n, W, C)
      top rows for tile i = x[i*th - n : i*th],   bot rows = x[(i+1)*th : (i+1)*th + n]
    """
    B, H, W, C = x.shape
    nH = H // th
    xr = x.reshape(B, nH, th, W, C)
    zero = jnp.zeros((B, 1, n, W, C), x.dtype)
    top = jnp.concatenate([zero, xr[:, :-1, th - n:th]], axis=1).reshape(B, nH * n, W, C)
    bot = jnp.concatenate([xr[:, 1:, 0:n], zero], axis=1).reshape(B, nH * n, W, C)
    return top, bot


# ----------------------------------------------------------------------------
# Kernel 1: 3x3 conv (stride 1, pad 1) + folded-BN bias + optional ReLU
#   9 accumulating MXU dots (K = cin), bf16 operands, f32 accumulation.
# ----------------------------------------------------------------------------
def _conv3x3_kernel(x_ref, top_ref, bot_ref, w_ref, b_ref, o_ref, xpad_ref,
                    *, th, W, cin, cout, act):
    f32 = jnp.float32
    bf16 = jnp.bfloat16

    # 1-px-halo padded tile in a VMEM staging scratch (no HBM pad roundtrip).
    xpad_ref[:, 0:1, :] = jnp.zeros((th + 2, 1, cin), f32)
    xpad_ref[:, W + 1:W + 2, :] = jnp.zeros((th + 2, 1, cin), f32)
    xpad_ref[0:1, 1:W + 1, :] = top_ref[0].astype(f32)
    xpad_ref[th + 1:th + 2, 1:W + 1, :] = bot_ref[0].astype(f32)
    xpad_ref[1:th + 1, 1:W + 1, :] = x_ref[0].astype(f32)

    # 3x3 conv = 9 accumulating dots, one per (dy, dx) tap.  No im2col temp.
    acc = None
    for t, (dy, dx) in enumerate((dy, dx) for dy in range(3) for dx in range(3)):
        slab = xpad_ref[dy:dy + th, dx:dx + W, :].astype(bf16).reshape(th * W, cin)
        part = jnp.dot(slab, w_ref[t], preferred_element_type=f32)
        acc = part if acc is None else acc + part

    y = acc + b_ref[...]
    if act:
        y = jnp.maximum(y, 0.0)
    o_ref[0] = y.astype(o_ref.dtype)


def conv3x3_bn_relu(x, w, scale, bias, *, act=True):
    """x: (B, H, W, cin) NHWC; w: (3, 3, cin, cout) HWIO; scale/bias: (cout,)."""
    B, H, W, cin = x.shape
    cout = w.shape[-1]
    th = _pick_tile_h(H, W, lambda t: _conv_tile_bytes(t, W, cin, cout),
                      _tile_budget_bytes())
    nH = H // th

    x = x.astype(jnp.bfloat16)
    top, bot = _make_halos(x, th, 1)
    # Fold the BN scale into the weights (inference-exact); bias-only epilogue.
    wf = (w.astype(jnp.float32) * scale.reshape(1, 1, 1, cout)
          ).reshape(9, cin, cout).astype(jnp.bfloat16)
    b2 = bias.reshape(1, cout).astype(jnp.float32)

    kern = functools.partial(_conv3x3_kernel, th=th, W=W, cin=cin, cout=cout, act=act)
    out = pl.pallas_call(
        kern,
        out_shape=jax.ShapeDtypeStruct((B, H * W, cout), jnp.bfloat16),
        grid=(B, nH),
        in_specs=[
            pl.BlockSpec((1, th, W, cin), lambda b, i: (b, i, 0, 0)),
            pl.BlockSpec((1, 1, W, cin), lambda b, i: (b, i, 0, 0)),
            pl.BlockSpec((1, 1, W, cin), lambda b, i: (b, i, 0, 0)),
            pl.BlockSpec((9, cin, cout), lambda b, i: (0, 0, 0)),
            pl.BlockSpec((1, cout), lambda b, i: (0, 0)),
        ],
        out_specs=pl.BlockSpec((1, th * W, cout), lambda b, i: (b, i, 0)),
        scratch_shapes=[pltpu.VMEM((th + 2, W + 2, cin), jnp.float32)],
        compiler_params=pltpu.CompilerParams(
            dimension_semantics=("parallel", "parallel"),
            vmem_limit_bytes=_vmem_limit_bytes()),
    )(x, top, bot, wf, b2)
    return out.reshape(B, H, W, cout)


# ----------------------------------------------------------------------------
# Kernel 2: fused att_layer + softmax + merge, H-tiled with a 2-row halo
#   h   = ReLU(conv3x3([low, high], w_att1) * bn)   (x_cat never built)
#   d   = conv3x3(h, w_att2[...,0] - w_att2[...,1]) + (b2[0] - b2[1])
#   p   = sigmoid(d)  (== 2-way softmax, low branch)
#   out = p*low + (1-p)*high
# ----------------------------------------------------------------------------
def _att_fused_kernel(low_ref, lt_ref, lb_ref, high_ref, ht_ref, hb_ref,
                      w1l_ref, w1h_ref, b1_ref, wdv_ref, bd_ref, o_ref,
                      lowpad, highpad, hpad, *, th, W, cout, chid):
    f32 = jnp.float32
    bf16 = jnp.bfloat16
    i = pl.program_id(1)
    taps = [(dy, dx) for dy in range(3) for dx in range(3)]

    def fill(pad, top, mid, bot):
        rows = pad.shape[0]
        c = pad.shape[-1]
        pad[:, 0:1, :] = jnp.zeros((rows, 1, c), f32)
        pad[:, W + 1:W + 2, :] = jnp.zeros((rows, 1, c), f32)
        pad[0:2, 1:W + 1, :] = top.astype(f32)
        pad[2:th + 2, 1:W + 1, :] = mid.astype(f32)
        pad[th + 2:th + 4, 1:W + 1, :] = bot.astype(f32)

    # 2-row-halo padded tiles (conv1 is computed on th+2 rows so conv2 has valid
    # h values one row beyond the output tile).
    fill(lowpad, lt_ref[0], low_ref[0], lb_ref[0])
    fill(highpad, ht_ref[0], high_ref[0], hb_ref[0])

    # att_layer conv1 over the implicit channel-concat [low, high]: 18 accumulating
    # MXU dots (K = cout each).
    acc = None
    for t, (dy, dx) in enumerate(taps):
        sl = lowpad[dy:dy + th + 2, dx:dx + W, :].astype(bf16).reshape((th + 2) * W, cout)
        sh = highpad[dy:dy + th + 2, dx:dx + W, :].astype(bf16).reshape((th + 2) * W, cout)
        part = jnp.dot(sl, w1l_ref[t], preferred_element_type=f32)
        part = part + jnp.dot(sh, w1h_ref[t], preferred_element_type=f32)
        acc = part if acc is None else acc + part
    h = jnp.maximum(acc + b1_ref[...], 0.0)                  # ((th+2)*W, chid) f32

    # Stage h (plus conv2's zero padding) for the second conv.
    hpad[:, 0:1, :] = jnp.zeros((th + 2, 1, chid), f32)
    hpad[:, W + 1:W + 2, :] = jnp.zeros((th + 2, 1, chid), f32)
    hpad[:, 1:W + 1, :] = h.reshape(th + 2, W, chid)

    # Rows of h that fall outside the image are conv2 zero padding, not values.
    @pl.when(i == 0)
    def _():
        hpad[0:1, :, :] = jnp.zeros((1, W + 2, chid), f32)

    @pl.when(i == pl.num_programs(1) - 1)
    def _():
        hpad[th + 1:th + 2, :, :] = jnp.zeros((1, W + 2, chid), f32)

    # att_layer conv2 reduced to the logit *difference* (softmax-of-2 == sigmoid),
    # computed as 9 shift-accumulated VPU FMAs + one lane reduction (no N=1 MXU dot).
    acc2 = None
    for t, (dy, dx) in enumerate(taps):
        s = hpad[dy:dy + th, dx:dx + W, :].reshape(th * W, chid)
        part = s * wdv_ref[t]
        acc2 = part if acc2 is None else acc2 + part
    d = jnp.sum(acc2, axis=-1, keepdims=True) + bd_ref[...]  # (th*W, 1)
    p_low = 0.5 * (jnp.tanh(0.5 * d) + 1.0)                  # sigmoid via EUP tanh

    low = low_ref[0].astype(f32).reshape(th * W, cout)
    high = high_ref[0].astype(f32).reshape(th * W, cout)
    o_ref[0] = p_low * low + (1.0 - p_low) * high


def att_fused_merge(low_feat, high_feat, w_att1, s_att1, b_att1, w_att2, b_att2):
    B, H, W, cout = low_feat.shape
    chid = w_att1.shape[-1]
    assert w_att1.shape[2] == 2 * cout
    th = _pick_tile_h(H, W, lambda t: _att_tile_bytes(t, W, cout, chid),
                      _tile_budget_bytes())
    nH = H // th

    lt, lb = _make_halos(low_feat, th, 2)
    ht, hb = _make_halos(high_feat, th, 2)

    w1 = w_att1.astype(jnp.float32) * s_att1.reshape(1, 1, 1, chid)
    w1l = w1[:, :, :cout, :].reshape(9, cout, chid).astype(jnp.bfloat16)   # low half
    w1h = w1[:, :, cout:, :].reshape(9, cout, chid).astype(jnp.bfloat16)   # high half
    b1 = b_att1.reshape(1, chid).astype(jnp.float32)
    wdv = (w_att2[..., 0] - w_att2[..., 1]).reshape(9, 1, chid).astype(jnp.float32)
    bd = (b_att2[0] - b_att2[1]).reshape(1, 1).astype(jnp.float32)

    kern = functools.partial(_att_fused_kernel, th=th, W=W, cout=cout, chid=chid)
    out = pl.pallas_call(
        kern,
        out_shape=jax.ShapeDtypeStruct((B, H * W, cout), jnp.float32),
        grid=(B, nH),
        in_specs=[
            pl.BlockSpec((1, th, W, cout), lambda b, i: (b, i, 0, 0)),
            pl.BlockSpec((1, 2, W, cout), lambda b, i: (b, i, 0, 0)),
            pl.BlockSpec((1, 2, W, cout), lambda b, i: (b, i, 0, 0)),
            pl.BlockSpec((1, th, W, cout), lambda b, i: (b, i, 0, 0)),
            pl.BlockSpec((1, 2, W, cout), lambda b, i: (b, i, 0, 0)),
            pl.BlockSpec((1, 2, W, cout), lambda b, i: (b, i, 0, 0)),
            pl.BlockSpec((9, cout, chid), lambda b, i: (0, 0, 0)),
            pl.BlockSpec((9, cout, chid), lambda b, i: (0, 0, 0)),
            pl.BlockSpec((1, chid), lambda b, i: (0, 0)),
            pl.BlockSpec((9, 1, chid), lambda b, i: (0, 0, 0)),
            pl.BlockSpec((1, 1), lambda b, i: (0, 0)),
        ],
        out_specs=pl.BlockSpec((1, th * W, cout), lambda b, i: (b, i, 0)),
        scratch_shapes=[
            pltpu.VMEM((th + 4, W + 2, cout), jnp.float32),
            pltpu.VMEM((th + 4, W + 2, cout), jnp.float32),
            pltpu.VMEM((th + 2, W + 2, chid), jnp.float32),
        ],
        compiler_params=pltpu.CompilerParams(
            dimension_semantics=("parallel", "parallel"),
            vmem_limit_bytes=_vmem_limit_bytes()),
    )(low_feat, lt, lb, high_feat, ht, hb, w1l, w1h, b1, wdv, bd)
    return out.reshape(B, H, W, cout)


# ----------------------------------------------------------------------------
# Full AttMerge forward (inference)
# ----------------------------------------------------------------------------
@functools.partial(jax.jit, static_argnames=("size",))
def att_merge_forward(x_low_nchw, x_high_nchw, params, size):
    # TODO(synk): if the surrounding pipeline is JAX, keep NHWC end-to-end and drop
    #             these boundary transposes (each is a full HBM roundtrip).
    x_low = jnp.transpose(x_low_nchw, (0, 2, 3, 1))
    x_high = jnp.transpose(x_high_nchw, (0, 2, 3, 1))
    B, H, W, _ = x_low.shape
    assert (H, W) == tuple(size)

    # F.upsample(..., mode='bilinear', align_corners=False) == half-pixel resize.
    x_high_up = jax.image.resize(
        x_high, (B, H, W, x_high.shape[-1]), method="bilinear").astype(jnp.bfloat16)
    x_low = x_low.astype(jnp.bfloat16)

    # conv_low / conv_high branches (conv3x3 + folded BN + ReLU), bf16 feature maps.
    low_feat = conv3x3_bn_relu(x_low, params["w_low"],
                               params["s_low"], params["b_low"], act=True)
    high_feat = conv3x3_bn_relu(x_high_up, params["w_high"],
                                params["s_high"], params["b_high"], act=True)

    # Dropout(p=0.2) is identity at inference (training=False).

    # fused att_layer + 2-way softmax + attention-weighted merge
    out = att_fused_merge(low_feat, high_feat,
                          params["w_att1"], params["s_att1"], params["b_att1"],
                          params["w_att2"], params["b_att2"])

    # NHWC -> NCHW
    return jnp.transpose(out, (0, 3, 1, 2))


# ----------------------------------------------------------------------------
# Deterministic parameter init (BN running stats folded into scale/bias)
# ----------------------------------------------------------------------------
def init_params(key, cin_low, cin_high, cout, eps=1e-5):
    chid = cout // 2
    ks = jax.random.split(key, 11)

    def bn_fold(c, kg, kb):
        gamma = 1.0 + 0.1 * jax.random.normal(kg, (c,), jnp.float32)
        beta = 0.1 * jax.random.normal(kb, (c,), jnp.float32)
        mean = jnp.zeros((c,), jnp.float32)
        var = jnp.ones((c,), jnp.float32)
        s = gamma / jnp.sqrt(var + eps)
        return s, beta - mean * s

    p = {}
    p["w_low"] = 0.1 * jax.random.normal(ks[0], (3, 3, cin_low, cout), jnp.float32)
    p["w_high"] = 0.1 * jax.random.normal(ks[1], (3, 3, cin_high, cout), jnp.float32)
    p["w_att1"] = 0.1 * jax.random.normal(ks[2], (3, 3, 2 * cout, chid), jnp.float32)
    p["w_att2"] = 0.1 * jax.random.normal(ks[3], (3, 3, chid, 2), jnp.float32)
    p["b_att2"] = 0.1 * jax.random.normal(ks[4], (2,), jnp.float32)
    p["s_low"], p["b_low"] = bn_fold(cout, ks[5], ks[6])
    p["s_high"], p["b_high"] = bn_fold(cout, ks[7], ks[8])
    p["s_att1"], p["b_att1"] = bn_fold(chid, ks[9], ks[10])
    return p


if __name__ == "__main__":
    B, cin_low, cin_high, cout = 2, 8, 16, 16
    H, W = 16, 16
    size = (H, W)

    key = jax.random.PRNGKey(0)
    k_xl, k_xh, k_p = jax.random.split(key, 3)
    # PyTorch NCHW input shapes: x_low (B, cin_low, H, W), x_high at half resolution.
    x_low = jax.random.normal(k_xl, (B, cin_low, H, W), jnp.float32)
    x_high = jax.random.normal(k_xh, (B, cin_high, H // 2, W // 2), jnp.float32)
    params = init_params(k_p, cin_low, cin_high, cout)

    out = att_merge_forward(x_low, x_high, params, size)
    out = jax.block_until_ready(out)
    assert out.shape == (B, cout, H, W)
    assert bool(jnp.all(jnp.isfinite(out)))
    print("KERNEL_OK")
</pallas_src>

<mosaic_0001>
module attributes {stable_mosaic.version = 11 : i64} {
  func.func @_conv3x3_kernel(%arg0: i32, %arg1: i32, %arg2: memref<1x8x16x8xbf16, #tpu.memory_space<vmem>>, %arg3: memref<1x1x16x8xbf16, #tpu.memory_space<vmem>>, %arg4: memref<1x1x16x8xbf16, #tpu.memory_space<vmem>>, %arg5: memref<9x8x16xbf16, #tpu.memory_space<vmem>>, %arg6: memref<1x16xf32, #tpu.memory_space<vmem>>, %arg7: memref<1x128x16xbf16, #tpu.memory_space<vmem>>, %arg8: memref<10x18x8xf32, #tpu.memory_space<vmem>>) attributes {dimension_semantics = [#tpu.dimension_semantics<parallel>, #tpu.dimension_semantics<parallel>], iteration_bounds = array<i64: 2, 2>, scalar_prefetch = 0 : i64, scratch_operands = 1 : i64, tpu.core_type = #tpu.core_type<tc>, window_params = [{transform_indices = @transform_0, window_bounds = array<i64: 1, 8, 16, 8>}, {transform_indices = @transform_1, window_bounds = array<i64: 1, 1, 16, 8>}, {transform_indices = @transform_2, window_bounds = array<i64: 1, 1, 16, 8>}, {pipeline_mode = #tpu.pipeline_mode<synchronous>, transform_indices = @transform_3, window_bounds = array<i64: 9, 8, 16>}, {pipeline_mode = #tpu.pipeline_mode<synchronous>, transform_indices = @transform_4, window_bounds = array<i64: 1, 16>}, {transform_indices = @transform_5, window_bounds = array<i64: 1, 128, 16>}]} {
    %cst = arith.constant 0.000000e+00 : f32
    %0 = vector.broadcast %cst : f32 to vector<10x1x8xf32>
    %c0 = arith.constant 0 : index
    %c0_0 = arith.constant 0 : index
    %c0_1 = arith.constant 0 : index
    %1 = vector.load %arg8[%c0, %c0_0, %c0_1] : memref<10x18x8xf32, #tpu.memory_space<vmem>>, vector<10x1x8xf32>
    tpu.vector_store %arg8[%c0, %c0_0, %c0_1], %0 {strides = array<i32>} : memref<10x18x8xf32, #tpu.memory_space<vmem>>, vector<10x1x8xf32>,
    %cst_2 = arith.constant 0.000000e+00 : f32
    %2 = vector.broadcast %cst_2 : f32 to vector<10x1x8xf32>
    %c0_3 = arith.constant 0 : index
    %c17 = arith.constant 17 : index
    %c0_4 = arith.constant 0 : index
    %3 = vector.load %arg8[%c0_3, %c17, %c0_4] : memref<10x18x8xf32, #tpu.memory_space<vmem>>, vector<10x1x8xf32>
    tpu.vector_store %arg8[%c0_3, %c17, %c0_4], %2 {strides = array<i32>} : memref<10x18x8xf32, #tpu.memory_space<vmem>>, vector<10x1x8xf32>,
    %c0_5 = arith.constant 0 : index
    %c0_6 = arith.constant 0 : index
    %c0_7 = arith.constant 0 : index
    %c0_8 = arith.constant 0 : index
    %4 = vector.load %arg3[%c0_5, %c0_6, %c0_7, %c0_8] : memref<1x1x16x8xbf16, #tpu.memory_space<vmem>>, vector<1x1x16x8xbf16>
    %5 = vector.shape_cast %4 : vector<1x1x16x8xbf16> to vector<1x16x8xbf16>
    %6 = arith.extf %5 : vector<1x16x8xbf16> to vector<1x16x8xf32>
    %c0_9 = arith.constant 0 : index
    %c1 = arith.constant 1 : index
    %c0_10 = arith.constant 0 : index
    %7 = vector.load %arg8[%c0_9, %c1, %c0_10] : memref<10x18x8xf32, #tpu.memory_space<vmem>>, vector<1x16x8xf32>
    tpu.vector_store %arg8[%c0_9, %c1, %c0_10], %6 {strides = array<i32>} : memref<10x18x8xf32, #tpu.memory_space<vmem>>, vector<1x16x8xf32>,
    %c0_11 = arith.constant 0 : index
    %c0_12 = arith.constant 0 : index
    %c0_13 = arith.constant 0 : index
    %c0_14 = arith.constant 0 : index
    %8 = vector.load %arg4[%c0_11, %c0_12, %c0_13, %c0_14] : memref<1x1x16x8xbf16, #tpu.memory_space<vmem>>, vector<1x1x16x8xbf16>
    %9 = vector.shape_cast %8 : vector<1x1x16x8xbf16> to vector<1x16x8xbf16>
    %10 = arith.extf %9 : vector<1x16x8xbf16> to vector<1x16x8xf32>
    %c9 = arith.constant 9 : index
    %c1_15 = arith.constant 1 : index
    %c0_16 = arith.constant 0 : index
    %11 = vector.load %arg8[%c9, %c1_15, %c0_16] : memref<10x18x8xf32, #tpu.memory_space<vmem>>, vector<1x16x8xf32>
    tpu.vector_store %arg8[%c9, %c1_15, %c0_16], %10 {strides = array<i32>} : memref<10x18x8xf32, #tpu.memory_space<vmem>>, vector<1x16x8xf32>,
    %c0_17 = arith.constant 0 : index
    %c0_18 = arith.constant 0 : index
    %c0_19 = arith.constant 0 : index
    %c0_20 = arith.constant 0 : index
    %12 = vector.load %arg2[%c0_17, %c0_18, %c0_19, %c0_20] : memref<1x8x16x8xbf16, #tpu.memory_space<vmem>>, vector<1x8x16x8xbf16>
    %13 = vector.shape_cast %12 : vector<1x8x16x8xbf16> to vector<8x16x8xbf16>
    %14 = arith.extf %13 : vector<8x16x8xbf16> to vector<8x16x8xf32>
    %c1_21 = arith.constant 1 : index
    %c1_22 = arith.constant 1 : index
    %c0_23 = arith.constant 0 : index
    %15 = vector.load %arg8[%c1_21, %c1_22, %c0_23] : memref<10x18x8xf32, #tpu.memory_space<vmem>>, vector<8x16x8xf32>
    tpu.vector_store %arg8[%c1_21, %c1_22, %c0_23], %14 {strides = array<i32>} : memref<10x18x8xf32, #tpu.memory_space<vmem>>, vector<8x16x8xf32>,
    %c0_24 = arith.constant 0 : index
    %c0_25 = arith.constant 0 : index
    %c0_26 = arith.constant 0 : index
    %16 = vector.load %arg8[%c0_24, %c0_25, %c0_26] : memref<10x18x8xf32, #tpu.memory_space<vmem>>, vector<8x16x8xf32>
    %17 = arith.truncf %16 : vector<8x16x8xf32> to vector<8x16x8xbf16>
    %18 = vector.shape_cast %17 : vector<8x16x8xbf16> to vector<128x8xbf16>
    %c0_27 = arith.constant 0 : index
    %c0_28 = arith.constant 0 : index
    %c0_29 = arith.constant 0 : index
    %19 = vector.load %arg5[%c0_27, %c0_28, %c0_29] : memref<9x8x16xbf16, #tpu.memory_space<vmem>>, vector<1x8x16xbf16>
    %20 = vector.shape_cast %19 : vector<1x8x16xbf16> to vector<8x16xbf16>
    %cst_30 = arith.constant dense<0.000000e+00> : vector<128x16xf32>
    %21 = tpu.matmul %18, %20, %cst_30 {dimension_numbers = #tpu.dot_dimension_numbers<[1], [0], [0], [1], [0, 0, 1, 1], [], []>} : vector<128x8xbf16>, vector<8x16xbf16>, vector<128x16xf32> -> vector<128x16xf32>
    %c0_31 = arith.constant 0 : index
    %c1_32 = arith.constant 1 : index
    %c0_33 = arith.constant 0 : index
    %22 = vector.load %arg8[%c0_31, %c1_32, %c0_33] : memref<10x18x8xf32, #tpu.memory_space<vmem>>, vector<8x16x8xf32>
    %23 = arith.truncf %22 : vector<8x16x8xf32> to vector<8x16x8xbf16>
    %24 = vector.shape_cast %23 : vector<8x16x8xbf16> to vector<128x8xbf16>
    %c1_34 = arith.constant 1 : index
    %c0_35 = arith.constant 0 : index
    %c0_36 = arith.constant 0 : index
    %25 = vector.load %arg5[%c1_34, %c0_35, %c0_36] : memref<9x8x16xbf16, #tpu.memory_space<vmem>>, vector<1x8x16xbf16>
    %26 = vector.shape_cast %25 : vector<1x8x16xbf16> to vector<8x16xbf16>
    %cst_37 = arith.constant dense<0.000000e+00> : vector<128x16xf32>
    %27 = tpu.matmul %24, %26, %cst_37 {dimension_numbers = #tpu.dot_dimension_numbers<[1], [0], [0], [1], [0, 0, 1, 1], [], []>} : vector<128x8xbf16>, vector<8x16xbf16>, vector<128x16xf32> -> vector<128x16xf32>
    %28 = arith.addf %21, %27 : vector<128x16xf32>
    %c0_38 = arith.constant 0 : index
    %c2 = arith.constant 2 : index
    %c0_39 = arith.constant 0 : index
    %29 = vector.load %arg8[%c0_38, %c2, %c0_39] : memref<10x18x8xf32, #tpu.memory_space<vmem>>, vector<8x16x8xf32>
    %30 = arith.truncf %29 : vector<8x16x8xf32> to vector<8x16x8xbf16>
    %31 = vector.shape_cast %30 : vector<8x16x8xbf16> to vector<128x8xbf16>
    %c2_40 = arith.constant 2 : index
    %c0_41 = arith.constant 0 : index
    %c0_42 = arith.constant 0 : index
    %32 = vector.load %arg5[%c2_40, %c0_41, %c0_42] : memref<9x8x16xbf16, #tpu.memory_space<vmem>>, vector<1x8x16xbf16>
    %33 = vector.shape_cast %32 : vector<1x8x16xbf16> to vector<8x16xbf16>
    %cst_43 = arith.constant dense<0.000000e+00> : vector<128x16xf32>
    %34 = tpu.matmul %31, %33, %cst_43 {dimension_numbers = #tpu.dot_dimension_numbers<[1], [0], [0], [1], [0, 0, 1, 1], [], []>} : vector<128x8xbf16>, vector<8x16xbf16>, vector<128x16xf32> -> vector<128x16xf32>
    %35 = arith.addf %28, %34 : vector<128x16xf32>
    %c1_44 = arith.constant 1 : index
    %c0_45 = arith.constant 0 : index
    %c0_46 = arith.constant 0 : index
    %36 = vector.load %arg8[%c1_44, %c0_45, %c0_46] : memref<10x18x8xf32, #tpu.memory_space<vmem>>, vector<8x16x8xf32>
    %37 = arith.truncf %36 : vector<8x16x8xf32> to vector<8x16x8xbf16>
    %38 = vector.shape_cast %37 : vector<8x16x8xbf16> to vector<128x8xbf16>
    %c3 = arith.constant 3 : index
    %c0_47 = arith.constant 0 : index
    %c0_48 = arith.constant 0 : index
    %39 = vector.load %arg5[%c3, %c0_47, %c0_48] : memref<9x8x16xbf16, #tpu.memory_space<vmem>>, vector<1x8x16xbf16>
    %40 = vector.shape_cast %39 : vector<1x8x16xbf16> to vector<8x16xbf16>
    %cst_49 = arith.constant dense<0.000000e+00> : vector<128x16xf32>
    %41 = tpu.matmul %38, %40, %cst_49 {dimension_numbers = #tpu.dot_dimension_numbers<[1], [0], [0], [1], [0, 0, 1, 1], [], []>} : vector<128x8xbf16>, vector<8x16xbf16>, vector<128x16xf32> -> vector<128x16xf32>
    %42 = arith.addf %35, %41 : vector<128x16xf32>
    %c1_50 = arith.constant 1 : index
    %c1_51 = arith.constant 1 : index
    %c0_52 = arith.constant 0 : index
    %43 = vector.load %arg8[%c1_50, %c1_51, %c0_52] : memref<10x18x8xf32, #tpu.memory_space<vmem>>, vector<8x16x8xf32>
    %44 = arith.truncf %43 : vector<8x16x8xf32> to vector<8x16x8xbf16>
    %45 = vector.shape_cast %44 : vector<8x16x8xbf16> to vector<128x8xbf16>
    %c4 = arith.constant 4 : index
    %c0_53 = arith.constant 0 : index
    %c0_54 = arith.constant 0 : index
    %46 = vector.load %arg5[%c4, %c0_53, %c0_54] : memref<9x8x16xbf16, #tpu.memory_space<vmem>>, vector<1x8x16xbf16>
    %47 = vector.shape_cast %46 : vector<1x8x16xbf16> to vector<8x16xbf16>
    %cst_55 = arith.constant dense<0.000000e+00> : vector<128x16xf32>
    %48 = tpu.matmul %45, %47, %cst_55 {dimension_numbers = #tpu.dot_dimension_numbers<[1], [0], [0], [1], [0, 0, 1, 1], [], []>} : vector<128x8xbf16>, vector<8x16xbf16>, vector<128x16xf32> -> vector<128x16xf32>
    %49 = arith.addf %42, %48 : vector<128x16xf32>
    %c1_56 = arith.constant 1 : index
    %c2_57 = arith.constant 2 : index
    %c0_58 = arith.constant 0 : index
    %50 = vector.load %arg8[%c1_56, %c2_57, %c0_58] : memref<10x18x8xf32, #tpu.memory_space<vmem>>, vector<8x16x8xf32>
    %51 = arith.truncf %50 : vector<8x16x8xf32> to vector<8x16x8xbf16>
    %52 = vector.shape_cast %51 : vector<8x16x8xbf16> to vector<128x8xbf16>
    %c5 = arith.constant 5 : index
    %c0_59 = arith.constant 0 : index
    %c0_60 = arith.constant 0 : index
    %53 = vector.load %arg5[%c5, %c0_59, %c0_60] : memref<9x8x16xbf16, #tpu.memory_space<vmem>>, vector<1x8x16xbf16>
    %54 = vector.shape_cast %53 : vector<1x8x16xbf16> to vector<8x16xbf16>
    %cst_61 = arith.constant dense<0.000000e+00> : vector<128x16xf32>
    %55 = tpu.matmul %52, %54, %cst_61 {dimension_numbers = #tpu.dot_dimension_numbers<[1], [0], [0], [1], [0, 0, 1, 1], [], []>} : vector<128x8xbf16>, vector<8x16xbf16>, vector<128x16xf32> -> vector<128x16xf32>
    %56 = arith.addf %49, %55 : vector<128x16xf32>
    %c2_62 = arith.constant 2 : index
    %c0_63 = arith.constant 0 : index
    %c0_64 = arith.constant 0 : index
    %57 = vector.load %arg8[%c2_62, %c0_63, %c0_64] : memref<10x18x8xf32, #tpu.memory_space<vmem>>, vector<8x16x8xf32>
    %58 = arith.truncf %57 : vector<8x16x8xf32> to vector<8x16x8xbf16>
    %59 = vector.shape_cast %58 : vector<8x16x8xbf16> to vector<128x8xbf16>
    %c6 = arith.constant 6 : index
    %c0_65 = arith.constant 0 : index
    %c0_66 = arith.constant 0 : index
    %60 = vector.load %arg5[%c6, %c0_65, %c0_66] : memref<9x8x16xbf16, #tpu.memory_space<vmem>>, vector<1x8x16xbf16>
    %61 = vector.shape_cast %60 : vector<1x8x16xbf16> to vector<8x16xbf16>
    %cst_67 = arith.constant dense<0.000000e+00> : vector<128x16xf32>
    %62 = tpu.matmul %59, %61, %cst_67 {dimension_numbers = #tpu.dot_dimension_numbers<[1], [0], [0], [1], [0, 0, 1, 1], [], []>} : vector<128x8xbf16>, vector<8x16xbf16>, vector<128x16xf32> -> vector<128x16xf32>
    %63 = arith.addf %56, %62 : vector<128x16xf32>
    %c2_68 = arith.constant 2 : index
    %c1_69 = arith.constant 1 : index
    %c0_70 = arith.constant 0 : index
    %64 = vector.load %arg8[%c2_68, %c1_69, %c0_70] : memref<10x18x8xf32, #tpu.memory_space<vmem>>, vector<8x16x8xf32>
    %65 = arith.truncf %64 : vector<8x16x8xf32> to vector<8x16x8xbf16>
    %66 = vector.shape_cast %65 : vector<8x16x8xbf16> to vector<128x8xbf16>
    %c7 = arith.constant 7 : index
    %c0_71 = arith.constant 0 : index
    %c0_72 = arith.constant 0 : index
    %67 = vector.load %arg5[%c7, %c0_71, %c0_72] : memref<9x8x16xbf16, #tpu.memory_space<vmem>>, vector<1x8x16xbf16>
    %68 = vector.shape_cast %67 : vector<1x8x16xbf16> to vector<8x16xbf16>
    %cst_73 = arith.constant dense<0.000000e+00> : vector<128x16xf32>
    %69 = tpu.matmul %66, %68, %cst_73 {dimension_numbers = #tpu.dot_dimension_numbers<[1], [0], [0], [1], [0, 0, 1, 1], [], []>} : vector<128x8xbf16>, vector<8x16xbf16>, vector<128x16xf32> -> vector<128x16xf32>
    %70 = arith.addf %63, %69 : vector<128x16xf32>
    %c2_74 = arith.constant 2 : index
    %c2_75 = arith.constant 2 : index
    %c0_76 = arith.constant 0 : index
    %71 = vector.load %arg8[%c2_74, %c2_75, %c0_76] : memref<10x18x8xf32, #tpu.memory_space<vmem>>, vector<8x16x8xf32>
    %72 = arith.truncf %71 : vector<8x16x8xf32> to vector<8x16x8xbf16>
    %73 = vector.shape_cast %72 : vector<8x16x8xbf16> to vector<128x8xbf16>
    %c8 = arith.constant 8 : index
    %c0_77 = arith.constant 0 : index
    %c0_78 = arith.constant 0 : index
    %74 = vector.load %arg5[%c8, %c0_77, %c0_78] : memref<9x8x16xbf16, #tpu.memory_space<vmem>>, vector<1x8x16xbf16>
    %75 = vector.shape_cast %74 : vector<1x8x16xbf16> to vector<8x16xbf16>
    %cst_79 = arith.constant dense<0.000000e+00> : vector<128x16xf32>
    %76 = tpu.matmul %73, %75, %cst_79 {dimension_numbers = #tpu.dot_dimension_numbers<[1], [0], [0], [1], [0, 0, 1, 1], [], []>} : vector<128x8xbf16>, vector<8x16xbf16>, vector<128x16xf32> -> vector<128x16xf32>
    %77 = arith.addf %70, %76 : vector<128x16xf32>
    %c0_80 = arith.constant 0 : index
    %c0_81 = arith.constant 0 : index
    %78 = vector.load %arg6[%c0_80, %c0_81] : memref<1x16xf32, #tpu.memory_space<vmem>>, vector<1x16xf32>
    %79 = vector.broadcast %78 : vector<1x16xf32> to vector<128x16xf32>
    %80 = arith.addf %77, %79 : vector<128x16xf32>
    %cst_82 = arith.constant 0.000000e+00 : f32
    %81 = vector.broadcast %cst_82 : f32 to vector<128x16xf32>
    %82 = arith.maximumf %80, %81 : vector<128x16xf32>
    %83 = arith.truncf %82 : vector<128x16xf32> to vector<128x16xbf16>
    %c0_83 = arith.constant 0 : index
    %c0_84 = arith.constant 0 : index
    %c0_85 = arith.constant 0 : index
    %84 = vector.load %arg7[%c0_83, %c0_84, %c0_85] : memref<1x128x16xbf16, #tpu.memory_space<vmem>>, vector<1x128x16xbf16>
    %85 = vector.shape_cast %84 : vector<1x128x16xbf16> to vector<128x16xbf16>
    %86 = vector.shape_cast %83 : vector<128x16xbf16> to vector<1x128x16xbf16>
    tpu.vector_store %arg7[%c0_83, %c0_84, %c0_85], %86 {strides = array<i32>} : memref<1x128x16xbf16, #tpu.memory_space<vmem>>, vector<1x128x16xbf16>,
    return
  }
  func.func @transform_0(%arg0: i32, %arg1: i32) -> (i32, i32, i32, i32) {
    %c0_i32 = arith.constant 0 : i32
    %c0_i32_0 = arith.constant 0 : i32
    %c0_i32_1 = arith.constant 0 : i32
    return %arg0, %arg1, %c0_i32, %c0_i32_0 : i32, i32, i32, i32
  }
  func.func @transform_1(%arg0: i32, %arg1: i32) -> (i32, i32, i32, i32) {
    %c0_i32 = arith.constant 0 : i32
    %c0_i32_0 = arith.constant 0 : i32
    %c0_i32_1 = arith.constant 0 : i32
    return %arg0, %arg1, %c0_i32, %c0_i32_0 : i32, i32, i32, i32
  }
  func.func @transform_2(%arg0: i32, %arg1: i32) -> (i32, i32, i32, i32) {
    %c0_i32 = arith.constant 0 : i32
    %c0_i32_0 = arith.constant 0 : i32
    %c0_i32_1 = arith.constant 0 : i32
    return %arg0, %arg1, %c0_i32, %c0_i32_0 : i32, i32, i32, i32
  }
  func.func @transform_3(%arg0: i32, %arg1: i32) -> (i32, i32, i32) {
    %c0_i32 = arith.constant 0 : i32
    %c0_i32_0 = arith.constant 0 : i32
    %c0_i32_1 = arith.constant 0 : i32
    %c0_i32_2 = arith.constant 0 : i32
    return %c0_i32, %c0_i32_0, %c0_i32_1 : i32, i32, i32
  }
  func.func @transform_4(%arg0: i32, %arg1: i32) -> (i32, i32) {
    %c0_i32 = arith.constant 0 : i32
    %c0_i32_0 = arith.constant 0 : i32
    %c0_i32_1 = arith.constant 0 : i32
    return %c0_i32, %c0_i32_0 : i32, i32
  }
  func.func @transform_5(%arg0: i32, %arg1: i32) -> (i32, i32, i32) {
    %c0_i32 = arith.constant 0 : i32
    %c0_i32_0 = arith.constant 0 : i32
    return %arg0, %arg1, %c0_i32 : i32, i32, i32
  }
}

module attributes {stable_mosaic.version = 11 : i64} {
  func.func @_conv3x3_kernel(%arg0: i32, %arg1: i32, %arg2: memref<1x8x16x16xbf16, #tpu.memory_space<vmem>>, %arg3: memref<1x1x16x16xbf16, #tpu.memory_space<vmem>>, %arg4: memref<1x1x16x16xbf16, #tpu.memory_space<vmem>>, %arg5: memref<9x16x16xbf16, #tpu.memory_space<vmem>>, %arg6: memref<1x16xf32, #tpu.memory_space<vmem>>, %arg7: memref<1x128x16xbf16, #tpu.memory_space<vmem>>, %arg8: memref<10x18x16xf32, #tpu.memory_space<vmem>>) attributes {dimension_semantics = [#tpu.dimension_semantics<parallel>, #tpu.dimension_semantics<parallel>], iteration_bounds = array<i64: 2, 2>, scalar_prefetch = 0 : i64, scratch_operands = 1 : i64, tpu.core_type = #tpu.core_type<tc>, window_params = [{transform_indices = @transform_0, window_bounds = array<i64: 1, 8, 16, 16>}, {transform_indices = @transform_1, window_bounds = array<i64: 1, 1, 16, 16>}, {transform_indices = @transform_2, window_bounds = array<i64: 1, 1, 16, 16>}, {pipeline_mode = #tpu.pipeline_mode<synchronous>, transform_indices = @transform_3, window_bounds = array<i64: 9, 16, 16>}, {pipeline_mode = #tpu.pipeline_mode<synchronous>, transform_indices = @transform_4, window_bounds = array<i64: 1, 16>}, {transform_indices = @transform_5, window_bounds = array<i64: 1, 128, 16>}]} {
    %cst = arith.constant 0.000000e+00 : f32
    %0 = vector.broadcast %cst : f32 to vector<10x1x16xf32>
    %c0 = arith.constant 0 : index
    %c0_0 = arith.constant 0 : index
    %c0_1 = arith.constant 0 : index
    %1 = vector.load %arg8[%c0, %c0_0, %c0_1] : memref<10x18x16xf32, #tpu.memory_space<vmem>>, vector<10x1x16xf32>
    tpu.vector_store %arg8[%c0, %c0_0, %c0_1], %0 {strides = array<i32>} : memref<10x18x16xf32, #tpu.memory_space<vmem>>, vector<10x1x16xf32>,
    %cst_2 = arith.constant 0.000000e+00 : f32
    %2 = vector.broadcast %cst_2 : f32 to vector<10x1x16xf32>
    %c0_3 = arith.constant 0 : index
    %c17 = arith.constant 17 : index
    %c0_4 = arith.constant 0 : index
    %3 = vector.load %arg8[%c0_3, %c17, %c0_4] : memref<10x18x16xf32, #tpu.memory_space<vmem>>, vector<10x1x16xf32>
    tpu.vector_store %arg8[%c0_3, %c17, %c0_4], %2 {strides = array<i32>} : memref<10x18x16xf32, #tpu.memory_space<vmem>>, vector<10x1x16xf32>,
    %c0_5 = arith.constant 0 : index
    %c0_6 = arith.constant 0 : index
    %c0_7 = arith.constant 0 : index
    %c0_8 = arith.constant 0 : index
    %4 = vector.load %arg3[%c0_5, %c0_6, %c0_7, %c0_8] : memref<1x1x16x16xbf16, #tpu.memory_space<vmem>>, vector<1x1x16x16xbf16>
    %5 = vector.shape_cast %4 : vector<1x1x16x16xbf16> to vector<1x16x16xbf16>
    %6 = arith.extf %5 : vector<1x16x16xbf16> to vector<1x16x16xf32>
    %c0_9 = arith.constant 0 : index
    %c1 = arith.constant 1 : index
    %c0_10 = arith.constant 0 : index
    %7 = vector.load %arg8[%c0_9, %c1, %c0_10] : memref<10x18x16xf32, #tpu.memory_space<vmem>>, vector<1x16x16xf32>
    tpu.vector_store %arg8[%c0_9, %c1, %c0_10], %6 {strides = array<i32>} : memref<10x18x16xf32, #tpu.memory_space<vmem>>, vector<1x16x16xf32>,
    %c0_11 = arith.constant 0 : index
    %c0_12 = arith.constant 0 : index
    %c0_13 = arith.constant 0 : index
    %c0_14 = arith.constant 0 : index
    %8 = vector.load %arg4[%c0_11, %c0_12, %c0_13, %c0_14] : memref<1x1x16x16xbf16, #tpu.memory_space<vmem>>, vector<1x1x16x16xbf16>
    %9 = vector.shape_cast %8 : vector<1x1x16x16xbf16> to vector<1x16x16xbf16>
    %10 = arith.extf %9 : vector<1x16x16xbf16> to vector<1x16x16xf32>
    %c9 = arith.constant 9 : index
    %c1_15 = arith.constant 1 : index
    %c0_16 = arith.constant 0 : index
    %11 = vector.load %arg8[%c9, %c1_15, %c0_16] : memref<10x18x16xf32, #tpu.memory_space<vmem>>, vector<1x16x16xf32>
    tpu.vector_store %arg8[%c9, %c1_15, %c0_16], %10 {strides = array<i32>} : memref<10x18x16xf32, #tpu.memory_space<vmem>>, vector<1x16x16xf32>,
    %c0_17 = arith.constant 0 : index
    %c0_18 = arith.constant 0 : index
    %c0_19 = arith.constant 0 : index
    %c0_20 = arith.constant 0 : index
    %12 = vector.load %arg2[%c0_17, %c0_18, %c0_19, %c0_20] : memref<1x8x16x16xbf16, #tpu.memory_space<vmem>>, vector<1x8x16x16xbf16>
    %13 = vector.shape_cast %12 : vector<1x8x16x16xbf16> to vector<8x16x16xbf16>
    %14 = arith.extf %13 : vector<8x16x16xbf16> to vector<8x16x16xf32>
    %c1_21 = arith.constant 1 : index
    %c1_22 = arith.constant 1 : index
    %c0_23 = arith.constant 0 : index
    %15 = vector.load %arg8[%c1_21, %c1_22, %c0_23] : memref<10x18x16xf32, #tpu.memory_space<vmem>>, vector<8x16x16xf32>
    tpu.vector_store %arg8[%c1_21, %c1_22, %c0_23], %14 {strides = array<i32>} : memref<10x18x16xf32, #tpu.memory_space<vmem>>, vector<8x16x16xf32>,
    %c0_24 = arith.constant 0 : index
    %c0_25 = arith.constant 0 : index
    %c0_26 = arith.constant 0 : index
    %16 = vector.load %arg8[%c0_24, %c0_25, %c0_26] : memref<10x18x16xf32, #tpu.memory_space<vmem>>, vector<8x16x16xf32>
    %17 = arith.truncf %16 : vector<8x16x16xf32> to vector<8x16x16xbf16>
    %18 = vector.shape_cast %17 : vector<8x16x16xbf16> to vector<128x16xbf16>
    %c0_27 = arith.constant 0 : index
    %c0_28 = arith.constant 0 : index
    %c0_29 = arith.constant 0 : index
    %19 = vector.load %arg5[%c0_27, %c0_28, %c0_29] : memref<9x16x16xbf16, #tpu.memory_space<vmem>>, vector<1x16x16xbf16>
    %20 = vector.shape_cast %19 : vector<1x16x16xbf16> to vector<16x16xbf16>
    %cst_30 = arith.constant dense<0.000000e+00> : vector<128x16xf32>
    %21 = tpu.matmul %18, %20, %cst_30 {dimension_numbers = #tpu.dot_dimension_numbers<[1], [0], [0], [1], [0, 0, 1, 1], [], []>} : vector<128x16xbf16>, vector<16x16xbf16>, vector<128x16xf32> -> vector<128x16xf32>
    %c0_31 = arith.constant 0 : index
    %c1_32 = arith.constant 1 : index
    %c0_33 = arith.constant 0 : index
    %22 = vector.load %arg8[%c0_31, %c1_32, %c0_33] : memref<10x18x16xf32, #tpu.memory_space<vmem>>, vector<8x16x16xf32>
    %23 = arith.truncf %22 : vector<8x16x16xf32> to vector<8x16x16xbf16>
    %24 = vector.shape_cast %23 : vector<8x16x16xbf16> to vector<128x16xbf16>
    %c1_34 = arith.constant 1 : index
    %c0_35 = arith.constant 0 : index
    %c0_36 = arith.constant 0 : index
    %25 = vector.load %arg5[%c1_34, %c0_35, %c0_36] : memref<9x16x16xbf16, #tpu.memory_space<vmem>>, vector<1x16x16xbf16>
    %26 = vector.shape_cast %25 : vector<1x16x16xbf16> to vector<16x16xbf16>
    %cst_37 = arith.constant dense<0.000000e+00> : vector<128x16xf32>
    %27 = tpu.matmul %24, %26, %cst_37 {dimension_numbers = #tpu.dot_dimension_numbers<[1], [0], [0], [1], [0, 0, 1, 1], [], []>} : vector<128x16xbf16>, vector<16x16xbf16>, vector<128x16xf32> -> vector<128x16xf32>
    %28 = arith.addf %21, %27 : vector<128x16xf32>
    %c0_38 = arith.constant 0 : index
    %c2 = arith.constant 2 : index
    %c0_39 = arith.constant 0 : index
    %29 = vector.load %arg8[%c0_38, %c2, %c0_39] : memref<10x18x16xf32, #tpu.memory_space<vmem>>, vector<8x16x16xf32>
    %30 = arith.truncf %29 : vector<8x16x16xf32> to vector<8x16x16xbf16>
    %31 = vector.shape_cast %30 : vector<8x16x16xbf16> to vector<128x16xbf16>
    %c2_40 = arith.constant 2 : index
    %c0_41 = arith.constant 0 : index
    %c0_42 = arith.constant 0 : index
    %32 = vector.load %arg5[%c2_40, %c0_41, %c0_42] : memref<9x16x16xbf16, #tpu.memory_space<vmem>>, vector<1x16x16xbf16>
    %33 = vector.shape_cast %32 : vector<1x16x16xbf16> to vector<16x16xbf16>
    %cst_43 = arith.constant dense<0.000000e+00> : vector<128x16xf32>
    %34 = tpu.matmul %31, %33, %cst_43 {dimension_numbers = #tpu.dot_dimension_numbers<[1], [0], [0], [1], [0, 0, 1, 1], [], []>} : vector<128x16xbf16>, vector<16x16xbf16>, vector<128x16xf32> -> vector<128x16xf32>
    %35 = arith.addf %28, %34 : vector<128x16xf32>
    %c1_44 = arith.constant 1 : index
    %c0_45 = arith.constant 0 : index
    %c0_46 = arith.constant 0 : index
    %36 = vector.load %arg8[%c1_44, %c0_45, %c0_46] : memref<10x18x16xf32, #tpu.memory_space<vmem>>, vector<8x16x16xf32>
    %37 = arith.truncf %36 : vector<8x16x16xf32> to vector<8x16x16xbf16>
    %38 = vector.shape_cast %37 : vector<8x16x16xbf16> to vector<128x16xbf16>
    %c3 = arith.constant 3 : index
    %c0_47 = arith.constant 0 : index
    %c0_48 = arith.constant 0 : index
    %39 = vector.load %arg5[%c3, %c0_47, %c0_48] : memref<9x16x16xbf16, #tpu.memory_space<vmem>>, vector<1x16x16xbf16>
    %40 = vector.shape_cast %39 : vector<1x16x16xbf16> to vector<16x16xbf16>
    %cst_49 = arith.constant dense<0.000000e+00> : vector<128x16xf32>
    %41 = tpu.matmul %38, %40, %cst_49 {dimension_numbers = #tpu.dot_dimension_numbers<[1], [0], [0], [1], [0, 0, 1, 1], [], []>} : vector<128x16xbf16>, vector<16x16xbf16>, vector<128x16xf32> -> vector<128x16xf32>
    %42 = arith.addf %35, %41 : vector<128x16xf32>
    %c1_50 = arith.constant 1 : index
    %c1_51 = arith.constant 1 : index
    %c0_52 = arith.constant 0 : index
    %43 = vector.load %arg8[%c1_50, %c1_51, %c0_52] : memref<10x18x16xf32, #tpu.memory_space<vmem>>, vector<8x16x16xf32>
    %44 = arith.truncf %43 : vector<8x16x16xf32> to vector<8x16x16xbf16>
    %45 = vector.shape_cast %44 : vector<8x16x16xbf16> to vector<128x16xbf16>
    %c4 = arith.constant 4 : index
    %c0_53 = arith.constant 0 : index
    %c0_54 = arith.constant 0 : index
    %46 = vector.load %arg5[%c4, %c0_53, %c0_54] : memref<9x16x16xbf16, #tpu.memory_space<vmem>>, vector<1x16x16xbf16>
    %47 = vector.shape_cast %46 : vector<1x16x16xbf16> to vector<16x16xbf16>
    %cst_55 = arith.constant dense<0.000000e+00> : vector<128x16xf32>
    %48 = tpu.matmul %45, %47, %cst_55 {dimension_numbers = #tpu.dot_dimension_numbers<[1], [0], [0], [1], [0, 0, 1, 1], [], []>} : vector<128x16xbf16>, vector<16x16xbf16>, vector<128x16xf32> -> vector<128x16xf32>
    %49 = arith.addf %42, %48 : vector<128x16xf32>
    %c1_56 = arith.constant 1 : index
    %c2_57 = arith.constant 2 : index
    %c0_58 = arith.constant 0 : index
    %50 = vector.load %arg8[%c1_56, %c2_57, %c0_58] : memref<10x18x16xf32, #tpu.memory_space<vmem>>, vector<8x16x16xf32>
    %51 = arith.truncf %50 : vector<8x16x16xf32> to vector<8x16x16xbf16>
    %52 = vector.shape_cast %51 : vector<8x16x16xbf16> to vector<128x16xbf16>
    %c5 = arith.constant 5 : index
    %c0_59 = arith.constant 0 : index
    %c0_60 = arith.constant 0 : index
    %53 = vector.load %arg5[%c5, %c0_59, %c0_60] : memref<9x16x16xbf16, #tpu.memory_space<vmem>>, vector<1x16x16xbf16>
    %54 = vector.shape_cast %53 : vector<1x16x16xbf16> to vector<16x16xbf16>
    %cst_61 = arith.constant dense<0.000000e+00> : vector<128x16xf32>
    %55 = tpu.matmul %52, %54, %cst_61 {dimension_numbers = #tpu.dot_dimension_numbers<[1], [0], [0], [1], [0, 0, 1, 1], [], []>} : vector<128x16xbf16>, vector<16x16xbf16>, vector<128x16xf32> -> vector<128x16xf32>
    %56 = arith.addf %49, %55 : vector<128x16xf32>
    %c2_62 = arith.constant 2 : index
    %c0_63 = arith.constant 0 : index
    %c0_64 = arith.constant 0 : index
    %57 = vector.load %arg8[%c2_62, %c0_63, %c0_64] : memref<10x18x16xf32, #tpu.memory_space<vmem>>, vector<8x16x16xf32>
    %58 = arith.truncf %57 : vector<8x16x16xf32> to vector<8x16x16xbf16>
    %59 = vector.shape_cast %58 : vector<8x16x16xbf16> to vector<128x16xbf16>
    %c6 = arith.constant 6 : index
    %c0_65 = arith.constant 0 : index
    %c0_66 = arith.constant 0 : index
    %60 = vector.load %arg5[%c6, %c0_65, %c0_66] : memref<9x16x16xbf16, #tpu.memory_space<vmem>>, vector<1x16x16xbf16>
    %61 = vector.shape_cast %60 : vector<1x16x16xbf16> to vector<16x16xbf16>
    %cst_67 = arith.constant dense<0.000000e+00> : vector<128x16xf32>
    %62 = tpu.matmul %59, %61, %cst_67 {dimension_numbers = #tpu.dot_dimension_numbers<[1], [0], [0], [1], [0, 0, 1, 1], [], []>} : vector<128x16xbf16>, vector<16x16xbf16>, vector<128x16xf32> -> vector<128x16xf32>
    %63 = arith.addf %56, %62 : vector<128x16xf32>
    %c2_68 = arith.constant 2 : index
    %c1_69 = arith.constant 1 : index
    %c0_70 = arith.constant 0 : index
    %64 = vector.load %arg8[%c2_68, %c1_69, %c0_70] : memref<10x18x16xf32, #tpu.memory_space<vmem>>, vector<8x16x16xf32>
    %65 = arith.truncf %64 : vector<8x16x16xf32> to vector<8x16x16xbf16>
    %66 = vector.shape_cast %65 : vector<8x16x16xbf16> to vector<128x16xbf16>
    %c7 = arith.constant 7 : index
    %c0_71 = arith.constant 0 : index
    %c0_72 = arith.constant 0 : index
    %67 = vector.load %arg5[%c7, %c0_71, %c0_72] : memref<9x16x16xbf16, #tpu.memory_space<vmem>>, vector<1x16x16xbf16>
    %68 = vector.shape_cast %67 : vector<1x16x16xbf16> to vector<16x16xbf16>
    %cst_73 = arith.constant dense<0.000000e+00> : vector<128x16xf32>
    %69 = tpu.matmul %66, %68, %cst_73 {dimension_numbers = #tpu.dot_dimension_numbers<[1], [0], [0], [1], [0, 0, 1, 1], [], []>} : vector<128x16xbf16>, vector<16x16xbf16>, vector<128x16xf32> -> vector<128x16xf32>
    %70 = arith.addf %63, %69 : vector<128x16xf32>
    %c2_74 = arith.constant 2 : index
    %c2_75 = arith.constant 2 : index
    %c0_76 = arith.constant 0 : index
    %71 = vector.load %arg8[%c2_74, %c2_75, %c0_76] : memref<10x18x16xf32, #tpu.memory_space<vmem>>, vector<8x16x16xf32>
    %72 = arith.truncf %71 : vector<8x16x16xf32> to vector<8x16x16xbf16>
    %73 = vector.shape_cast %72 : vector<8x16x16xbf16> to vector<128x16xbf16>
    %c8 = arith.constant 8 : index
    %c0_77 = arith.constant 0 : index
    %c0_78 = arith.constant 0 : index
    %74 = vector.load %arg5[%c8, %c0_77, %c0_78] : memref<9x16x16xbf16, #tpu.memory_space<vmem>>, vector<1x16x16xbf16>
    %75 = vector.shape_cast %74 : vector<1x16x16xbf16> to vector<16x16xbf16>
    %cst_79 = arith.constant dense<0.000000e+00> : vector<128x16xf32>
    %76 = tpu.matmul %73, %75, %cst_79 {dimension_numbers = #tpu.dot_dimension_numbers<[1], [0], [0], [1], [0, 0, 1, 1], [], []>} : vector<128x16xbf16>, vector<16x16xbf16>, vector<128x16xf32> -> vector<128x16xf32>
    %77 = arith.addf %70, %76 : vector<128x16xf32>
    %c0_80 = arith.constant 0 : index
    %c0_81 = arith.constant 0 : index
    %78 = vector.load %arg6[%c0_80, %c0_81] : memref<1x16xf32, #tpu.memory_space<vmem>>, vector<1x16xf32>
    %79 = vector.broadcast %78 : vector<1x16xf32> to vector<128x16xf32>
    %80 = arith.addf %77, %79 : vector<128x16xf32>
    %cst_82 = arith.constant 0.000000e+00 : f32
    %81 = vector.broadcast %cst_82 : f32 to vector<128x16xf32>
    %82 = arith.maximumf %80, %81 : vector<128x16xf32>
    %83 = arith.truncf %82 : vector<128x16xf32> to vector<128x16xbf16>
    %c0_83 = arith.constant 0 : index
    %c0_84 = arith.constant 0 : index
    %c0_85 = arith.constant 0 : index
    %84 = vector.load %arg7[%c0_83, %c0_84, %c0_85] : memref<1x128x16xbf16, #tpu.memory_space<vmem>>, vector<1x128x16xbf16>
    %85 = vector.shape_cast %84 : vector<1x128x16xbf16> to vector<128x16xbf16>
    %86 = vector.shape_cast %83 : vector<128x16xbf16> to vector<1x128x16xbf16>
    tpu.vector_store %arg7[%c0_83, %c0_84, %c0_85], %86 {strides = array<i32>} : memref<1x128x16xbf16, #tpu.memory_space<vmem>>, vector<1x128x16xbf16>,
    return
  }
  func.func @transform_0(%arg0: i32, %arg1: i32) -> (i32, i32, i32, i32) {
    %c0_i32 = arith.constant 0 : i32
    %c0_i32_0 = arith.constant 0 : i32
    %c0_i32_1 = arith.constant 0 : i32
    return %arg0, %arg1, %c0_i32, %c0_i32_0 : i32, i32, i32, i32
  }
  func.func @transform_1(%arg0: i32, %arg1: i32) -> (i32, i32, i32, i32) {
    %c0_i32 = arith.constant 0 : i32
    %c0_i32_0 = arith.constant 0 : i32
    %c0_i32_1 = arith.constant 0 : i32
    return %arg0, %arg1, %c0_i32, %c0_i32_0 : i32, i32, i32, i32
  }
  func.func @transform_2(%arg0: i32, %arg1: i32) -> (i32, i32, i32, i32) {
    %c0_i32 = arith.constant 0 : i32
    %c0_i32_0 = arith.constant 0 : i32
    %c0_i32_1 = arith.constant 0 : i32
    return %arg0, %arg1, %c0_i32, %c0_i32_0 : i32, i32, i32, i32
  }
  func.func @transform_3(%arg0: i32, %arg1: i32) -> (i32, i32, i32) {
    %c0_i32 = arith.constant 0 : i32
    %c0_i32_0 = arith.constant 0 : i32
    %c0_i32_1 = arith.constant 0 : i32
    %c0_i32_2 = arith.constant 0 : i32
    return %c0_i32, %c0_i32_0, %c0_i32_1 : i32, i32, i32
  }
  func.func @transform_4(%arg0: i32, %arg1: i32) -> (i32, i32) {
    %c0_i32 = arith.constant 0 : i32
    %c0_i32_0 = arith.constant 0 : i32
    %c0_i32_1 = arith.constant 0 : i32
    return %c0_i32, %c0_i32_0 : i32, i32
  }
  func.func @transform_5(%arg0: i32, %arg1: i32) -> (i32, i32, i32) {
    %c0_i32 = arith.constant 0 : i32
    %c0_i32_0 = arith.constant 0 : i32
    return %arg0, %arg1, %c0_i32 : i32, i32, i32
  }
}

module attributes {stable_mosaic.version = 11 : i64} {
  func.func @_att_fused_kernel(%arg0: i32, %arg1: i32, %arg2: memref<1x8x16x16xbf16, #tpu.memory_space<vmem>>, %arg3: memref<1x2x16x16xbf16, #tpu.memory_space<vmem>>, %arg4: memref<1x2x16x16xbf16, #tpu.memory_space<vmem>>, %arg5: memref<1x8x16x16xbf16, #tpu.memory_space<vmem>>, %arg6: memref<1x2x16x16xbf16, #tpu.memory_space<vmem>>, %arg7: memref<1x2x16x16xbf16, #tpu.memory_space<vmem>>, %arg8: memref<9x16x8xbf16, #tpu.memory_space<vmem>>, %arg9: memref<9x16x8xbf16, #tpu.memory_space<vmem>>, %arg10: memref<1x8xf32, #tpu.memory_space<vmem>>, %arg11: memref<9x1x8xf32, #tpu.memory_space<vmem>>, %arg12: memref<1x1xf32, #tpu.memory_space<vmem>>, %arg13: memref<1x128x16xf32, #tpu.memory_space<vmem>>, %arg14: memref<12x18x16xf32, #tpu.memory_space<vmem>>, %arg15: memref<12x18x16xf32, #tpu.memory_space<vmem>>, %arg16: memref<10x18x8xf32, #tpu.memory_space<vmem>>) attributes {dimension_semantics = [#tpu.dimension_semantics<parallel>, #tpu.dimension_semantics<parallel>], iteration_bounds = array<i64: 2, 2>, scalar_prefetch = 0 : i64, scratch_operands = 3 : i64, tpu.core_type = #tpu.core_type<tc>, window_params = [{transform_indices = @transform_0, window_bounds = array<i64: 1, 8, 16, 16>}, {transform_indices = @transform_1, window_bounds = array<i64: 1, 2, 16, 16>}, {transform_indices = @transform_2, window_bounds = array<i64: 1, 2, 16, 16>}, {transform_indices = @transform_3, window_bounds = array<i64: 1, 8, 16, 16>}, {transform_indices = @transform_4, window_bounds = array<i64: 1, 2, 16, 16>}, {transform_indices = @transform_5, window_bounds = array<i64: 1, 2, 16, 16>}, {pipeline_mode = #tpu.pipeline_mode<synchronous>, transform_indices = @transform_6, window_bounds = array<i64: 9, 16, 8>}, {pipeline_mode = #tpu.pipeline_mode<synchronous>, transform_indices = @transform_7, window_bounds = array<i64: 9, 16, 8>}, {pipeline_mode = #tpu.pipeline_mode<synchronous>, transform_indices = @transform_8, window_bounds = array<i64: 1, 8>}, {pipeline_mode = #tpu.pipeline_mode<synchronous>, transform_indices = @transform_9, window_bounds = array<i64: 9, 1, 8>}, {pipeline_mode = #tpu.pipeline_mode<synchronous>, transform_indices = @transform_10, window_bounds = array<i64: 1, 1>}, {transform_indices = @transform_11, window_bounds = array<i64: 1, 128, 16>}]} {
    %c0 = arith.constant 0 : index
    %c0_0 = arith.constant 0 : index
    %c0_1 = arith.constant 0 : index
    %c0_2 = arith.constant 0 : index
    %0 = vector.load %arg3[%c0, %c0_0, %c0_1, %c0_2] : memref<1x2x16x16xbf16, #tpu.memory_space<vmem>>, vector<1x2x16x16xbf16>
    %1 = vector.shape_cast %0 : vector<1x2x16x16xbf16> to vector<2x16x16xbf16>
    %c0_3 = arith.constant 0 : index
    %c0_4 = arith.constant 0 : index
    %c0_5 = arith.constant 0 : index
    %c0_6 = arith.constant 0 : index
    %2 = vector.load %arg2[%c0_3, %c0_4, %c0_5, %c0_6] : memref<1x8x16x16xbf16, #tpu.memory_space<vmem>>, vector<1x8x16x16xbf16>
    %3 = vector.shape_cast %2 : vector<1x8x16x16xbf16> to vector<8x16x16xbf16>
    %c0_7 = arith.constant 0 : index
    %c0_8 = arith.constant 0 : index
    %c0_9 = arith.constant 0 : index
    %c0_10 = arith.constant 0 : index
    %4 = vector.load %arg4[%c0_7, %c0_8, %c0_9, %c0_10] : memref<1x2x16x16xbf16, #tpu.memory_space<vmem>>, vector<1x2x16x16xbf16>
    %5 = vector.shape_cast %4 : vector<1x2x16x16xbf16> to vector<2x16x16xbf16>
    %cst = arith.constant 0.000000e+00 : f32
    %6 = vector.broadcast %cst : f32 to vector<12x1x16xf32>
    %c0_11 = arith.constant 0 : index
    %c0_12 = arith.constant 0 : index
    %c0_13 = arith.constant 0 : index
    %7 = vector.load %arg14[%c0_11, %c0_12, %c0_13] : memref<12x18x16xf32, #tpu.memory_space<vmem>>, vector<12x1x16xf32>
    tpu.vector_store %arg14[%c0_11, %c0_12, %c0_13], %6 {strides = array<i32>} : memref<12x18x16xf32, #tpu.memory_space<vmem>>, vector<12x1x16xf32>,
    %cst_14 = arith.constant 0.000000e+00 : f32
    %8 = vector.broadcast %cst_14 : f32 to vector<12x1x16xf32>
    %c0_15 = arith.constant 0 : index
    %c17 = arith.constant 17 : index
    %c0_16 = arith.constant 0 : index
    %9 = vector.load %arg14[%c0_15, %c17, %c0_16] : memref<12x18x16xf32, #tpu.memory_space<vmem>>, vector<12x1x16xf32>
    tpu.vector_store %arg14[%c0_15, %c17, %c0_16], %8 {strides = array<i32>} : memref<12x18x16xf32, #tpu.memory_space<vmem>>, vector<12x1x16xf32>,
    %10 = arith.extf %1 : vector<2x16x16xbf16> to vector<2x16x16xf32>
    %c0_17 = arith.constant 0 : index
    %c1 = arith.constant 1 : index
    %c0_18 = arith.constant 0 : index
    %11 = vector.load %arg14[%c0_17, %c1, %c0_18] : memref<12x18x16xf32, #tpu.memory_space<vmem>>, vector<2x16x16xf32>
    tpu.vector_store %arg14[%c0_17, %c1, %c0_18], %10 {strides = array<i32>} : memref<12x18x16xf32, #tpu.memory_space<vmem>>, vector<2x16x16xf32>,
    %12 = arith.extf %3 : vector<8x16x16xbf16> to vector<8x16x16xf32>
    %c2 = arith.constant 2 : index
    %c1_19 = arith.constant 1 : index
    %c0_20 = arith.constant 0 : index
    %13 = vector.load %arg14[%c2, %c1_19, %c0_20] : memref<12x18x16xf32, #tpu.memory_space<vmem>>, vector<8x16x16xf32>
    tpu.vector_store %arg14[%c2, %c1_19, %c0_20], %12 {strides = array<i32>} : memref<12x18x16xf32, #tpu.memory_space<vmem>>, vector<8x16x16xf32>,
    %14 = arith.extf %5 : vector<2x16x16xbf16> to vector<2x16x16xf32>
    %c10 = arith.constant 10 : index
    %c1_21 = arith.constant 1 : index
    %c0_22 = arith.constant 0 : index
    %15 = vector.load %arg14[%c10, %c1_21, %c0_22] : memref<12x18x16xf32, #tpu.memory_space<vmem>>, vector<2x16x16xf32>
    tpu.vector_store %arg14[%c10, %c1_21, %c0_22], %14 {strides = array<i32>} : memref<12x18x16xf32, #tpu.memory_space<vmem>>, vector<2x16x16xf32>,
    %c0_23 = arith.constant 0 : index
    %c0_24 = arith.constant 0 : index
    %c0_25 = arith.constant 0 : index
    %c0_26 = arith.constant 0 : index
    %16 = vector.load %arg6[%c0_23, %c0_24, %c0_25, %c0_26] : memref<1x2x16x16xbf16, #tpu.memory_space<vmem>>, vector<1x2x16x16xbf16>
    %17 = vector.shape_cast %16 : vector<1x2x16x16xbf16> to vector<2x16x16xbf16>
    %c0_27 = arith.constant 0 : index
    %c0_28 = arith.constant 0 : index
    %c0_29 = arith.constant 0 : index
    %c0_30 = arith.constant 0 : index
    %18 = vector.load %arg5[%c0_27, %c0_28, %c0_29, %c0_30] : memref<1x8x16x16xbf16, #tpu.memory_space<vmem>>, vector<1x8x16x16xbf16>
    %19 = vector.shape_cast %18 : vector<1x8x16x16xbf16> to vector<8x16x16xbf16>
    %c0_31 = arith.constant 0 : index
    %c0_32 = arith.constant 0 : index
    %c0_33 = arith.constant 0 : index
    %c0_34 = arith.constant 0 : index
    %20 = vector.load %arg7[%c0_31, %c0_32, %c0_33, %c0_34] : memref<1x2x16x16xbf16, #tpu.memory_space<vmem>>, vector<1x2x16x16xbf16>
    %21 = vector.shape_cast %20 : vector<1x2x16x16xbf16> to vector<2x16x16xbf16>
    %cst_35 = arith.constant 0.000000e+00 : f32
    %22 = vector.broadcast %cst_35 : f32 to vector<12x1x16xf32>
    %c0_36 = arith.constant 0 : index
    %c0_37 = arith.constant 0 : index
    %c0_38 = arith.constant 0 : index
    %23 = vector.load %arg15[%c0_36, %c0_37, %c0_38] : memref<12x18x16xf32, #tpu.memory_space<vmem>>, vector<12x1x16xf32>
    tpu.vector_store %arg15[%c0_36, %c0_37, %c0_38], %22 {strides = array<i32>} : memref<12x18x16xf32, #tpu.memory_space<vmem>>, vector<12x1x16xf32>,
    %cst_39 = arith.constant 0.000000e+00 : f32
    %24 = vector.broadcast %cst_39 : f32 to vector<12x1x16xf32>
    %c0_40 = arith.constant 0 : index
    %c17_41 = arith.constant 17 : index
    %c0_42 = arith.constant 0 : index
    %25 = vector.load %arg15[%c0_40, %c17_41, %c0_42] : memref<12x18x16xf32, #tpu.memory_space<vmem>>, vector<12x1x16xf32>
    tpu.vector_store %arg15[%c0_40, %c17_41, %c0_42], %24 {strides = array<i32>} : memref<12x18x16xf32, #tpu.memory_space<vmem>>, vector<12x1x16xf32>,
    %26 = arith.extf %17 : vector<2x16x16xbf16> to vector<2x16x16xf32>
    %c0_43 = arith.constant 0 : index
    %c1_44 = arith.constant 1 : index
    %c0_45 = arith.constant 0 : index
    %27 = vector.load %arg15[%c0_43, %c1_44, %c0_45] : memref<12x18x16xf32, #tpu.memory_space<vmem>>, vector<2x16x16xf32>
    tpu.vector_store %arg15[%c0_43, %c1_44, %c0_45], %26 {strides = array<i32>} : memref<12x18x16xf32, #tpu.memory_space<vmem>>, vector<2x16x16xf32>,
    %28 = arith.extf %19 : vector<8x16x16xbf16> to vector<8x16x16xf32>
    %c2_46 = arith.constant 2 : index
    %c1_47 = arith.constant 1 : index
    %c0_48 = arith.constant 0 : index
    %29 = vector.load %arg15[%c2_46, %c1_47, %c0_48] : memref<12x18x16xf32, #tpu.memory_space<vmem>>, vector<8x16x16xf32>
    tpu.vector_store %arg15[%c2_46, %c1_47, %c0_48], %28 {strides = array<i32>} : memref<12x18x16xf32, #tpu.memory_space<vmem>>, vector<8x16x16xf32>,
    %30 = arith.extf %21 : vector<2x16x16xbf16> to vector<2x16x16xf32>
    %c10_49 = arith.constant 10 : index
    %c1_50 = arith.constant 1 : index
    %c0_51 = arith.constant 0 : index
    %31 = vector.load %arg15[%c10_49, %c1_50, %c0_51] : memref<12x18x16xf32, #tpu.memory_space<vmem>>, vector<2x16x16xf32>
    tpu.vector_store %arg15[%c10_49, %c1_50, %c0_51], %30 {strides = array<i32>} : memref<12x18x16xf32, #tpu.memory_space<vmem>>, vector<2x16x16xf32>,
    %c0_52 = arith.constant 0 : index
    %c0_53 = arith.constant 0 : index
    %c0_54 = arith.constant 0 : index
    %32 = vector.load %arg14[%c0_52, %c0_53, %c0_54] : memref<12x18x16xf32, #tpu.memory_space<vmem>>, vector<10x16x16xf32>
    %33 = arith.truncf %32 : vector<10x16x16xf32> to vector<10x16x16xbf16>
    %34 = vector.shape_cast %33 : vector<10x16x16xbf16> to vector<160x16xbf16>
    %c0_55 = arith.constant 0 : index
    %c0_56 = arith.constant 0 : index
    %c0_57 = arith.constant 0 : index
    %35 = vector.load %arg15[%c0_55, %c0_56, %c0_57] : memref<12x18x16xf32, #tpu.memory_space<vmem>>, vector<10x16x16xf32>
    %36 = arith.truncf %35 : vector<10x16x16xf32> to vector<10x16x16xbf16>
    %37 = vector.shape_cast %36 : vector<10x16x16xbf16> to vector<160x16xbf16>
    %c0_58 = arith.constant 0 : index
    %c0_59 = arith.constant 0 : index
    %c0_60 = arith.constant 0 : index
    %38 = vector.load %arg8[%c0_58, %c0_59, %c0_60] : memref<9x16x8xbf16, #tpu.memory_space<vmem>>, vector<1x16x8xbf16>
    %39 = vector.shape_cast %38 : vector<1x16x8xbf16> to vector<16x8xbf16>
    %cst_61 = arith.constant dense<0.000000e+00> : vector<160x8xf32>
    %40 = tpu.matmul %34, %39, %cst_61 {dimension_numbers = #tpu.dot_dimension_numbers<[1], [0], [0], [1], [0, 0, 1, 1], [], []>} : vector<160x16xbf16>, vector<16x8xbf16>, vector<160x8xf32> -> vector<160x8xf32>
    %c0_62 = arith.constant 0 : index
    %c0_63 = arith.constant 0 : index
    %c0_64 = arith.constant 0 : index
    %41 = vector.load %arg9[%c0_62, %c0_63, %c0_64] : memref<9x16x8xbf16, #tpu.memory_space<vmem>>, vector<1x16x8xbf16>
    %42 = vector.shape_cast %41 : vector<1x16x8xbf16> to vector<16x8xbf16>
    %cst_65 = arith.constant dense<0.000000e+00> : vector<160x8xf32>
    %43 = tpu.matmul %37, %42, %cst_65 {dimension_numbers = #tpu.dot_dimension_numbers<[1], [0], [0], [1], [0, 0, 1, 1], [], []>} : vector<160x16xbf16>, vector<16x8xbf16>, vector<160x8xf32> -> vector<160x8xf32>
    %44 = arith.addf %40, %43 : vector<160x8xf32>
    %c0_66 = arith.constant 0 : index
    %c1_67 = arith.constant 1 : index
    %c0_68 = arith.constant 0 : index
    %45 = vector.load %arg14[%c0_66, %c1_67, %c0_68] : memref<12x18x16xf32, #tpu.memory_space<vmem>>, vector<10x16x16xf32>
    %46 = arith.truncf %45 : vector<10x16x16xf32> to vector<10x16x16xbf16>
    %47 = vector.shape_cast %46 : vector<10x16x16xbf16> to vector<160x16xbf16>
    %c0_69 = arith.constant 0 : index
    %c1_70 = arith.constant 1 : index
    %c0_71 = arith.constant 0 : index
    %48 = vector.load %arg15[%c0_69, %c1_70, %c0_71] : memref<12x18x16xf32, #tpu.memory_space<vmem>>, vector<10x16x16xf32>
    %49 = arith.truncf %48 : vector<10x16x16xf32> to vector<10x16x16xbf16>
    %50 = vector.shape_cast %49 : vector<10x16x16xbf16> to vector<160x16xbf16>
    %c1_72 = arith.constant 1 : index
    %c0_73 = arith.constant 0 : index
    %c0_74 = arith.constant 0 : index
    %51 = vector.load %arg8[%c1_72, %c0_73, %c0_74] : memref<9x16x8xbf16, #tpu.memory_space<vmem>>, vector<1x16x8xbf16>
    %52 = vector.shape_cast %51 : vector<1x16x8xbf16> to vector<16x8xbf16>
    %cst_75 = arith.constant dense<0.000000e+00> : vector<160x8xf32>
    %53 = tpu.matmul %47, %52, %cst_75 {dimension_numbers = #tpu.dot_dimension_numbers<[1], [0], [0], [1], [0, 0, 1, 1], [], []>} : vector<160x16xbf16>, vector<16x8xbf16>, vector<160x8xf32> -> vector<160x8xf32>
    %c1_76 = arith.constant 1 : index
    %c0_77 = arith.constant 0 : index
    %c0_78 = arith.constant 0 : index
    %54 = vector.load %arg9[%c1_76, %c0_77, %c0_78] : memref<9x16x8xbf16, #tpu.memory_space<vmem>>, vector<1x16x8xbf16>
    %55 = vector.shape_cast %54 : vector<1x16x8xbf16> to vector<16x8xbf16>
    %cst_79 = arith.constant dense<0.000000e+00> : vector<160x8xf32>
    %56 = tpu.matmul %50, %55, %cst_79 {dimension_numbers = #tpu.dot_dimension_numbers<[1], [0], [0], [1], [0, 0, 1, 1], [], []>} : vector<160x16xbf16>, vector<16x8xbf16>, vector<160x8xf32> -> vector<160x8xf32>
    %57 = arith.addf %53, %56 : vector<160x8xf32>
    %58 = arith.addf %44, %57 : vector<160x8xf32>
    %c0_80 = arith.constant 0 : index
    %c2_81 = arith.constant 2 : index
    %c0_82 = arith.constant 0 : index
    %59 = vector.load %arg14[%c0_80, %c2_81, %c0_82] : memref<12x18x16xf32, #tpu.memory_space<vmem>>, vector<10x16x16xf32>
    %60 = arith.truncf %59 : vector<10x16x16xf32> to vector<10x16x16xbf16>
    %61 = vector.shape_cast %60 : vector<10x16x16xbf16> to vector<160x16xbf16>
    %c0_83 = arith.constant 0 : index
    %c2_84 = arith.constant 2 : index
    %c0_85 = arith.constant 0 : index
    %62 = vector.load %arg15[%c0_83, %c2_84, %c0_85] : memref<12x18x16xf32, #tpu.memory_space<vmem>>, vector<10x16x16xf32>
    %63 = arith.truncf %62 : vector<10x16x16xf32> to vector<10x16x16xbf16>
    %64 = vector.shape_cast %63 : vector<10x16x16xbf16> to vector<160x16xbf16>
    %c2_86 = arith.constant 2 : index
    %c0_87 = arith.constant 0 : index
    %c0_88 = arith.constant 0 : index
    %65 = vector.load %arg8[%c2_86, %c0_87, %c0_88] : memref<9x16x8xbf16, #tpu.memory_space<vmem>>, vector<1x16x8xbf16>
    %66 = vector.shape_cast %65 : vector<1x16x8xbf16> to vector<16x8xbf16>
    %cst_89 = arith.constant dense<0.000000e+00> : vector<160x8xf32>
    %67 = tpu.matmul %61, %66, %cst_89 {dimension_numbers = #tpu.dot_dimension_numbers<[1], [0], [0], [1], [0, 0, 1, 1], [], []>} : vector<160x16xbf16>, vector<16x8xbf16>, vector<160x8xf32> -> vector<160x8xf32>
    %c2_90 = arith.constant 2 : index
    %c0_91 = arith.constant 0 : index
    %c0_92 = arith.constant 0 : index
    %68 = vector.load %arg9[%c2_90, %c0_91, %c0_92] : memref<9x16x8xbf16, #tpu.memory_space<vmem>>, vector<1x16x8xbf16>
    %69 = vector.shape_cast %68 : vector<1x16x8xbf16> to vector<16x8xbf16>
    %cst_93 = arith.constant dense<0.000000e+00> : vector<160x8xf32>
    %70 = tpu.matmul %64, %69, %cst_93 {dimension_numbers = #tpu.dot_dimension_numbers<[1], [0], [0], [1], [0, 0, 1, 1], [], []>} : vector<160x16xbf16>, vector<16x8xbf16>, vector<160x8xf32> -> vector<160x8xf32>
    %71 = arith.addf %67, %70 : vector<160x8xf32>
    %72 = arith.addf %58, %71 : vector<160x8xf32>
    %c1_94 = arith.constant 1 : index
    %c0_95 = arith.constant 0 : index
    %c0_96 = arith.constant 0 : index
    %73 = vector.load %arg14[%c1_94, %c0_95, %c0_96] : memref<12x18x16xf32, #tpu.memory_space<vmem>>, vector<10x16x16xf32>
    %74 = arith.truncf %73 : vector<10x16x16xf32> to vector<10x16x16xbf16>
    %75 = vector.shape_cast %74 : vector<10x16x16xbf16> to vector<160x16xbf16>
    %c1_97 = arith.constant 1 : index
    %c0_98 = arith.constant 0 : index
    %c0_99 = arith.constant 0 : index
    %76 = vector.load %arg15[%c1_97, %c0_98, %c0_99] : memref<12x18x16xf32, #tpu.memory_space<vmem>>, vector<10x16x16xf32>
    %77 = arith.truncf %76 : vector<10x16x16xf32> to vector<10x16x16xbf16>
    %78 = vector.shape_cast %77 : vector<10x16x16xbf16> to vector<160x16xbf16>
    %c3 = arith.constant 3 : index
    %c0_100 = arith.constant 0 : index
    %c0_101 = arith.constant 0 : index
    %79 = vector.load %arg8[%c3, %c0_100, %c0_101] : memref<9x16x8xbf16, #tpu.memory_space<vmem>>, vector<1x16x8xbf16>
    %80 = vector.shape_cast %79 : vector<1x16x8xbf16> to vector<16x8xbf16>
    %cst_102 = arith.constant dense<0.000000e+00> : vector<160x8xf32>
    %81 = tpu.matmul %75, %80, %cst_102 {dimension_numbers = #tpu.dot_dimension_numbers<[1], [0], [0], [1], [0, 0, 1, 1], [], []>} : vector<160x16xbf16>, vector<16x8xbf16>, vector<160x8xf32> -> vector<160x8xf32>
    %c3_103 = arith.constant 3 : index
    %c0_104 = arith.constant 0 : index
    %c0_105 = arith.constant 0 : index
    %82 = vector.load %arg9[%c3_103, %c0_104, %c0_105] : memref<9x16x8xbf16, #tpu.memory_space<vmem>>, vector<1x16x8xbf16>
    %83 = vector.shape_cast %82 : vector<1x16x8xbf16> to vector<16x8xbf16>
    %cst_106 = arith.constant dense<0.000000e+00> : vector<160x8xf32>
    %84 = tpu.matmul %78, %83, %cst_106 {dimension_numbers = #tpu.dot_dimension_numbers<[1], [0], [0], [1], [0, 0, 1, 1], [], []>} : vector<160x16xbf16>, vector<16x8xbf16>, vector<160x8xf32> -> vector<160x8xf32>
    %85 = arith.addf %81, %84 : vector<160x8xf32>
    %86 = arith.addf %72, %85 : vector<160x8xf32>
    %c1_107 = arith.constant 1 : index
    %c1_108 = arith.constant 1 : index
    %c0_109 = arith.constant 0 : index
    %87 = vector.load %arg14[%c1_107, %c1_108, %c0_109] : memref<12x18x16xf32, #tpu.memory_space<vmem>>, vector<10x16x16xf32>
    %88 = arith.truncf %87 : vector<10x16x16xf32> to vector<10x16x16xbf16>
    %89 = vector.shape_cast %88 : vector<10x16x16xbf16> to vector<160x16xbf16>
    %c1_110 = arith.constant 1 : index
    %c1_111 = arith.constant 1 : index
    %c0_112 = arith.constant 0 : index
    %90 = vector.load %arg15[%c1_110, %c1_111, %c0_112] : memref<12x18x16xf32, #tpu.memory_space<vmem>>, vector<10x16x16xf32>
    %91 = arith.truncf %90 : vector<10x16x16xf32> to vector<10x16x16xbf16>
    %92 = vector.shape_cast %91 : vector<10x16x16xbf16> to vector<160x16xbf16>
    %c4 = arith.constant 4 : index
    %c0_113 = arith.constant 0 : index
    %c0_114 = arith.constant 0 : index
    %93 = vector.load %arg8[%c4, %c0_113, %c0_114] : memref<9x16x8xbf16, #tpu.memory_space<vmem>>, vector<1x16x8xbf16>
    %94 = vector.shape_cast %93 : vector<1x16x8xbf16> to vector<16x8xbf16>
    %cst_115 = arith.constant dense<0.000000e+00> : vector<160x8xf32>
    %95 = tpu.matmul %89, %94, %cst_115 {dimension_numbers = #tpu.dot_dimension_numbers<[1], [0], [0], [1], [0, 0, 1, 1], [], []>} : vector<160x16xbf16>, vector<16x8xbf16>, vector<160x8xf32> -> vector<160x8xf32>
    %c4_116 = arith.constant 4 : index
    %c0_117 = arith.constant 0 : index
    %c0_118 = arith.constant 0 : index
    %96 = vector.load %arg9[%c4_116, %c0_117, %c0_118] : memref<9x16x8xbf16, #tpu.memory_space<vmem>>, vector<1x16x8xbf16>
    %97 = vector.shape_cast %96 : vector<1x16x8xbf16> to vector<16x8xbf16>
    %cst_119 = arith.constant dense<0.000000e+00> : vector<160x8xf32>
    %98 = tpu.matmul %92, %97, %cst_119 {dimension_numbers = #tpu.dot_dimension_numbers<[1], [0], [0], [1], [0, 0, 1, 1], [], []>} : vector<160x16xbf16>, vector<16x8xbf16>, vector<160x8xf32> -> vector<160x8xf32>
    %99 = arith.addf %95, %98 : vector<160x8xf32>
    %100 = arith.addf %86, %99 : vector<160x8xf32>
    %c1_120 = arith.constant 1 : index
    %c2_121 = arith.constant 2 : index
    %c0_122 = arith.constant 0 : index
    %101 = vector.load %arg14[%c1_120, %c2_121, %c0_122] : memref<12x18x16xf32, #tpu.memory_space<vmem>>, vector<10x16x16xf32>
    %102 = arith.truncf %101 : vector<10x16x16xf32> to vector<10x16x16xbf16>
    %103 = vector.shape_cast %102 : vector<10x16x16xbf16> to vector<160x16xbf16>
    %c1_123 = arith.constant 1 : index
    %c2_124 = arith.constant 2 : index
    %c0_125 = arith.constant 0 : index
    %104 = vector.load %arg15[%c1_123, %c2_124, %c0_125] : memref<12x18x16xf32, #tpu.memory_space<vmem>>, vector<10x16x16xf32>
    %105 = arith.truncf %104 : vector<10x16x16xf32> to vector<10x16x16xbf16>
    %106 = vector.shape_cast %105 : vector<10x16x16xbf16> to vector<160x16xbf16>
    %c5 = arith.constant 5 : index
    %c0_126 = arith.constant 0 : index
    %c0_127 = arith.constant 0 : index
    %107 = vector.load %arg8[%c5, %c0_126, %c0_127] : memref<9x16x8xbf16, #tpu.memory_space<vmem>>, vector<1x16x8xbf16>
    %108 = vector.shape_cast %107 : vector<1x16x8xbf16> to vector<16x8xbf16>
    %cst_128 = arith.constant dense<0.000000e+00> : vector<160x8xf32>
    %109 = tpu.matmul %103, %108, %cst_128 {dimension_numbers = #tpu.dot_dimension_numbers<[1], [0], [0], [1], [0, 0, 1, 1], [], []>} : vector<160x16xbf16>, vector<16x8xbf16>, vector<160x8xf32> -> vector<160x8xf32>
    %c5_129 = arith.constant 5 : index
    %c0_130 = arith.constant 0 : index
    %c0_131 = arith.constant 0 : index
    %110 = vector.load %arg9[%c5_129, %c0_130, %c0_131] : memref<9x16x8xbf16, #tpu.memory_space<vmem>>, vector<1x16x8xbf16>
    %111 = vector.shape_cast %110 : vector<1x16x8xbf16> to vector<16x8xbf16>
    %cst_132 = arith.constant dense<0.000000e+00> : vector<160x8xf32>
    %112 = tpu.matmul %106, %111, %cst_132 {dimension_numbers = #tpu.dot_dimension_numbers<[1], [0], [0], [1], [0, 0, 1, 1], [], []>} : vector<160x16xbf16>, vector<16x8xbf16>, vector<160x8xf32> -> vector<160x8xf32>
    %113 = arith.addf %109, %112 : vector<160x8xf32>
    %114 = arith.addf %100, %113 : vector<160x8xf32>
    %c2_133 = arith.constant 2 : index
    %c0_134 = arith.constant 0 : index
    %c0_135 = arith.constant 0 : index
    %115 = vector.load %arg14[%c2_133, %c0_134, %c0_135] : memref<12x18x16xf32, #tpu.memory_space<vmem>>, vector<10x16x16xf32>
    %116 = arith.truncf %115 : vector<10x16x16xf32> to vector<10x16x16xbf16>
    %117 = vector.shape_cast %116 : vector<10x16x16xbf16> to vector<160x16xbf16>
    %c2_136 = arith.constant 2 : index
    %c0_137 = arith.constant 0 : index
    %c0_138 = arith.constant 0 : index
    %118 = vector.load %arg15[%c2_136, %c0_137, %c0_138] : memref<12x18x16xf32, #tpu.memory_space<vmem>>, vector<10x16x16xf32>
    %119 = arith.truncf %118 : vector<10x16x16xf32> to vector<10x16x16xbf16>
    %120 = vector.shape_cast %119 : vector<10x16x16xbf16> to vector<160x16xbf16>
    %c6 = arith.constant 6 : index
    %c0_139 = arith.constant 0 : index
    %c0_140 = arith.constant 0 : index
    %121 = vector.load %arg8[%c6, %c0_139, %c0_140] : memref<9x16x8xbf16, #tpu.memory_space<vmem>>, vector<1x16x8xbf16>
    %122 = vector.shape_cast %121 : vector<1x16x8xbf16> to vector<16x8xbf16>
    %cst_141 = arith.constant dense<0.000000e+00> : vector<160x8xf32>
    %123 = tpu.matmul %117, %122, %cst_141 {dimension_numbers = #tpu.dot_dimension_numbers<[1], [0], [0], [1], [0, 0, 1, 1], [], []>} : vector<160x16xbf16>, vector<16x8xbf16>, vector<160x8xf32> -> vector<160x8xf32>
    %c6_142 = arith.constant 6 : index
    %c0_143 = arith.constant 0 : index
    %c0_144 = arith.constant 0 : index
    %124 = vector.load %arg9[%c6_142, %c0_143, %c0_144] : memref<9x16x8xbf16, #tpu.memory_space<vmem>>, vector<1x16x8xbf16>
    %125 = vector.shape_cast %124 : vector<1x16x8xbf16> to vector<16x8xbf16>
    %cst_145 = arith.constant dense<0.000000e+00> : vector<160x8xf32>
    %126 = tpu.matmul %120, %125, %cst_145 {dimension_numbers = #tpu.dot_dimension_numbers<[1], [0], [0], [1], [0, 0, 1, 1], [], []>} : vector<160x16xbf16>, vector<16x8xbf16>, vector<160x8xf32> -> vector<160x8xf32>
    %127 = arith.addf %123, %126 : vector<160x8xf32>
    %128 = arith.addf %114, %127 : vector<160x8xf32>
    %c2_146 = arith.constant 2 : index
    %c1_147 = arith.constant 1 : index
    %c0_148 = arith.constant 0 : index
    %129 = vector.load %arg14[%c2_146, %c1_147, %c0_148] : memref<12x18x16xf32, #tpu.memory_space<vmem>>, vector<10x16x16xf32>
    %130 = arith.truncf %129 : vector<10x16x16xf32> to vector<10x16x16xbf16>
    %131 = vector.shape_cast %130 : vector<10x16x16xbf16> to vector<160x16xbf16>
    %c2_149 = arith.constant 2 : index
    %c1_150 = arith.constant 1 : index
    %c0_151 = arith.constant 0 : index
    %132 = vector.load %arg15[%c2_149, %c1_150, %c0_151] : memref<12x18x16xf32, #tpu.memory_space<vmem>>, vector<10x16x16xf32>
    %133 = arith.truncf %132 : vector<10x16x16xf32> to vector<10x16x16xbf16>
    %134 = vector.shape_cast %133 : vector<10x16x16xbf16> to vector<160x16xbf16>
    %c7 = arith.constant 7 : index
    %c0_152 = arith.constant 0 : index
    %c0_153 = arith.constant 0 : index
    %135 = vector.load %arg8[%c7, %c0_152, %c0_153] : memref<9x16x8xbf16, #tpu.memory_space<vmem>>, vector<1x16x8xbf16>
    %136 = vector.shape_cast %135 : vector<1x16x8xbf16> to vector<16x8xbf16>
    %cst_154 = arith.constant dense<0.000000e+00> : vector<160x8xf32>
    %137 = tpu.matmul %131, %136, %cst_154 {dimension_numbers = #tpu.dot_dimension_numbers<[1], [0], [0], [1], [0, 0, 1, 1], [], []>} : vector<160x16xbf16>, vector<16x8xbf16>, vector<160x8xf32> -> vector<160x8xf32>
    %c7_155 = arith.constant 7 : index
    %c0_156 = arith.constant 0 : index
    %c0_157 = arith.constant 0 : index
    %138 = vector.load %arg9[%c7_155, %c0_156, %c0_157] : memref<9x16x8xbf16, #tpu.memory_space<vmem>>, vector<1x16x8xbf16>
    %139 = vector.shape_cast %138 : vector<1x16x8xbf16> to vector<16x8xbf16>
    %cst_158 = arith.constant dense<0.000000e+00> : vector<160x8xf32>
    %140 = tpu.matmul %134, %139, %cst_158 {dimension_numbers = #tpu.dot_dimension_numbers<[1], [0], [0], [1], [0, 0, 1, 1], [], []>} : vector<160x16xbf16>, vector<16x8xbf16>, vector<160x8xf32> -> vector<160x8xf32>
    %141 = arith.addf %137, %140 : vector<160x8xf32>
    %142 = arith.addf %128, %141 : vector<160x8xf32>
    %c2_159 = arith.constant 2 : index
    %c2_160 = arith.constant 2 : index
    %c0_161 = arith.constant 0 : index
    %143 = vector.load %arg14[%c2_159, %c2_160, %c0_161] : memref<12x18x16xf32, #tpu.memory_space<vmem>>, vector<10x16x16xf32>
    %144 = arith.truncf %143 : vector<10x16x16xf32> to vector<10x16x16xbf16>
    %145 = vector.shape_cast %144 : vector<10x16x16xbf16> to vector<160x16xbf16>
    %c2_162 = arith.constant 2 : index
    %c2_163 = arith.constant 2 : index
    %c0_164 = arith.constant 0 : index
    %146 = vector.load %arg15[%c2_162, %c2_163, %c0_164] : memref<12x18x16xf32, #tpu.memory_space<vmem>>, vector<10x16x16xf32>
    %147 = arith.truncf %146 : vector<10x16x16xf32> to vector<10x16x16xbf16>
    %148 = vector.shape_cast %147 : vector<10x16x16xbf16> to vector<160x16xbf16>
    %c8 = arith.constant 8 : index
    %c0_165 = arith.constant 0 : index
    %c0_166 = arith.constant 0 : index
    %149 = vector.load %arg8[%c8, %c0_165, %c0_166] : memref<9x16x8xbf16, #tpu.memory_space<vmem>>, vector<1x16x8xbf16>
    %150 = vector.shape_cast %149 : vector<1x16x8xbf16> to vector<16x8xbf16>
    %cst_167 = arith.constant dense<0.000000e+00> : vector<160x8xf32>
    %151 = tpu.matmul %145, %150, %cst_167 {dimension_numbers = #tpu.dot_dimension_numbers<[1], [0], [0], [1], [0, 0, 1, 1], [], []>} : vector<160x16xbf16>, vector<16x8xbf16>, vector<160x8xf32> -> vector<160x8xf32>
    %c8_168 = arith.constant 8 : index
    %c0_169 = arith.constant 0 : index
    %c0_170 = arith.constant 0 : index
    %152 = vector.load %arg9[%c8_168, %c0_169, %c0_170] : memref<9x16x8xbf16, #tpu.memory_space<vmem>>, vector<1x16x8xbf16>
    %153 = vector.shape_cast %152 : vector<1x16x8xbf16> to vector<16x8xbf16>
    %cst_171 = arith.constant dense<0.000000e+00> : vector<160x8xf32>
    %154 = tpu.matmul %148, %153, %cst_171 {dimension_numbers = #tpu.dot_dimension_numbers<[1], [0], [0], [1], [0, 0, 1, 1], [], []>} : vector<160x16xbf16>, vector<16x8xbf16>, vector<160x8xf32> -> vector<160x8xf32>
    %155 = arith.addf %151, %154 : vector<160x8xf32>
    %156 = arith.addf %142, %155 : vector<160x8xf32>
    %c0_172 = arith.constant 0 : index
    %c0_173 = arith.constant 0 : index
    %157 = vector.load %arg10[%c0_172, %c0_173] : memref<1x8xf32, #tpu.memory_space<vmem>>, vector<1x8xf32>
    %158 = vector.broadcast %157 : vector<1x8xf32> to vector<160x8xf32>
    %159 = arith.addf %156, %158 : vector<160x8xf32>
    %cst_174 = arith.constant 0.000000e+00 : f32
    %160 = vector.broadcast %cst_174 : f32 to vector<160x8xf32>
    %161 = arith.maximumf %159, %160 : vector<160x8xf32>
    %cst_175 = arith.constant 0.000000e+00 : f32
    %162 = vector.broadcast %cst_175 : f32 to vector<10x1x8xf32>
    %c0_176 = arith.constant 0 : index
    %c0_177 = arith.constant 0 : index
    %c0_178 = arith.constant 0 : index
    %163 = vector.load %arg16[%c0_176, %c0_177, %c0_178] : memref<10x18x8xf32, #tpu.memory_space<vmem>>, vector<10x1x8xf32>
    tpu.vector_store %arg16[%c0_176, %c0_177, %c0_178], %162 {strides = array<i32>} : memref<10x18x8xf32, #tpu.memory_space<vmem>>, vector<10x1x8xf32>,
    %cst_179 = arith.constant 0.000000e+00 : f32
    %164 = vector.broadcast %cst_179 : f32 to vector<10x1x8xf32>
    %c0_180 = arith.constant 0 : index
    %c17_181 = arith.constant 17 : index
    %c0_182 = arith.constant 0 : index
    %165 = vector.load %arg16[%c0_180, %c17_181, %c0_182] : memref<10x18x8xf32, #tpu.memory_space<vmem>>, vector<10x1x8xf32>
    tpu.vector_store %arg16[%c0_180, %c17_181, %c0_182], %164 {strides = array<i32>} : memref<10x18x8xf32, #tpu.memory_space<vmem>>, vector<10x1x8xf32>,
    %166 = vector.shape_cast %161 : vector<160x8xf32> to vector<10x16x8xf32>
    %c0_183 = arith.constant 0 : index
    %c1_184 = arith.constant 1 : index
    %c0_185 = arith.constant 0 : index
    %167 = vector.load %arg16[%c0_183, %c1_184, %c0_185] : memref<10x18x8xf32, #tpu.memory_space<vmem>>, vector<10x16x8xf32>
    tpu.vector_store %arg16[%c0_183, %c1_184, %c0_185], %166 {strides = array<i32>} : memref<10x18x8xf32, #tpu.memory_space<vmem>>, vector<10x16x8xf32>,
    %c0_i32 = arith.constant 0 : i32
    %168 = arith.cmpi eq, %arg1, %c0_i32 : i32
    %169 = arith.extui %168 : i1 to i32
    %c0_i32_186 = arith.constant 0 : i32
    %170 = arith.cmpi ne, %169, %c0_i32_186 : i32
    scf.if %170 {
      %cst_260 = arith.constant 0.000000e+00 : f32
      %266 = vector.broadcast %cst_260 : f32 to vector<1x18x8xf32>
      %c0_261 = arith.constant 0 : index
      %c0_262 = arith.constant 0 : index
      %c0_263 = arith.constant 0 : index
      %267 = vector.load %arg16[%c0_261, %c0_262, %c0_263] : memref<10x18x8xf32, #tpu.memory_space<vmem>>, vector<1x18x8xf32>
      tpu.vector_store %arg16[%c0_261, %c0_262, %c0_263], %266 {strides = array<i32>} : memref<10x18x8xf32, #tpu.memory_space<vmem>>, vector<1x18x8xf32>,
    } else {
    }
    %c1_i32 = arith.constant 1 : i32
    %171 = arith.cmpi eq, %arg1, %c1_i32 : i32
    %172 = arith.extui %171 : i1 to i32
    %c0_i32_187 = arith.constant 0 : i32
    %173 = arith.cmpi ne, %172, %c0_i32_187 : i32
    scf.if %173 {
      %cst_260 = arith.constant 0.000000e+00 : f32
      %266 = vector.broadcast %cst_260 : f32 to vector<1x18x8xf32>
      %c9 = arith.constant 9 : index
      %c0_261 = arith.constant 0 : index
      %c0_262 = arith.constant 0 : index
      %267 = vector.load %arg16[%c9, %c0_261, %c0_262] : memref<10x18x8xf32, #tpu.memory_space<vmem>>, vector<1x18x8xf32>
      tpu.vector_store %arg16[%c9, %c0_261, %c0_262], %266 {strides = array<i32>} : memref<10x18x8xf32, #tpu.memory_space<vmem>>, vector<1x18x8xf32>,
    } else {
    }
    %c0_188 = arith.constant 0 : index
    %c0_189 = arith.constant 0 : index
    %c0_190 = arith.constant 0 : index
    %174 = vector.load %arg16[%c0_188, %c0_189, %c0_190] : memref<10x18x8xf32, #tpu.memory_space<vmem>>, vector<8x16x8xf32>
    %175 = vector.shape_cast %174 : vector<8x16x8xf32> to vector<128x8xf32>
    %c0_191 = arith.constant 0 : index
    %c0_192 = arith.constant 0 : index
    %c0_193 = arith.constant 0 : index
    %176 = vector.load %arg11[%c0_191, %c0_192, %c0_193] : memref<9x1x8xf32, #tpu.memory_space<vmem>>, vector<1x1x8xf32>
    %177 = vector.shape_cast %176 : vector<1x1x8xf32> to vector<1x8xf32>
    %178 = vector.broadcast %177 : vector<1x8xf32> to vector<128x8xf32>
    %179 = arith.mulf %175, %178 : vector<128x8xf32>
    %c0_194 = arith.constant 0 : index
    %c1_195 = arith.constant 1 : index
    %c0_196 = arith.constant 0 : index
    %180 = vector.load %arg16[%c0_194, %c1_195, %c0_196] : memref<10x18x8xf32, #tpu.memory_space<vmem>>, vector<8x16x8xf32>
    %181 = vector.shape_cast %180 : vector<8x16x8xf32> to vector<128x8xf32>
    %c1_197 = arith.constant 1 : index
    %c0_198 = arith.constant 0 : index
    %c0_199 = arith.constant 0 : index
    %182 = vector.load %arg11[%c1_197, %c0_198, %c0_199] : memref<9x1x8xf32, #tpu.memory_space<vmem>>, vector<1x1x8xf32>
    %183 = vector.shape_cast %182 : vector<1x1x8xf32> to vector<1x8xf32>
    %184 = vector.broadcast %183 : vector<1x8xf32> to vector<128x8xf32>
    %185 = arith.mulf %181, %184 : vector<128x8xf32>
    %186 = arith.addf %179, %185 : vector<128x8xf32>
    %c0_200 = arith.constant 0 : index
    %c2_201 = arith.constant 2 : index
    %c0_202 = arith.constant 0 : index
    %187 = vector.load %arg16[%c0_200, %c2_201, %c0_202] : memref<10x18x8xf32, #tpu.memory_space<vmem>>, vector<8x16x8xf32>
    %188 = vector.shape_cast %187 : vector<8x16x8xf32> to vector<128x8xf32>
    %c2_203 = arith.constant 2 : index
    %c0_204 = arith.constant 0 : index
    %c0_205 = arith.constant 0 : index
    %189 = vector.load %arg11[%c2_203, %c0_204, %c0_205] : memref<9x1x8xf32, #tpu.memory_space<vmem>>, vector<1x1x8xf32>
    %190 = vector.shape_cast %189 : vector<1x1x8xf32> to vector<1x8xf32>
    %191 = vector.broadcast %190 : vector<1x8xf32> to vector<128x8xf32>
    %192 = arith.mulf %188, %191 : vector<128x8xf32>
    %193 = arith.addf %186, %192 : vector<128x8xf32>
    %c1_206 = arith.constant 1 : index
    %c0_207 = arith.constant 0 : index
    %c0_208 = arith.constant 0 : index
    %194 = vector.load %arg16[%c1_206, %c0_207, %c0_208] : memref<10x18x8xf32, #tpu.memory_space<vmem>>, vector<8x16x8xf32>
    %195 = vector.shape_cast %194 : vector<8x16x8xf32> to vector<128x8xf32>
    %c3_209 = arith.constant 3 : index
    %c0_210 = arith.constant 0 : index
    %c0_211 = arith.constant 0 : index
    %196 = vector.load %arg11[%c3_209, %c0_210, %c0_211] : memref<9x1x8xf32, #tpu.memory_space<vmem>>, vector<1x1x8xf32>
    %197 = vector.shape_cast %196 : vector<1x1x8xf32> to vector<1x8xf32>
    %198 = vector.broadcast %197 : vector<1x8xf32> to vector<128x8xf32>
    %199 = arith.mulf %195, %198 : vector<128x8xf32>
    %200 = arith.addf %193, %199 : vector<128x8xf32>
    %c1_212 = arith.constant 1 : index
    %c1_213 = arith.constant 1 : index
    %c0_214 = arith.constant 0 : index
    %201 = vector.load %arg16[%c1_212, %c1_213, %c0_214] : memref<10x18x8xf32, #tpu.memory_space<vmem>>, vector<8x16x8xf32>
    %202 = vector.shape_cast %201 : vector<8x16x8xf32> to vector<128x8xf32>
    %c4_215 = arith.constant 4 : index
    %c0_216 = arith.constant 0 : index
    %c0_217 = arith.constant 0 : index
    %203 = vector.load %arg11[%c4_215, %c0_216, %c0_217] : memref<9x1x8xf32, #tpu.memory_space<vmem>>, vector<1x1x8xf32>
    %204 = vector.shape_cast %203 : vector<1x1x8xf32> to vector<1x8xf32>
    %205 = vector.broadcast %204 : vector<1x8xf32> to vector<128x8xf32>
    %206 = arith.mulf %202, %205 : vector<128x8xf32>
    %207 = arith.addf %200, %206 : vector<128x8xf32>
    %c1_218 = arith.constant 1 : index
    %c2_219 = arith.constant 2 : index
    %c0_220 = arith.constant 0 : index
    %208 = vector.load %arg16[%c1_218, %c2_219, %c0_220] : memref<10x18x8xf32, #tpu.memory_space<vmem>>, vector<8x16x8xf32>
    %209 = vector.shape_cast %208 : vector<8x16x8xf32> to vector<128x8xf32>
    %c5_221 = arith.constant 5 : index
    %c0_222 = arith.constant 0 : index
    %c0_223 = arith.constant 0 : index
    %210 = vector.load %arg11[%c5_221, %c0_222, %c0_223] : memref<9x1x8xf32, #tpu.memory_space<vmem>>, vector<1x1x8xf32>
    %211 = vector.shape_cast %210 : vector<1x1x8xf32> to vector<1x8xf32>
    %212 = vector.broadcast %211 : vector<1x8xf32> to vector<128x8xf32>
    %213 = arith.mulf %209, %212 : vector<128x8xf32>
    %214 = arith.addf %207, %213 : vector<128x8xf32>
    %c2_224 = arith.constant 2 : index
    %c0_225 = arith.constant 0 : index
    %c0_226 = arith.constant 0 : index
    %215 = vector.load %arg16[%c2_224, %c0_225, %c0_226] : memref<10x18x8xf32, #tpu.memory_space<vmem>>, vector<8x16x8xf32>
    %216 = vector.shape_cast %215 : vector<8x16x8xf32> to vector<128x8xf32>
    %c6_227 = arith.constant 6 : index
    %c0_228 = arith.constant 0 : index
    %c0_229 = arith.constant 0 : index
    %217 = vector.load %arg11[%c6_227, %c0_228, %c0_229] : memref<9x1x8xf32, #tpu.memory_space<vmem>>, vector<1x1x8xf32>
    %218 = vector.shape_cast %217 : vector<1x1x8xf32> to vector<1x8xf32>
    %219 = vector.broadcast %218 : vector<1x8xf32> to vector<128x8xf32>
    %220 = arith.mulf %216, %219 : vector<128x8xf32>
    %221 = arith.addf %214, %220 : vector<128x8xf32>
    %c2_230 = arith.constant 2 : index
    %c1_231 = arith.constant 1 : index
    %c0_232 = arith.constant 0 : index
    %222 = vector.load %arg16[%c2_230, %c1_231, %c0_232] : memref<10x18x8xf32, #tpu.memory_space<vmem>>, vector<8x16x8xf32>
    %223 = vector.shape_cast %222 : vector<8x16x8xf32> to vector<128x8xf32>
    %c7_233 = arith.constant 7 : index
    %c0_234 = arith.constant 0 : index
    %c0_235 = arith.constant 0 : index
    %224 = vector.load %arg11[%c7_233, %c0_234, %c0_235] : memref<9x1x8xf32, #tpu.memory_space<vmem>>, vector<1x1x8xf32>
    %225 = vector.shape_cast %224 : vector<1x1x8xf32> to vector<1x8xf32>
    %226 = vector.broadcast %225 : vector<1x8xf32> to vector<128x8xf32>
    %227 = arith.mulf %223, %226 : vector<128x8xf32>
    %228 = arith.addf %221, %227 : vector<128x8xf32>
    %c2_236 = arith.constant 2 : index
    %c2_237 = arith.constant 2 : index
    %c0_238 = arith.constant 0 : index
    %229 = vector.load %arg16[%c2_236, %c2_237, %c0_238] : memref<10x18x8xf32, #tpu.memory_space<vmem>>, vector<8x16x8xf32>
    %230 = vector.shape_cast %229 : vector<8x16x8xf32> to vector<128x8xf32>
    %c8_239 = arith.constant 8 : index
    %c0_240 = arith.constant 0 : index
    %c0_241 = arith.constant 0 : index
    %231 = vector.load %arg11[%c8_239, %c0_240, %c0_241] : memref<9x1x8xf32, #tpu.memory_space<vmem>>, vector<1x1x8xf32>
    %232 = vector.shape_cast %231 : vector<1x1x8xf32> to vector<1x8xf32>
    %233 = vector.broadcast %232 : vector<1x8xf32> to vector<128x8xf32>
    %234 = arith.mulf %230, %233 : vector<128x8xf32>
    %235 = arith.addf %228, %234 : vector<128x8xf32>
    %cst_242 = arith.constant dense<0.000000e+00> : vector<128xf32>
    %236 = vector.multi_reduction <add>, %235, %cst_242 [1] : vector<128x8xf32> to vector<128xf32>
    %237 = vector.shape_cast %236 : vector<128xf32> to vector<128x1xf32>
    %c0_243 = arith.constant 0 : index
    %c0_244 = arith.constant 0 : index
    %238 = vector.load %arg12[%c0_243, %c0_244] : memref<1x1xf32, #tpu.memory_space<vmem>>, vector<1x1xf32>
    %239 = vector.broadcast %238 : vector<1x1xf32> to vector<128x1xf32>
    %240 = arith.addf %237, %239 : vector<128x1xf32>
    %cst_245 = arith.constant 5.000000e-01 : f32
    %241 = vector.broadcast %cst_245 : f32 to vector<128x1xf32>
    %242 = arith.mulf %241, %240 : vector<128x1xf32>
    %243 = math.tanh %242 : vector<128x1xf32>
    %cst_246 = arith.constant 1.000000e+00 : f32
    %244 = vector.broadcast %cst_246 : f32 to vector<128x1xf32>
    %245 = arith.addf %243, %244 : vector<128x1xf32>
    %cst_247 = arith.constant 5.000000e-01 : f32
    %246 = vector.broadcast %cst_247 : f32 to vector<128x1xf32>
    %247 = arith.mulf %246, %245 : vector<128x1xf32>
    %c0_248 = arith.constant 0 : index
    %c0_249 = arith.constant 0 : index
    %c0_250 = arith.constant 0 : index
    %c0_251 = arith.constant 0 : index
    %248 = vector.load %arg2[%c0_248, %c0_249, %c0_250, %c0_251] : memref<1x8x16x16xbf16, #tpu.memory_space<vmem>>, vector<1x8x16x16xbf16>
    %249 = vector.shape_cast %248 : vector<1x8x16x16xbf16> to vector<8x16x16xbf16>
    %250 = arith.extf %249 : vector<8x16x16xbf16> to vector<8x16x16xf32>
    %251 = vector.shape_cast %250 : vector<8x16x16xf32> to vector<128x16xf32>
    %c0_252 = arith.constant 0 : index
    %c0_253 = arith.constant 0 : index
    %c0_254 = arith.constant 0 : index
    %c0_255 = arith.constant 0 : index
    %252 = vector.load %arg5[%c0_252, %c0_253, %c0_254, %c0_255] : memref<1x8x16x16xbf16, #tpu.memory_space<vmem>>, vector<1x8x16x16xbf16>
    %253 = vector.shape_cast %252 : vector<1x8x16x16xbf16> to vector<8x16x16xbf16>
    %254 = arith.extf %253 : vector<8x16x16xbf16> to vector<8x16x16xf32>
    %255 = vector.shape_cast %254 : vector<8x16x16xf32> to vector<128x16xf32>
    %256 = vector.broadcast %247 : vector<128x1xf32> to vector<128x16xf32>
    %257 = arith.mulf %256, %251 : vector<128x16xf32>
    %cst_256 = arith.constant 1.000000e+00 : f32
    %258 = vector.broadcast %cst_256 : f32 to vector<128x1xf32>
    %259 = arith.subf %258, %247 : vector<128x1xf32>
    %260 = vector.broadcast %259 : vector<128x1xf32> to vector<128x16xf32>
    %261 = arith.mulf %260, %255 : vector<128x16xf32>
    %262 = arith.addf %257, %261 : vector<128x16xf32>
    %c0_257 = arith.constant 0 : index
    %c0_258 = arith.constant 0 : index
    %c0_259 = arith.constant 0 : index
    %263 = vector.load %arg13[%c0_257, %c0_258, %c0_259] : memref<1x128x16xf32, #tpu.memory_space<vmem>>, vector<1x128x16xf32>
    %264 = vector.shape_cast %263 : vector<1x128x16xf32> to vector<128x16xf32>
    %265 = vector.shape_cast %262 : vector<128x16xf32> to vector<1x128x16xf32>
    tpu.vector_store %arg13[%c0_257, %c0_258, %c0_259], %265 {strides = array<i32>} : memref<1x128x16xf32, #tpu.memory_space<vmem>>, vector<1x128x16xf32>,
    return
  }
  func.func @transform_0(%arg0: i32, %arg1: i32) -> (i32, i32, i32, i32) {
    %c0_i32 = arith.constant 0 : i32
    %c0_i32_0 = arith.constant 0 : i32
    %c0_i32_1 = arith.constant 0 : i32
    return %arg0, %arg1, %c0_i32, %c0_i32_0 : i32, i32, i32, i32
  }
  func.func @transform_1(%arg0: i32, %arg1: i32) -> (i32, i32, i32, i32) {
    %c0_i32 = arith.constant 0 : i32
    %c0_i32_0 = arith.constant 0 : i32
    %c0_i32_1 = arith.constant 0 : i32
    return %arg0, %arg1, %c0_i32, %c0_i32_0 : i32, i32, i32, i32
  }
  func.func @transform_2(%arg0: i32, %arg1: i32) -> (i32, i32, i32, i32) {
    %c0_i32 = arith.constant 0 : i32
    %c0_i32_0 = arith.constant 0 : i32
    %c0_i32_1 = arith.constant 0 : i32
    return %arg0, %arg1, %c0_i32, %c0_i32_0 : i32, i32, i32, i32
  }
  func.func @transform_3(%arg0: i32, %arg1: i32) -> (i32, i32, i32, i32) {
    %c0_i32 = arith.constant 0 : i32
    %c0_i32_0 = arith.constant 0 : i32
    %c0_i32_1 = arith.constant 0 : i32
    return %arg0, %arg1, %c0_i32, %c0_i32_0 : i32, i32, i32, i32
  }
  func.func @transform_4(%arg0: i32, %arg1: i32) -> (i32, i32, i32, i32) {
    %c0_i32 = arith.constant 0 : i32
    %c0_i32_0 = arith.constant 0 : i32
    %c0_i32_1 = arith.constant 0 : i32
    return %arg0, %arg1, %c0_i32, %c0_i32_0 : i32, i32, i32, i32
  }
  func.func @transform_5(%arg0: i32, %arg1: i32) -> (i32, i32, i32, i32) {
    %c0_i32 = arith.constant 0 : i32
    %c0_i32_0 = arith.constant 0 : i32
    %c0_i32_1 = arith.constant 0 : i32
    return %arg0, %arg1, %c0_i32, %c0_i32_0 : i32, i32, i32, i32
  }
  func.func @transform_6(%arg0: i32, %arg1: i32) -> (i32, i32, i32) {
    %c0_i32 = arith.constant 0 : i32
    %c0_i32_0 = arith.constant 0 : i32
    %c0_i32_1 = arith.constant 0 : i32
    %c0_i32_2 = arith.constant 0 : i32
    return %c0_i32, %c0_i32_0, %c0_i32_1 : i32, i32, i32
  }
  func.func @transform_7(%arg0: i32, %arg1: i32) -> (i32, i32, i32) {
    %c0_i32 = arith.constant 0 : i32
    %c0_i32_0 = arith.constant 0 : i32
    %c0_i32_1 = arith.constant 0 : i32
    %c0_i32_2 = arith.constant 0 : i32
    return %c0_i32, %c0_i32_0, %c0_i32_1 : i32, i32, i32
  }
  func.func @transform_8(%arg0: i32, %arg1: i32) -> (i32, i32) {
    %c0_i32 = arith.constant 0 : i32
    %c0_i32_0 = arith.constant 0 : i32
    %c0_i32_1 = arith.constant 0 : i32
    return %c0_i32, %c0_i32_0 : i32, i32
  }
  func.func @transform_9(%arg0: i32, %arg1: i32) -> (i32, i32, i32) {
    %c0_i32 = arith.constant 0 : i32
    %c0_i32_0 = arith.constant 0 : i32
    %c0_i32_1 = arith.constant 0 : i32
    %c0_i32_2 = arith.constant 0 : i32
    return %c0_i32, %c0_i32_0, %c0_i32_1 : i32, i32, i32
  }
  func.func @transform_10(%arg0: i32, %arg1: i32) -> (i32, i32) {
    %c0_i32 = arith.constant 0 : i32
    %c0_i32_0 = arith.constant 0 : i32
    %c0_i32_1 = arith.constant 0 : i32
    return %c0_i32, %c0_i32_0 : i32, i32
  }
  func.func @transform_11(%arg0: i32, %arg1: i32) -> (i32, i32, i32) {
    %c0_i32 = arith.constant 0 : i32
    %c0_i32_0 = arith.constant 0 : i32
    return %arg0, %arg1, %c0_i32 : i32, i32, i32
  }
}

</mosaic_0001>

<llo_original>
// kernel: att_merge_forward.3
$region0: #{att_merge_forward.3}
  #allocation0 [shape = 'u32[]', space=smem, size = 0x4, offset = 0x4, fixed_abs, tag = 'smem constant byte address 0x4 - core index']
  #allocation1 [shape = 'u32[144,128]{1,0:T(1,128)}', space=vmem, size = 0x12000, scoped, tag = 'internal scratch']
  #allocation2 [shape = 'f32[10,18,8]{2,1,0:T(8,128)}', space=vmem, size = 0x1e000, scoped, tag = 'scratch operand']
  %s0 = inlined_call_operand.vmem [shape: bf16[2,16,16,8], index: 0, kind: input, shape index: {}]
  %s1 = inlined_call_operand.vmem [shape: bf16[2,2,16,8], index: 1, kind: input, shape index: {}]
  %s2 = inlined_call_operand.vmem [shape: bf16[2,2,16,8], index: 2, kind: input, shape index: {}]
  %s3 = inlined_call_operand.vmem [shape: bf16[9,8,16], index: 3, kind: input, shape index: {}]
  %s4 = inlined_call_operand.vmem [shape: f32[1,16], index: 4, kind: input, shape index: {}]
  %s5 = inlined_call_operand.vmem [shape: bf16[2,256,16], index: 5, kind: output, shape index: {}]
  %s6 = sld [smem:[#allocation0]]
  $region53: #{att_merge_forward.3} parent=0
    _
  %s8 = ssub.s32 1, %s6
  %s9 = scalar_select 0, %s8, %s6
  loop: start=0, step=1, limit=6
  $region2: #{att_merge_forward.3} parent=0 // loop_pre_header
    _
  $region3: #{att_merge_forward.3} parent=0 // loop_header
    %s11 = sphi 0, %s15
    %p12 = scmp.ge.s32.totalorder %s11, 6
    %s18 = sphi 0, %s30
    %s19 = sphi 0, %s26
    %s20 = sphi 0, %s18
    %s21 = sphi 0, %s19
    %s22 = sphi 0, %s20
    %s23 = sphi 0, %s21
    %s35 = sphi 0, %s37
    %s38 = sphi 0, %s35
    %s39 = sphi 0, %s38
    %s55 = sphi 0, %s39
    %s63 = sphi 0, %s65
    %s66 = sphi 0, %s63
    %s67 = sphi 0, %s66
    %s83 = sphi 0, %s67
    %s91 = sphi 0, %s93
    %s94 = sphi 0, %s91
    %s95 = sphi 0, %s94
    %s111 = sphi 0, %s95
    %s115 = sphi 0, %s115
    %s117 = sphi 0, %s115
    %s118 = sphi 0, %s117
    %s132 = sphi 0, %s118
    %s136 = sphi 0, %s136
    %s138 = sphi 0, %s136
    %s139 = sphi 0, %s138
    %s153 = sphi 0, %s139
    %s161 = sphi 0, %s163
    %s164 = sphi 0, %s161
    %s165 = sphi 0, %s164
    %s181 = sphi 0, %s165
  $region4: #{att_merge_forward.3} parent=0 // loop_header_branch
    %14 = sbr.rel (%p12) target = $region8
  $region5: #{att_merge_forward.3} parent=0 // loop_body
    %s16 = ssub.s32 %s11, 1
    %s17 = ssub.s32 %s11, 2
    %s24 = sadd.s32 1, %s19
    %p25 = scmp.ge.s32.totalorder %s24, 2
    %s26 = scalar_select %p25, 0, %s24
    %s27 = sadd.s32 1, %s18
    %s28 = scalar_select %p25, %s27, %s18
    %p29 = scmp.ge.s32.totalorder %s28, 2
    %s30 = scalar_select %p29, 0, %s28
    %s31 = ssub.s32 %s18, %s30
    %s32 = ssub.s32 %s19, %s26
    %s33 = sor.u32 %s31, %s32
    %p34 = scmp.eq.s32.totalorder %s33, 0
    %s36 = sadd.s32 %s35, 1
    %s37 = scalar_select %p34, %s35, %s36
    %p40 = pneg %p34
    %p41 = scmp.eq.s32.totalorder %s11, 3
    %p42 = por %p40, %p41
    %p43 = scmp.ne.s32.totalorder %s35, %s38
    %p44 = scmp.eq.s32.totalorder %s11, 0
    %p45 = por %p43, %p44
    %p46 = scmp.ne.s32.totalorder %s35, %s38
    %p47 = scmp.eq.s32.totalorder %s16, 3
    %p48 = por %p46, %p47
    %p49 = scmp.ne.s32.totalorder %s38, %s39
    %p50 = scmp.eq.s32.totalorder %s16, 0
    %p51 = por %p49, %p50
    %p52 = scmp.ne.s32.totalorder %s38, %s39
    %p53 = scmp.eq.s32.totalorder %s17, 3
    %p54 = por %p52, %p53
    %p56 = scmp.ne.s32.totalorder %s39, %s55
    %p57 = scmp.eq.s32.totalorder %s17, 0
    %p58 = por %p56, %p57
    %s59 = ssub.s32 %s18, %s30
    %s60 = ssub.s32 %s19, %s26
    %s61 = sor.u32 %s59, %s60
    %p62 = scmp.eq.s32.totalorder %s61, 0
    %s64 = sadd.s32 %s63, 1
    %s65 = scalar_select %p62, %s63, %s64
    %p68 = pneg %p62
    %p69 = scmp.eq.s32.totalorder %s11, 3
    %p70 = por %p68, %p69
    %p71 = scmp.ne.s32.totalorder %s63, %s66
    %p72 = scmp.eq.s32.totalorder %s11, 0
    %p73 = por %p71, %p72
    %p74 = scmp.ne.s32.totalorder %s63, %s66
    %p75 = scmp.eq.s32.totalorder %s16, 3
    %p76 = por %p74, %p75
    %p77 = scmp.ne.s32.totalorder %s66, %s67
    %p78 = scmp.eq.s32.totalorder %s16, 0
    %p79 = por %p77, %p78
    %p80 = scmp.ne.s32.totalorder %s66, %s67
    %p81 = scmp.eq.s32.totalorder %s17, 3
    %p82 = por %p80, %p81
    %p84 = scmp.ne.s32.totalorder %s67, %s83
    %p85 = scmp.eq.s32.totalorder %s17, 0
    %p86 = por %p84, %p85
    %s87 = ssub.s32 %s18, %s30
    %s88 = ssub.s32 %s19, %s26
    %s89 = sor.u32 %s87, %s88
    %p90 = scmp.eq.s32.totalorder %s89, 0
    %s92 = sadd.s32 %s91, 1
    %s93 = scalar_select %p90, %s91, %s92
    %p96 = pneg %p90
    %p97 = scmp.eq.s32.totalorder %s11, 3
    %p98 = por %p96, %p97
    %p99 = scmp.ne.s32.totalorder %s91, %s94
    %p100 = scmp.eq.s32.totalorder %s11, 0
    %p101 = por %p99, %p100
    %p102 = scmp.ne.s32.totalorder %s91, %s94
    %p103 = scmp.eq.s32.totalorder %s16, 3
    %p104 = por %p102, %p103
    %p105 = scmp.ne.s32.totalorder %s94, %s95
    %p106 = scmp.eq.s32.totalorder %s16, 0
    %p107 = por %p105, %p106
    %p108 = scmp.ne.s32.totalorder %s94, %s95
    %p109 = scmp.eq.s32.totalorder %s17, 3
    %p110 = por %p108, %p109
    %p112 = scmp.ne.s32.totalorder %s95, %s111
    %p113 = scmp.eq.s32.totalorder %s17, 0
    %p114 = por %p112, %p113
    %s116 = sadd.s32 %s115, 1
    %p119 = scmp.eq.s32.totalorder %s11, 3
    %p120 = scmp.ne.s32.totalorder %s115, %s117
    %p121 = scmp.eq.s32.totalorder %s11, 0
    %p122 = por %p120, %p121
    %p123 = scmp.ne.s32.totalorder %s115, %s117
    %p124 = scmp.eq.s32.totalorder %s16, 3
    %p125 = por %p123, %p124
    %p126 = scmp.ne.s32.totalorder %s117, %s118
    %p127 = scmp.eq.s32.totalorder %s16, 0
    %p128 = por %p126, %p127
    %p129 = scmp.ne.s32.totalorder %s117, %s118
    %p130 = scmp.eq.s32.totalorder %s17, 3
    %p131 = por %p129, %p130
    %p133 = scmp.ne.s32.totalorder %s118, %s132
    %p134 = scmp.eq.s32.totalorder %s17, 0
    %p135 = por %p133, %p134
    %s137 = sadd.s32 %s136, 1
    %p140 = scmp.eq.s32.totalorder %s11, 3
    %p141 = scmp.ne.s32.totalorder %s136, %s138
    %p142 = scmp.eq.s32.totalorder %s11, 0
    %p143 = por %p141, %p142
    %p144 = scmp.ne.s32.totalorder %s136, %s138
    %p145 = scmp.eq.s32.totalorder %s16, 3
    %p146 = por %p144, %p145
    %p147 = scmp.ne.s32.totalorder %s138, %s139
    %p148 = scmp.eq.s32.totalorder %s16, 0
    %p149 = por %p147, %p148
    %p150 = scmp.ne.s32.totalorder %s138, %s139
    %p151 = scmp.eq.s32.totalorder %s17, 3
    %p152 = por %p150, %p151
    %p154 = scmp.ne.s32.totalorder %s139, %s153
    %p155 = scmp.eq.s32.totalorder %s17, 0
    %p156 = por %p154, %p155
    %s157 = ssub.s32 %s18, %s30
    %s158 = ssub.s32 %s19, %s26
    %s159 = sor.u32 %s157, %s158
    %p160 = scmp.eq.s32.totalorder %s159, 0
    %s162 = sadd.s32 %s161, 1
    %s163 = scalar_select %p160, %s161, %s162
    %p166 = pneg %p160
    %p167 = scmp.eq.s32.totalorder %s11, 3
    %p168 = por %p166, %p167
    %p169 = scmp.ne.s32.totalorder %s161, %s164
    %p170 = scmp.eq.s32.totalorder %s11, 0
    %p171 = por %p169, %p170
    %p172 = scmp.ne.s32.totalorder %s161, %s164
    %p173 = scmp.eq.s32.totalorder %s16, 3
    %p174 = por %p172, %p173
    %p175 = scmp.ne.s32.totalorder %s164, %s165
    %p176 = scmp.eq.s32.totalorder %s16, 0
    %p177 = por %p175, %p176
    %p178 = scmp.ne.s32.totalorder %s164, %s165
    %p179 = scmp.eq.s32.totalorder %s17, 3
    %p180 = por %p178, %p179
    %p182 = scmp.ne.s32.totalorder %s165, %s181
    %p183 = scmp.eq.s32.totalorder %s17, 0
    %p184 = por %p182, %p183
    %p185 = scmp.le.s32.totalorder 1, %s11
    %p186 = scmp.lt.s32.totalorder %s11, 5
    %p187 = pnand %p185, %p186
    %p188 = pneg %p187
    // Predicated region
    $region9: #{att_merge_forward.3} parent=5 // pred_check
      _
    $region10: #{att_merge_forward.3} parent=5 // pred_check_branch
      %190 = sbr.rel (%p187) target = $region12
    $region11: #{att_merge_forward.3} parent=5 // pred_region
      %s191 = ssub.s32 %s11, 1
      // Predicated region
      $region13: #{att_merge_forward.3} parent=11 // pred_check
        %p192 = pneg %p128
      $region14: #{att_merge_forward.3} parent=11 // pred_check_branch
        %194 = sbr.rel (%p192) target = $region16
      $region15: #{att_merge_forward.3} parent=11 // pred_region
        _
      $region16: #{att_merge_forward.3} parent=11 // pred_fallthru
        _
      // Predicated region
      $region17: #{att_merge_forward.3} parent=11 // pred_check
        %p195 = pneg %p149
      $region18: #{att_merge_forward.3} parent=11 // pred_check_branch
        %197 = sbr.rel (%p195) target = $region20
      $region19: #{att_merge_forward.3} parent=11 // pred_region
        _
      $region20: #{att_merge_forward.3} parent=11 // pred_fallthru
        _
    $region12: #{att_merge_forward.3} parent=5 // pred_fallthru
      _
    %p198 = scmp.lt.s32.totalorder %s11, 4
    // Predicated region
    $region21: #{att_merge_forward.3} parent=5 // pred_check
      %p199 = pneg %p198
    $region22: #{att_merge_forward.3} parent=5 // pred_check_branch
      %201 = sbr.rel (%p199) target = $region24
    $region23: #{att_merge_forward.3} parent=5 // pred_region
      // Predicated region
      $region25: #{att_merge_forward.3} parent=23 // pred_check
        %p202 = pneg %p45
      $region26: #{att_merge_forward.3} parent=23 // pred_check_branch
        %204 = sbr.rel (%p202) target = $region28
      $region27: #{att_merge_forward.3} parent=23 // pred_region
        %s205 = smul.u32 8, %s19
        %p206 = scmp.lt.s32.totalorder %s18, 1
        %s207 = scalar_select %p206, %s18, 1
        %p208 = scmp.lt.s32.totalorder %s205, 15
        %s209 = scalar_select %p208, %s205, 15
        %s210 = smul.addr %s209, 2
        %s211 = smul.addr %s207, 32
        %s212 = sadd.s32 %s210, %s211
        %s213 = smul.addr %s212, 4
        %s214 = scalar_lea.vmem %s0, %s213
        %s215 = smul.u32 8, %s19
      $region28: #{att_merge_forward.3} parent=23 // pred_fallthru
        _
      // Predicated region
      $region29: #{att_merge_forward.3} parent=23 // pred_check
        %p216 = pneg %p73
      $region30: #{att_merge_forward.3} parent=23 // pred_check_branch
        %218 = sbr.rel (%p216) target = $region32
      $region31: #{att_merge_forward.3} parent=23 // pred_region
        %p219 = scmp.lt.s32.totalorder %s18, 1
        %s220 = scalar_select %p219, %s18, 1
        %p221 = scmp.lt.s32.totalorder %s19, 1
        %s222 = scalar_select %p221, %s19, 1
        %s223 = smul.addr %s222, 2
        %s224 = smul.addr %s220, 4
        %s225 = sadd.s32 %s223, %s224
        %s226 = smul.addr %s225, 4
        %s227 = scalar_lea.vmem %s1, %s226
      $region32: #{att_merge_forward.3} parent=23 // pred_fallthru
        _
      // Predicated region
      $region33: #{att_merge_forward.3} parent=23 // pred_check
        %p228 = pneg %p101
      $region34: #{att_merge_forward.3} parent=23 // pred_check_branch
        %230 = sbr.rel (%p228) target = $region36
      $region35: #{att_merge_forward.3} parent=23 // pred_region
        %p231 = scmp.lt.s32.totalorder %s18, 1
        %s232 = scalar_select %p231, %s18, 1
        %p233 = scmp.lt.s32.totalorder %s19, 1
        %s234 = scalar_select %p233, %s19, 1
        %s235 = smul.addr %s234, 2
        %s236 = smul.addr %s232, 4
        %s237 = sadd.s32 %s235, %s236
        %s238 = smul.addr %s237, 4
        %s239 = scalar_lea.vmem %s2, %s238
      $region36: #{att_merge_forward.3} parent=23 // pred_fallthru
        _
    $region24: #{att_merge_forward.3} parent=5 // pred_fallthru
      _
    %p240 = scmp.le.s32.totalorder 1, %s11
    %p241 = scmp.lt.s32.totalorder %s11, 5
    %p242 = pnand %p240, %p241
    %p243 = pneg %p242
    // Predicated region
    $region37: #{att_merge_forward.3} parent=5 // pred_check
      _
    $region38: #{att_merge_forward.3} parent=5 // pred_check_branch
      %245 = sbr.rel (%p242) target = $region40
    $region39: #{att_merge_forward.3} parent=5 // pred_region
      %s246 = ssub.s32 %s11, 1
      %s247 = smul.u32 8, %s21
      %p248 = scmp.lt.s32.totalorder %s20, 1
      %s249 = scalar_select %p248, %s20, 1
      %p250 = scmp.lt.s32.totalorder %s247, 15
      %s251 = scalar_select %p250, %s247, 15
      %s252 = smul.addr %s251, 2
      %s253 = smul.addr %s249, 32
      %s254 = sadd.s32 %s252, %s253
      %s255 = smul.addr %s254, 4
      %s256 = scalar_lea.vmem %s0, %s255
      %p257 = pneg %p51
      %p258 = pneg %p48
      %p259 = scmp.lt.s32.totalorder %s20, 1
      %s260 = scalar_select %p259, %s20, 1
      %p261 = scmp.lt.s32.totalorder %s21, 1
      %s262 = scalar_select %p261, %s21, 1
      %s263 = smul.addr %s262, 2
      %s264 = smul.addr %s260, 4
      %s265 = sadd.s32 %s263, %s264
      %s266 = smul.addr %s265, 4
      %s267 = scalar_lea.vmem %s1, %s266
      %p268 = pneg %p79
      %p269 = pneg %p76
      %p270 = scmp.lt.s32.totalorder %s20, 1
      %s271 = scalar_select %p270, %s20, 1
      %p272 = scmp.lt.s32.totalorder %s21, 1
      %s273 = scalar_select %p272, %s21, 1
      %s274 = smul.addr %s273, 2
      %s275 = smul.addr %s271, 4
      %s276 = sadd.s32 %s274, %s275
      %s277 = smul.addr %s276, 4
      %s278 = scalar_lea.vmem %s2, %s277
      %p279 = pneg %p107
      %p280 = pneg %p104
      %p281 = pneg %p128
      %p282 = pneg %p125
      %p283 = pneg %p149
      %p284 = pneg %p146
      %p285 = pneg %p177
      %p286 = pneg %p174
      %s287 = smul.u32 16, %s21
      %p288 = scmp.lt.s32.totalorder %s20, 1
      %s289 = scalar_select %p288, %s20, 1
      %p290 = scmp.lt.s32.totalorder %s287, 31
      %s291 = scalar_select %p290, %s287, 31
      %s292 = smul.addr %s289, 32
      %s293 = sadd.s32 %s291, %s292
      %s294 = smul.addr %s293, 4
      %s295 = scalar_lea.vmem %s5, %s294
      %s296 = smul.u32 8, %s21
      %p297 = scmp.lt.s32.totalorder %s20, 1
      %s298 = scalar_select %p297, %s20, 1
      %p299 = scmp.lt.s32.totalorder %s296, 15
      %s300 = scalar_select %p299, %s296, 15
      %s301 = smul.addr %s300, 2
      %s302 = smul.addr %s298, 32
      %s303 = sadd.s32 %s301, %s302
      %s304 = smul.addr %s303, 4
      %s305 = scalar_lea.vmem %s0, %s304
      %s306 = smul.u32 8, %s21
      %p307 = scmp.lt.s32.totalorder %s20, 1
      %s308 = scalar_select %p307, %s20, 1
      %p309 = scmp.lt.s32.totalorder %s21, 1
      %s310 = scalar_select %p309, %s21, 1
      %s311 = smul.addr %s310, 2
      %s312 = smul.addr %s308, 4
      %s313 = sadd.s32 %s311, %s312
      %s314 = smul.addr %s313, 4
      %s315 = scalar_lea.vmem %s1, %s314
      %p316 = scmp.lt.s32.totalorder %s20, 1
      %s317 = scalar_select %p316, %s20, 1
      %p318 = scmp.lt.s32.totalorder %s21, 1
      %s319 = scalar_select %p318, %s21, 1
      %s320 = smul.addr %s319, 2
      %s321 = smul.addr %s317, 4
      %s322 = sadd.s32 %s320, %s321
      %s323 = smul.addr %s322, 4
      %s324 = scalar_lea.vmem %s2, %s323
      %s325 = smul.u32 16, %s21
      %p326 = scmp.lt.s32.totalorder %s20, 1
      %s327 = scalar_select %p326, %s20, 1
      %p328 = scmp.lt.s32.totalorder %s325, 31
      %s329 = scalar_select %p328, %s325, 31
      %s330 = smul.addr %s327, 32
      %s331 = sadd.s32 %s329, %s330
      %s332 = smul.addr %s331, 4
      %s333 = scalar_lea.vmem %s5, %s332
      %s334 = smul.u32 16, %s21
      %vm336 = vcmask 57344
      %337 = vst.msk [vmem:[#allocation2] sm:$0x1] %vm336, 0.0
      %338 = vst.msk [vmem:[#allocation2 + $0x18] sm:$0x1] %vm336, 0.0
      %339 = vst.msk [vmem:[#allocation2 + $0x30] sm:$0x1] %vm336, 0.0
      %340 = vst.msk [vmem:[#allocation2 + $0x48] sm:$0x1] %vm336, 0.0
      %341 = vst.msk [vmem:[#allocation2 + $0x60] sm:$0x1] %vm336, 0.0
      %342 = vst.msk [vmem:[#allocation2 + $0x78] sm:$0x1] %vm336, 0.0
      %343 = vst.msk [vmem:[#allocation2 + $0x90] sm:$0x1] %vm336, 0.0
      %344 = vst.msk [vmem:[#allocation2 + $0xa8] sm:$0x1] %vm336, 0.0
      %345 = vst.msk [vmem:[#allocation2 + $0xc0] sm:$0x1] %vm336, 0.0
      %346 = vst.msk [vmem:[#allocation2 + $0xd8] sm:$0x1] %vm336, 0.0
      %347 = vst.msk [vmem:[#allocation2 + $0x11] sm:$0x1] %vm336, 0.0
      %348 = vst.msk [vmem:[#allocation2 + $0x29] sm:$0x1] %vm336, 0.0
      %349 = vst.msk [vmem:[#allocation2 + $0x41] sm:$0x1] %vm336, 0.0
      %350 = vst.msk [vmem:[#allocation2 + $0x59] sm:$0x1] %vm336, 0.0
      %351 = vst.msk [vmem:[#allocation2 + $0x71] sm:$0x1] %vm336, 0.0
      %352 = vst.msk [vmem:[#allocation2 + $0x89] sm:$0x1] %vm336, 0.0
      %353 = vst.msk [vmem:[#allocation2 + $0xa1] sm:$0x1] %vm336, 0.0
      %354 = vst.msk [vmem:[#allocation2 + $0xb9] sm:$0x1] %vm336, 0.0
      %355 = vst.msk [vmem:[#allocation2 + $0xd1] sm:$0x1] %vm336, 0.0
      %356 = vst.msk [vmem:[#allocation2 + $0xe9] sm:$0x1] %vm336, 0.0
      %v357 = vld [vmem:[%s315] sm:$0xf]
      %v358 = vld [vmem:[%s315 + $0x4] sm:$0xf]
      %v359 = vunpack.c.l.bf16 %v357
      %v360 = vunpack.c.l.bf16 %v358
      %vm361 = vcmask 64512
      %362 = vst.msk [vmem:[#allocation2 + $0x1] sm:$0xff] %vm361, %v359
      %363 = vst.msk [vmem:[#allocation2 + $0x9] sm:$0xff] %vm361, %v360
      %v364 = vld [vmem:[%s324] sm:$0xf]
      %v365 = vld [vmem:[%s324 + $0x4] sm:$0xf]
      %v366 = vunpack.c.l.bf16 %v364
      %v367 = vunpack.c.l.bf16 %v365
      %s368 = scalar_lea.vmem [#allocation2], 216
      %369 = vst.msk [vmem:[%s368 + $0x1] sm:$0xff] %vm361, %v366
      %370 = vst.msk [vmem:[%s368 + $0x9] sm:$0xff] %vm361, %v367
      %v371 = vld [vmem:[%s305] sm:$0xf]
      %v372 = vld [vmem:[%s305 + $0x4] sm:$0xf]
      %v373 = vld [vmem:[%s305 + $0x8] sm:$0xf]
      %v374 = vld [vmem:[%s305 + $0xc] sm:$0xf]
      %v375 = vld [vmem:[%s305 + $0x10] sm:$0xf]
      %v376 = vld [vmem:[%s305 + $0x14] sm:$0xf]
      %v377 = vld [vmem:[%s305 + $0x18] sm:$0xf]
      %v378 = vld [vmem:[%s305 + $0x1c] sm:$0xf]
      %v379 = vld [vmem:[%s305 + $0x20] sm:$0xf]
      %v380 = vld [vmem:[%s305 + $0x24] sm:$0xf]
      %v381 = vld [vmem:[%s305 + $0x28] sm:$0xf]
      %v382 = vld [vmem:[%s305 + $0x2c] sm:$0xf]
      %v383 = vld [vmem:[%s305 + $0x30] sm:$0xf]
      %v384 = vld [vmem:[%s305 + $0x34] sm:$0xf]
      %v385 = vld [vmem:[%s305 + $0x38] sm:$0xf]
      %v386 = vld [vmem:[%s305 + $0x3c] sm:$0xf]
      %v387 = vunpack.c.l.bf16 %v371
      %v388 = vunpack.c.l.bf16 %v372
      %v389 = vunpack.c.l.bf16 %v373
      %v390 = vunpack.c.l.bf16 %v374
      %v391 = vunpack.c.l.bf16 %v375
      %v392 = vunpack.c.l.bf16 %v376
      %v393 = vunpack.c.l.bf16 %v377
      %v394 = vunpack.c.l.bf16 %v378
      %v395 = vunpack.c.l.bf16 %v379
      %v396 = vunpack.c.l.bf16 %v380
      %v397 = vunpack.c.l.bf16 %v381
      %v398 = vunpack.c.l.bf16 %v382
      %v399 = vunpack.c.l.bf16 %v383
      %v400 = vunpack.c.l.bf16 %v384
      %v401 = vunpack.c.l.bf16 %v385
      %v402 = vunpack.c.l.bf16 %v386
      %s403 = scalar_lea.vmem [#allocation2], 24
      %404 = vst.msk [vmem:[%s403 + $0x1] sm:$0xff] %vm361, %v387
      %405 = vst.msk [vmem:[%s403 + $0x9] sm:$0xff] %vm361, %v388
      %406 = vst.msk [vmem:[%s403 + $0x19] sm:$0xff] %vm361, %v389
      %407 = vst.msk [vmem:[%s403 + $0x21] sm:$0xff] %vm361, %v390
      %408 = vst.msk [vmem:[%s403 + $0x31] sm:$0xff] %vm361, %v391
      %409 = vst.msk [vmem:[%s403 + $0x39] sm:$0xff] %vm361, %v392
      %410 = vst.msk [vmem:[%s403 + $0x49] sm:$0xff] %vm361, %v393
      %411 = vst.msk [vmem:[%s403 + $0x51] sm:$0xff] %vm361, %v394
      %412 = vst.msk [vmem:[%s403 + $0x61] sm:$0xff] %vm361, %v395
      %413 = vst.msk [vmem:[%s403 + $0x69] sm:$0xff] %vm361, %v396
      %414 = vst.msk [vmem:[%s403 + $0x79] sm:$0xff] %vm361, %v397
      %415 = vst.msk [vmem:[%s403 + $0x81] sm:$0xff] %vm361, %v398
      %416 = vst.msk [vmem:[%s403 + $0x91] sm:$0xff] %vm361, %v399
      %417 = vst.msk [vmem:[%s403 + $0x99] sm:$0xff] %vm361, %v400
      %418 = vst.msk [vmem:[%s403 + $0xa9] sm:$0xff] %vm361, %v401
      %419 = vst.msk [vmem:[%s403 + $0xb1] sm:$0xff] %vm361, %v402
      %v420 = vld [vmem:[#allocation2] sm:$0xff]
      %v421 = vld [vmem:[#allocation2 + $0x8] sm:$0xff]
      %v422 = vld [vmem:[#allocation2 + $0x18] sm:$0xff]
      %v423 = vld [vmem:[#allocation2 + $0x20] sm:$0xff]
      %v424 = vld [vmem:[#allocation2 + $0x30] sm:$0xff]
      %v425 = vld [vmem:[#allocation2 + $0x38] sm:$0xff]
      %v426 = vld [vmem:[#allocation2 + $0x48] sm:$0xff]
      %v427 = vld [vmem:[#allocation2 + $0x50] sm:$0xff]
      %v428 = vld [vmem:[#allocation2 + $0x60] sm:$0xff]
      %v429 = vld [vmem:[#allocation2 + $0x68] sm:$0xff]
      %v430 = vld [vmem:[#allocation2 + $0x78] sm:$0xff]
      %v431 = vld [vmem:[#allocation2 + $0x80] sm:$0xff]
      %v432 = vld [vmem:[#allocation2 + $0x90] sm:$0xff]
      %v433 = vld [vmem:[#allocation2 + $0x98] sm:$0xff]
      %v434 = vld [vmem:[#allocation2 + $0xa8] sm:$0xff]
      %v435 = vld [vmem:[#allocation2 + $0xb0] sm:$0xff]
      %v436 = vpack.c.bf16 %v421, %v420
      %v437 = vpack.c.bf16 %v423, %v422
      %v438 = vpack.c.bf16 %v425, %v424
      %v439 = vpack.c.bf16 %v427, %v426
      %v440 = vpack.c.bf16 %v429, %v428
      %v441 = vpack.c.bf16 %v431, %v430
      %v442 = vpack.c.bf16 %v433, %v432
      %v443 = vpack.c.bf16 %v435, %v434
      %v444 = vld [vmem:[%s3] sm:$0xf]
      %v445 = vld [vmem:[#allocation2 + $0x1] sm:$0xff]
      %v446 = vld [vmem:[#allocation2 + $0x9] sm:$0xff]
      %v447 = vld [vmem:[#allocation2 + $0x19] sm:$0xff]
      %v448 = vld [vmem:[#allocation2 + $0x21] sm:$0xff]
      %v449 = vld [vmem:[#allocation2 + $0x31] sm:$0xff]
      %v450 = vld [vmem:[#allocation2 + $0x39] sm:$0xff]
      %v451 = vld [vmem:[#allocation2 + $0x49] sm:$0xff]
      %v452 = vld [vmem:[#allocation2 + $0x51] sm:$0xff]
      %v453 = vld [vmem:[#allocation2 + $0x61] sm:$0xff]
      %v454 = vld [vmem:[#allocation2 + $0x69] sm:$0xff]
      %v455 = vld [vmem:[#allocation2 + $0x79] sm:$0xff]
      %v456 = vld [vmem:[#allocation2 + $0x81] sm:$0xff]
      %v457 = vld [vmem:[#allocation2 + $0x91] sm:$0xff]
      %v458 = vld [vmem:[#allocation2 + $0x99] sm:$0xff]
      %v459 = vld [vmem:[#allocation2 + $0xa9] sm:$0xff]
      %v460 = vld [vmem:[#allocation2 + $0xb1] sm:$0xff]
      %v461 = vpack.c.bf16 %v446, %v445
      %v462 = vpack.c.bf16 %v448, %v447
      %v463 = vpack.c.bf16 %v450, %v449
      %v464 = vpack.c.bf16 %v452, %v451
      %v465 = vpack.c.bf16 %v454, %v453
      %v466 = vpack.c.bf16 %v456, %v455
      %v467 = vpack.c.bf16 %v458, %v457
      %v468 = vpack.c.bf16 %v460, %v459
      %s469 = scalar_lea.vmem %s3, 4
      %v470 = vld [vmem:[%s469] sm:$0xf]
      %v472 = vsel %vm361, %v461, 0
      %v475 = vsel %vm361, %v462, 0
      %v478 = vsel %vm361, %v463, 0
      %v481 = vsel %vm361, %v464, 0
      %v484 = vsel %vm361, %v465, 0
      %v487 = vsel %vm361, %v466, 0
      %v490 = vsel %vm361, %v467, 0
      %v493 = vsel %vm361, %v468, 0
      %vm495 = vcmask 1043456
      %v497 = vsel %vm495, %v470, 0
      %499 = vmatprep.subr.bf16.mxu0 0
      %500 = vmatpush1.bf16.msra.mxu0 0
      %501 = vmatprep.subr.bf16.mxu0 0
      %502 = vmatpush1.bf16.msra.mxu0 0
      %503 = vmatprep.subr.bf16.mxu0 0
      %504 = vmatpush1.bf16.msra.mxu0 0
      %505 = vmatprep.subr.bf16.mxu0 0
      %506 = vmatpush1.bf16.msra.mxu0 0
      %507 = vmatprep.subr.bf16.mxu0 0
      %508 = vmatpush1.bf16.msra.mxu0 0
      %509 = vmatprep.subr.bf16.mxu0 0
      %510 = vmatpush1.bf16.msra.mxu0 0
      %511 = vmatprep.subr.bf16.mxu0 0
      %512 = vmatpush1.bf16.msra.mxu0 0
      %513 = vmatprep.subr.bf16.mxu0 0
      %514 = vmatpush1.bf16.msra.mxu0 %v497
      %515 = vmatprep.subr.bf16.mxu0 0
      %516 = vmatpush2.bf16.msra.mxu0 0
      %517 = vmatprep.subr.bf16.mxu0 0
      %518 = vmatpush2.bf16.msra.mxu0 0
      %519 = vmatprep.subr.bf16.mxu0 0
      %520 = vmatpush2.bf16.msra.mxu0 0
      %521 = vmatprep.subr.bf16.mxu0 0
      %522 = vmatpush2.bf16.msra.mxu0 0
      %523 = vmatprep.subr.bf16.mxu0 0
      %524 = vmatpush2.bf16.msra.mxu0 0
      %525 = vmatprep.subr.bf16.mxu0 0
      %526 = vmatpush2.bf16.msra.mxu0 0
      %527 = vmatprep.subr.bf16.mxu0 0
      %528 = vmatpush2.bf16.msra.mxu0 0
      %529 = vmatprep.subr.bf16.mxu0 0
      %530 = vmatpush2.bf16.msra.mxu0 0
      %531 = vmatprep.mubr.bf16.mxu0 0
      %532 = vmatmul.mubr.bf16.gmra.mxu0 %v472
      %v533 = vpop.f32.mrf.mxu0
      %v534 = vadd.f32 0.0, %v533
      %v535 = vpop.f32.mrf.mxu0
      %v536 = vpop.f32.mrf.mxu0
      %v537 = vadd.f32 0.0, %v536
      %v538 = vpop.f32.mrf.mxu0
      %539 = vmatprep.mubr.bf16.mxu0 0
      %540 = vmatmul.mubr.bf16.gmra.mxu0 %v475
      %v541 = vpop.f32.mrf.mxu0
      %v542 = vadd.f32 0.0, %v541
      %v543 = vpop.f32.mrf.mxu0
      %v544 = vpop.f32.mrf.mxu0
      %v545 = vadd.f32 0.0, %v544
      %v546 = vpop.f32.mrf.mxu0
      %547 = vmatprep.mubr.bf16.mxu0 0
      %548 = vmatmul.mubr.bf16.gmra.mxu0 %v478
      %v549 = vpop.f32.mrf.mxu0
      %v550 = vadd.f32 0.0, %v549
      %v551 = vpop.f32.mrf.mxu0
      %v552 = vpop.f32.mrf.mxu0
      %v553 = vadd.f32 0.0, %v552
      %v554 = vpop.f32.mrf.mxu0
      %555 = vmatprep.mubr.bf16.mxu0 0
      %556 = vmatmul.mubr.bf16.gmra.mxu0 %v481
      %v557 = vpop.f32.mrf.mxu0
      %v558 = vadd.f32 0.0, %v557
      %v559 = vpop.f32.mrf.mxu0
      %v560 = vpop.f32.mrf.mxu0
      %v561 = vadd.f32 0.0, %v560
      %v562 = vpop.f32.mrf.mxu0
      %563 = vmatprep.mubr.bf16.mxu0 0
      %564 = vmatmul.mubr.bf16.gmra.mxu0 %v484
      %v565 = vpop.f32.mrf.mxu0
      %v566 = vadd.f32 0.0, %v565
      %v567 = vpop.f32.mrf.mxu0
      %v568 = vpop.f32.mrf.mxu0
      %v569 = vadd.f32 0.0, %v568
      %v570 = vpop.f32.mrf.mxu0
      %571 = vmatprep.mubr.bf16.mxu0 0
      %572 = vmatmul.mubr.bf16.gmra.mxu0 %v487
      %v573 = vpop.f32.mrf.mxu0
      %v574 = vadd.f32 0.0, %v573
      %v575 = vpop.f32.mrf.mxu0
      %v576 = vpop.f32.mrf.mxu0
      %v577 = vadd.f32 0.0, %v576
      %v578 = vpop.f32.mrf.mxu0
      %579 = vmatprep.mubr.bf16.mxu0 0
      %580 = vmatmul.mubr.bf16.gmra.mxu0 %v490
      %v581 = vpop.f32.mrf.mxu0
      %v582 = vadd.f32 0.0, %v581
      %v583 = vpop.f32.mrf.mxu0
      %v584 = vpop.f32.mrf.mxu0
      %v585 = vadd.f32 0.0, %v584
      %v586 = vpop.f32.mrf.mxu0
      %587 = vmatprep.mubr.bf16.mxu0 0
      %588 = vmatmul.mubr.bf16.gmra.mxu0 %v493
      %v589 = vpop.f32.mrf.mxu0
      %v590 = vadd.f32 0.0, %v589
      %v591 = vpop.f32.mrf.mxu0
      %v592 = vpop.f32.mrf.mxu0
      %v593 = vadd.f32 0.0, %v592
      %v594 = vpop.f32.mrf.mxu0
      %595 = vdwg.mxu0
      %v597 = vsel %vm361, %v436, 0
      %v600 = vsel %vm361, %v437, 0
      %v603 = vsel %vm361, %v438, 0
      %v606 = vsel %vm361, %v439, 0
      %v609 = vsel %vm361, %v440, 0
      %v612 = vsel %vm361, %v441, 0
      %v615 = vsel %vm361, %v442, 0
      %v618 = vsel %vm361, %v443, 0
      %v621 = vsel %vm495, %v444, 0
      %623 = vmatprep.subr.bf16.mxu0 0
      %624 = vmatpush1.bf16.msra.mxu0 0
      %625 = vmatprep.subr.bf16.mxu0 0
      %626 = vmatpush1.bf16.msra.mxu0 0
      %627 = vmatprep.subr.bf16.mxu0 0
      %628 = vmatpush1.bf16.msra.mxu0 0
      %629 = vmatprep.subr.bf16.mxu0 0
      %630 = vmatpush1.bf16.msra.mxu0 0
      %631 = vmatprep.subr.bf16.mxu0 0
      %632 = vmatpush1.bf16.msra.mxu0 0
      %633 = vmatprep.subr.bf16.mxu0 0
      %634 = vmatpush1.bf16.msra.mxu0 0
      %635 = vmatprep.subr.bf16.mxu0 0
      %636 = vmatpush1.bf16.msra.mxu0 0
      %637 = vmatprep.subr.bf16.mxu0 0
      %638 = vmatpush1.bf16.msra.mxu0 %v621
      %639 = vmatprep.subr.bf16.mxu0 0
      %640 = vmatpush2.bf16.msra.mxu0 0
      %641 = vmatprep.subr.bf16.mxu0 0
      %642 = vmatpush2.bf16.msra.mxu0 0
      %643 = vmatprep.subr.bf16.mxu0 0
      %644 = vmatpush2.bf16.msra.mxu0 0
      %645 = vmatprep.subr.bf16.mxu0 0
      %646 = vmatpush2.bf16.msra.mxu0 0
      %647 = vmatprep.subr.bf16.mxu0 0
      %648 = vmatpush2.bf16.msra.mxu0 0
      %649 = vmatprep.subr.bf16.mxu0 0
      %650 = vmatpush2.bf16.msra.mxu0 0
      %651 = vmatprep.subr.bf16.mxu0 0
      %652 = vmatpush2.bf16.msra.mxu0 0
      %653 = vmatprep.subr.bf16.mxu0 0
      %654 = vmatpush2.bf16.msra.mxu0 0
      %655 = vmatprep.mubr.bf16.mxu0 0
      %656 = vmatmul.mubr.bf16.gmra.mxu0 %v597
      %v657 = vpop.f32.mrf.mxu0
      %v658 = vadd.f32 %v534, %v657
      %v659 = vpop.f32.mrf.mxu0
      %v660 = vpop.f32.mrf.mxu0
      %v661 = vadd.f32 %v537, %v660
      %v662 = vpop.f32.mrf.mxu0
      %663 = vmatprep.mubr.bf16.mxu0 0
      %664 = vmatmul.mubr.bf16.gmra.mxu0 %v600
      %v665 = vpop.f32.mrf.mxu0
      %v666 = vadd.f32 %v542, %v665
      %v667 = vpop.f32.mrf.mxu0
      %v668 = vpop.f32.mrf.mxu0
      %v669 = vadd.f32 %v545, %v668
      %v670 = vpop.f32.mrf.mxu0
      %671 = vmatprep.mubr.bf16.mxu0 0
      %672 = vmatmul.mubr.bf16.gmra.mxu0 %v603
      %v673 = vpop.f32.mrf.mxu0
      %v674 = vadd.f32 %v550, %v673
      %v675 = vpop.f32.mrf.mxu0
      %v676 = vpop.f32.mrf.mxu0
      %v677 = vadd.f32 %v553, %v676
      %v678 = vpop.f32.mrf.mxu0
      %679 = vmatprep.mubr.bf16.mxu0 0
      %680 = vmatmul.mubr.bf16.gmra.mxu0 %v606
      %v681 = vpop.f32.mrf.mxu0
      %v682 = vadd.f32 %v558, %v681
      %v683 = vpop.f32.mrf.mxu0
      %v684 = vpop.f32.mrf.mxu0
      %v685 = vadd.f32 %v561, %v684
      %v686 = vpop.f32.mrf.mxu0
      %687 = vmatprep.mubr.bf16.mxu0 0
      %688 = vmatmul.mubr.bf16.gmra.mxu0 %v609
      %v689 = vpop.f32.mrf.mxu0
      %v690 = vadd.f32 %v566, %v689
      %v691 = vpop.f32.mrf.mxu0
      %v692 = vpop.f32.mrf.mxu0
      %v693 = vadd.f32 %v569, %v692
      %v694 = vpop.f32.mrf.mxu0
      %695 = vmatprep.mubr.bf16.mxu0 0
      %696 = vmatmul.mubr.bf16.gmra.mxu0 %v612
      %v697 = vpop.f32.mrf.mxu0
      %v698 = vadd.f32 %v574, %v697
      %v699 = vpop.f32.mrf.mxu0
      %v700 = vpop.f32.mrf.mxu0
      %v701 = vadd.f32 %v577, %v700
      %v702 = vpop.f32.mrf.mxu0
      %703 = vmatprep.mubr.bf16.mxu0 0
      %704 = vmatmul.mubr.bf16.gmra.mxu0 %v615
      %v705 = vpop.f32.mrf.mxu0
      %v706 = vadd.f32 %v582, %v705
      %v707 = vpop.f32.mrf.mxu0
      %v708 = vpop.f32.mrf.mxu0
      %v709 = vadd.f32 %v585, %v708
      %v710 = vpop.f32.mrf.mxu0
      %711 = vmatprep.mubr.bf16.mxu0 0
      %712 = vmatmul.mubr.bf16.gmra.mxu0 %v618
      %v713 = vpop.f32.mrf.mxu0
      %v714 = vadd.f32 %v590, %v713
      %v715 = vpop.f32.mrf.mxu0
      %v716 = vpop.f32.mrf.mxu0
      %v717 = vadd.f32 %v593, %v716
      %v718 = vpop.f32.mrf.mxu0
      %719 = vdwg.mxu0
      %v720 = vld [vmem:[#allocation2 + $0x2] sm:$0xff]
      %v721 = vld [vmem:[#allocation2 + $0xa] sm:$0xff]
      %v722 = vld [vmem:[#allocation2 + $0x1a] sm:$0xff]
      %v723 = vld [vmem:[#allocation2 + $0x22] sm:$0xff]
      %v724 = vld [vmem:[#allocation2 + $0x32] sm:$0xff]
      %v725 = vld [vmem:[#allocation2 + $0x3a] sm:$0xff]
      %v726 = vld [vmem:[#allocation2 + $0x4a] sm:$0xff]
      %v727 = vld [vmem:[#allocation2 + $0x52] sm:$0xff]
      %v728 = vld [vmem:[#allocation2 + $0x62] sm:$0xff]
      %v729 = vld [vmem:[#allocation2 + $0x6a] sm:$0xff]
      %v730 = vld [vmem:[#allocation2 + $0x7a] sm:$0xff]
      %v731 = vld [vmem:[#allocation2 + $0x82] sm:$0xff]
      %v732 = vld [vmem:[#allocation2 + $0x92] sm:$0xff]
      %v733 = vld [vmem:[#allocation2 + $0x9a] sm:$0xff]
      %v734 = vld [vmem:[#allocation2 + $0xaa] sm:$0xff]
      %v735 = vld [vmem:[#allocation2 + $0xb2] sm:$0xff]
      %v736 = vpack.c.bf16 %v721, %v720
      %v737 = vpack.c.bf16 %v723, %v722
      %v738 = vpack.c.bf16 %v725, %v724
      %v739 = vpack.c.bf16 %v727, %v726
      %v740 = vpack.c.bf16 %v729, %v728
      %v741 = vpack.c.bf16 %v731, %v730
      %v742 = vpack.c.bf16 %v733, %v732
      %v743 = vpack.c.bf16 %v735, %v734
      %s744 = scalar_lea.vmem %s3, 8
      %v745 = vld [vmem:[%s744] sm:$0xf]
      %v747 = vsel %vm361, %v736, 0
      %v750 = vsel %vm361, %v737, 0
      %v753 = vsel %vm361, %v738, 0
      %v756 = vsel %vm361, %v739, 0
      %v759 = vsel %vm361, %v740, 0
      %v762 = vsel %vm361, %v741, 0
      %v765 = vsel %vm361, %v742, 0
      %v768 = vsel %vm361, %v743, 0
      %v771 = vsel %vm495, %v745, 0
      %773 = vmatprep.subr.bf16.mxu0 0
      %774 = vmatpush1.bf16.msra.mxu0 0
      %775 = vmatprep.subr.bf16.mxu0 0
      %776 = vmatpush1.bf16.msra.mxu0 0
      %777 = vmatprep.subr.bf16.mxu0 0
      %778 = vmatpush1.bf16.msra.mxu0 0
      %779 = vmatprep.subr.bf16.mxu0 0
      %780 = vmatpush1.bf16.msra.mxu0 0
      %781 = vmatprep.subr.bf16.mxu0 0
      %782 = vmatpush1.bf16.msra.mxu0 0
      %783 = vmatprep.subr.bf16.mxu0 0
      %784 = vmatpush1.bf16.msra.mxu0 0
      %785 = vmatprep.subr.bf16.mxu0 0
      %786 = vmatpush1.bf16.msra.mxu0 0
      %787 = vmatprep.subr.bf16.mxu0 0
      %788 = vmatpush1.bf16.msra.mxu0 %v771
      %789 = vmatprep.subr.bf16.mxu0 0
      %790 = vmatpush2.bf16.msra.mxu0 0
      %791 = vmatprep.subr.bf16.mxu0 0
      %792 = vmatpush2.bf16.msra.mxu0 0
      %793 = vmatprep.subr.bf16.mxu0 0
      %794 = vmatpush2.bf16.msra.mxu0 0
      %795 = vmatprep.subr.bf16.mxu0 0
      %796 = vmatpush2.bf16.msra.mxu0 0
      %797 = vmatprep.subr.bf16.mxu0 0
      %798 = vmatpush2.bf16.msra.mxu0 0
      %799 = vmatprep.subr.bf16.mxu0 0
      %800 = vmatpush2.bf16.msra.mxu0 0
      %801 = vmatprep.subr.bf16.mxu0 0
      %802 = vmatpush2.bf16.msra.mxu0 0
      %803 = vmatprep.subr.bf16.mxu0 0
      %804 = vmatpush2.bf16.msra.mxu0 0
      %805 = vmatprep.mubr.bf16.mxu0 0
      %806 = vmatmul.mubr.bf16.gmra.mxu0 %v747
      %v807 = vpop.f32.mrf.mxu0
      %v808 = vadd.f32 0.0, %v807
      %v809 = vpop.f32.mrf.mxu0
      %v810 = vpop.f32.mrf.mxu0
      %v811 = vadd.f32 0.0, %v810
      %v812 = vpop.f32.mrf.mxu0
      %813 = vmatprep.mubr.bf16.mxu0 0
      %814 = vmatmul.mubr.bf16.gmra.mxu0 %v750
      %v815 = vpop.f32.mrf.mxu0
      %v816 = vadd.f32 0.0, %v815
      %v817 = vpop.f32.mrf.mxu0
      %v818 = vpop.f32.mrf.mxu0
      %v819 = vadd.f32 0.0, %v818
      %v820 = vpop.f32.mrf.mxu0
      %821 = vmatprep.mubr.bf16.mxu0 0
      %822 = vmatmul.mubr.bf16.gmra.mxu0 %v753
      %v823 = vpop.f32.mrf.mxu0
      %v824 = vadd.f32 0.0, %v823
      %v825 = vpop.f32.mrf.mxu0
      %v826 = vpop.f32.mrf.mxu0
      %v827 = vadd.f32 0.0, %v826
      %v828 = vpop.f32.mrf.mxu0
      %829 = vmatprep.mubr.bf16.mxu0 0
      %830 = vmatmul.mubr.bf16.gmra.mxu0 %v756
      %v831 = vpop.f32.mrf.mxu0
      %v832 = vadd.f32 0.0, %v831
      %v833 = vpop.f32.mrf.mxu0
      %v834 = vpop.f32.mrf.mxu0
      %v835 = vadd.f32 0.0, %v834
      %v836 = vpop.f32.mrf.mxu0
      %837 = vmatprep.mubr.bf16.mxu0 0
      %838 = vmatmul.mubr.bf16.gmra.mxu0 %v759
      %v839 = vpop.f32.mrf.mxu0
      %v840 = vadd.f32 0.0, %v839
      %v841 = vpop.f32.mrf.mxu0
      %v842 = vpop.f32.mrf.mxu0
      %v843 = vadd.f32 0.0, %v842
      %v844 = vpop.f32.mrf.mxu0
      %845 = vmatprep.mubr.bf16.mxu0 0
      %846 = vmatmul.mubr.bf16.gmra.mxu0 %v762
      %v847 = vpop.f32.mrf.mxu0
      %v848 = vadd.f32 0.0, %v847
      %v849 = vpop.f32.mrf.mxu0
      %v850 = vpop.f32.mrf.mxu0
      %v851 = vadd.f32 0.0, %v850
      %v852 = vpop.f32.mrf.mxu0
      %853 = vmatprep.mubr.bf16.mxu0 0
      %854 = vmatmul.mubr.bf16.gmra.mxu0 %v765
      %v855 = vpop.f32.mrf.mxu0
      %v856 = vadd.f32 0.0, %v855
      %v857 = vpop.f32.mrf.mxu0
      %v858 = vpop.f32.mrf.mxu0
      %v859 = vadd.f32 0.0, %v858
      %v860 = vpop.f32.mrf.mxu0
      %861 = vmatprep.mubr.bf16.mxu0 0
      %862 = vmatmul.mubr.bf16.gmra.mxu0 %v768
      %v863 = vpop.f32.mrf.mxu0
      %v864 = vadd.f32 0.0, %v863
      %v865 = vpop.f32.mrf.mxu0
      %v866 = vpop.f32.mrf.mxu0
      %v867 = vadd.f32 0.0, %v866
      %v868 = vpop.f32.mrf.mxu0
      %869 = vdwg.mxu0
      %v870 = vadd.f32 %v658, %v808
      %v871 = vadd.f32 %v661, %v811
      %v872 = vadd.f32 %v666, %v816
      %v873 = vadd.f32 %v669, %v819
      %v874 = vadd.f32 %v674, %v824
      %v875 = vadd.f32 %v677, %v827
      %v876 = vadd.f32 %v682, %v832
      %v877 = vadd.f32 %v685, %v835
      %v878 = vadd.f32 %v690, %v840
      %v879 = vadd.f32 %v693, %v843
      %v880 = vadd.f32 %v698, %v848
      %v881 = vadd.f32 %v701, %v851
      %v882 = vadd.f32 %v706, %v856
      %v883 = vadd.f32 %v709, %v859
      %v884 = vadd.f32 %v714, %v864
      %v885 = vadd.f32 %v717, %v867
      %v886 = vld [vmem:[%s403] sm:$0xff]
      %v887 = vld [vmem:[%s403 + $0x8] sm:$0xff]
      %v888 = vld [vmem:[%s403 + $0x18] sm:$0xff]
      %v889 = vld [vmem:[%s403 + $0x20] sm:$0xff]
      %v890 = vld [vmem:[%s403 + $0x30] sm:$0xff]
      %v891 = vld [vmem:[%s403 + $0x38] sm:$0xff]
      %v892 = vld [vmem:[%s403 + $0x48] sm:$0xff]
      %v893 = vld [vmem:[%s403 + $0x50] sm:$0xff]
      %v894 = vld [vmem:[%s403 + $0x60] sm:$0xff]
      %v895 = vld [vmem:[%s403 + $0x68] sm:$0xff]
      %v896 = vld [vmem:[%s403 + $0x78] sm:$0xff]
      %v897 = vld [vmem:[%s403 + $0x80] sm:$0xff]
      %v898 = vld [vmem:[%s403 + $0x90] sm:$0xff]
      %v899 = vld [vmem:[%s403 + $0x98] sm:$0xff]
      %v900 = vld [vmem:[%s403 + $0xa8] sm:$0xff]
      %v901 = vld [vmem:[%s403 + $0xb0] sm:$0xff]
      %v902 = vpack.c.bf16 %v887, %v886
      %v903 = vpack.c.bf16 %v889, %v888
      %v904 = vpack.c.bf16 %v891, %v890
      %v905 = vpack.c.bf16 %v893, %v892
      %v906 = vpack.c.bf16 %v895, %v894
      %v907 = vpack.c.bf16 %v897, %v896
      %v908 = vpack.c.bf16 %v899, %v898
      %v909 = vpack.c.bf16 %v901, %v900
      %s910 = scalar_lea.vmem %s3, 12
      %v911 = vld [vmem:[%s910] sm:$0xf]
      %v913 = vsel %vm361, %v902, 0
      %v916 = vsel %vm361, %v903, 0
      %v919 = vsel %vm361, %v904, 0
      %v922 = vsel %vm361, %v905, 0
      %v925 = vsel %vm361, %v906, 0
      %v928 = vsel %vm361, %v907, 0
      %v931 = vsel %vm361, %v908, 0
      %v934 = vsel %vm361, %v909, 0
      %v937 = vsel %vm495, %v911, 0
      %939 = vmatprep.subr.bf16.mxu0 0
      %940 = vmatpush1.bf16.msra.mxu0 0
      %941 = vmatprep.subr.bf16.mxu0 0
      %942 = vmatpush1.bf16.msra.mxu0 0
      %943 = vmatprep.subr.bf16.mxu0 0
      %944 = vmatpush1.bf16.msra.mxu0 0
      %945 = vmatprep.subr.bf16.mxu0 0
      %946 = vmatpush1.bf16.msra.mxu0 0
      %947 = vmatprep.subr.bf16.mxu0 0
      %948 = vmatpush1.bf16.msra.mxu0 0
      %949 = vmatprep.subr.bf16.mxu0 0
      %950 = vmatpush1.bf16.msra.mxu0 0
      %951 = vmatprep.subr.bf16.mxu0 0
      %952 = vmatpush1.bf16.msra.mxu0 0
      %953 = vmatprep.subr.bf16.mxu0 0
      %954 = vmatpush1.bf16.msra.mxu0 %v937
      %955 = vmatprep.subr.bf16.mxu0 0
      %956 = vmatpush2.bf16.msra.mxu0 0
      %957 = vmatprep.subr.bf16.mxu0 0
      %958 = vmatpush2.bf16.msra.mxu0 0
      %959 = vmatprep.subr.bf16.mxu0 0
      %960 = vmatpush2.bf16.msra.mxu0 0
      %961 = vmatprep.subr.bf16.mxu0 0
      %962 = vmatpush2.bf16.msra.mxu0 0
      %963 = vmatprep.subr.bf16.mxu0 0
      %964 = vmatpush2.bf16.msra.mxu0 0
      %965 = vmatprep.subr.bf16.mxu0 0
      %966 = vmatpush2.bf16.msra.mxu0 0
      %967 = vmatprep.subr.bf16.mxu0 0
      %968 = vmatpush2.bf16.msra.mxu0 0
      %969 = vmatprep.subr.bf16.mxu0 0
      %970 = vmatpush2.bf16.msra.mxu0 0
      %971 = vmatprep.mubr.bf16.mxu0 0
      %972 = vmatmul.mubr.bf16.gmra.mxu0 %v913
      %v973 = vpop.f32.mrf.mxu0
      %v974 = vadd.f32 0.0, %v973
      %v975 = vpop.f32.mrf.mxu0
      %v976 = vpop.f32.mrf.mxu0
      %v977 = vadd.f32 0.0, %v976
      %v978 = vpop.f32.mrf.mxu0
      %979 = vmatprep.mubr.bf16.mxu0 0
      %980 = vmatmul.mubr.bf16.gmra.mxu0 %v916
      %v981 = vpop.f32.mrf.mxu0
      %v982 = vadd.f32 0.0, %v981
      %v983 = vpop.f32.mrf.mxu0
      %v984 = vpop.f32.mrf.mxu0
      %v985 = vadd.f32 0.0, %v984
      %v986 = vpop.f32.mrf.mxu0
      %987 = vmatprep.mubr.bf16.mxu0 0
      %988 = vmatmul.mubr.bf16.gmra.mxu0 %v919
      %v989 = vpop.f32.mrf.mxu0
      %v990 = vadd.f32 0.0, %v989
      %v991 = vpop.f32.mrf.mxu0
      %v992 = vpop.f32.mrf.mxu0
      %v993 = vadd.f32 0.0, %v992
      %v994 = vpop.f32.mrf.mxu0
      %995 = vmatprep.mubr.bf16.mxu0 0
      %996 = vmatmul.mubr.bf16.gmra.mxu0 %v922
      %v997 = vpop.f32.mrf.mxu0
      %v998 = vadd.f32 0.0, %v997
      %v999 = vpop.f32.mrf.mxu0
      %v1000 = vpop.f32.mrf.mxu0
      %v1001 = vadd.f32 0.0, %v1000
      %v1002 = vpop.f32.mrf.mxu0
      %1003 = vmatprep.mubr.bf16.mxu0 0
      %1004 = vmatmul.mubr.bf16.gmra.mxu0 %v925
      %v1005 = vpop.f32.mrf.mxu0
      %v1006 = vadd.f32 0.0, %v1005
      %v1007 = vpop.f32.mrf.mxu0
      %v1008 = vpop.f32.mrf.mxu0
      %v1009 = vadd.f32 0.0, %v1008
      %v1010 = vpop.f32.mrf.mxu0
      %1011 = vmatprep.mubr.bf16.mxu0 0
      %1012 = vmatmul.mubr.bf16.gmra.mxu0 %v928
      %v1013 = vpop.f32.mrf.mxu0
      %v1014 = vadd.f32 0.0, %v1013
      %v1015 = vpop.f32.mrf.mxu0
      %v1016 = vpop.f32.mrf.mxu0
      %v1017 = vadd.f32 0.0, %v1016
      %v1018 = vpop.f32.mrf.mxu0
      %1019 = vmatprep.mubr.bf16.mxu0 0
      %1020 = vmatmul.mubr.bf16.gmra.mxu0 %v931
      %v1021 = vpop.f32.mrf.mxu0
      %v1022 = vadd.f32 0.0, %v1021
      %v1023 = vpop.f32.mrf.mxu0
      %v1024 = vpop.f32.mrf.mxu0
      %v1025 = vadd.f32 0.0, %v1024
      %v1026 = vpop.f32.mrf.mxu0
      %1027 = vmatprep.mubr.bf16.mxu0 0
      %1028 = vmatmul.mubr.bf16.gmra.mxu0 %v934
      %v1029 = vpop.f32.mrf.mxu0
      %v1030 = vadd.f32 0.0, %v1029
      %v1031 = vpop.f32.mrf.mxu0
      %v1032 = vpop.f32.mrf.mxu0
      %v1033 = vadd.f32 0.0, %v1032
      %v1034 = vpop.f32.mrf.mxu0
      %1035 = vdwg.mxu0
      %v1036 = vadd.f32 %v870, %v974
      %v1037 = vadd.f32 %v871, %v977
      %v1038 = vadd.f32 %v872, %v982
      %v1039 = vadd.f32 %v873, %v985
      %v1040 = vadd.f32 %v874, %v990
      %v1041 = vadd.f32 %v875, %v993
      %v1042 = vadd.f32 %v876, %v998
      %v1043 = vadd.f32 %v877, %v1001
      %v1044 = vadd.f32 %v878, %v1006
      %v1045 = vadd.f32 %v879, %v1009
      %v1046 = vadd.f32 %v880, %v1014
      %v1047 = vadd.f32 %v881, %v1017
      %v1048 = vadd.f32 %v882, %v1022
      %v1049 = vadd.f32 %v883, %v1025
      %v1050 = vadd.f32 %v884, %v1030
      %v1051 = vadd.f32 %v885, %v1033
      %v1052 = vld [vmem:[%s403 + $0x1] sm:$0xff]
      %v1053 = vld [vmem:[%s403 + $0x9] sm:$0xff]
      %v1054 = vld [vmem:[%s403 + $0x19] sm:$0xff]
      %v1055 = vld [vmem:[%s403 + $0x21] sm:$0xff]
      %v1056 = vld [vmem:[%s403 + $0x31] sm:$0xff]
      %v1057 = vld [vmem:[%s403 + $0x39] sm:$0xff]
      %v1058 = vld [vmem:[%s403 + $0x49] sm:$0xff]
      %v1059 = vld [vmem:[%s403 + $0x51] sm:$0xff]
      %v1060 = vld [vmem:[%s403 + $0x61] sm:$0xff]
      %v1061 = vld [vmem:[%s403 + $0x69] sm:$0xff]
      %v1062 = vld [vmem:[%s403 + $0x79] sm:$0xff]
      %v1063 = vld [vmem:[%s403 + $0x81] sm:$0xff]
      %v1064 = vld [vmem:[%s403 + $0x91] sm:$0xff]
      %v1065 = vld [vmem:[%s403 + $0x99] sm:$0xff]
      %v1066 = vld [vmem:[%s403 + $0xa9] sm:$0xff]
      %v1067 = vld [vmem:[%s403 + $0xb1] sm:$0xff]
      %v1068 = vpack.c.bf16 %v1053, %v1052
      %v1069 = vpack.c.bf16 %v1055, %v1054
      %v1070 = vpack.c.bf16 %v1057, %v1056
      %v1071 = vpack.c.bf16 %v1059, %v1058
      %v1072 = vpack.c.bf16 %v1061, %v1060
      %v1073 = vpack.c.bf16 %v1063, %v1062
      %v1074 = vpack.c.bf16 %v1065, %v1064
      %v1075 = vpack.c.bf16 %v1067, %v1066
      %s1076 = scalar_lea.vmem %s3, 16
      %v1077 = vld [vmem:[%s1076] sm:$0xf]
      %v1079 = vsel %vm361, %v1068, 0
      %v1082 = vsel %vm361, %v1069, 0
      %v1085 = vsel %vm361, %v1070, 0
      %v1088 = vsel %vm361, %v1071, 0
      %v1091 = vsel %vm361, %v1072, 0
      %v1094 = vsel %vm361, %v1073, 0
      %v1097 = vsel %vm361, %v1074, 0
      %v1100 = vsel %vm361, %v1075, 0
      %v1103 = vsel %vm495, %v1077, 0
      %1105 = vmatprep.subr.bf16.mxu0 0
      %1106 = vmatpush1.bf16.msra.mxu0 0
      %1107 = vmatprep.subr.bf16.mxu0 0
      %1108 = vmatpush1.bf16.msra.mxu0 0
      %1109 = vmatprep.subr.bf16.mxu0 0
      %1110 = vmatpush1.bf16.msra.mxu0 0
      %1111 = vmatprep.subr.bf16.mxu0 0
      %1112 = vmatpush1.bf16.msra.mxu0 0
      %1113 = vmatprep.subr.bf16.mxu0 0
      %1114 = vmatpush1.bf16.msra.mxu0 0
      %1115 = vmatprep.subr.bf16.mxu0 0
      %1116 = vmatpush1.bf16.msra.mxu0 0
      %1117 = vmatprep.subr.bf16.mxu0 0
      %1118 = vmatpush1.bf16.msra.mxu0 0
      %1119 = vmatprep.subr.bf16.mxu0 0
      %1120 = vmatpush1.bf16.msra.mxu0 %v1103
      %1121 = vmatprep.subr.bf16.mxu0 0
      %1122 = vmatpush2.bf16.msra.mxu0 0
      %1123 = vmatprep.subr.bf16.mxu0 0
      %1124 = vmatpush2.bf16.msra.mxu0 0
      %1125 = vmatprep.subr.bf16.mxu0 0
      %1126 = vmatpush2.bf16.msra.mxu0 0
      %1127 = vmatprep.subr.bf16.mxu0 0
      %1128 = vmatpush2.bf16.msra.mxu0 0
      %1129 = vmatprep.subr.bf16.mxu0 0
      %1130 = vmatpush2.bf16.msra.mxu0 0
      %1131 = vmatprep.subr.bf16.mxu0 0
      %1132 = vmatpush2.bf16.msra.mxu0 0
      %1133 = vmatprep.subr.bf16.mxu0 0
      %1134 = vmatpush2.bf16.msra.mxu0 0
      %1135 = vmatprep.subr.bf16.mxu0 0
      %1136 = vmatpush2.bf16.msra.mxu0 0
      %1137 = vmatprep.mubr.bf16.mxu0 0
      %1138 = vmatmul.mubr.bf16.gmra.mxu0 %v1079
      %v1139 = vpop.f32.mrf.mxu0
      %v1140 = vadd.f32 0.0, %v1139
      %v1141 = vpop.f32.mrf.mxu0
      %v1142 = vpop.f32.mrf.mxu0
      %v1143 = vadd.f32 0.0, %v1142
      %v1144 = vpop.f32.mrf.mxu0
      %1145 = vmatprep.mubr.bf16.mxu0 0
      %1146 = vmatmul.mubr.bf16.gmra.mxu0 %v1082
      %v1147 = vpop.f32.mrf.mxu0
      %v1148 = vadd.f32 0.0, %v1147
      %v1149 = vpop.f32.mrf.mxu0
      %v1150 = vpop.f32.mrf.mxu0
      %v1151 = vadd.f32 0.0, %v1150
      %v1152 = vpop.f32.mrf.mxu0
      %1153 = vmatprep.mubr.bf16.mxu0 0
      %1154 = vmatmul.mubr.bf16.gmra.mxu0 %v1085
      %v1155 = vpop.f32.mrf.mxu0
      %v1156 = vadd.f32 0.0, %v1155
      %v1157 = vpop.f32.mrf.mxu0
      %v1158 = vpop.f32.mrf.mxu0
      %v1159 = vadd.f32 0.0, %v1158
      %v1160 = vpop.f32.mrf.mxu0
      %1161 = vmatprep.mubr.bf16.mxu0 0
      %1162 = vmatmul.mubr.bf16.gmra.mxu0 %v1088
      %v1163 = vpop.f32.mrf.mxu0
      %v1164 = vadd.f32 0.0, %v1163
      %v1165 = vpop.f32.mrf.mxu0
      %v1166 = vpop.f32.mrf.mxu0
      %v1167 = vadd.f32 0.0, %v1166
      %v1168 = vpop.f32.mrf.mxu0
      %1169 = vmatprep.mubr.bf16.mxu0 0
      %1170 = vmatmul.mubr.bf16.gmra.mxu0 %v1091
      %v1171 = vpop.f32.mrf.mxu0
      %v1172 = vadd.f32 0.0, %v1171
      %v1173 = vpop.f32.mrf.mxu0
      %v1174 = vpop.f32.mrf.mxu0
      %v1175 = vadd.f32 0.0, %v1174
      %v1176 = vpop.f32.mrf.mxu0
      %1177 = vmatprep.mubr.bf16.mxu0 0
      %1178 = vmatmul.mubr.bf16.gmra.mxu0 %v1094
      %v1179 = vpop.f32.mrf.mxu0
      %v1180 = vadd.f32 0.0, %v1179
      %v1181 = vpop.f32.mrf.mxu0
      %v1182 = vpop.f32.mrf.mxu0
      %v1183 = vadd.f32 0.0, %v1182
      %v1184 = vpop.f32.mrf.mxu0
      %1185 = vmatprep.mubr.bf16.mxu0 0
      %1186 = vmatmul.mubr.bf16.gmra.mxu0 %v1097
      %v1187 = vpop.f32.mrf.mxu0
      %v1188 = vadd.f32 0.0, %v1187
      %v1189 = vpop.f32.mrf.mxu0
      %v1190 = vpop.f32.mrf.mxu0
      %v1191 = vadd.f32 0.0, %v1190
      %v1192 = vpop.f32.mrf.mxu0
      %1193 = vmatprep.mubr.bf16.mxu0 0
      %1194 = vmatmul.mubr.bf16.gmra.mxu0 %v1100
      %v1195 = vpop.f32.mrf.mxu0
      %v1196 = vadd.f32 0.0, %v1195
      %v1197 = vpop.f32.mrf.mxu0
      %v1198 = vpop.f32.mrf.mxu0
      %v1199 = vadd.f32 0.0, %v1198
      %v1200 = vpop.f32.mrf.mxu0
      %1201 = vdwg.mxu0
      %v1202 = vadd.f32 %v1036, %v1140
      %v1203 = vadd.f32 %v1037, %v1143
      %v1204 = vadd.f32 %v1038, %v1148
      %v1205 = vadd.f32 %v1039, %v1151
      %v1206 = vadd.f32 %v1040, %v1156
      %v1207 = vadd.f32 %v1041, %v1159
      %v1208 = vadd.f32 %v1042, %v1164
      %v1209 = vadd.f32 %v1043, %v1167
      %v1210 = vadd.f32 %v1044, %v1172
      %v1211 = vadd.f32 %v1045, %v1175
      %v1212 = vadd.f32 %v1046, %v1180
      %v1213 = vadd.f32 %v1047, %v1183
      %v1214 = vadd.f32 %v1048, %v1188
      %v1215 = vadd.f32 %v1049, %v1191
      %v1216 = vadd.f32 %v1050, %v1196
      %v1217 = vadd.f32 %v1051, %v1199
      %v1218 = vld [vmem:[%s403 + $0x2] sm:$0xff]
      %v1219 = vld [vmem:[%s403 + $0xa] sm:$0xff]
      %v1220 = vld [vmem:[%s403 + $0x1a] sm:$0xff]
      %v1221 = vld [vmem:[%s403 + $0x22] sm:$0xff]
      %v1222 = vld [vmem:[%s403 + $0x32] sm:$0xff]
      %v1223 = vld [vmem:[%s403 + $0x3a] sm:$0xff]
      %v1224 = vld [vmem:[%s403 + $0x4a] sm:$0xff]
      %v1225 = vld [vmem:[%s403 + $0x52] sm:$0xff]
      %v1226 = vld [vmem:[%s403 + $0x62] sm:$0xff]
      %v1227 = vld [vmem:[%s403 + $0x6a] sm:$0xff]
      %v1228 = vld [vmem:[%s403 + $0x7a] sm:$0xff]
      %v1229 = vld [vmem:[%s403 + $0x82] sm:$0xff]
      %v1230 = vld [vmem:[%s403 + $0x92] sm:$0xff]
      %v1231 = vld [vmem:[%s403 + $0x9a] sm:$0xff]
      %v1232 = vld [vmem:[%s403 + $0xaa] sm:$0xff]
      %v1233 = vld [vmem:[%s403 + $0xb2] sm:$0xff]
      %v1234 = vpack.c.bf16 %v1219, %v1218
      %v1235 = vpack.c.bf16 %v1221, %v1220
      %v1236 = vpack.c.bf16 %v1223, %v1222
      %v1237 = vpack.c.bf16 %v1225, %v1224
      %v1238 = vpack.c.bf16 %v1227, %v1226
      %v1239 = vpack.c.bf16 %v1229, %v1228
      %v1240 = vpack.c.bf16 %v1231, %v1230
      %v1241 = vpack.c.bf16 %v1233, %v1232
      %s1242 = scalar_lea.vmem %s3, 20
      %v1243 = vld [vmem:[%s1242] sm:$0xf]
      %v1245 = vsel %vm361, %v1234, 0
      %v1248 = vsel %vm361, %v1235, 0
      %v1251 = vsel %vm361, %v1236, 0
      %v1254 = vsel %vm361, %v1237, 0
      %v1257 = vsel %vm361, %v1238, 0
      %v1260 = vsel %vm361, %v1239, 0
      %v1263 = vsel %vm361, %v1240, 0
      %v1266 = vsel %vm361, %v1241, 0
      %v1269 = vsel %vm495, %v1243, 0
      %1271 = vmatprep.subr.bf16.mxu0 0
      %1272 = vmatpush1.bf16.msra.mxu0 0
      %1273 = vmatprep.subr.bf16.mxu0 0
      %1274 = vmatpush1.bf16.msra.mxu0 0
      %1275 = vmatprep.subr.bf16.mxu0 0
      %1276 = vmatpush1.bf16.msra.mxu0 0
      %1277 = vmatprep.subr.bf16.mxu0 0
      %1278 = vmatpush1.bf16.msra.mxu0 0
      %1279 = vmatprep.subr.bf16.mxu0 0
      %1280 = vmatpush1.bf16.msra.mxu0 0
      %1281 = vmatprep.subr.bf16.mxu0 0
      %1282 = vmatpush1.bf16.msra.mxu0 0
      %1283 = vmatprep.subr.bf16.mxu0 0
      %1284 = vmatpush1.bf16.msra.mxu0 0
      %1285 = vmatprep.subr.bf16.mxu0 0
      %1286 = vmatpush1.bf16.msra.mxu0 %v1269
      %1287 = vmatprep.subr.bf16.mxu0 0
      %1288 = vmatpush2.bf16.msra.mxu0 0
      %1289 = vmatprep.subr.bf16.mxu0 0
      %1290 = vmatpush2.bf16.msra.mxu0 0
      %1291 = vmatprep.subr.bf16.mxu0 0
      %1292 = vmatpush2.bf16.msra.mxu0 0
      %1293 = vmatprep.subr.bf16.mxu0 0
      %1294 = vmatpush2.bf16.msra.mxu0 0
      %1295 = vmatprep.subr.bf16.mxu0 0
      %1296 = vmatpush2.bf16.msra.mxu0 0
      %1297 = vmatprep.subr.bf16.mxu0 0
      %1298 = vmatpush2.bf16.msra.mxu0 0
      %1299 = vmatprep.subr.bf16.mxu0 0
      %1300 = vmatpush2.bf16.msra.mxu0 0
      %1301 = vmatprep.subr.bf16.mxu0 0
      %1302 = vmatpush2.bf16.msra.mxu0 0
      %1303 = vmatprep.mubr.bf16.mxu0 0
      %1304 = vmatmul.mubr.bf16.gmra.mxu0 %v1245
      %v1305 = vpop.f32.mrf.mxu0
      %v1306 = vadd.f32 0.0, %v1305
      %v1307 = vpop.f32.mrf.mxu0
      %v1308 = vpop.f32.mrf.mxu0
      %v1309 = vadd.f32 0.0, %v1308
      %v1310 = vpop.f32.mrf.mxu0
      %1311 = vmatprep.mubr.bf16.mxu0 0
      %1312 = vmatmul.mubr.bf16.gmra.mxu0 %v1248
      %v1313 = vpop.f32.mrf.mxu0
      %v1314 = vadd.f32 0.0, %v1313
      %v1315 = vpop.f32.mrf.mxu0
      %v1316 = vpop.f32.mrf.mxu0
      %v1317 = vadd.f32 0.0, %v1316
      %v1318 = vpop.f32.mrf.mxu0
      %1319 = vmatprep.mubr.bf16.mxu0 0
      %1320 = vmatmul.mubr.bf16.gmra.mxu0 %v1251
      %v1321 = vpop.f32.mrf.mxu0
      %v1322 = vadd.f32 0.0, %v1321
      %v1323 = vpop.f32.mrf.mxu0
      %v1324 = vpop.f32.mrf.mxu0
      %v1325 = vadd.f32 0.0, %v1324
      %v1326 = vpop.f32.mrf.mxu0
      %1327 = vmatprep.mubr.bf16.mxu0 0
      %1328 = vmatmul.mubr.bf16.gmra.mxu0 %v1254
      %v1329 = vpop.f32.mrf.mxu0
      %v1330 = vadd.f32 0.0, %v1329
      %v1331 = vpop.f32.mrf.mxu0
      %v1332 = vpop.f32.mrf.mxu0
      %v1333 = vadd.f32 0.0, %v1332
      %v1334 = vpop.f32.mrf.mxu0
      %1335 = vmatprep.mubr.bf16.mxu0 0
      %1336 = vmatmul.mubr.bf16.gmra.mxu0 %v1257
      %v1337 = vpop.f32.mrf.mxu0
      %v1338 = vadd.f32 0.0, %v1337
      %v1339 = vpop.f32.mrf.mxu0
      %v1340 = vpop.f32.mrf.mxu0
      %v1341 = vadd.f32 0.0, %v1340
      %v1342 = vpop.f32.mrf.mxu0
      %1343 = vmatprep.mubr.bf16.mxu0 0
      %1344 = vmatmul.mubr.bf16.gmra.mxu0 %v1260
      %v1345 = vpop.f32.mrf.mxu0
      %v1346 = vadd.f32 0.0, %v1345
      %v1347 = vpop.f32.mrf.mxu0
      %v1348 = vpop.f32.mrf.mxu0
      %v1349 = vadd.f32 0.0, %v1348
      %v1350 = vpop.f32.mrf.mxu0
      %1351 = vmatprep.mubr.bf16.mxu0 0
      %1352 = vmatmul.mubr.bf16.gmra.mxu0 %v1263
      %v1353 = vpop.f32.mrf.mxu0
      %v1354 = vadd.f32 0.0, %v1353
      %v1355 = vpop.f32.mrf.mxu0
      %v1356 = vpop.f32.mrf.mxu0
      %v1357 = vadd.f32 0.0, %v1356
      %v1358 = vpop.f32.mrf.mxu0
      %1359 = vmatprep.mubr.bf16.mxu0 0
      %1360 = vmatmul.mubr.bf16.gmra.mxu0 %v1266
      %v1361 = vpop.f32.mrf.mxu0
      %v1362 = vadd.f32 0.0, %v1361
      %v1363 = vpop.f32.mrf.mxu0
      %v1364 = vpop.f32.mrf.mxu0
      %v1365 = vadd.f32 0.0, %v1364
      %v1366 = vpop.f32.mrf.mxu0
      %1367 = vdwg.mxu0
      %v1368 = vadd.f32 %v1202, %v1306
      %v1369 = vadd.f32 %v1203, %v1309
      %v1370 = vadd.f32 %v1204, %v1314
      %v1371 = vadd.f32 %v1205, %v1317
      %v1372 = vadd.f32 %v1206, %v1322
      %v1373 = vadd.f32 %v1207, %v1325
      %v1374 = vadd.f32 %v1208, %v1330
      %v1375 = vadd.f32 %v1209, %v1333
      %v1376 = vadd.f32 %v1210, %v1338
      %v1377 = vadd.f32 %v1211, %v1341
      %v1378 = vadd.f32 %v1212, %v1346
      %v1379 = vadd.f32 %v1213, %v1349
      %v1380 = vadd.f32 %v1214, %v1354
      %v1381 = vadd.f32 %v1215, %v1357
      %v1382 = vadd.f32 %v1216, %v1362
      %v1383 = vadd.f32 %v1217, %v1365
      %s1384 = scalar_lea.vmem [#allocation2], 48
      %v1385 = vld [vmem:[%s1384] sm:$0xff]
      %v1386 = vld [vmem:[%s1384 + $0x8] sm:$0xff]
      %v1387 = vld [vmem:[%s1384 + $0x18] sm:$0xff]
      %v1388 = vld [vmem:[%s1384 + $0x20] sm:$0xff]
      %v1389 = vld [vmem:[%s1384 + $0x30] sm:$0xff]
      %v1390 = vld [vmem:[%s1384 + $0x38] sm:$0xff]
      %v1391 = vld [vmem:[%s1384 + $0x48] sm:$0xff]
      %v1392 = vld [vmem:[%s1384 + $0x50] sm:$0xff]
      %v1393 = vld [vmem:[%s1384 + $0x60] sm:$0xff]
      %v1394 = vld [vmem:[%s1384 + $0x68] sm:$0xff]
      %v1395 = vld [vmem:[%s1384 + $0x78] sm:$0xff]
      %v1396 = vld [vmem:[%s1384 + $0x80] sm:$0xff]
      %v1397 = vld [vmem:[%s1384 + $0x90] sm:$0xff]
      %v1398 = vld [vmem:[%s1384 + $0x98] sm:$0xff]
      %v1399 = vld [vmem:[%s1384 + $0xa8] sm:$0xff]
      %v1400 = vld [vmem:[%s1384 + $0xb0] sm:$0xff]
      %v1401 = vpack.c.bf16 %v1386, %v1385
      %v1402 = vpack.c.bf16 %v1388, %v1387
      %v1403 = vpack.c.bf16 %v1390, %v1389
      %v1404 = vpack.c.bf16 %v1392, %v1391
      %v1405 = vpack.c.bf16 %v1394, %v1393
      %v1406 = vpack.c.bf16 %v1396, %v1395
      %v1407 = vpack.c.bf16 %v1398, %v1397
      %v1408 = vpack.c.bf16 %v1400, %v1399
      %s1409 = scalar_lea.vmem %s3, 24
      %v1410 = vld [vmem:[%s1409] sm:$0xf]
      %v1412 = vsel %vm361, %v1401, 0
      %v1415 = vsel %vm361, %v1402, 0
      %v1418 = vsel %vm361, %v1403, 0
      %v1421 = vsel %vm361, %v1404, 0
      %v1424 = vsel %vm361, %v1405, 0
      %v1427 = vsel %vm361, %v1406, 0
      %v1430 = vsel %vm361, %v1407, 0
      %v1433 = vsel %vm361, %v1408, 0
      %v1436 = vsel %vm495, %v1410, 0
      %1438 = vmatprep.subr.bf16.mxu0 0
      %1439 = vmatpush1.bf16.msra.mxu0 0
      %1440 = vmatprep.subr.bf16.mxu0 0
      %1441 = vmatpush1.bf16.msra.mxu0 0
      %1442 = vmatprep.subr.bf16.mxu0 0
      %1443 = vmatpush1.bf16.msra.mxu0 0
      %1444 = vmatprep.subr.bf16.mxu0 0
      %1445 = vmatpush1.bf16.msra.mxu0 0
      %1446 = vmatprep.subr.bf16.mxu0 0
      %1447 = vmatpush1.bf16.msra.mxu0 0
      %1448 = vmatprep.subr.bf16.mxu0 0
      %1449 = vmatpush1.bf16.msra.mxu0 0
      %1450 = vmatprep.subr.bf16.mxu0 0
      %1451 = vmatpush1.bf16.msra.mxu0 0
      %1452 = vmatprep.subr.bf16.mxu0 0
      %1453 = vmatpush1.bf16.msra.mxu0 %v1436
      %1454 = vmatprep.subr.bf16.mxu0 0
      %1455 = vmatpush2.bf16.msra.mxu0 0
      %1456 = vmatprep.subr.bf16.mxu0 0
      %1457 = vmatpush2.bf16.msra.mxu0 0
      %1458 = vmatprep.subr.bf16.mxu0 0
      %1459 = vmatpush2.bf16.msra.mxu0 0
      %1460 = vmatprep.subr.bf16.mxu0 0
      %1461 = vmatpush2.bf16.msra.mxu0 0
      %1462 = vmatprep.subr.bf16.mxu0 0
      %1463 = vmatpush2.bf16.msra.mxu0 0
      %1464 = vmatprep.subr.bf16.mxu0 0
      %1465 = vmatpush2.bf16.msra.mxu0 0
      %1466 = vmatprep.subr.bf16.mxu0 0
      %1467 = vmatpush2.bf16.msra.mxu0 0
      %1468 = vmatprep.subr.bf16.mxu0 0
      %1469 = vmatpush2.bf16.msra.mxu0 0
      %1470 = vmatprep.mubr.bf16.mxu0 0
      %1471 = vmatmul.mubr.bf16.gmra.mxu0 %v1412
      %v1472 = vpop.f32.mrf.mxu0
      %v1473 = vadd.f32 0.0, %v1472
      %v1474 = vpop.f32.mrf.mxu0
      %v1475 = vpop.f32.mrf.mxu0
      %v1476 = vadd.f32 0.0, %v1475
      %v1477 = vpop.f32.mrf.mxu0
      %1478 = vmatprep.mubr.bf16.mxu0 0
      %1479 = vmatmul.mubr.bf16.gmra.mxu0 %v1415
      %v1480 = vpop.f32.mrf.mxu0
      %v1481 = vadd.f32 0.0, %v1480
      %v1482 = vpop.f32.mrf.mxu0
      %v1483 = vpop.f32.mrf.mxu0
      %v1484 = vadd.f32 0.0, %v1483
      %v1485 = vpop.f32.mrf.mxu0
      %1486 = vmatprep.mubr.bf16.mxu0 0
      %1487 = vmatmul.mubr.bf16.gmra.mxu0 %v1418
      %v1488 = vpop.f32.mrf.mxu0
      %v1489 = vadd.f32 0.0, %v1488
      %v1490 = vpop.f32.mrf.mxu0
      %v1491 = vpop.f32.mrf.mxu0
      %v1492 = vadd.f32 0.0, %v1491
      %v1493 = vpop.f32.mrf.mxu0
      %1494 = vmatprep.mubr.bf16.mxu0 0
      %1495 = vmatmul.mubr.bf16.gmra.mxu0 %v1421
      %v1496 = vpop.f32.mrf.mxu0
      %v1497 = vadd.f32 0.0, %v1496
      %v1498 = vpop.f32.mrf.mxu0
      %v1499 = vpop.f32.mrf.mxu0
      %v1500 = vadd.f32 0.0, %v1499
      %v1501 = vpop.f32.mrf.mxu0
      %1502 = vmatprep.mubr.bf16.mxu0 0
      %1503 = vmatmul.mubr.bf16.gmra.mxu0 %v1424
      %v1504 = vpop.f32.mrf.mxu0
      %v1505 = vadd.f32 0.0, %v1504
      %v1506 = vpop.f32.mrf.mxu0
      %v1507 = vpop.f32.mrf.mxu0
      %v1508 = vadd.f32 0.0, %v1507
      %v1509 = vpop.f32.mrf.mxu0
      %1510 = vmatprep.mubr.bf16.mxu0 0
      %1511 = vmatmul.mubr.bf16.gmra.mxu0 %v1427
      %v1512 = vpop.f32.mrf.mxu0
      %v1513 = vadd.f32 0.0, %v1512
      %v1514 = vpop.f32.mrf.mxu0
      %v1515 = vpop.f32.mrf.mxu0
      %v1516 = vadd.f32 0.0, %v1515
      %v1517 = vpop.f32.mrf.mxu0
      %1518 = vmatprep.mubr.bf16.mxu0 0
      %1519 = vmatmul.mubr.bf16.gmra.mxu0 %v1430
      %v1520 = vpop.f32.mrf.mxu0
      %v1521 = vadd.f32 0.0, %v1520
      %v1522 = vpop.f32.mrf.mxu0
      %v1523 = vpop.f32.mrf.mxu0
      %v1524 = vadd.f32 0.0, %v1523
      %v1525 = vpop.f32.mrf.mxu0
      %1526 = vmatprep.mubr.bf16.mxu0 0
      %1527 = vmatmul.mubr.bf16.gmra.mxu0 %v1433
      %v1528 = vpop.f32.mrf.mxu0
      %v1529 = vadd.f32 0.0, %v1528
      %v1530 = vpop.f32.mrf.mxu0
      %v1531 = vpop.f32.mrf.mxu0
      %v1532 = vadd.f32 0.0, %v1531
      %v1533 = vpop.f32.mrf.mxu0
      %1534 = vdwg.mxu0
      %v1535 = vadd.f32 %v1368, %v1473
      %v1536 = vadd.f32 %v1369, %v1476
      %v1537 = vadd.f32 %v1370, %v1481
      %v1538 = vadd.f32 %v1371, %v1484
      %v1539 = vadd.f32 %v1372, %v1489
      %v1540 = vadd.f32 %v1373, %v1492
      %v1541 = vadd.f32 %v1374, %v1497
      %v1542 = vadd.f32 %v1375, %v1500
      %v1543 = vadd.f32 %v1376, %v1505
      %v1544 = vadd.f32 %v1377, %v1508
      %v1545 = vadd.f32 %v1378, %v1513
      %v1546 = vadd.f32 %v1379, %v1516
      %v1547 = vadd.f32 %v1380, %v1521
      %v1548 = vadd.f32 %v1381, %v1524
      %v1549 = vadd.f32 %v1382, %v1529
      %v1550 = vadd.f32 %v1383, %v1532
      %v1551 = vld [vmem:[%s1384 + $0x1] sm:$0xff]
      %v1552 = vld [vmem:[%s1384 + $0x9] sm:$0xff]
      %v1553 = vld [vmem:[%s1384 + $0x19] sm:$0xff]
      %v1554 = vld [vmem:[%s1384 + $0x21] sm:$0xff]
      %v1555 = vld [vmem:[%s1384 + $0x31] sm:$0xff]
      %v1556 = vld [vmem:[%s1384 + $0x39] sm:$0xff]
      %v1557 = vld [vmem:[%s1384 + $0x49] sm:$0xff]
      %v1558 = vld [vmem:[%s1384 + $0x51] sm:$0xff]
      %v1559 = vld [vmem:[%s1384 + $0x61] sm:$0xff]
      %v1560 = vld [vmem:[%s1384 + $0x69] sm:$0xff]
      %v1561 = vld [vmem:[%s1384 + $0x79] sm:$0xff]
      %v1562 = vld [vmem:[%s1384 + $0x81] sm:$0xff]
      %v1563 = vld [vmem:[%s1384 + $0x91] sm:$0xff]
      %v1564 = vld [vmem:[%s1384 + $0x99] sm:$0xff]
      %v1565 = vld [vmem:[%s1384 + $0xa9] sm:$0xff]
      %v1566 = vld [vmem:[%s1384 + $0xb1] sm:$0xff]
      %v1567 = vpack.c.bf16 %v1552, %v1551
      %v1568 = vpack.c.bf16 %v1554, %v1553
      %v1569 = vpack.c.bf16 %v1556, %v1555
      %v1570 = vpack.c.bf16 %v1558, %v1557
      %v1571 = vpack.c.bf16 %v1560, %v1559
      %v1572 = vpack.c.bf16 %v1562, %v1561
      %v1573 = vpack.c.bf16 %v1564, %v1563
      %v1574 = vpack.c.bf16 %v1566, %v1565
      %s1575 = scalar_lea.vmem %s3, 28
      %v1576 = vld [vmem:[%s1575] sm:$0xf]
      %v1578 = vsel %vm361, %v1567, 0
      %v1581 = vsel %vm361, %v1568, 0
      %v1584 = vsel %vm361, %v1569, 0
      %v1587 = vsel %vm361, %v1570, 0
      %v1590 = vsel %vm361, %v1571, 0
      %v1593 = vsel %vm361, %v1572, 0
      %v1596 = vsel %vm361, %v1573, 0
      %v1599 = vsel %vm361, %v1574, 0
      %v1602 = vsel %vm495, %v1576, 0
      %1604 = vmatprep.subr.bf16.mxu0 0
      %1605 = vmatpush1.bf16.msra.mxu0 0
      %1606 = vmatprep.subr.bf16.mxu0 0
      %1607 = vmatpush1.bf16.msra.mxu0 0
      %1608 = vmatprep.subr.bf16.mxu0 0
      %1609 = vmatpush1.bf16.msra.mxu0 0
      %1610 = vmatprep.subr.bf16.mxu0 0
      %1611 = vmatpush1.bf16.msra.mxu0 0
      %1612 = vmatprep.subr.bf16.mxu0 0
      %1613 = vmatpush1.bf16.msra.mxu0 0
      %1614 = vmatprep.subr.bf16.mxu0 0
      %1615 = vmatpush1.bf16.msra.mxu0 0
      %1616 = vmatprep.subr.bf16.mxu0 0
      %1617 = vmatpush1.bf16.msra.mxu0 0
      %1618 = vmatprep.subr.bf16.mxu0 0
      %1619 = vmatpush1.bf16.msra.mxu0 %v1602
      %1620 = vmatprep.subr.bf16.mxu0 0
      %1621 = vmatpush2.bf16.msra.mxu0 0
      %1622 = vmatprep.subr.bf16.mxu0 0
      %1623 = vmatpush2.bf16.msra.mxu0 0
      %1624 = vmatprep.subr.bf16.mxu0 0
      %1625 = vmatpush2.bf16.msra.mxu0 0
      %1626 = vmatprep.subr.bf16.mxu0 0
      %1627 = vmatpush2.bf16.msra.mxu0 0
      %1628 = vmatprep.subr.bf16.mxu0 0
      %1629 = vmatpush2.bf16.msra.mxu0 0
      %1630 = vmatprep.subr.bf16.mxu0 0
      %1631 = vmatpush2.bf16.msra.mxu0 0
      %1632 = vmatprep.subr.bf16.mxu0 0
      %1633 = vmatpush2.bf16.msra.mxu0 0
      %1634 = vmatprep.subr.bf16.mxu0 0
      %1635 = vmatpush2.bf16.msra.mxu0 0
      %1636 = vmatprep.mubr.bf16.mxu0 0
      %1637 = vmatmul.mubr.bf16.gmra.mxu0 %v1578
      %v1638 = vpop.f32.mrf.mxu0
      %v1639 = vadd.f32 0.0, %v1638
      %v1640 = vpop.f32.mrf.mxu0
      %v1641 = vpop.f32.mrf.mxu0
      %v1642 = vadd.f32 0.0, %v1641
      %v1643 = vpop.f32.mrf.mxu0
      %1644 = vmatprep.mubr.bf16.mxu0 0
      %1645 = vmatmul.mubr.bf16.gmra.mxu0 %v1581
      %v1646 = vpop.f32.mrf.mxu0
      %v1647 = vadd.f32 0.0, %v1646
      %v1648 = vpop.f32.mrf.mxu0
      %v1649 = vpop.f32.mrf.mxu0
      %v1650 = vadd.f32 0.0, %v1649
      %v1651 = vpop.f32.mrf.mxu0
      %1652 = vmatprep.mubr.bf16.mxu0 0
      %1653 = vmatmul.mubr.bf16.gmra.mxu0 %v1584
      %v1654 = vpop.f32.mrf.mxu0
      %v1655 = vadd.f32 0.0, %v1654
      %v1656 = vpop.f32.mrf.mxu0
      %v1657 = vpop.f32.mrf.mxu0
      %v1658 = vadd.f32 0.0, %v1657
      %v1659 = vpop.f32.mrf.mxu0
      %1660 = vmatprep.mubr.bf16.mxu0 0
      %1661 = vmatmul.mubr.bf16.gmra.mxu0 %v1587
      %v1662 = vpop.f32.mrf.mxu0
      %v1663 = vadd.f32 0.0, %v1662
      %v1664 = vpop.f32.mrf.mxu0
      %v1665 = vpop.f32.mrf.mxu0
      %v1666 = vadd.f32 0.0, %v1665
      %v1667 = vpop.f32.mrf.mxu0
      %1668 = vmatprep.mubr.bf16.mxu0 0
      %1669 = vmatmul.mubr.bf16.gmra.mxu0 %v1590
      %v1670 = vpop.f32.mrf.mxu0
      %v1671 = vadd.f32 0.0, %v1670
      %v1672 = vpop.f32.mrf.mxu0
      %v1673 = vpop.f32.mrf.mxu0
      %v1674 = vadd.f32 0.0, %v1673
      %v1675 = vpop.f32.mrf.mxu0
      %1676 = vmatprep.mubr.bf16.mxu0 0
      %1677 = vmatmul.mubr.bf16.gmra.mxu0 %v1593
      %v1678 = vpop.f32.mrf.mxu0
      %v1679 = vadd.f32 0.0, %v1678
      %v1680 = vpop.f32.mrf.mxu0
      %v1681 = vpop.f32.mrf.mxu0
      %v1682 = vadd.f32 0.0, %v1681
      %v1683 = vpop.f32.mrf.mxu0
      %1684 = vmatprep.mubr.bf16.mxu0 0
      %1685 = vmatmul.mubr.bf16.gmra.mxu0 %v1596
      %v1686 = vpop.f32.mrf.mxu0
      %v1687 = vadd.f32 0.0, %v1686
      %v1688 = vpop.f32.mrf.mxu0
      %v1689 = vpop.f32.mrf.mxu0
      %v1690 = vadd.f32 0.0, %v1689
      %v1691 = vpop.f32.mrf.mxu0
      %1692 = vmatprep.mubr.bf16.mxu0 0
      %1693 = vmatmul.mubr.bf16.gmra.mxu0 %v1599
      %v1694 = vpop.f32.mrf.mxu0
      %v1695 = vadd.f32 0.0, %v1694
      %v1696 = vpop.f32.mrf.mxu0
      %v1697 = vpop.f32.mrf.mxu0
      %v1698 = vadd.f32 0.0, %v1697
      %v1699 = vpop.f32.mrf.mxu0
      %1700 = vdwg.mxu0
      %v1701 = vadd.f32 %v1535, %v1639
      %v1702 = vadd.f32 %v1536, %v1642
      %v1703 = vadd.f32 %v1537, %v1647
      %v1704 = vadd.f32 %v1538, %v1650
      %v1705 = vadd.f32 %v1539, %v1655
      %v1706 = vadd.f32 %v1540, %v1658
      %v1707 = vadd.f32 %v1541, %v1663
      %v1708 = vadd.f32 %v1542, %v1666
      %v1709 = vadd.f32 %v1543, %v1671
      %v1710 = vadd.f32 %v1544, %v1674
      %v1711 = vadd.f32 %v1545, %v1679
      %v1712 = vadd.f32 %v1546, %v1682
      %v1713 = vadd.f32 %v1547, %v1687
      %v1714 = vadd.f32 %v1548, %v1690
      %v1715 = vadd.f32 %v1549, %v1695
      %v1716 = vadd.f32 %v1550, %v1698
      %v1717 = vld [vmem:[%s1384 + $0x2] sm:$0xff]
      %v1718 = vld [vmem:[%s1384 + $0xa] sm:$0xff]
      %v1719 = vld [vmem:[%s1384 + $0x1a] sm:$0xff]
      %v1720 = vld [vmem:[%s1384 + $0x22] sm:$0xff]
      %v1721 = vld [vmem:[%s1384 + $0x32] sm:$0xff]
      %v1722 = vld [vmem:[%s1384 + $0x3a] sm:$0xff]
      %v1723 = vld [vmem:[%s1384 + $0x4a] sm:$0xff]
      %v1724 = vld [vmem:[%s1384 + $0x52] sm:$0xff]
      %v1725 = vld [vmem:[%s1384 + $0x62] sm:$0xff]
      %v1726 = vld [vmem:[%s1384 + $0x6a] sm:$0xff]
      %v1727 = vld [vmem:[%s1384 + $0x7a] sm:$0xff]
      %v1728 = vld [vmem:[%s1384 + $0x82] sm:$0xff]
      %v1729 = vld [vmem:[%s1384 + $0x92] sm:$0xff]
      %v1730 = vld [vmem:[%s1384 + $0x9a] sm:$0xff]
      %v1731 = vld [vmem:[%s1384 + $0xaa] sm:$0xff]
      %v1732 = vld [vmem:[%s1384 + $0xb2] sm:$0xff]
      %v1733 = vpack.c.bf16 %v1718, %v1717
      %v1734 = vpack.c.bf16 %v1720, %v1719
      %v1735 = vpack.c.bf16 %v1722, %v1721
      %v1736 = vpack.c.bf16 %v1724, %v1723
      %v1737 = vpack.c.bf16 %v1726, %v1725
      %v1738 = vpack.c.bf16 %v1728, %v1727
      %v1739 = vpack.c.bf16 %v1730, %v1729
      %v1740 = vpack.c.bf16 %v1732, %v1731
      %s1741 = scalar_lea.vmem %s3, 32
      %v1742 = vld [vmem:[%s1741] sm:$0xf]
      %v1744 = vsel %vm361, %v1733, 0
      %v1747 = vsel %vm361, %v1734, 0
      %v1750 = vsel %vm361, %v1735, 0
      %v1753 = vsel %vm361, %v1736, 0
      %v1756 = vsel %vm361, %v1737, 0
      %v1759 = vsel %vm361, %v1738, 0
      %v1762 = vsel %vm361, %v1739, 0
      %v1765 = vsel %vm361, %v1740, 0
      %v1768 = vsel %vm495, %v1742, 0
      %1770 = vmatprep.subr.bf16.mxu0 0
      %1771 = vmatpush1.bf16.msra.mxu0 0
      %1772 = vmatprep.subr.bf16.mxu0 0
      %1773 = vmatpush1.bf16.msra.mxu0 0
      %1774 = vmatprep.subr.bf16.mxu0 0
      %1775 = vmatpush1.bf16.msra.mxu0 0
      %1776 = vmatprep.subr.bf16.mxu0 0
      %1777 = vmatpush1.bf16.msra.mxu0 0
      %1778 = vmatprep.subr.bf16.mxu0 0
      %1779 = vmatpush1.bf16.msra.mxu0 0
      %1780 = vmatprep.subr.bf16.mxu0 0
      %1781 = vmatpush1.bf16.msra.mxu0 0
      %1782 = vmatprep.subr.bf16.mxu0 0
      %1783 = vmatpush1.bf16.msra.mxu0 0
      %1784 = vmatprep.subr.bf16.mxu0 0
      %1785 = vmatpush1.bf16.msra.mxu0 %v1768
      %1786 = vmatprep.subr.bf16.mxu0 0
      %1787 = vmatpush2.bf16.msra.mxu0 0
      %1788 = vmatprep.subr.bf16.mxu0 0
      %1789 = vmatpush2.bf16.msra.mxu0 0
      %1790 = vmatprep.subr.bf16.mxu0 0
      %1791 = vmatpush2.bf16.msra.mxu0 0
      %1792 = vmatprep.subr.bf16.mxu0 0
      %1793 = vmatpush2.bf16.msra.mxu0 0
      %1794 = vmatprep.subr.bf16.mxu0 0
      %1795 = vmatpush2.bf16.msra.mxu0 0
      %1796 = vmatprep.subr.bf16.mxu0 0
      %1797 = vmatpush2.bf16.msra.mxu0 0
      %1798 = vmatprep.subr.bf16.mxu0 0
      %1799 = vmatpush2.bf16.msra.mxu0 0
      %1800 = vmatprep.subr.bf16.mxu0 0
      %1801 = vmatpush2.bf16.msra.mxu0 0
      %1802 = vmatprep.mubr.bf16.mxu0 0
      %1803 = vmatmul.mubr.bf16.gmra.mxu0 %v1744
      %v1804 = vpop.f32.mrf.mxu0
      %v1805 = vadd.f32 0.0, %v1804
      %v1806 = vpop.f32.mrf.mxu0
      %v1807 = vpop.f32.mrf.mxu0
      %v1808 = vadd.f32 0.0, %v1807
      %v1809 = vpop.f32.mrf.mxu0
      %1810 = vmatprep.mubr.bf16.mxu0 0
      %1811 = vmatmul.mubr.bf16.gmra.mxu0 %v1747
      %v1812 = vpop.f32.mrf.mxu0
      %v1813 = vadd.f32 0.0, %v1812
      %v1814 = vpop.f32.mrf.mxu0
      %v1815 = vpop.f32.mrf.mxu0
      %v1816 = vadd.f32 0.0, %v1815
      %v1817 = vpop.f32.mrf.mxu0
      %1818 = vmatprep.mubr.bf16.mxu0 0
      %1819 = vmatmul.mubr.bf16.gmra.mxu0 %v1750
      %v1820 = vpop.f32.mrf.mxu0
      %v1821 = vadd.f32 0.0, %v1820
      %v1822 = vpop.f32.mrf.mxu0
      %v1823 = vpop.f32.mrf.mxu0
      %v1824 = vadd.f32 0.0, %v1823
      %v1825 = vpop.f32.mrf.mxu0
      %1826 = vmatprep.mubr.bf16.mxu0 0
      %1827 = vmatmul.mubr.bf16.gmra.mxu0 %v1753
      %v1828 = vpop.f32.mrf.mxu0
      %v1829 = vadd.f32 0.0, %v1828
      %v1830 = vpop.f32.mrf.mxu0
      %v1831 = vpop.f32.mrf.mxu0
      %v1832 = vadd.f32 0.0, %v1831
      %v1833 = vpop.f32.mrf.mxu0
      %1834 = vmatprep.mubr.bf16.mxu0 0
      %1835 = vmatmul.mubr.bf16.gmra.mxu0 %v1756
      %v1836 = vpop.f32.mrf.mxu0
      %v1837 = vadd.f32 0.0, %v1836
      %v1838 = vpop.f32.mrf.mxu0
      %v1839 = vpop.f32.mrf.mxu0
      %v1840 = vadd.f32 0.0, %v1839
      %v1841 = vpop.f32.mrf.mxu0
      %1842 = vmatprep.mubr.bf16.mxu0 0
      %1843 = vmatmul.mubr.bf16.gmra.mxu0 %v1759
      %v1844 = vpop.f32.mrf.mxu0
      %v1845 = vadd.f32 0.0, %v1844
      %v1846 = vpop.f32.mrf.mxu0
      %v1847 = vpop.f32.mrf.mxu0
      %v1848 = vadd.f32 0.0, %v1847
      %v1849 = vpop.f32.mrf.mxu0
      %1850 = vmatprep.mubr.bf16.mxu0 0
      %1851 = vmatmul.mubr.bf16.gmra.mxu0 %v1762
      %v1852 = vpop.f32.mrf.mxu0
      %v1853 = vadd.f32 0.0, %v1852
      %v1854 = vpop.f32.mrf.mxu0
      %v1855 = vpop.f32.mrf.mxu0
      %v1856 = vadd.f32 0.0, %v1855
      %v1857 = vpop.f32.mrf.mxu0
      %1858 = vmatprep.mubr.bf16.mxu0 0
      %1859 = vmatmul.mubr.bf16.gmra.mxu0 %v1765
      %v1860 = vpop.f32.mrf.mxu0
      %v1861 = vadd.f32 0.0, %v1860
      %v1862 = vpop.f32.mrf.mxu0
      %v1863 = vpop.f32.mrf.mxu0
      %v1864 = vadd.f32 0.0, %v1863
      %v1865 = vpop.f32.mrf.mxu0
      %1866 = vdwg.mxu0
      %v1867 = vadd.f32 %v1701, %v1805
      %v1868 = vadd.f32 %v1702, %v1808
      %v1869 = vadd.f32 %v1703, %v1813
      %v1870 = vadd.f32 %v1704, %v1816
      %v1871 = vadd.f32 %v1705, %v1821
      %v1872 = vadd.f32 %v1706, %v1824
      %v1873 = vadd.f32 %v1707, %v1829
      %v1874 = vadd.f32 %v1708, %v1832
      %v1875 = vadd.f32 %v1709, %v1837
      %v1876 = vadd.f32 %v1710, %v1840
      %v1877 = vadd.f32 %v1711, %v1845
      %v1878 = vadd.f32 %v1712, %v1848
      %v1879 = vadd.f32 %v1713, %v1853
      %v1880 = vadd.f32 %v1714, %v1856
      %v1881 = vadd.f32 %v1715, %v1861
      %v1882 = vadd.f32 %v1716, %v1864
      %v1883 = vld [vmem:[%s4] sm:$0x1]
      %v1885 = vlaneseq
      %v1886 = vshrl.u32 %v1885, 7
      %v1887 = vsub.s32 0, %v1886
      %v1888 = vrot.slane %v1883, %v1887
      %v1890 = vadd.f32 %v1867, %v1888
      %v1891 = vadd.f32 %v1868, %v1888
      %v1892 = vadd.f32 %v1869, %v1888
      %v1893 = vadd.f32 %v1870, %v1888
      %v1894 = vadd.f32 %v1871, %v1888
      %v1895 = vadd.f32 %v1872, %v1888
      %v1896 = vadd.f32 %v1873, %v1888
      %v1897 = vadd.f32 %v1874, %v1888
      %v1898 = vadd.f32 %v1875, %v1888
      %v1899 = vadd.f32 %v1876, %v1888
      %v1900 = vadd.f32 %v1877, %v1888
      %v1901 = vadd.f32 %v1878, %v1888
      %v1902 = vadd.f32 %v1879, %v1888
      %v1903 = vadd.f32 %v1880, %v1888
      %v1904 = vadd.f32 %v1881, %v1888
      %v1905 = vadd.f32 %v1882, %v1888
      %v1906 = vmax.f32 %v1890, 0.0
      %v1907 = vmax.f32 %v1891, 0.0
      %v1908 = vmax.f32 %v1892, 0.0
      %v1909 = vmax.f32 %v1893, 0.0
      %v1910 = vmax.f32 %v1894, 0.0
      %v1911 = vmax.f32 %v1895, 0.0
      %v1912 = vmax.f32 %v1896, 0.0
      %v1913 = vmax.f32 %v1897, 0.0
      %v1914 = vmax.f32 %v1898, 0.0
      %v1915 = vmax.f32 %v1899, 0.0
      %v1916 = vmax.f32 %v1900, 0.0
      %v1917 = vmax.f32 %v1901, 0.0
      %v1918 = vmax.f32 %v1902, 0.0
      %v1919 = vmax.f32 %v1903, 0.0
      %v1920 = vmax.f32 %v1904, 0.0
      %v1921 = vmax.f32 %v1905, 0.0
      %v1922 = vpack.c.bf16 %v1907, %v1906
      %v1923 = vpack.c.bf16 %v1909, %v1908
      %v1924 = vpack.c.bf16 %v1911, %v1910
      %v1925 = vpack.c.bf16 %v1913, %v1912
      %v1926 = vpack.c.bf16 %v1915, %v1914
      %v1927 = vpack.c.bf16 %v1917, %v1916
      %v1928 = vpack.c.bf16 %v1919, %v1918
      %v1929 = vpack.c.bf16 %v1921, %v1920
      %v1938 = vunpack.c.l.b16 %v1922
      %v1939 = vunpack.c.h.b16 %v1922
      %v1940 = vunpack.c.l.b16 %v1923
      %v1941 = vunpack.c.h.b16 %v1923
      %v1942 = vunpack.c.l.b16 %v1924
      %v1943 = vunpack.c.h.b16 %v1924
      %v1944 = vunpack.c.l.b16 %v1925
      %v1945 = vunpack.c.h.b16 %v1925
      %v1946 = vunpack.c.l.b16 %v1926
      %v1947 = vunpack.c.h.b16 %v1926
      %v1948 = vunpack.c.l.b16 %v1927
      %v1949 = vunpack.c.h.b16 %v1927
      %v1950 = vunpack.c.l.b16 %v1928
      %v1951 = vunpack.c.h.b16 %v1928
      %v1952 = vunpack.c.l.b16 %v1929
      %v1953 = vunpack.c.h.b16 %v1929
      %v1954 = vpack.c.b16 %v1938, %v1938
      %v1955 = vpack.c.b16 %v1939, %v1939
      %v1956 = vpack.c.b16 %v1940, %v1940
      %v1957 = vpack.c.b16 %v1941, %v1941
      %v1958 = vpack.c.b16 %v1942, %v1942
      %v1959 = vpack.c.b16 %v1943, %v1943
      %v1960 = vpack.c.b16 %v1944, %v1944
      %v1961 = vpack.c.b16 %v1945, %v1945
      %v1962 = vpack.c.b16 %v1946, %v1946
      %v1963 = vpack.c.b16 %v1947, %v1947
      %v1964 = vpack.c.b16 %v1948, %v1948
      %v1965 = vpack.c.b16 %v1949, %v1949
      %v1966 = vpack.c.b16 %v1950, %v1950
      %v1967 = vpack.c.b16 %v1951, %v1951
      %v1968 = vpack.c.b16 %v1952, %v1952
      %v1969 = vpack.c.b16 %v1953, %v1953
      %vm1986 = vcmask 125952
      %1987 = vst.msk [vmem:[%s333] sm:$0xf] %vm1986, %v1954
      %1988 = vst.msk [vmem:[%s333 + $0x4] sm:$0xf] %vm1986, %v1955
      %1989 = vst.msk [vmem:[%s333 + $0x8] sm:$0xf] %vm1986, %v1956
      %1990 = vst.msk [vmem:[%s333 + $0xc] sm:$0xf] %vm1986, %v1957
      %1991 = vst.msk [vmem:[%s333 + $0x10] sm:$0xf] %vm1986, %v1958
      %1992 = vst.msk [vmem:[%s333 + $0x14] sm:$0xf] %vm1986, %v1959
      %1993 = vst.msk [vmem:[%s333 + $0x18] sm:$0xf] %vm1986, %v1960
      %1994 = vst.msk [vmem:[%s333 + $0x1c] sm:$0xf] %vm1986, %v1961
      %1995 = vst.msk [vmem:[%s333 + $0x20] sm:$0xf] %vm1986, %v1962
      %1996 = vst.msk [vmem:[%s333 + $0x24] sm:$0xf] %vm1986, %v1963
      %1997 = vst.msk [vmem:[%s333 + $0x28] sm:$0xf] %vm1986, %v1964
      %1998 = vst.msk [vmem:[%s333 + $0x2c] sm:$0xf] %vm1986, %v1965
      %1999 = vst.msk [vmem:[%s333 + $0x30] sm:$0xf] %vm1986, %v1966
      %2000 = vst.msk [vmem:[%s333 + $0x34] sm:$0xf] %vm1986, %v1967
      %2001 = vst.msk [vmem:[%s333 + $0x38] sm:$0xf] %vm1986, %v1968
      %2002 = vst.msk [vmem:[%s333 + $0x3c] sm:$0xf] %vm1986, %v1969
      %s2003 = smul.u32 16, %s21
      %p2004 = scmp.lt.s32.totalorder %s20, 1
      %s2005 = scalar_select %p2004, %s20, 1
      %p2006 = scmp.lt.s32.totalorder %s2003, 31
      %s2007 = scalar_select %p2006, %s2003, 31
      %s2008 = smul.addr %s2005, 32
      %s2009 = sadd.s32 %s2007, %s2008
      %s2010 = smul.addr %s2009, 4
      %s2011 = scalar_lea.vmem %s5, %s2010
      // Predicated region
      $region41: #{att_merge_forward.3} parent=39 // pred_check
        %p2012 = pneg %p174
      $region42: #{att_merge_forward.3} parent=39 // pred_check_branch
        %2014 = sbr.rel (%p2012) target = $region44
      $region43: #{att_merge_forward.3} parent=39 // pred_region
        %s2015 = smul.u32 16, %s21
      $region44: #{att_merge_forward.3} parent=39 // pred_fallthru
        _
    $region40: #{att_merge_forward.3} parent=5 // pred_fallthru
      _
    %p2016 = scmp.le.s32.totalorder 2, %s11
    // Predicated region
    $region45: #{att_merge_forward.3} parent=5 // pred_check
      %p2017 = pneg %p2016
    $region46: #{att_merge_forward.3} parent=5 // pred_check_branch
      %2019 = sbr.rel (%p2017) target = $region48
    $region47: #{att_merge_forward.3} parent=5 // pred_region
      %s2020 = ssub.s32 %s11, 2
      // Predicated region
      $region49: #{att_merge_forward.3} parent=47 // pred_check
        %p2021 = pneg %p180
      $region50: #{att_merge_forward.3} parent=47 // pred_check_branch
        %2023 = sbr.rel (%p2021) target = $region52
      $region51: #{att_merge_forward.3} parent=47 // pred_region
        %s2024 = smul.u32 16, %s23
        %p2025 = scmp.lt.s32.totalorder %s22, 1
        %s2026 = scalar_select %p2025, %s22, 1
        %p2027 = scmp.lt.s32.totalorder %s2024, 31
        %s2028 = scalar_select %p2027, %s2024, 31
        %s2029 = smul.addr %s2026, 32
        %s2030 = sadd.s32 %s2028, %s2029
        %s2031 = smul.addr %s2030, 4
        %s2032 = scalar_lea.vmem %s5, %s2031
      $region52: #{att_merge_forward.3} parent=47 // pred_fallthru
        _
    $region48: #{att_merge_forward.3} parent=5 // pred_fallthru
      _
  $region6: #{att_merge_forward.3} parent=0 // loop_footer
    %s15 = sadd.s32 1, %s11
  $region7: #{att_merge_forward.3} parent=0 // loop_footer_branch
    %10 = sbr.rel target = $region3
  $region8: #{att_merge_forward.3} parent=0 // loop_exit
    _

// kernel: att_merge_forward.4
$region0: #{att_merge_forward.4}
  #allocation0 [shape = 'u32[]', space=smem, size = 0x4, offset = 0x4, fixed_abs, tag = 'smem constant byte address 0x4 - core index']
  #allocation1 [shape = 'u32[144,128]{1,0:T(1,128)}', space=vmem, size = 0x12000, scoped, tag = 'internal scratch']
  #allocation2 [shape = 'f32[10,18,16]{2,1,0:T(8,128)}', space=vmem, size = 0x1e000, scoped, tag = 'scratch operand']
  %s0 = inlined_call_operand.vmem [shape: bf16[2,16,16,16], index: 0, kind: input, shape index: {}]
  %s1 = inlined_call_operand.vmem [shape: bf16[2,2,16,16], index: 1, kind: input, shape index: {}]
  %s2 = inlined_call_operand.vmem [shape: bf16[2,2,16,16], index: 2, kind: input, shape index: {}]
  %s3 = inlined_call_operand.vmem [shape: bf16[9,16,16], index: 3, kind: input, shape index: {}]
  %s4 = inlined_call_operand.vmem [shape: f32[1,16], index: 4, kind: input, shape index: {}]
  %s5 = inlined_call_operand.vmem [shape: bf16[2,256,16], index: 5, kind: output, shape index: {}]
  %s6 = sld [smem:[#allocation0]]
  $region53: #{att_merge_forward.4} parent=0
    _
  %s8 = ssub.s32 1, %s6
  %s9 = scalar_select 0, %s8, %s6
  loop: start=0, step=1, limit=6
  $region2: #{att_merge_forward.4} parent=0 // loop_pre_header
    _
  $region3: #{att_merge_forward.4} parent=0 // loop_header
    %s11 = sphi 0, %s15
    %p12 = scmp.ge.s32.totalorder %s11, 6
    %s18 = sphi 0, %s30
    %s19 = sphi 0, %s26
    %s20 = sphi 0, %s18
    %s21 = sphi 0, %s19
    %s22 = sphi 0, %s20
    %s23 = sphi 0, %s21
    %s35 = sphi 0, %s37
    %s38 = sphi 0, %s35
    %s39 = sphi 0, %s38
    %s55 = sphi 0, %s39
    %s63 = sphi 0, %s65
    %s66 = sphi 0, %s63
    %s67 = sphi 0, %s66
    %s83 = sphi 0, %s67
    %s91 = sphi 0, %s93
    %s94 = sphi 0, %s91
    %s95 = sphi 0, %s94
    %s111 = sphi 0, %s95
    %s115 = sphi 0, %s115
    %s117 = sphi 0, %s115
    %s118 = sphi 0, %s117
    %s132 = sphi 0, %s118
    %s136 = sphi 0, %s136
    %s138 = sphi 0, %s136
    %s139 = sphi 0, %s138
    %s153 = sphi 0, %s139
    %s161 = sphi 0, %s163
    %s164 = sphi 0, %s161
    %s165 = sphi 0, %s164
    %s181 = sphi 0, %s165
  $region4: #{att_merge_forward.4} parent=0 // loop_header_branch
    %14 = sbr.rel (%p12) target = $region8
  $region5: #{att_merge_forward.4} parent=0 // loop_body
    %s16 = ssub.s32 %s11, 1
    %s17 = ssub.s32 %s11, 2
    %s24 = sadd.s32 1, %s19
    %p25 = scmp.ge.s32.totalorder %s24, 2
    %s26 = scalar_select %p25, 0, %s24
    %s27 = sadd.s32 1, %s18
    %s28 = scalar_select %p25, %s27, %s18
    %p29 = scmp.ge.s32.totalorder %s28, 2
    %s30 = scalar_select %p29, 0, %s28
    %s31 = ssub.s32 %s18, %s30
    %s32 = ssub.s32 %s19, %s26
    %s33 = sor.u32 %s31, %s32
    %p34 = scmp.eq.s32.totalorder %s33, 0
    %s36 = sadd.s32 %s35, 1
    %s37 = scalar_select %p34, %s35, %s36
    %p40 = pneg %p34
    %p41 = scmp.eq.s32.totalorder %s11, 3
    %p42 = por %p40, %p41
    %p43 = scmp.ne.s32.totalorder %s35, %s38
    %p44 = scmp.eq.s32.totalorder %s11, 0
    %p45 = por %p43, %p44
    %p46 = scmp.ne.s32.totalorder %s35, %s38
    %p47 = scmp.eq.s32.totalorder %s16, 3
    %p48 = por %p46, %p47
    %p49 = scmp.ne.s32.totalorder %s38, %s39
    %p50 = scmp.eq.s32.totalorder %s16, 0
    %p51 = por %p49, %p50
    %p52 = scmp.ne.s32.totalorder %s38, %s39
    %p53 = scmp.eq.s32.totalorder %s17, 3
    %p54 = por %p52, %p53
    %p56 = scmp.ne.s32.totalorder %s39, %s55
    %p57 = scmp.eq.s32.totalorder %s17, 0
    %p58 = por %p56, %p57
    %s59 = ssub.s32 %s18, %s30
    %s60 = ssub.s32 %s19, %s26
    %s61 = sor.u32 %s59, %s60
    %p62 = scmp.eq.s32.totalorder %s61, 0
    %s64 = sadd.s32 %s63, 1
    %s65 = scalar_select %p62, %s63, %s64
    %p68 = pneg %p62
    %p69 = scmp.eq.s32.totalorder %s11, 3
    %p70 = por %p68, %p69
    %p71 = scmp.ne.s32.totalorder %s63, %s66
    %p72 = scmp.eq.s32.totalorder %s11, 0
    %p73 = por %p71, %p72
    %p74 = scmp.ne.s32.totalorder %s63, %s66
    %p75 = scmp.eq.s32.totalorder %s16, 3
    %p76 = por %p74, %p75
    %p77 = scmp.ne.s32.totalorder %s66, %s67
    %p78 = scmp.eq.s32.totalorder %s16, 0
    %p79 = por %p77, %p78
    %p80 = scmp.ne.s32.totalorder %s66, %s67
    %p81 = scmp.eq.s32.totalorder %s17, 3
    %p82 = por %p80, %p81
    %p84 = scmp.ne.s32.totalorder %s67, %s83
    %p85 = scmp.eq.s32.totalorder %s17, 0
    %p86 = por %p84, %p85
    %s87 = ssub.s32 %s18, %s30
    %s88 = ssub.s32 %s19, %s26
    %s89 = sor.u32 %s87, %s88
    %p90 = scmp.eq.s32.totalorder %s89, 0
    %s92 = sadd.s32 %s91, 1
    %s93 = scalar_select %p90, %s91, %s92
    %p96 = pneg %p90
    %p97 = scmp.eq.s32.totalorder %s11, 3
    %p98 = por %p96, %p97
    %p99 = scmp.ne.s32.totalorder %s91, %s94
    %p100 = scmp.eq.s32.totalorder %s11, 0
    %p101 = por %p99, %p100
    %p102 = scmp.ne.s32.totalorder %s91, %s94
    %p103 = scmp.eq.s32.totalorder %s16, 3
    %p104 = por %p102, %p103
    %p105 = scmp.ne.s32.totalorder %s94, %s95
    %p106 = scmp.eq.s32.totalorder %s16, 0
    %p107 = por %p105, %p106
    %p108 = scmp.ne.s32.totalorder %s94, %s95
    %p109 = scmp.eq.s32.totalorder %s17, 3
    %p110 = por %p108, %p109
    %p112 = scmp.ne.s32.totalorder %s95, %s111
    %p113 = scmp.eq.s32.totalorder %s17, 0
    %p114 = por %p112, %p113
    %s116 = sadd.s32 %s115, 1
    %p119 = scmp.eq.s32.totalorder %s11, 3
    %p120 = scmp.ne.s32.totalorder %s115, %s117
    %p121 = scmp.eq.s32.totalorder %s11, 0
    %p122 = por %p120, %p121
    %p123 = scmp.ne.s32.totalorder %s115, %s117
    %p124 = scmp.eq.s32.totalorder %s16, 3
    %p125 = por %p123, %p124
    %p126 = scmp.ne.s32.totalorder %s117, %s118
    %p127 = scmp.eq.s32.totalorder %s16, 0
    %p128 = por %p126, %p127
    %p129 = scmp.ne.s32.totalorder %s117, %s118
    %p130 = scmp.eq.s32.totalorder %s17, 3
    %p131 = por %p129, %p130
    %p133 = scmp.ne.s32.totalorder %s118, %s132
    %p134 = scmp.eq.s32.totalorder %s17, 0
    %p135 = por %p133, %p134
    %s137 = sadd.s32 %s136, 1
    %p140 = scmp.eq.s32.totalorder %s11, 3
    %p141 = scmp.ne.s32.totalorder %s136, %s138
    %p142 = scmp.eq.s32.totalorder %s11, 0
    %p143 = por %p141, %p142
    %p144 = scmp.ne.s32.totalorder %s136, %s138
    %p145 = scmp.eq.s32.totalorder %s16, 3
    %p146 = por %p144, %p145
    %p147 = scmp.ne.s32.totalorder %s138, %s139
    %p148 = scmp.eq.s32.totalorder %s16, 0
    %p149 = por %p147, %p148
    %p150 = scmp.ne.s32.totalorder %s138, %s139
    %p151 = scmp.eq.s32.totalorder %s17, 3
    %p152 = por %p150, %p151
    %p154 = scmp.ne.s32.totalorder %s139, %s153
    %p155 = scmp.eq.s32.totalorder %s17, 0
    %p156 = por %p154, %p155
    %s157 = ssub.s32 %s18, %s30
    %s158 = ssub.s32 %s19, %s26
    %s159 = sor.u32 %s157, %s158
    %p160 = scmp.eq.s32.totalorder %s159, 0
    %s162 = sadd.s32 %s161, 1
    %s163 = scalar_select %p160, %s161, %s162
    %p166 = pneg %p160
    %p167 = scmp.eq.s32.totalorder %s11, 3
    %p168 = por %p166, %p167
    %p169 = scmp.ne.s32.totalorder %s161, %s164
    %p170 = scmp.eq.s32.totalorder %s11, 0
    %p171 = por %p169, %p170
    %p172 = scmp.ne.s32.totalorder %s161, %s164
    %p173 = scmp.eq.s32.totalorder %s16, 3
    %p174 = por %p172, %p173
    %p175 = scmp.ne.s32.totalorder %s164, %s165
    %p176 = scmp.eq.s32.totalorder %s16, 0
    %p177 = por %p175, %p176
    %p178 = scmp.ne.s32.totalorder %s164, %s165
    %p179 = scmp.eq.s32.totalorder %s17, 3
    %p180 = por %p178, %p179
    %p182 = scmp.ne.s32.totalorder %s165, %s181
    %p183 = scmp.eq.s32.totalorder %s17, 0
    %p184 = por %p182, %p183
    %p185 = scmp.le.s32.totalorder 1, %s11
    %p186 = scmp.lt.s32.totalorder %s11, 5
    %p187 = pnand %p185, %p186
    %p188 = pneg %p187
    // Predicated region
    $region9: #{att_merge_forward.4} parent=5 // pred_check
      _
    $region10: #{att_merge_forward.4} parent=5 // pred_check_branch
      %190 = sbr.rel (%p187) target = $region12
    $region11: #{att_merge_forward.4} parent=5 // pred_region
      %s191 = ssub.s32 %s11, 1
      // Predicated region
      $region13: #{att_merge_forward.4} parent=11 // pred_check
        %p192 = pneg %p128
      $region14: #{att_merge_forward.4} parent=11 // pred_check_branch
        %194 = sbr.rel (%p192) target = $region16
      $region15: #{att_merge_forward.4} parent=11 // pred_region
        _
      $region16: #{att_merge_forward.4} parent=11 // pred_fallthru
        _
      // Predicated region
      $region17: #{att_merge_forward.4} parent=11 // pred_check
        %p195 = pneg %p149
      $region18: #{att_merge_forward.4} parent=11 // pred_check_branch
        %197 = sbr.rel (%p195) target = $region20
      $region19: #{att_merge_forward.4} parent=11 // pred_region
        _
      $region20: #{att_merge_forward.4} parent=11 // pred_fallthru
        _
    $region12: #{att_merge_forward.4} parent=5 // pred_fallthru
      _
    %p198 = scmp.lt.s32.totalorder %s11, 4
    // Predicated region
    $region21: #{att_merge_forward.4} parent=5 // pred_check
      %p199 = pneg %p198
    $region22: #{att_merge_forward.4} parent=5 // pred_check_branch
      %201 = sbr.rel (%p199) target = $region24
    $region23: #{att_merge_forward.4} parent=5 // pred_region
      // Predicated region
      $region25: #{att_merge_forward.4} parent=23 // pred_check
        %p202 = pneg %p45
      $region26: #{att_merge_forward.4} parent=23 // pred_check_branch
        %204 = sbr.rel (%p202) target = $region28
      $region27: #{att_merge_forward.4} parent=23 // pred_region
        %s205 = smul.u32 8, %s19
        %p206 = scmp.lt.s32.totalorder %s18, 1
        %s207 = scalar_select %p206, %s18, 1
        %p208 = scmp.lt.s32.totalorder %s205, 15
        %s209 = scalar_select %p208, %s205, 15
        %s210 = smul.addr %s209, 2
        %s211 = smul.addr %s207, 32
        %s212 = sadd.s32 %s210, %s211
        %s213 = smul.addr %s212, 4
        %s214 = scalar_lea.vmem %s0, %s213
        %s215 = smul.u32 8, %s19
      $region28: #{att_merge_forward.4} parent=23 // pred_fallthru
        _
      // Predicated region
      $region29: #{att_merge_forward.4} parent=23 // pred_check
        %p216 = pneg %p73
      $region30: #{att_merge_forward.4} parent=23 // pred_check_branch
        %218 = sbr.rel (%p216) target = $region32
      $region31: #{att_merge_forward.4} parent=23 // pred_region
        %p219 = scmp.lt.s32.totalorder %s18, 1
        %s220 = scalar_select %p219, %s18, 1
        %p221 = scmp.lt.s32.totalorder %s19, 1
        %s222 = scalar_select %p221, %s19, 1
        %s223 = smul.addr %s222, 2
        %s224 = smul.addr %s220, 4
        %s225 = sadd.s32 %s223, %s224
        %s226 = smul.addr %s225, 4
        %s227 = scalar_lea.vmem %s1, %s226
      $region32: #{att_merge_forward.4} parent=23 // pred_fallthru
        _
      // Predicated region
      $region33: #{att_merge_forward.4} parent=23 // pred_check
        %p228 = pneg %p101
      $region34: #{att_merge_forward.4} parent=23 // pred_check_branch
        %230 = sbr.rel (%p228) target = $region36
      $region35: #{att_merge_forward.4} parent=23 // pred_region
        %p231 = scmp.lt.s32.totalorder %s18, 1
        %s232 = scalar_select %p231, %s18, 1
        %p233 = scmp.lt.s32.totalorder %s19, 1
        %s234 = scalar_select %p233, %s19, 1
        %s235 = smul.addr %s234, 2
        %s236 = smul.addr %s232, 4
        %s237 = sadd.s32 %s235, %s236
        %s238 = smul.addr %s237, 4
        %s239 = scalar_lea.vmem %s2, %s238
      $region36: #{att_merge_forward.4} parent=23 // pred_fallthru
        _
    $region24: #{att_merge_forward.4} parent=5 // pred_fallthru
      _
    %p240 = scmp.le.s32.totalorder 1, %s11
    %p241 = scmp.lt.s32.totalorder %s11, 5
    %p242 = pnand %p240, %p241
    %p243 = pneg %p242
    // Predicated region
    $region37: #{att_merge_forward.4} parent=5 // pred_check
      _
    $region38: #{att_merge_forward.4} parent=5 // pred_check_branch
      %245 = sbr.rel (%p242) target = $region40
    $region39: #{att_merge_forward.4} parent=5 // pred_region
      %s246 = ssub.s32 %s11, 1
      %s247 = smul.u32 8, %s21
      %p248 = scmp.lt.s32.totalorder %s20, 1
      %s249 = scalar_select %p248, %s20, 1
      %p250 = scmp.lt.s32.totalorder %s247, 15
      %s251 = scalar_select %p250, %s247, 15
      %s252 = smul.addr %s251, 2
      %s253 = smul.addr %s249, 32
      %s254 = sadd.s32 %s252, %s253
      %s255 = smul.addr %s254, 4
      %s256 = scalar_lea.vmem %s0, %s255
      %p257 = pneg %p51
      %p258 = pneg %p48
      %p259 = scmp.lt.s32.totalorder %s20, 1
      %s260 = scalar_select %p259, %s20, 1
      %p261 = scmp.lt.s32.totalorder %s21, 1
      %s262 = scalar_select %p261, %s21, 1
      %s263 = smul.addr %s262, 2
      %s264 = smul.addr %s260, 4
      %s265 = sadd.s32 %s263, %s264
      %s266 = smul.addr %s265, 4
      %s267 = scalar_lea.vmem %s1, %s266
      %p268 = pneg %p79
      %p269 = pneg %p76
      %p270 = scmp.lt.s32.totalorder %s20, 1
      %s271 = scalar_select %p270, %s20, 1
      %p272 = scmp.lt.s32.totalorder %s21, 1
      %s273 = scalar_select %p272, %s21, 1
      %s274 = smul.addr %s273, 2
      %s275 = smul.addr %s271, 4
      %s276 = sadd.s32 %s274, %s275
      %s277 = smul.addr %s276, 4
      %s278 = scalar_lea.vmem %s2, %s277
      %p279 = pneg %p107
      %p280 = pneg %p104
      %p281 = pneg %p128
      %p282 = pneg %p125
      %p283 = pneg %p149
      %p284 = pneg %p146
      %p285 = pneg %p177
      %p286 = pneg %p174
      %s287 = smul.u32 16, %s21
      %p288 = scmp.lt.s32.totalorder %s20, 1
      %s289 = scalar_select %p288, %s20, 1
      %p290 = scmp.lt.s32.totalorder %s287, 31
      %s291 = scalar_select %p290, %s287, 31
      %s292 = smul.addr %s289, 32
      %s293 = sadd.s32 %s291, %s292
      %s294 = smul.addr %s293, 4
      %s295 = scalar_lea.vmem %s5, %s294
      %s296 = smul.u32 8, %s21
      %p297 = scmp.lt.s32.totalorder %s20, 1
      %s298 = scalar_select %p297, %s20, 1
      %p299 = scmp.lt.s32.totalorder %s296, 15
      %s300 = scalar_select %p299, %s296, 15
      %s301 = smul.addr %s300, 2
      %s302 = smul.addr %s298, 32
      %s303 = sadd.s32 %s301, %s302
      %s304 = smul.addr %s303, 4
      %s305 = scalar_lea.vmem %s0, %s304
      %s306 = smul.u32 8, %s21
      %p307 = scmp.lt.s32.totalorder %s20, 1
      %s308 = scalar_select %p307, %s20, 1
      %p309 = scmp.lt.s32.totalorder %s21, 1
      %s310 = scalar_select %p309, %s21, 1
      %s311 = smul.addr %s310, 2
      %s312 = smul.addr %s308, 4
      %s313 = sadd.s32 %s311, %s312
      %s314 = smul.addr %s313, 4
      %s315 = scalar_lea.vmem %s1, %s314
      %p316 = scmp.lt.s32.totalorder %s20, 1
      %s317 = scalar_select %p316, %s20, 1
      %p318 = scmp.lt.s32.totalorder %s21, 1
      %s319 = scalar_select %p318, %s21, 1
      %s320 = smul.addr %s319, 2
      %s321 = smul.addr %s317, 4
      %s322 = sadd.s32 %s320, %s321
      %s323 = smul.addr %s322, 4
      %s324 = scalar_lea.vmem %s2, %s323
      %s325 = smul.u32 16, %s21
      %p326 = scmp.lt.s32.totalorder %s20, 1
      %s327 = scalar_select %p326, %s20, 1
      %p328 = scmp.lt.s32.totalorder %s325, 31
      %s329 = scalar_select %p328, %s325, 31
      %s330 = smul.addr %s327, 32
      %s331 = sadd.s32 %s329, %s330
      %s332 = smul.addr %s331, 4
      %s333 = scalar_lea.vmem %s5, %s332
      %s334 = smul.u32 16, %s21
      %vm336 = vcmask 122880
      %337 = vst.msk [vmem:[#allocation2] sm:$0x1] %vm336, 0.0
      %338 = vst.msk [vmem:[#allocation2 + $0x18] sm:$0x1] %vm336, 0.0
      %339 = vst.msk [vmem:[#allocation2 + $0x30] sm:$0x1] %vm336, 0.0
      %340 = vst.msk [vmem:[#allocation2 + $0x48] sm:$0x1] %vm336, 0.0
      %341 = vst.msk [vmem:[#allocation2 + $0x60] sm:$0x1] %vm336, 0.0
      %342 = vst.msk [vmem:[#allocation2 + $0x78] sm:$0x1] %vm336, 0.0
      %343 = vst.msk [vmem:[#allocation2 + $0x90] sm:$0x1] %vm336, 0.0
      %344 = vst.msk [vmem:[#allocation2 + $0xa8] sm:$0x1] %vm336, 0.0
      %345 = vst.msk [vmem:[#allocation2 + $0xc0] sm:$0x1] %vm336, 0.0
      %346 = vst.msk [vmem:[#allocation2 + $0xd8] sm:$0x1] %vm336, 0.0
      %347 = vst.msk [vmem:[#allocation2 + $0x11] sm:$0x1] %vm336, 0.0
      %348 = vst.msk [vmem:[#allocation2 + $0x29] sm:$0x1] %vm336, 0.0
      %349 = vst.msk [vmem:[#allocation2 + $0x41] sm:$0x1] %vm336, 0.0
      %350 = vst.msk [vmem:[#allocation2 + $0x59] sm:$0x1] %vm336, 0.0
      %351 = vst.msk [vmem:[#allocation2 + $0x71] sm:$0x1] %vm336, 0.0
      %352 = vst.msk [vmem:[#allocation2 + $0x89] sm:$0x1] %vm336, 0.0
      %353 = vst.msk [vmem:[#allocation2 + $0xa1] sm:$0x1] %vm336, 0.0
      %354 = vst.msk [vmem:[#allocation2 + $0xb9] sm:$0x1] %vm336, 0.0
      %355 = vst.msk [vmem:[#allocation2 + $0xd1] sm:$0x1] %vm336, 0.0
      %356 = vst.msk [vmem:[#allocation2 + $0xe9] sm:$0x1] %vm336, 0.0
      %v357 = vld [vmem:[%s315] sm:$0xf]
      %v358 = vld [vmem:[%s315 + $0x4] sm:$0xf]
      %v359 = vunpack.c.l.bf16 %v357
      %v360 = vunpack.c.l.bf16 %v358
      %vm361 = vcmask 130048
      %362 = vst.msk [vmem:[#allocation2 + $0x1] sm:$0xff] %vm361, %v359
      %363 = vst.msk [vmem:[#allocation2 + $0x9] sm:$0xff] %vm361, %v360
      %v364 = vld [vmem:[%s324] sm:$0xf]
      %v365 = vld [vmem:[%s324 + $0x4] sm:$0xf]
      %v366 = vunpack.c.l.bf16 %v364
      %v367 = vunpack.c.l.bf16 %v365
      %s368 = scalar_lea.vmem [#allocation2], 216
      %369 = vst.msk [vmem:[%s368 + $0x1] sm:$0xff] %vm361, %v366
      %370 = vst.msk [vmem:[%s368 + $0x9] sm:$0xff] %vm361, %v367
      %v371 = vld [vmem:[%s305] sm:$0xf]
      %v372 = vld [vmem:[%s305 + $0x4] sm:$0xf]
      %v373 = vld [vmem:[%s305 + $0x8] sm:$0xf]
      %v374 = vld [vmem:[%s305 + $0xc] sm:$0xf]
      %v375 = vld [vmem:[%s305 + $0x10] sm:$0xf]
      %v376 = vld [vmem:[%s305 + $0x14] sm:$0xf]
      %v377 = vld [vmem:[%s305 + $0x18] sm:$0xf]
      %v378 = vld [vmem:[%s305 + $0x1c] sm:$0xf]
      %v379 = vld [vmem:[%s305 + $0x20] sm:$0xf]
      %v380 = vld [vmem:[%s305 + $0x24] sm:$0xf]
      %v381 = vld [vmem:[%s305 + $0x28] sm:$0xf]
      %v382 = vld [vmem:[%s305 + $0x2c] sm:$0xf]
      %v383 = vld [vmem:[%s305 + $0x30] sm:$0xf]
      %v384 = vld [vmem:[%s305 + $0x34] sm:$0xf]
      %v385 = vld [vmem:[%s305 + $0x38] sm:$0xf]
      %v386 = vld [vmem:[%s305 + $0x3c] sm:$0xf]
      %v387 = vunpack.c.l.bf16 %v371
      %v388 = vunpack.c.l.bf16 %v372
      %v389 = vunpack.c.l.bf16 %v373
      %v390 = vunpack.c.l.bf16 %v374
      %v391 = vunpack.c.l.bf16 %v375
      %v392 = vunpack.c.l.bf16 %v376
      %v393 = vunpack.c.l.bf16 %v377
      %v394 = vunpack.c.l.bf16 %v378
      %v395 = vunpack.c.l.bf16 %v379
      %v396 = vunpack.c.l.bf16 %v380
      %v397 = vunpack.c.l.bf16 %v381
      %v398 = vunpack.c.l.bf16 %v382
      %v399 = vunpack.c.l.bf16 %v383
      %v400 = vunpack.c.l.bf16 %v384
      %v401 = vunpack.c.l.bf16 %v385
      %v402 = vunpack.c.l.bf16 %v386
      %s403 = scalar_lea.vmem [#allocation2], 24
      %404 = vst.msk [vmem:[%s403 + $0x1] sm:$0xff] %vm361, %v387
      %405 = vst.msk [vmem:[%s403 + $0x9] sm:$0xff] %vm361, %v388
      %406 = vst.msk [vmem:[%s403 + $0x19] sm:$0xff] %vm361, %v389
      %407 = vst.msk [vmem:[%s403 + $0x21] sm:$0xff] %vm361, %v390
      %408 = vst.msk [vmem:[%s403 + $0x31] sm:$0xff] %vm361, %v391
      %409 = vst.msk [vmem:[%s403 + $0x39] sm:$0xff] %vm361, %v392
      %410 = vst.msk [vmem:[%s403 + $0x49] sm:$0xff] %vm361, %v393
      %411 = vst.msk [vmem:[%s403 + $0x51] sm:$0xff] %vm361, %v394
      %412 = vst.msk [vmem:[%s403 + $0x61] sm:$0xff] %vm361, %v395
      %413 = vst.msk [vmem:[%s403 + $0x69] sm:$0xff] %vm361, %v396
      %414 = vst.msk [vmem:[%s403 + $0x79] sm:$0xff] %vm361, %v397
      %415 = vst.msk [vmem:[%s403 + $0x81] sm:$0xff] %vm361, %v398
      %416 = vst.msk [vmem:[%s403 + $0x91] sm:$0xff] %vm361, %v399
      %417 = vst.msk [vmem:[%s403 + $0x99] sm:$0xff] %vm361, %v400
      %418 = vst.msk [vmem:[%s403 + $0xa9] sm:$0xff] %vm361, %v401
      %419 = vst.msk [vmem:[%s403 + $0xb1] sm:$0xff] %vm361, %v402
      %v420 = vld [vmem:[#allocation2] sm:$0xff]
      %v421 = vld [vmem:[#allocation2 + $0x8] sm:$0xff]
      %v422 = vld [vmem:[#allocation2 + $0x18] sm:$0xff]
      %v423 = vld [vmem:[#allocation2 + $0x20] sm:$0xff]
      %v424 = vld [vmem:[#allocation2 + $0x30] sm:$0xff]
      %v425 = vld [vmem:[#allocation2 + $0x38] sm:$0xff]
      %v426 = vld [vmem:[#allocation2 + $0x48] sm:$0xff]
      %v427 = vld [vmem:[#allocation2 + $0x50] sm:$0xff]
      %v428 = vld [vmem:[#allocation2 + $0x60] sm:$0xff]
      %v429 = vld [vmem:[#allocation2 + $0x68] sm:$0xff]
      %v430 = vld [vmem:[#allocation2 + $0x78] sm:$0xff]
      %v431 = vld [vmem:[#allocation2 + $0x80] sm:$0xff]
      %v432 = vld [vmem:[#allocation2 + $0x90] sm:$0xff]
      %v433 = vld [vmem:[#allocation2 + $0x98] sm:$0xff]
      %v434 = vld [vmem:[#allocation2 + $0xa8] sm:$0xff]
      %v435 = vld [vmem:[#allocation2 + $0xb0] sm:$0xff]
      %v436 = vpack.c.bf16 %v421, %v420
      %v437 = vpack.c.bf16 %v423, %v422
      %v438 = vpack.c.bf16 %v425, %v424
      %v439 = vpack.c.bf16 %v427, %v426
      %v440 = vpack.c.bf16 %v429, %v428
      %v441 = vpack.c.bf16 %v431, %v430
      %v442 = vpack.c.bf16 %v433, %v432
      %v443 = vpack.c.bf16 %v435, %v434
      %v444 = vld [vmem:[%s3] sm:$0xf]
      %v445 = vld [vmem:[%s3 + $0x4] sm:$0xf]
      %v446 = vld [vmem:[#allocation2 + $0x1] sm:$0xff]
      %v447 = vld [vmem:[#allocation2 + $0x9] sm:$0xff]
      %v448 = vld [vmem:[#allocation2 + $0x19] sm:$0xff]
      %v449 = vld [vmem:[#allocation2 + $0x21] sm:$0xff]
      %v450 = vld [vmem:[#allocation2 + $0x31] sm:$0xff]
      %v451 = vld [vmem:[#allocation2 + $0x39] sm:$0xff]
      %v452 = vld [vmem:[#allocation2 + $0x49] sm:$0xff]
      %v453 = vld [vmem:[#allocation2 + $0x51] sm:$0xff]
      %v454 = vld [vmem:[#allocation2 + $0x61] sm:$0xff]
      %v455 = vld [vmem:[#allocation2 + $0x69] sm:$0xff]
      %v456 = vld [vmem:[#allocation2 + $0x79] sm:$0xff]
      %v457 = vld [vmem:[#allocation2 + $0x81] sm:$0xff]
      %v458 = vld [vmem:[#allocation2 + $0x91] sm:$0xff]
      %v459 = vld [vmem:[#allocation2 + $0x99] sm:$0xff]
      %v460 = vld [vmem:[#allocation2 + $0xa9] sm:$0xff]
      %v461 = vld [vmem:[#allocation2 + $0xb1] sm:$0xff]
      %v462 = vpack.c.bf16 %v447, %v446
      %v463 = vpack.c.bf16 %v449, %v448
      %v464 = vpack.c.bf16 %v451, %v450
      %v465 = vpack.c.bf16 %v453, %v452
      %v466 = vpack.c.bf16 %v455, %v454
      %v467 = vpack.c.bf16 %v457, %v456
      %v468 = vpack.c.bf16 %v459, %v458
      %v469 = vpack.c.bf16 %v461, %v460
      %s470 = scalar_lea.vmem %s3, 8
      %v471 = vld [vmem:[%s470] sm:$0xf]
      %v472 = vld [vmem:[%s470 + $0x4] sm:$0xf]
      %v475 = vunpack.c.l.b16 %v471
      %v476 = vunpack.c.l.b16 %v472
      %v477 = vpack.c.b16 %v476, %v475
      %v480 = vsel %vm361, %v462, 0
      %v483 = vsel %vm361, %v463, 0
      %v486 = vsel %vm361, %v464, 0
      %v489 = vsel %vm361, %v465, 0
      %v492 = vsel %vm361, %v466, 0
      %v495 = vsel %vm361, %v467, 0
      %v498 = vsel %vm361, %v468, 0
      %v501 = vsel %vm361, %v469, 0
      %503 = vmatprep.subr.bf16.mxu0 0
      %504 = vmatpush1.bf16.msra.mxu0 0
      %505 = vmatprep.subr.bf16.mxu0 0
      %506 = vmatpush1.bf16.msra.mxu0 0
      %507 = vmatprep.subr.bf16.mxu0 0
      %508 = vmatpush1.bf16.msra.mxu0 0
      %509 = vmatprep.subr.bf16.mxu0 0
      %510 = vmatpush1.bf16.msra.mxu0 0
      %511 = vmatprep.subr.bf16.mxu0 0
      %512 = vmatpush1.bf16.msra.mxu0 0
      %513 = vmatprep.subr.bf16.mxu0 0
      %514 = vmatpush1.bf16.msra.mxu0 0
      %515 = vmatprep.subr.bf16.mxu0 0
      %516 = vmatpush1.bf16.msra.mxu0 0
      %517 = vmatprep.subr.bf16.mxu0 0
      %518 = vmatpush1.bf16.msra.mxu0 %v477
      %519 = vmatprep.subr.bf16.mxu0 0
      %520 = vmatpush2.bf16.msra.mxu0 0
      %521 = vmatprep.subr.bf16.mxu0 0
      %522 = vmatpush2.bf16.msra.mxu0 0
      %523 = vmatprep.subr.bf16.mxu0 0
      %524 = vmatpush2.bf16.msra.mxu0 0
      %525 = vmatprep.subr.bf16.mxu0 0
      %526 = vmatpush2.bf16.msra.mxu0 0
      %527 = vmatprep.subr.bf16.mxu0 0
      %528 = vmatpush2.bf16.msra.mxu0 0
      %529 = vmatprep.subr.bf16.mxu0 0
      %530 = vmatpush2.bf16.msra.mxu0 0
      %531 = vmatprep.subr.bf16.mxu0 0
      %532 = vmatpush2.bf16.msra.mxu0 0
      %533 = vmatprep.subr.bf16.mxu0 0
      %534 = vmatpush2.bf16.msra.mxu0 0
      %535 = vmatprep.mubr.bf16.mxu0 0
      %536 = vmatmul.mubr.bf16.gmra.mxu0 %v480
      %v537 = vpop.f32.mrf.mxu0
      %v538 = vadd.f32 0.0, %v537
      %v539 = vpop.f32.mrf.mxu0
      %v540 = vpop.f32.mrf.mxu0
      %v541 = vadd.f32 0.0, %v540
      %v542 = vpop.f32.mrf.mxu0
      %543 = vmatprep.mubr.bf16.mxu0 0
      %544 = vmatmul.mubr.bf16.gmra.mxu0 %v483
      %v545 = vpop.f32.mrf.mxu0
      %v546 = vadd.f32 0.0, %v545
      %v547 = vpop.f32.mrf.mxu0
      %v548 = vpop.f32.mrf.mxu0
      %v549 = vadd.f32 0.0, %v548
      %v550 = vpop.f32.mrf.mxu0
      %551 = vmatprep.mubr.bf16.mxu0 0
      %552 = vmatmul.mubr.bf16.gmra.mxu0 %v486
      %v553 = vpop.f32.mrf.mxu0
      %v554 = vadd.f32 0.0, %v553
      %v555 = vpop.f32.mrf.mxu0
      %v556 = vpop.f32.mrf.mxu0
      %v557 = vadd.f32 0.0, %v556
      %v558 = vpop.f32.mrf.mxu0
      %559 = vmatprep.mubr.bf16.mxu0 0
      %560 = vmatmul.mubr.bf16.gmra.mxu0 %v489
      %v561 = vpop.f32.mrf.mxu0
      %v562 = vadd.f32 0.0, %v561
      %v563 = vpop.f32.mrf.mxu0
      %v564 = vpop.f32.mrf.mxu0
      %v565 = vadd.f32 0.0, %v564
      %v566 = vpop.f32.mrf.mxu0
      %567 = vmatprep.mubr.bf16.mxu0 0
      %568 = vmatmul.mubr.bf16.gmra.mxu0 %v492
      %v569 = vpop.f32.mrf.mxu0
      %v570 = vadd.f32 0.0, %v569
      %v571 = vpop.f32.mrf.mxu0
      %v572 = vpop.f32.mrf.mxu0
      %v573 = vadd.f32 0.0, %v572
      %v574 = vpop.f32.mrf.mxu0
      %575 = vmatprep.mubr.bf16.mxu0 0
      %576 = vmatmul.mubr.bf16.gmra.mxu0 %v495
      %v577 = vpop.f32.mrf.mxu0
      %v578 = vadd.f32 0.0, %v577
      %v579 = vpop.f32.mrf.mxu0
      %v580 = vpop.f32.mrf.mxu0
      %v581 = vadd.f32 0.0, %v580
      %v582 = vpop.f32.mrf.mxu0
      %583 = vmatprep.mubr.bf16.mxu0 0
      %584 = vmatmul.mubr.bf16.gmra.mxu0 %v498
      %v585 = vpop.f32.mrf.mxu0
      %v586 = vadd.f32 0.0, %v585
      %v587 = vpop.f32.mrf.mxu0
      %v588 = vpop.f32.mrf.mxu0
      %v589 = vadd.f32 0.0, %v588
      %v590 = vpop.f32.mrf.mxu0
      %591 = vmatprep.mubr.bf16.mxu0 0
      %592 = vmatmul.mubr.bf16.gmra.mxu0 %v501
      %v593 = vpop.f32.mrf.mxu0
      %v594 = vadd.f32 0.0, %v593
      %v595 = vpop.f32.mrf.mxu0
      %v596 = vpop.f32.mrf.mxu0
      %v597 = vadd.f32 0.0, %v596
      %v598 = vpop.f32.mrf.mxu0
      %599 = vdwg.mxu0
      %v602 = vunpack.c.l.b16 %v444
      %v603 = vunpack.c.l.b16 %v445
      %v604 = vpack.c.b16 %v603, %v602
      %v607 = vsel %vm361, %v436, 0
      %v610 = vsel %vm361, %v437, 0
      %v613 = vsel %vm361, %v438, 0
      %v616 = vsel %vm361, %v439, 0
      %v619 = vsel %vm361, %v440, 0
      %v622 = vsel %vm361, %v441, 0
      %v625 = vsel %vm361, %v442, 0
      %v628 = vsel %vm361, %v443, 0
      %630 = vmatprep.subr.bf16.mxu0 0
      %631 = vmatpush1.bf16.msra.mxu0 0
      %632 = vmatprep.subr.bf16.mxu0 0
      %633 = vmatpush1.bf16.msra.mxu0 0
      %634 = vmatprep.subr.bf16.mxu0 0
      %635 = vmatpush1.bf16.msra.mxu0 0
      %636 = vmatprep.subr.bf16.mxu0 0
      %637 = vmatpush1.bf16.msra.mxu0 0
      %638 = vmatprep.subr.bf16.mxu0 0
      %639 = vmatpush1.bf16.msra.mxu0 0
      %640 = vmatprep.subr.bf16.mxu0 0
      %641 = vmatpush1.bf16.msra.mxu0 0
      %642 = vmatprep.subr.bf16.mxu0 0
      %643 = vmatpush1.bf16.msra.mxu0 0
      %644 = vmatprep.subr.bf16.mxu0 0
      %645 = vmatpush1.bf16.msra.mxu0 %v604
      %646 = vmatprep.subr.bf16.mxu0 0
      %647 = vmatpush2.bf16.msra.mxu0 0
      %648 = vmatprep.subr.bf16.mxu0 0
      %649 = vmatpush2.bf16.msra.mxu0 0
      %650 = vmatprep.subr.bf16.mxu0 0
      %651 = vmatpush2.bf16.msra.mxu0 0
      %652 = vmatprep.subr.bf16.mxu0 0
      %653 = vmatpush2.bf16.msra.mxu0 0
      %654 = vmatprep.subr.bf16.mxu0 0
      %655 = vmatpush2.bf16.msra.mxu0 0
      %656 = vmatprep.subr.bf16.mxu0 0
      %657 = vmatpush2.bf16.msra.mxu0 0
      %658 = vmatprep.subr.bf16.mxu0 0
      %659 = vmatpush2.bf16.msra.mxu0 0
      %660 = vmatprep.subr.bf16.mxu0 0
      %661 = vmatpush2.bf16.msra.mxu0 0
      %662 = vmatprep.mubr.bf16.mxu0 0
      %663 = vmatmul.mubr.bf16.gmra.mxu0 %v607
      %v664 = vpop.f32.mrf.mxu0
      %v665 = vadd.f32 %v538, %v664
      %v666 = vpop.f32.mrf.mxu0
      %v667 = vpop.f32.mrf.mxu0
      %v668 = vadd.f32 %v541, %v667
      %v669 = vpop.f32.mrf.mxu0
      %670 = vmatprep.mubr.bf16.mxu0 0
      %671 = vmatmul.mubr.bf16.gmra.mxu0 %v610
      %v672 = vpop.f32.mrf.mxu0
      %v673 = vadd.f32 %v546, %v672
      %v674 = vpop.f32.mrf.mxu0
      %v675 = vpop.f32.mrf.mxu0
      %v676 = vadd.f32 %v549, %v675
      %v677 = vpop.f32.mrf.mxu0
      %678 = vmatprep.mubr.bf16.mxu0 0
      %679 = vmatmul.mubr.bf16.gmra.mxu0 %v613
      %v680 = vpop.f32.mrf.mxu0
      %v681 = vadd.f32 %v554, %v680
      %v682 = vpop.f32.mrf.mxu0
      %v683 = vpop.f32.mrf.mxu0
      %v684 = vadd.f32 %v557, %v683
      %v685 = vpop.f32.mrf.mxu0
      %686 = vmatprep.mubr.bf16.mxu0 0
      %687 = vmatmul.mubr.bf16.gmra.mxu0 %v616
      %v688 = vpop.f32.mrf.mxu0
      %v689 = vadd.f32 %v562, %v688
      %v690 = vpop.f32.mrf.mxu0
      %v691 = vpop.f32.mrf.mxu0
      %v692 = vadd.f32 %v565, %v691
      %v693 = vpop.f32.mrf.mxu0
      %694 = vmatprep.mubr.bf16.mxu0 0
      %695 = vmatmul.mubr.bf16.gmra.mxu0 %v619
      %v696 = vpop.f32.mrf.mxu0
      %v697 = vadd.f32 %v570, %v696
      %v698 = vpop.f32.mrf.mxu0
      %v699 = vpop.f32.mrf.mxu0
      %v700 = vadd.f32 %v573, %v699
      %v701 = vpop.f32.mrf.mxu0
      %702 = vmatprep.mubr.bf16.mxu0 0
      %703 = vmatmul.mubr.bf16.gmra.mxu0 %v622
      %v704 = vpop.f32.mrf.mxu0
      %v705 = vadd.f32 %v578, %v704
      %v706 = vpop.f32.mrf.mxu0
      %v707 = vpop.f32.mrf.mxu0
      %v708 = vadd.f32 %v581, %v707
      %v709 = vpop.f32.mrf.mxu0
      %710 = vmatprep.mubr.bf16.mxu0 0
      %711 = vmatmul.mubr.bf16.gmra.mxu0 %v625
      %v712 = vpop.f32.mrf.mxu0
      %v713 = vadd.f32 %v586, %v712
      %v714 = vpop.f32.mrf.mxu0
      %v715 = vpop.f32.mrf.mxu0
      %v716 = vadd.f32 %v589, %v715
      %v717 = vpop.f32.mrf.mxu0
      %718 = vmatprep.mubr.bf16.mxu0 0
      %719 = vmatmul.mubr.bf16.gmra.mxu0 %v628
      %v720 = vpop.f32.mrf.mxu0
      %v721 = vadd.f32 %v594, %v720
      %v722 = vpop.f32.mrf.mxu0
      %v723 = vpop.f32.mrf.mxu0
      %v724 = vadd.f32 %v597, %v723
      %v725 = vpop.f32.mrf.mxu0
      %726 = vdwg.mxu0
      %v727 = vld [vmem:[#allocation2 + $0x2] sm:$0xff]
      %v728 = vld [vmem:[#allocation2 + $0xa] sm:$0xff]
      %v729 = vld [vmem:[#allocation2 + $0x1a] sm:$0xff]
      %v730 = vld [vmem:[#allocation2 + $0x22] sm:$0xff]
      %v731 = vld [vmem:[#allocation2 + $0x32] sm:$0xff]
      %v732 = vld [vmem:[#allocation2 + $0x3a] sm:$0xff]
      %v733 = vld [vmem:[#allocation2 + $0x4a] sm:$0xff]
      %v734 = vld [vmem:[#allocation2 + $0x52] sm:$0xff]
      %v735 = vld [vmem:[#allocation2 + $0x62] sm:$0xff]
      %v736 = vld [vmem:[#allocation2 + $0x6a] sm:$0xff]
      %v737 = vld [vmem:[#allocation2 + $0x7a] sm:$0xff]
      %v738 = vld [vmem:[#allocation2 + $0x82] sm:$0xff]
      %v739 = vld [vmem:[#allocation2 + $0x92] sm:$0xff]
      %v740 = vld [vmem:[#allocation2 + $0x9a] sm:$0xff]
      %v741 = vld [vmem:[#allocation2 + $0xaa] sm:$0xff]
      %v742 = vld [vmem:[#allocation2 + $0xb2] sm:$0xff]
      %v743 = vpack.c.bf16 %v728, %v727
      %v744 = vpack.c.bf16 %v730, %v729
      %v745 = vpack.c.bf16 %v732, %v731
      %v746 = vpack.c.bf16 %v734, %v733
      %v747 = vpack.c.bf16 %v736, %v735
      %v748 = vpack.c.bf16 %v738, %v737
      %v749 = vpack.c.bf16 %v740, %v739
      %v750 = vpack.c.bf16 %v742, %v741
      %s751 = scalar_lea.vmem %s3, 16
      %v752 = vld [vmem:[%s751] sm:$0xf]
      %v753 = vld [vmem:[%s751 + $0x4] sm:$0xf]
      %v756 = vunpack.c.l.b16 %v752
      %v757 = vunpack.c.l.b16 %v753
      %v758 = vpack.c.b16 %v757, %v756
      %v761 = vsel %vm361, %v743, 0
      %v764 = vsel %vm361, %v744, 0
      %v767 = vsel %vm361, %v745, 0
      %v770 = vsel %vm361, %v746, 0
      %v773 = vsel %vm361, %v747, 0
      %v776 = vsel %vm361, %v748, 0
      %v779 = vsel %vm361, %v749, 0
      %v782 = vsel %vm361, %v750, 0
      %784 = vmatprep.subr.bf16.mxu0 0
      %785 = vmatpush1.bf16.msra.mxu0 0
      %786 = vmatprep.subr.bf16.mxu0 0
      %787 = vmatpush1.bf16.msra.mxu0 0
      %788 = vmatprep.subr.bf16.mxu0 0
      %789 = vmatpush1.bf16.msra.mxu0 0
      %790 = vmatprep.subr.bf16.mxu0 0
      %791 = vmatpush1.bf16.msra.mxu0 0
      %792 = vmatprep.subr.bf16.mxu0 0
      %793 = vmatpush1.bf16.msra.mxu0 0
      %794 = vmatprep.subr.bf16.mxu0 0
      %795 = vmatpush1.bf16.msra.mxu0 0
      %796 = vmatprep.subr.bf16.mxu0 0
      %797 = vmatpush1.bf16.msra.mxu0 0
      %798 = vmatprep.subr.bf16.mxu0 0
      %799 = vmatpush1.bf16.msra.mxu0 %v758
      %800 = vmatprep.subr.bf16.mxu0 0
      %801 = vmatpush2.bf16.msra.mxu0 0
      %802 = vmatprep.subr.bf16.mxu0 0
      %803 = vmatpush2.bf16.msra.mxu0 0
      %804 = vmatprep.subr.bf16.mxu0 0
      %805 = vmatpush2.bf16.msra.mxu0 0
      %806 = vmatprep.subr.bf16.mxu0 0
      %807 = vmatpush2.bf16.msra.mxu0 0
      %808 = vmatprep.subr.bf16.mxu0 0
      %809 = vmatpush2.bf16.msra.mxu0 0
      %810 = vmatprep.subr.bf16.mxu0 0
      %811 = vmatpush2.bf16.msra.mxu0 0
      %812 = vmatprep.subr.bf16.mxu0 0
      %813 = vmatpush2.bf16.msra.mxu0 0
      %814 = vmatprep.subr.bf16.mxu0 0
      %815 = vmatpush2.bf16.msra.mxu0 0
      %816 = vmatprep.mubr.bf16.mxu0 0
      %817 = vmatmul.mubr.bf16.gmra.mxu0 %v761
      %v818 = vpop.f32.mrf.mxu0
      %v819 = vadd.f32 0.0, %v818
      %v820 = vpop.f32.mrf.mxu0
      %v821 = vpop.f32.mrf.mxu0
      %v822 = vadd.f32 0.0, %v821
      %v823 = vpop.f32.mrf.mxu0
      %824 = vmatprep.mubr.bf16.mxu0 0
      %825 = vmatmul.mubr.bf16.gmra.mxu0 %v764
      %v826 = vpop.f32.mrf.mxu0
      %v827 = vadd.f32 0.0, %v826
      %v828 = vpop.f32.mrf.mxu0
      %v829 = vpop.f32.mrf.mxu0
      %v830 = vadd.f32 0.0, %v829
      %v831 = vpop.f32.mrf.mxu0
      %832 = vmatprep.mubr.bf16.mxu0 0
      %833 = vmatmul.mubr.bf16.gmra.mxu0 %v767
      %v834 = vpop.f32.mrf.mxu0
      %v835 = vadd.f32 0.0, %v834
      %v836 = vpop.f32.mrf.mxu0
      %v837 = vpop.f32.mrf.mxu0
      %v838 = vadd.f32 0.0, %v837
      %v839 = vpop.f32.mrf.mxu0
      %840 = vmatprep.mubr.bf16.mxu0 0
      %841 = vmatmul.mubr.bf16.gmra.mxu0 %v770
      %v842 = vpop.f32.mrf.mxu0
      %v843 = vadd.f32 0.0, %v842
      %v844 = vpop.f32.mrf.mxu0
      %v845 = vpop.f32.mrf.mxu0
      %v846 = vadd.f32 0.0, %v845
      %v847 = vpop.f32.mrf.mxu0
      %848 = vmatprep.mubr.bf16.mxu0 0
      %849 = vmatmul.mubr.bf16.gmra.mxu0 %v773
      %v850 = vpop.f32.mrf.mxu0
      %v851 = vadd.f32 0.0, %v850
      %v852 = vpop.f32.mrf.mxu0
      %v853 = vpop.f32.mrf.mxu0
      %v854 = vadd.f32 0.0, %v853
      %v855 = vpop.f32.mrf.mxu0
      %856 = vmatprep.mubr.bf16.mxu0 0
      %857 = vmatmul.mubr.bf16.gmra.mxu0 %v776
      %v858 = vpop.f32.mrf.mxu0
      %v859 = vadd.f32 0.0, %v858
      %v860 = vpop.f32.mrf.mxu0
      %v861 = vpop.f32.mrf.mxu0
      %v862 = vadd.f32 0.0, %v861
      %v863 = vpop.f32.mrf.mxu0
      %864 = vmatprep.mubr.bf16.mxu0 0
      %865 = vmatmul.mubr.bf16.gmra.mxu0 %v779
      %v866 = vpop.f32.mrf.mxu0
      %v867 = vadd.f32 0.0, %v866
      %v868 = vpop.f32.mrf.mxu0
      %v869 = vpop.f32.mrf.mxu0
      %v870 = vadd.f32 0.0, %v869
      %v871 = vpop.f32.mrf.mxu0
      %872 = vmatprep.mubr.bf16.mxu0 0
      %873 = vmatmul.mubr.bf16.gmra.mxu0 %v782
      %v874 = vpop.f32.mrf.mxu0
      %v875 = vadd.f32 0.0, %v874
      %v876 = vpop.f32.mrf.mxu0
      %v877 = vpop.f32.mrf.mxu0
      %v878 = vadd.f32 0.0, %v877
      %v879 = vpop.f32.mrf.mxu0
      %880 = vdwg.mxu0
      %v881 = vadd.f32 %v665, %v819
      %v882 = vadd.f32 %v668, %v822
      %v883 = vadd.f32 %v673, %v827
      %v884 = vadd.f32 %v676, %v830
      %v885 = vadd.f32 %v681, %v835
      %v886 = vadd.f32 %v684, %v838
      %v887 = vadd.f32 %v689, %v843
      %v888 = vadd.f32 %v692, %v846
      %v889 = vadd.f32 %v697, %v851
      %v890 = vadd.f32 %v700, %v854
      %v891 = vadd.f32 %v705, %v859
      %v892 = vadd.f32 %v708, %v862
      %v893 = vadd.f32 %v713, %v867
      %v894 = vadd.f32 %v716, %v870
      %v895 = vadd.f32 %v721, %v875
      %v896 = vadd.f32 %v724, %v878
      %v897 = vld [vmem:[%s403] sm:$0xff]
      %v898 = vld [vmem:[%s403 + $0x8] sm:$0xff]
      %v899 = vld [vmem:[%s403 + $0x18] sm:$0xff]
      %v900 = vld [vmem:[%s403 + $0x20] sm:$0xff]
      %v901 = vld [vmem:[%s403 + $0x30] sm:$0xff]
      %v902 = vld [vmem:[%s403 + $0x38] sm:$0xff]
      %v903 = vld [vmem:[%s403 + $0x48] sm:$0xff]
      %v904 = vld [vmem:[%s403 + $0x50] sm:$0xff]
      %v905 = vld [vmem:[%s403 + $0x60] sm:$0xff]
      %v906 = vld [vmem:[%s403 + $0x68] sm:$0xff]
      %v907 = vld [vmem:[%s403 + $0x78] sm:$0xff]
      %v908 = vld [vmem:[%s403 + $0x80] sm:$0xff]
      %v909 = vld [vmem:[%s403 + $0x90] sm:$0xff]
      %v910 = vld [vmem:[%s403 + $0x98] sm:$0xff]
      %v911 = vld [vmem:[%s403 + $0xa8] sm:$0xff]
      %v912 = vld [vmem:[%s403 + $0xb0] sm:$0xff]
      %v913 = vpack.c.bf16 %v898, %v897
      %v914 = vpack.c.bf16 %v900, %v899
      %v915 = vpack.c.bf16 %v902, %v901
      %v916 = vpack.c.bf16 %v904, %v903
      %v917 = vpack.c.bf16 %v906, %v905
      %v918 = vpack.c.bf16 %v908, %v907
      %v919 = vpack.c.bf16 %v910, %v909
      %v920 = vpack.c.bf16 %v912, %v911
      %s921 = scalar_lea.vmem %s3, 24
      %v922 = vld [vmem:[%s921] sm:$0xf]
      %v923 = vld [vmem:[%s921 + $0x4] sm:$0xf]
      %v926 = vunpack.c.l.b16 %v922
      %v927 = vunpack.c.l.b16 %v923
      %v928 = vpack.c.b16 %v927, %v926
      %v931 = vsel %vm361, %v913, 0
      %v934 = vsel %vm361, %v914, 0
      %v937 = vsel %vm361, %v915, 0
      %v940 = vsel %vm361, %v916, 0
      %v943 = vsel %vm361, %v917, 0
      %v946 = vsel %vm361, %v918, 0
      %v949 = vsel %vm361, %v919, 0
      %v952 = vsel %vm361, %v920, 0
      %954 = vmatprep.subr.bf16.mxu0 0
      %955 = vmatpush1.bf16.msra.mxu0 0
      %956 = vmatprep.subr.bf16.mxu0 0
      %957 = vmatpush1.bf16.msra.mxu0 0
      %958 = vmatprep.subr.bf16.mxu0 0
      %959 = vmatpush1.bf16.msra.mxu0 0
      %960 = vmatprep.subr.bf16.mxu0 0
      %961 = vmatpush1.bf16.msra.mxu0 0
      %962 = vmatprep.subr.bf16.mxu0 0
      %963 = vmatpush1.bf16.msra.mxu0 0
      %964 = vmatprep.subr.bf16.mxu0 0
      %965 = vmatpush1.bf16.msra.mxu0 0
      %966 = vmatprep.subr.bf16.mxu0 0
      %967 = vmatpush1.bf16.msra.mxu0 0
      %968 = vmatprep.subr.bf16.mxu0 0
      %969 = vmatpush1.bf16.msra.mxu0 %v928
      %970 = vmatprep.subr.bf16.mxu0 0
      %971 = vmatpush2.bf16.msra.mxu0 0
      %972 = vmatprep.subr.bf16.mxu0 0
      %973 = vmatpush2.bf16.msra.mxu0 0
      %974 = vmatprep.subr.bf16.mxu0 0
      %975 = vmatpush2.bf16.msra.mxu0 0
      %976 = vmatprep.subr.bf16.mxu0 0
      %977 = vmatpush2.bf16.msra.mxu0 0
      %978 = vmatprep.subr.bf16.mxu0 0
      %979 = vmatpush2.bf16.msra.mxu0 0
      %980 = vmatprep.subr.bf16.mxu0 0
      %981 = vmatpush2.bf16.msra.mxu0 0
      %982 = vmatprep.subr.bf16.mxu0 0
      %983 = vmatpush2.bf16.msra.mxu0 0
      %984 = vmatprep.subr.bf16.mxu0 0
      %985 = vmatpush2.bf16.msra.mxu0 0
      %986 = vmatprep.mubr.bf16.mxu0 0
      %987 = vmatmul.mubr.bf16.gmra.mxu0 %v931
      %v988 = vpop.f32.mrf.mxu0
      %v989 = vadd.f32 0.0, %v988
      %v990 = vpop.f32.mrf.mxu0
      %v991 = vpop.f32.mrf.mxu0
      %v992 = vadd.f32 0.0, %v991
      %v993 = vpop.f32.mrf.mxu0
      %994 = vmatprep.mubr.bf16.mxu0 0
      %995 = vmatmul.mubr.bf16.gmra.mxu0 %v934
      %v996 = vpop.f32.mrf.mxu0
      %v997 = vadd.f32 0.0, %v996
      %v998 = vpop.f32.mrf.mxu0
      %v999 = vpop.f32.mrf.mxu0
      %v1000 = vadd.f32 0.0, %v999
      %v1001 = vpop.f32.mrf.mxu0
      %1002 = vmatprep.mubr.bf16.mxu0 0
      %1003 = vmatmul.mubr.bf16.gmra.mxu0 %v937
      %v1004 = vpop.f32.mrf.mxu0
      %v1005 = vadd.f32 0.0, %v1004
      %v1006 = vpop.f32.mrf.mxu0
      %v1007 = vpop.f32.mrf.mxu0
      %v1008 = vadd.f32 0.0, %v1007
      %v1009 = vpop.f32.mrf.mxu0
      %1010 = vmatprep.mubr.bf16.mxu0 0
      %1011 = vmatmul.mubr.bf16.gmra.mxu0 %v940
      %v1012 = vpop.f32.mrf.mxu0
      %v1013 = vadd.f32 0.0, %v1012
      %v1014 = vpop.f32.mrf.mxu0
      %v1015 = vpop.f32.mrf.mxu0
      %v1016 = vadd.f32 0.0, %v1015
      %v1017 = vpop.f32.mrf.mxu0
      %1018 = vmatprep.mubr.bf16.mxu0 0
      %1019 = vmatmul.mubr.bf16.gmra.mxu0 %v943
      %v1020 = vpop.f32.mrf.mxu0
      %v1021 = vadd.f32 0.0, %v1020
      %v1022 = vpop.f32.mrf.mxu0
      %v1023 = vpop.f32.mrf.mxu0
      %v1024 = vadd.f32 0.0, %v1023
      %v1025 = vpop.f32.mrf.mxu0
      %1026 = vmatprep.mubr.bf16.mxu0 0
      %1027 = vmatmul.mubr.bf16.gmra.mxu0 %v946
      %v1028 = vpop.f32.mrf.mxu0
      %v1029 = vadd.f32 0.0, %v1028
      %v1030 = vpop.f32.mrf.mxu0
      %v1031 = vpop.f32.mrf.mxu0
      %v1032 = vadd.f32 0.0, %v1031
      %v1033 = vpop.f32.mrf.mxu0
      %1034 = vmatprep.mubr.bf16.mxu0 0
      %1035 = vmatmul.mubr.bf16.gmra.mxu0 %v949
      %v1036 = vpop.f32.mrf.mxu0
      %v1037 = vadd.f32 0.0, %v1036
      %v1038 = vpop.f32.mrf.mxu0
      %v1039 = vpop.f32.mrf.mxu0
      %v1040 = vadd.f32 0.0, %v1039
      %v1041 = vpop.f32.mrf.mxu0
      %1042 = vmatprep.mubr.bf16.mxu0 0
      %1043 = vmatmul.mubr.bf16.gmra.mxu0 %v952
      %v1044 = vpop.f32.mrf.mxu0
      %v1045 = vadd.f32 0.0, %v1044
      %v1046 = vpop.f32.mrf.mxu0
      %v1047 = vpop.f32.mrf.mxu0
      %v1048 = vadd.f32 0.0, %v1047
      %v1049 = vpop.f32.mrf.mxu0
      %1050 = vdwg.mxu0
      %v1051 = vadd.f32 %v881, %v989
      %v1052 = vadd.f32 %v882, %v992
      %v1053 = vadd.f32 %v883, %v997
      %v1054 = vadd.f32 %v884, %v1000
      %v1055 = vadd.f32 %v885, %v1005
      %v1056 = vadd.f32 %v886, %v1008
      %v1057 = vadd.f32 %v887, %v1013
      %v1058 = vadd.f32 %v888, %v1016
      %v1059 = vadd.f32 %v889, %v1021
      %v1060 = vadd.f32 %v890, %v1024
      %v1061 = vadd.f32 %v891, %v1029
      %v1062 = vadd.f32 %v892, %v1032
      %v1063 = vadd.f32 %v893, %v1037
      %v1064 = vadd.f32 %v894, %v1040
      %v1065 = vadd.f32 %v895, %v1045
      %v1066 = vadd.f32 %v896, %v1048
      %v1067 = vld [vmem:[%s403 + $0x1] sm:$0xff]
      %v1068 = vld [vmem:[%s403 + $0x9] sm:$0xff]
      %v1069 = vld [vmem:[%s403 + $0x19] sm:$0xff]
      %v1070 = vld [vmem:[%s403 + $0x21] sm:$0xff]
      %v1071 = vld [vmem:[%s403 + $0x31] sm:$0xff]
      %v1072 = vld [vmem:[%s403 + $0x39] sm:$0xff]
      %v1073 = vld [vmem:[%s403 + $0x49] sm:$0xff]
      %v1074 = vld [vmem:[%s403 + $0x51] sm:$0xff]
      %v1075 = vld [vmem:[%s403 + $0x61] sm:$0xff]
      %v1076 = vld [vmem:[%s403 + $0x69] sm:$0xff]
      %v1077 = vld [vmem:[%s403 + $0x79] sm:$0xff]
      %v1078 = vld [vmem:[%s403 + $0x81] sm:$0xff]
      %v1079 = vld [vmem:[%s403 + $0x91] sm:$0xff]
      %v1080 = vld [vmem:[%s403 + $0x99] sm:$0xff]
      %v1081 = vld [vmem:[%s403 + $0xa9] sm:$0xff]
      %v1082 = vld [vmem:[%s403 + $0xb1] sm:$0xff]
      %v1083 = vpack.c.bf16 %v1068, %v1067
      %v1084 = vpack.c.bf16 %v1070, %v1069
      %v1085 = vpack.c.bf16 %v1072, %v1071
      %v1086 = vpack.c.bf16 %v1074, %v1073
      %v1087 = vpack.c.bf16 %v1076, %v1075
      %v1088 = vpack.c.bf16 %v1078, %v1077
      %v1089 = vpack.c.bf16 %v1080, %v1079
      %v1090 = vpack.c.bf16 %v1082, %v1081
      %s1091 = scalar_lea.vmem %s3, 32
      %v1092 = vld [vmem:[%s1091] sm:$0xf]
      %v1093 = vld [vmem:[%s1091 + $0x4] sm:$0xf]
      %v1096 = vunpack.c.l.b16 %v1092
      %v1097 = vunpack.c.l.b16 %v1093
      %v1098 = vpack.c.b16 %v1097, %v1096
      %v1101 = vsel %vm361, %v1083, 0
      %v1104 = vsel %vm361, %v1084, 0
      %v1107 = vsel %vm361, %v1085, 0
      %v1110 = vsel %vm361, %v1086, 0
      %v1113 = vsel %vm361, %v1087, 0
      %v1116 = vsel %vm361, %v1088, 0
      %v1119 = vsel %vm361, %v1089, 0
      %v1122 = vsel %vm361, %v1090, 0
      %1124 = vmatprep.subr.bf16.mxu0 0
      %1125 = vmatpush1.bf16.msra.mxu0 0
      %1126 = vmatprep.subr.bf16.mxu0 0
      %1127 = vmatpush1.bf16.msra.mxu0 0
      %1128 = vmatprep.subr.bf16.mxu0 0
      %1129 = vmatpush1.bf16.msra.mxu0 0
      %1130 = vmatprep.subr.bf16.mxu0 0
      %1131 = vmatpush1.bf16.msra.mxu0 0
      %1132 = vmatprep.subr.bf16.mxu0 0
      %1133 = vmatpush1.bf16.msra.mxu0 0
      %1134 = vmatprep.subr.bf16.mxu0 0
      %1135 = vmatpush1.bf16.msra.mxu0 0
      %1136 = vmatprep.subr.bf16.mxu0 0
      %1137 = vmatpush1.bf16.msra.mxu0 0
      %1138 = vmatprep.subr.bf16.mxu0 0
      %1139 = vmatpush1.bf16.msra.mxu0 %v1098
      %1140 = vmatprep.subr.bf16.mxu0 0
      %1141 = vmatpush2.bf16.msra.mxu0 0
      %1142 = vmatprep.subr.bf16.mxu0 0
      %1143 = vmatpush2.bf16.msra.mxu0 0
      %1144 = vmatprep.subr.bf16.mxu0 0
      %1145 = vmatpush2.bf16.msra.mxu0 0
      %1146 = vmatprep.subr.bf16.mxu0 0
      %1147 = vmatpush2.bf16.msra.mxu0 0
      %1148 = vmatprep.subr.bf16.mxu0 0
      %1149 = vmatpush2.bf16.msra.mxu0 0
      %1150 = vmatprep.subr.bf16.mxu0 0
      %1151 = vmatpush2.bf16.msra.mxu0 0
      %1152 = vmatprep.subr.bf16.mxu0 0
      %1153 = vmatpush2.bf16.msra.mxu0 0
      %1154 = vmatprep.subr.bf16.mxu0 0
      %1155 = vmatpush2.bf16.msra.mxu0 0
      %1156 = vmatprep.mubr.bf16.mxu0 0
      %1157 = vmatmul.mubr.bf16.gmra.mxu0 %v1101
      %v1158 = vpop.f32.mrf.mxu0
      %v1159 = vadd.f32 0.0, %v1158
      %v1160 = vpop.f32.mrf.mxu0
      %v1161 = vpop.f32.mrf.mxu0
      %v1162 = vadd.f32 0.0, %v1161
      %v1163 = vpop.f32.mrf.mxu0
      %1164 = vmatprep.mubr.bf16.mxu0 0
      %1165 = vmatmul.mubr.bf16.gmra.mxu0 %v1104
      %v1166 = vpop.f32.mrf.mxu0
      %v1167 = vadd.f32 0.0, %v1166
      %v1168 = vpop.f32.mrf.mxu0
      %v1169 = vpop.f32.mrf.mxu0
      %v1170 = vadd.f32 0.0, %v1169
      %v1171 = vpop.f32.mrf.mxu0
      %1172 = vmatprep.mubr.bf16.mxu0 0
      %1173 = vmatmul.mubr.bf16.gmra.mxu0 %v1107
      %v1174 = vpop.f32.mrf.mxu0
      %v1175 = vadd.f32 0.0, %v1174
      %v1176 = vpop.f32.mrf.mxu0
      %v1177 = vpop.f32.mrf.mxu0
      %v1178 = vadd.f32 0.0, %v1177
      %v1179 = vpop.f32.mrf.mxu0
      %1180 = vmatprep.mubr.bf16.mxu0 0
      %1181 = vmatmul.mubr.bf16.gmra.mxu0 %v1110
      %v1182 = vpop.f32.mrf.mxu0
      %v1183 = vadd.f32 0.0, %v1182
      %v1184 = vpop.f32.mrf.mxu0
      %v1185 = vpop.f32.mrf.mxu0
      %v1186 = vadd.f32 0.0, %v1185
      %v1187 = vpop.f32.mrf.mxu0
      %1188 = vmatprep.mubr.bf16.mxu0 0
      %1189 = vmatmul.mubr.bf16.gmra.mxu0 %v1113
      %v1190 = vpop.f32.mrf.mxu0
      %v1191 = vadd.f32 0.0, %v1190
      %v1192 = vpop.f32.mrf.mxu0
      %v1193 = vpop.f32.mrf.mxu0
      %v1194 = vadd.f32 0.0, %v1193
      %v1195 = vpop.f32.mrf.mxu0
      %1196 = vmatprep.mubr.bf16.mxu0 0
      %1197 = vmatmul.mubr.bf16.gmra.mxu0 %v1116
      %v1198 = vpop.f32.mrf.mxu0
      %v1199 = vadd.f32 0.0, %v1198
      %v1200 = vpop.f32.mrf.mxu0
      %v1201 = vpop.f32.mrf.mxu0
      %v1202 = vadd.f32 0.0, %v1201
      %v1203 = vpop.f32.mrf.mxu0
      %1204 = vmatprep.mubr.bf16.mxu0 0
      %1205 = vmatmul.mubr.bf16.gmra.mxu0 %v1119
      %v1206 = vpop.f32.mrf.mxu0
      %v1207 = vadd.f32 0.0, %v1206
      %v1208 = vpop.f32.mrf.mxu0
      %v1209 = vpop.f32.mrf.mxu0
      %v1210 = vadd.f32 0.0, %v1209
      %v1211 = vpop.f32.mrf.mxu0
      %1212 = vmatprep.mubr.bf16.mxu0 0
      %1213 = vmatmul.mubr.bf16.gmra.mxu0 %v1122
      %v1214 = vpop.f32.mrf.mxu0
      %v1215 = vadd.f32 0.0, %v1214
      %v1216 = vpop.f32.mrf.mxu0
      %v1217 = vpop.f32.mrf.mxu0
      %v1218 = vadd.f32 0.0, %v1217
      %v1219 = vpop.f32.mrf.mxu0
      %1220 = vdwg.mxu0
      %v1221 = vadd.f32 %v1051, %v1159
      %v1222 = vadd.f32 %v1052, %v1162
      %v1223 = vadd.f32 %v1053, %v1167
      %v1224 = vadd.f32 %v1054, %v1170
      %v1225 = vadd.f32 %v1055, %v1175
      %v1226 = vadd.f32 %v1056, %v1178
      %v1227 = vadd.f32 %v1057, %v1183
      %v1228 = vadd.f32 %v1058, %v1186
      %v1229 = vadd.f32 %v1059, %v1191
      %v1230 = vadd.f32 %v1060, %v1194
      %v1231 = vadd.f32 %v1061, %v1199
      %v1232 = vadd.f32 %v1062, %v1202
      %v1233 = vadd.f32 %v1063, %v1207
      %v1234 = vadd.f32 %v1064, %v1210
      %v1235 = vadd.f32 %v1065, %v1215
      %v1236 = vadd.f32 %v1066, %v1218
      %v1237 = vld [vmem:[%s403 + $0x2] sm:$0xff]
      %v1238 = vld [vmem:[%s403 + $0xa] sm:$0xff]
      %v1239 = vld [vmem:[%s403 + $0x1a] sm:$0xff]
      %v1240 = vld [vmem:[%s403 + $0x22] sm:$0xff]
      %v1241 = vld [vmem:[%s403 + $0x32] sm:$0xff]
      %v1242 = vld [vmem:[%s403 + $0x3a] sm:$0xff]
      %v1243 = vld [vmem:[%s403 + $0x4a] sm:$0xff]
      %v1244 = vld [vmem:[%s403 + $0x52] sm:$0xff]
      %v1245 = vld [vmem:[%s403 + $0x62] sm:$0xff]
      %v1246 = vld [vmem:[%s403 + $0x6a] sm:$0xff]
      %v1247 = vld [vmem:[%s403 + $0x7a] sm:$0xff]
      %v1248 = vld [vmem:[%s403 + $0x82] sm:$0xff]
      %v1249 = vld [vmem:[%s403 + $0x92] sm:$0xff]
      %v1250 = vld [vmem:[%s403 + $0x9a] sm:$0xff]
      %v1251 = vld [vmem:[%s403 + $0xaa] sm:$0xff]
      %v1252 = vld [vmem:[%s403 + $0xb2] sm:$0xff]
      %v1253 = vpack.c.bf16 %v1238, %v1237
      %v1254 = vpack.c.bf16 %v1240, %v1239
      %v1255 = vpack.c.bf16 %v1242, %v1241
      %v1256 = vpack.c.bf16 %v1244, %v1243
      %v1257 = vpack.c.bf16 %v1246, %v1245
      %v1258 = vpack.c.bf16 %v1248, %v1247
      %v1259 = vpack.c.bf16 %v1250, %v1249
      %v1260 = vpack.c.bf16 %v1252, %v1251
      %s1261 = scalar_lea.vmem %s3, 40
      %v1262 = vld [vmem:[%s1261] sm:$0xf]
      %v1263 = vld [vmem:[%s1261 + $0x4] sm:$0xf]
      %v1266 = vunpack.c.l.b16 %v1262
      %v1267 = vunpack.c.l.b16 %v1263
      %v1268 = vpack.c.b16 %v1267, %v1266
      %v1271 = vsel %vm361, %v1253, 0
      %v1274 = vsel %vm361, %v1254, 0
      %v1277 = vsel %vm361, %v1255, 0
      %v1280 = vsel %vm361, %v1256, 0
      %v1283 = vsel %vm361, %v1257, 0
      %v1286 = vsel %vm361, %v1258, 0
      %v1289 = vsel %vm361, %v1259, 0
      %v1292 = vsel %vm361, %v1260, 0
      %1294 = vmatprep.subr.bf16.mxu0 0
      %1295 = vmatpush1.bf16.msra.mxu0 0
      %1296 = vmatprep.subr.bf16.mxu0 0
      %1297 = vmatpush1.bf16.msra.mxu0 0
      %1298 = vmatprep.subr.bf16.mxu0 0
      %1299 = vmatpush1.bf16.msra.mxu0 0
      %1300 = vmatprep.subr.bf16.mxu0 0
      %1301 = vmatpush1.bf16.msra.mxu0 0
      %1302 = vmatprep.subr.bf16.mxu0 0
      %1303 = vmatpush1.bf16.msra.mxu0 0
      %1304 = vmatprep.subr.bf16.mxu0 0
      %1305 = vmatpush1.bf16.msra.mxu0 0
      %1306 = vmatprep.subr.bf16.mxu0 0
      %1307 = vmatpush1.bf16.msra.mxu0 0
      %1308 = vmatprep.subr.bf16.mxu0 0
      %1309 = vmatpush1.bf16.msra.mxu0 %v1268
      %1310 = vmatprep.subr.bf16.mxu0 0
      %1311 = vmatpush2.bf16.msra.mxu0 0
      %1312 = vmatprep.subr.bf16.mxu0 0
      %1313 = vmatpush2.bf16.msra.mxu0 0
      %1314 = vmatprep.subr.bf16.mxu0 0
      %1315 = vmatpush2.bf16.msra.mxu0 0
      %1316 = vmatprep.subr.bf16.mxu0 0
      %1317 = vmatpush2.bf16.msra.mxu0 0
      %1318 = vmatprep.subr.bf16.mxu0 0
      %1319 = vmatpush2.bf16.msra.mxu0 0
      %1320 = vmatprep.subr.bf16.mxu0 0
      %1321 = vmatpush2.bf16.msra.mxu0 0
      %1322 = vmatprep.subr.bf16.mxu0 0
      %1323 = vmatpush2.bf16.msra.mxu0 0
      %1324 = vmatprep.subr.bf16.mxu0 0
      %1325 = vmatpush2.bf16.msra.mxu0 0
      %1326 = vmatprep.mubr.bf16.mxu0 0
      %1327 = vmatmul.mubr.bf16.gmra.mxu0 %v1271
      %v1328 = vpop.f32.mrf.mxu0
      %v1329 = vadd.f32 0.0, %v1328
      %v1330 = vpop.f32.mrf.mxu0
      %v1331 = vpop.f32.mrf.mxu0
      %v1332 = vadd.f32 0.0, %v1331
      %v1333 = vpop.f32.mrf.mxu0
      %1334 = vmatprep.mubr.bf16.mxu0 0
      %1335 = vmatmul.mubr.bf16.gmra.mxu0 %v1274
      %v1336 = vpop.f32.mrf.mxu0
      %v1337 = vadd.f32 0.0, %v1336
      %v1338 = vpop.f32.mrf.mxu0
      %v1339 = vpop.f32.mrf.mxu0
      %v1340 = vadd.f32 0.0, %v1339
      %v1341 = vpop.f32.mrf.mxu0
      %1342 = vmatprep.mubr.bf16.mxu0 0
      %1343 = vmatmul.mubr.bf16.gmra.mxu0 %v1277
      %v1344 = vpop.f32.mrf.mxu0
      %v1345 = vadd.f32 0.0, %v1344
      %v1346 = vpop.f32.mrf.mxu0
      %v1347 = vpop.f32.mrf.mxu0
      %v1348 = vadd.f32 0.0, %v1347
      %v1349 = vpop.f32.mrf.mxu0
      %1350 = vmatprep.mubr.bf16.mxu0 0
      %1351 = vmatmul.mubr.bf16.gmra.mxu0 %v1280
      %v1352 = vpop.f32.mrf.mxu0
      %v1353 = vadd.f32 0.0, %v1352
      %v1354 = vpop.f32.mrf.mxu0
      %v1355 = vpop.f32.mrf.mxu0
      %v1356 = vadd.f32 0.0, %v1355
      %v1357 = vpop.f32.mrf.mxu0
      %1358 = vmatprep.mubr.bf16.mxu0 0
      %1359 = vmatmul.mubr.bf16.gmra.mxu0 %v1283
      %v1360 = vpop.f32.mrf.mxu0
      %v1361 = vadd.f32 0.0, %v1360
      %v1362 = vpop.f32.mrf.mxu0
      %v1363 = vpop.f32.mrf.mxu0
      %v1364 = vadd.f32 0.0, %v1363
      %v1365 = vpop.f32.mrf.mxu0
      %1366 = vmatprep.mubr.bf16.mxu0 0
      %1367 = vmatmul.mubr.bf16.gmra.mxu0 %v1286
      %v1368 = vpop.f32.mrf.mxu0
      %v1369 = vadd.f32 0.0, %v1368
      %v1370 = vpop.f32.mrf.mxu0
      %v1371 = vpop.f32.mrf.mxu0
      %v1372 = vadd.f32 0.0, %v1371
      %v1373 = vpop.f32.mrf.mxu0
      %1374 = vmatprep.mubr.bf16.mxu0 0
      %1375 = vmatmul.mubr.bf16.gmra.mxu0 %v1289
      %v1376 = vpop.f32.mrf.mxu0
      %v1377 = vadd.f32 0.0, %v1376
      %v1378 = vpop.f32.mrf.mxu0
      %v1379 = vpop.f32.mrf.mxu0
      %v1380 = vadd.f32 0.0, %v1379
      %v1381 = vpop.f32.mrf.mxu0
      %1382 = vmatprep.mubr.bf16.mxu0 0
      %1383 = vmatmul.mubr.bf16.gmra.mxu0 %v1292
      %v1384 = vpop.f32.mrf.mxu0
      %v1385 = vadd.f32 0.0, %v1384
      %v1386 = vpop.f32.mrf.mxu0
      %v1387 = vpop.f32.mrf.mxu0
      %v1388 = vadd.f32 0.0, %v1387
      %v1389 = vpop.f32.mrf.mxu0
      %1390 = vdwg.mxu0
      %v1391 = vadd.f32 %v1221, %v1329
      %v1392 = vadd.f32 %v1222, %v1332
      %v1393 = vadd.f32 %v1223, %v1337
      %v1394 = vadd.f32 %v1224, %v1340
      %v1395 = vadd.f32 %v1225, %v1345
      %v1396 = vadd.f32 %v1226, %v1348
      %v1397 = vadd.f32 %v1227, %v1353
      %v1398 = vadd.f32 %v1228, %v1356
      %v1399 = vadd.f32 %v1229, %v1361
      %v1400 = vadd.f32 %v1230, %v1364
      %v1401 = vadd.f32 %v1231, %v1369
      %v1402 = vadd.f32 %v1232, %v1372
      %v1403 = vadd.f32 %v1233, %v1377
      %v1404 = vadd.f32 %v1234, %v1380
      %v1405 = vadd.f32 %v1235, %v1385
      %v1406 = vadd.f32 %v1236, %v1388
      %s1407 = scalar_lea.vmem [#allocation2], 48
      %v1408 = vld [vmem:[%s1407] sm:$0xff]
      %v1409 = vld [vmem:[%s1407 + $0x8] sm:$0xff]
      %v1410 = vld [vmem:[%s1407 + $0x18] sm:$0xff]
      %v1411 = vld [vmem:[%s1407 + $0x20] sm:$0xff]
      %v1412 = vld [vmem:[%s1407 + $0x30] sm:$0xff]
      %v1413 = vld [vmem:[%s1407 + $0x38] sm:$0xff]
      %v1414 = vld [vmem:[%s1407 + $0x48] sm:$0xff]
      %v1415 = vld [vmem:[%s1407 + $0x50] sm:$0xff]
      %v1416 = vld [vmem:[%s1407 + $0x60] sm:$0xff]
      %v1417 = vld [vmem:[%s1407 + $0x68] sm:$0xff]
      %v1418 = vld [vmem:[%s1407 + $0x78] sm:$0xff]
      %v1419 = vld [vmem:[%s1407 + $0x80] sm:$0xff]
      %v1420 = vld [vmem:[%s1407 + $0x90] sm:$0xff]
      %v1421 = vld [vmem:[%s1407 + $0x98] sm:$0xff]
      %v1422 = vld [vmem:[%s1407 + $0xa8] sm:$0xff]
      %v1423 = vld [vmem:[%s1407 + $0xb0] sm:$0xff]
      %v1424 = vpack.c.bf16 %v1409, %v1408
      %v1425 = vpack.c.bf16 %v1411, %v1410
      %v1426 = vpack.c.bf16 %v1413, %v1412
      %v1427 = vpack.c.bf16 %v1415, %v1414
      %v1428 = vpack.c.bf16 %v1417, %v1416
      %v1429 = vpack.c.bf16 %v1419, %v1418
      %v1430 = vpack.c.bf16 %v1421, %v1420
      %v1431 = vpack.c.bf16 %v1423, %v1422
      %s1432 = scalar_lea.vmem %s3, 48
      %v1433 = vld [vmem:[%s1432] sm:$0xf]
      %v1434 = vld [vmem:[%s1432 + $0x4] sm:$0xf]
      %v1437 = vunpack.c.l.b16 %v1433
      %v1438 = vunpack.c.l.b16 %v1434
      %v1439 = vpack.c.b16 %v1438, %v1437
      %v1442 = vsel %vm361, %v1424, 0
      %v1445 = vsel %vm361, %v1425, 0
      %v1448 = vsel %vm361, %v1426, 0
      %v1451 = vsel %vm361, %v1427, 0
      %v1454 = vsel %vm361, %v1428, 0
      %v1457 = vsel %vm361, %v1429, 0
      %v1460 = vsel %vm361, %v1430, 0
      %v1463 = vsel %vm361, %v1431, 0
      %1465 = vmatprep.subr.bf16.mxu0 0
      %1466 = vmatpush1.bf16.msra.mxu0 0
      %1467 = vmatprep.subr.bf16.mxu0 0
      %1468 = vmatpush1.bf16.msra.mxu0 0
      %1469 = vmatprep.subr.bf16.mxu0 0
      %1470 = vmatpush1.bf16.msra.mxu0 0
      %1471 = vmatprep.subr.bf16.mxu0 0
      %1472 = vmatpush1.bf16.msra.mxu0 0
      %1473 = vmatprep.subr.bf16.mxu0 0
      %1474 = vmatpush1.bf16.msra.mxu0 0
      %1475 = vmatprep.subr.bf16.mxu0 0
      %1476 = vmatpush1.bf16.msra.mxu0 0
      %1477 = vmatprep.subr.bf16.mxu0 0
      %1478 = vmatpush1.bf16.msra.mxu0 0
      %1479 = vmatprep.subr.bf16.mxu0 0
      %1480 = vmatpush1.bf16.msra.mxu0 %v1439
      %1481 = vmatprep.subr.bf16.mxu0 0
      %1482 = vmatpush2.bf16.msra.mxu0 0
      %1483 = vmatprep.subr.bf16.mxu0 0
      %1484 = vmatpush2.bf16.msra.mxu0 0
      %1485 = vmatprep.subr.bf16.mxu0 0
      %1486 = vmatpush2.bf16.msra.mxu0 0
      %1487 = vmatprep.subr.bf16.mxu0 0
      %1488 = vmatpush2.bf16.msra.mxu0 0
      %1489 = vmatprep.subr.bf16.mxu0 0
      %1490 = vmatpush2.bf16.msra.mxu0 0
      %1491 = vmatprep.subr.bf16.mxu0 0
      %1492 = vmatpush2.bf16.msra.mxu0 0
      %1493 = vmatprep.subr.bf16.mxu0 0
      %1494 = vmatpush2.bf16.msra.mxu0 0
      %1495 = vmatprep.subr.bf16.mxu0 0
      %1496 = vmatpush2.bf16.msra.mxu0 0
      %1497 = vmatprep.mubr.bf16.mxu0 0
      %1498 = vmatmul.mubr.bf16.gmra.mxu0 %v1442
      %v1499 = vpop.f32.mrf.mxu0
      %v1500 = vadd.f32 0.0, %v1499
      %v1501 = vpop.f32.mrf.mxu0
      %v1502 = vpop.f32.mrf.mxu0
      %v1503 = vadd.f32 0.0, %v1502
      %v1504 = vpop.f32.mrf.mxu0
      %1505 = vmatprep.mubr.bf16.mxu0 0
      %1506 = vmatmul.mubr.bf16.gmra.mxu0 %v1445
      %v1507 = vpop.f32.mrf.mxu0
      %v1508 = vadd.f32 0.0, %v1507
      %v1509 = vpop.f32.mrf.mxu0
      %v1510 = vpop.f32.mrf.mxu0
      %v1511 = vadd.f32 0.0, %v1510
      %v1512 = vpop.f32.mrf.mxu0
      %1513 = vmatprep.mubr.bf16.mxu0 0
      %1514 = vmatmul.mubr.bf16.gmra.mxu0 %v1448
      %v1515 = vpop.f32.mrf.mxu0
      %v1516 = vadd.f32 0.0, %v1515
      %v1517 = vpop.f32.mrf.mxu0
      %v1518 = vpop.f32.mrf.mxu0
      %v1519 = vadd.f32 0.0, %v1518
      %v1520 = vpop.f32.mrf.mxu0
      %1521 = vmatprep.mubr.bf16.mxu0 0
      %1522 = vmatmul.mubr.bf16.gmra.mxu0 %v1451
      %v1523 = vpop.f32.mrf.mxu0
      %v1524 = vadd.f32 0.0, %v1523
      %v1525 = vpop.f32.mrf.mxu0
      %v1526 = vpop.f32.mrf.mxu0
      %v1527 = vadd.f32 0.0, %v1526
      %v1528 = vpop.f32.mrf.mxu0
      %1529 = vmatprep.mubr.bf16.mxu0 0
      %1530 = vmatmul.mubr.bf16.gmra.mxu0 %v1454
      %v1531 = vpop.f32.mrf.mxu0
      %v1532 = vadd.f32 0.0, %v1531
      %v1533 = vpop.f32.mrf.mxu0
      %v1534 = vpop.f32.mrf.mxu0
      %v1535 = vadd.f32 0.0, %v1534
      %v1536 = vpop.f32.mrf.mxu0
      %1537 = vmatprep.mubr.bf16.mxu0 0
      %1538 = vmatmul.mubr.bf16.gmra.mxu0 %v1457
      %v1539 = vpop.f32.mrf.mxu0
      %v1540 = vadd.f32 0.0, %v1539
      %v1541 = vpop.f32.mrf.mxu0
      %v1542 = vpop.f32.mrf.mxu0
      %v1543 = vadd.f32 0.0, %v1542
      %v1544 = vpop.f32.mrf.mxu0
      %1545 = vmatprep.mubr.bf16.mxu0 0
      %1546 = vmatmul.mubr.bf16.gmra.mxu0 %v1460
      %v1547 = vpop.f32.mrf.mxu0
      %v1548 = vadd.f32 0.0, %v1547
      %v1549 = vpop.f32.mrf.mxu0
      %v1550 = vpop.f32.mrf.mxu0
      %v1551 = vadd.f32 0.0, %v1550
      %v1552 = vpop.f32.mrf.mxu0
      %1553 = vmatprep.mubr.bf16.mxu0 0
      %1554 = vmatmul.mubr.bf16.gmra.mxu0 %v1463
      %v1555 = vpop.f32.mrf.mxu0
      %v1556 = vadd.f32 0.0, %v1555
      %v1557 = vpop.f32.mrf.mxu0
      %v1558 = vpop.f32.mrf.mxu0
      %v1559 = vadd.f32 0.0, %v1558
      %v1560 = vpop.f32.mrf.mxu0
      %1561 = vdwg.mxu0
      %v1562 = vadd.f32 %v1391, %v1500
      %v1563 = vadd.f32 %v1392, %v1503
      %v1564 = vadd.f32 %v1393, %v1508
      %v1565 = vadd.f32 %v1394, %v1511
      %v1566 = vadd.f32 %v1395, %v1516
      %v1567 = vadd.f32 %v1396, %v1519
      %v1568 = vadd.f32 %v1397, %v1524
      %v1569 = vadd.f32 %v1398, %v1527
      %v1570 = vadd.f32 %v1399, %v1532
      %v1571 = vadd.f32 %v1400, %v1535
      %v1572 = vadd.f32 %v1401, %v1540
      %v1573 = vadd.f32 %v1402, %v1543
      %v1574 = vadd.f32 %v1403, %v1548
      %v1575 = vadd.f32 %v1404, %v1551
      %v1576 = vadd.f32 %v1405, %v1556
      %v1577 = vadd.f32 %v1406, %v1559
      %v1578 = vld [vmem:[%s1407 + $0x1] sm:$0xff]
      %v1579 = vld [vmem:[%s1407 + $0x9] sm:$0xff]
      %v1580 = vld [vmem:[%s1407 + $0x19] sm:$0xff]
      %v1581 = vld [vmem:[%s1407 + $0x21] sm:$0xff]
      %v1582 = vld [vmem:[%s1407 + $0x31] sm:$0xff]
      %v1583 = vld [vmem:[%s1407 + $0x39] sm:$0xff]
      %v1584 = vld [vmem:[%s1407 + $0x49] sm:$0xff]
      %v1585 = vld [vmem:[%s1407 + $0x51] sm:$0xff]
      %v1586 = vld [vmem:[%s1407 + $0x61] sm:$0xff]
      %v1587 = vld [vmem:[%s1407 + $0x69] sm:$0xff]
      %v1588 = vld [vmem:[%s1407 + $0x79] sm:$0xff]
      %v1589 = vld [vmem:[%s1407 + $0x81] sm:$0xff]
      %v1590 = vld [vmem:[%s1407 + $0x91] sm:$0xff]
      %v1591 = vld [vmem:[%s1407 + $0x99] sm:$0xff]
      %v1592 = vld [vmem:[%s1407 + $0xa9] sm:$0xff]
      %v1593 = vld [vmem:[%s1407 + $0xb1] sm:$0xff]
      %v1594 = vpack.c.bf16 %v1579, %v1578
      %v1595 = vpack.c.bf16 %v1581, %v1580
      %v1596 = vpack.c.bf16 %v1583, %v1582
      %v1597 = vpack.c.bf16 %v1585, %v1584
      %v1598 = vpack.c.bf16 %v1587, %v1586
      %v1599 = vpack.c.bf16 %v1589, %v1588
      %v1600 = vpack.c.bf16 %v1591, %v1590
      %v1601 = vpack.c.bf16 %v1593, %v1592
      %s1602 = scalar_lea.vmem %s3, 56
      %v1603 = vld [vmem:[%s1602] sm:$0xf]
      %v1604 = vld [vmem:[%s1602 + $0x4] sm:$0xf]
      %v1607 = vunpack.c.l.b16 %v1603
      %v1608 = vunpack.c.l.b16 %v1604
      %v1609 = vpack.c.b16 %v1608, %v1607
      %v1612 = vsel %vm361, %v1594, 0
      %v1615 = vsel %vm361, %v1595, 0
      %v1618 = vsel %vm361, %v1596, 0
      %v1621 = vsel %vm361, %v1597, 0
      %v1624 = vsel %vm361, %v1598, 0
      %v1627 = vsel %vm361, %v1599, 0
      %v1630 = vsel %vm361, %v1600, 0
      %v1633 = vsel %vm361, %v1601, 0
      %1635 = vmatprep.subr.bf16.mxu0 0
      %1636 = vmatpush1.bf16.msra.mxu0 0
      %1637 = vmatprep.subr.bf16.mxu0 0
      %1638 = vmatpush1.bf16.msra.mxu0 0
      %1639 = vmatprep.subr.bf16.mxu0 0
      %1640 = vmatpush1.bf16.msra.mxu0 0
      %1641 = vmatprep.subr.bf16.mxu0 0
      %1642 = vmatpush1.bf16.msra.mxu0 0
      %1643 = vmatprep.subr.bf16.mxu0 0
      %1644 = vmatpush1.bf16.msra.mxu0 0
      %1645 = vmatprep.subr.bf16.mxu0 0
      %1646 = vmatpush1.bf16.msra.mxu0 0
      %1647 = vmatprep.subr.bf16.mxu0 0
      %1648 = vmatpush1.bf16.msra.mxu0 0
      %1649 = vmatprep.subr.bf16.mxu0 0
      %1650 = vmatpush1.bf16.msra.mxu0 %v1609
      %1651 = vmatprep.subr.bf16.mxu0 0
      %1652 = vmatpush2.bf16.msra.mxu0 0
      %1653 = vmatprep.subr.bf16.mxu0 0
      %1654 = vmatpush2.bf16.msra.mxu0 0
      %1655 = vmatprep.subr.bf16.mxu0 0
      %1656 = vmatpush2.bf16.msra.mxu0 0
      %1657 = vmatprep.subr.bf16.mxu0 0
      %1658 = vmatpush2.bf16.msra.mxu0 0
      %1659 = vmatprep.subr.bf16.mxu0 0
      %1660 = vmatpush2.bf16.msra.mxu0 0
      %1661 = vmatprep.subr.bf16.mxu0 0
      %1662 = vmatpush2.bf16.msra.mxu0 0
      %1663 = vmatprep.subr.bf16.mxu0 0
      %1664 = vmatpush2.bf16.msra.mxu0 0
      %1665 = vmatprep.subr.bf16.mxu0 0
      %1666 = vmatpush2.bf16.msra.mxu0 0
      %1667 = vmatprep.mubr.bf16.mxu0 0
      %1668 = vmatmul.mubr.bf16.gmra.mxu0 %v1612
      %v1669 = vpop.f32.mrf.mxu0
      %v1670 = vadd.f32 0.0, %v1669
      %v1671 = vpop.f32.mrf.mxu0
      %v1672 = vpop.f32.mrf.mxu0
      %v1673 = vadd.f32 0.0, %v1672
      %v1674 = vpop.f32.mrf.mxu0
      %1675 = vmatprep.mubr.bf16.mxu0 0
      %1676 = vmatmul.mubr.bf16.gmra.mxu0 %v1615
      %v1677 = vpop.f32.mrf.mxu0
      %v1678 = vadd.f32 0.0, %v1677
      %v1679 = vpop.f32.mrf.mxu0
      %v1680 = vpop.f32.mrf.mxu0
      %v1681 = vadd.f32 0.0, %v1680
      %v1682 = vpop.f32.mrf.mxu0
      %1683 = vmatprep.mubr.bf16.mxu0 0
      %1684 = vmatmul.mubr.bf16.gmra.mxu0 %v1618
      %v1685 = vpop.f32.mrf.mxu0
      %v1686 = vadd.f32 0.0, %v1685
      %v1687 = vpop.f32.mrf.mxu0
      %v1688 = vpop.f32.mrf.mxu0
      %v1689 = vadd.f32 0.0, %v1688
      %v1690 = vpop.f32.mrf.mxu0
      %1691 = vmatprep.mubr.bf16.mxu0 0
      %1692 = vmatmul.mubr.bf16.gmra.mxu0 %v1621
      %v1693 = vpop.f32.mrf.mxu0
      %v1694 = vadd.f32 0.0, %v1693
      %v1695 = vpop.f32.mrf.mxu0
      %v1696 = vpop.f32.mrf.mxu0
      %v1697 = vadd.f32 0.0, %v1696
      %v1698 = vpop.f32.mrf.mxu0
      %1699 = vmatprep.mubr.bf16.mxu0 0
      %1700 = vmatmul.mubr.bf16.gmra.mxu0 %v1624
      %v1701 = vpop.f32.mrf.mxu0
      %v1702 = vadd.f32 0.0, %v1701
      %v1703 = vpop.f32.mrf.mxu0
      %v1704 = vpop.f32.mrf.mxu0
      %v1705 = vadd.f32 0.0, %v1704
      %v1706 = vpop.f32.mrf.mxu0
      %1707 = vmatprep.mubr.bf16.mxu0 0
      %1708 = vmatmul.mubr.bf16.gmra.mxu0 %v1627
      %v1709 = vpop.f32.mrf.mxu0
      %v1710 = vadd.f32 0.0, %v1709
      %v1711 = vpop.f32.mrf.mxu0
      %v1712 = vpop.f32.mrf.mxu0
      %v1713 = vadd.f32 0.0, %v1712
      %v1714 = vpop.f32.mrf.mxu0
      %1715 = vmatprep.mubr.bf16.mxu0 0
      %1716 = vmatmul.mubr.bf16.gmra.mxu0 %v1630
      %v1717 = vpop.f32.mrf.mxu0
      %v1718 = vadd.f32 0.0, %v1717
      %v1719 = vpop.f32.mrf.mxu0
      %v1720 = vpop.f32.mrf.mxu0
      %v1721 = vadd.f32 0.0, %v1720
      %v1722 = vpop.f32.mrf.mxu0
      %1723 = vmatprep.mubr.bf16.mxu0 0
      %1724 = vmatmul.mubr.bf16.gmra.mxu0 %v1633
      %v1725 = vpop.f32.mrf.mxu0
      %v1726 = vadd.f32 0.0, %v1725
      %v1727 = vpop.f32.mrf.mxu0
      %v1728 = vpop.f32.mrf.mxu0
      %v1729 = vadd.f32 0.0, %v1728
      %v1730 = vpop.f32.mrf.mxu0
      %1731 = vdwg.mxu0
      %v1732 = vadd.f32 %v1562, %v1670
      %v1733 = vadd.f32 %v1563, %v1673
      %v1734 = vadd.f32 %v1564, %v1678
      %v1735 = vadd.f32 %v1565, %v1681
      %v1736 = vadd.f32 %v1566, %v1686
      %v1737 = vadd.f32 %v1567, %v1689
      %v1738 = vadd.f32 %v1568, %v1694
      %v1739 = vadd.f32 %v1569, %v1697
      %v1740 = vadd.f32 %v1570, %v1702
      %v1741 = vadd.f32 %v1571, %v1705
      %v1742 = vadd.f32 %v1572, %v1710
      %v1743 = vadd.f32 %v1573, %v1713
      %v1744 = vadd.f32 %v1574, %v1718
      %v1745 = vadd.f32 %v1575, %v1721
      %v1746 = vadd.f32 %v1576, %v1726
      %v1747 = vadd.f32 %v1577, %v1729
      %v1748 = vld [vmem:[%s1407 + $0x2] sm:$0xff]
      %v1749 = vld [vmem:[%s1407 + $0xa] sm:$0xff]
      %v1750 = vld [vmem:[%s1407 + $0x1a] sm:$0xff]
      %v1751 = vld [vmem:[%s1407 + $0x22] sm:$0xff]
      %v1752 = vld [vmem:[%s1407 + $0x32] sm:$0xff]
      %v1753 = vld [vmem:[%s1407 + $0x3a] sm:$0xff]
      %v1754 = vld [vmem:[%s1407 + $0x4a] sm:$0xff]
      %v1755 = vld [vmem:[%s1407 + $0x52] sm:$0xff]
      %v1756 = vld [vmem:[%s1407 + $0x62] sm:$0xff]
      %v1757 = vld [vmem:[%s1407 + $0x6a] sm:$0xff]
      %v1758 = vld [vmem:[%s1407 + $0x7a] sm:$0xff]
      %v1759 = vld [vmem:[%s1407 + $0x82] sm:$0xff]
      %v1760 = vld [vmem:[%s1407 + $0x92] sm:$0xff]
      %v1761 = vld [vmem:[%s1407 + $0x9a] sm:$0xff]
      %v1762 = vld [vmem:[%s1407 + $0xaa] sm:$0xff]
      %v1763 = vld [vmem:[%s1407 + $0xb2] sm:$0xff]
      %v1764 = vpack.c.bf16 %v1749, %v1748
      %v1765 = vpack.c.bf16 %v1751, %v1750
      %v1766 = vpack.c.bf16 %v1753, %v1752
      %v1767 = vpack.c.bf16 %v1755, %v1754
      %v1768 = vpack.c.bf16 %v1757, %v1756
      %v1769 = vpack.c.bf16 %v1759, %v1758
      %v1770 = vpack.c.bf16 %v1761, %v1760
      %v1771 = vpack.c.bf16 %v1763, %v1762
      %s1772 = scalar_lea.vmem %s3, 64
      %v1773 = vld [vmem:[%s1772] sm:$0xf]
      %v1774 = vld [vmem:[%s1772 + $0x4] sm:$0xf]
      %v1777 = vunpack.c.l.b16 %v1773
      %v1778 = vunpack.c.l.b16 %v1774
      %v1779 = vpack.c.b16 %v1778, %v1777
      %v1782 = vsel %vm361, %v1764, 0
      %v1785 = vsel %vm361, %v1765, 0
      %v1788 = vsel %vm361, %v1766, 0
      %v1791 = vsel %vm361, %v1767, 0
      %v1794 = vsel %vm361, %v1768, 0
      %v1797 = vsel %vm361, %v1769, 0
      %v1800 = vsel %vm361, %v1770, 0
      %v1803 = vsel %vm361, %v1771, 0
      %1805 = vmatprep.subr.bf16.mxu0 0
      %1806 = vmatpush1.bf16.msra.mxu0 0
      %1807 = vmatprep.subr.bf16.mxu0 0
      %1808 = vmatpush1.bf16.msra.mxu0 0
      %1809 = vmatprep.subr.bf16.mxu0 0
      %1810 = vmatpush1.bf16.msra.mxu0 0
      %1811 = vmatprep.subr.bf16.mxu0 0
      %1812 = vmatpush1.bf16.msra.mxu0 0
      %1813 = vmatprep.subr.bf16.mxu0 0
      %1814 = vmatpush1.bf16.msra.mxu0 0
      %1815 = vmatprep.subr.bf16.mxu0 0
      %1816 = vmatpush1.bf16.msra.mxu0 0
      %1817 = vmatprep.subr.bf16.mxu0 0
      %1818 = vmatpush1.bf16.msra.mxu0 0
      %1819 = vmatprep.subr.bf16.mxu0 0
      %1820 = vmatpush1.bf16.msra.mxu0 %v1779
      %1821 = vmatprep.subr.bf16.mxu0 0
      %1822 = vmatpush2.bf16.msra.mxu0 0
      %1823 = vmatprep.subr.bf16.mxu0 0
      %1824 = vmatpush2.bf16.msra.mxu0 0
      %1825 = vmatprep.subr.bf16.mxu0 0
      %1826 = vmatpush2.bf16.msra.mxu0 0
      %1827 = vmatprep.subr.bf16.mxu0 0
      %1828 = vmatpush2.bf16.msra.mxu0 0
      %1829 = vmatprep.subr.bf16.mxu0 0
      %1830 = vmatpush2.bf16.msra.mxu0 0
      %1831 = vmatprep.subr.bf16.mxu0 0
      %1832 = vmatpush2.bf16.msra.mxu0 0
      %1833 = vmatprep.subr.bf16.mxu0 0
      %1834 = vmatpush2.bf16.msra.mxu0 0
      %1835 = vmatprep.subr.bf16.mxu0 0
      %1836 = vmatpush2.bf16.msra.mxu0 0
      %1837 = vmatprep.mubr.bf16.mxu0 0
      %1838 = vmatmul.mubr.bf16.gmra.mxu0 %v1782
      %v1839 = vpop.f32.mrf.mxu0
      %v1840 = vadd.f32 0.0, %v1839
      %v1841 = vpop.f32.mrf.mxu0
      %v1842 = vpop.f32.mrf.mxu0
      %v1843 = vadd.f32 0.0, %v1842
      %v1844 = vpop.f32.mrf.mxu0
      %1845 = vmatprep.mubr.bf16.mxu0 0
      %1846 = vmatmul.mubr.bf16.gmra.mxu0 %v1785
      %v1847 = vpop.f32.mrf.mxu0
      %v1848 = vadd.f32 0.0, %v1847
      %v1849 = vpop.f32.mrf.mxu0
      %v1850 = vpop.f32.mrf.mxu0
      %v1851 = vadd.f32 0.0, %v1850
      %v1852 = vpop.f32.mrf.mxu0
      %1853 = vmatprep.mubr.bf16.mxu0 0
      %1854 = vmatmul.mubr.bf16.gmra.mxu0 %v1788
      %v1855 = vpop.f32.mrf.mxu0
      %v1856 = vadd.f32 0.0, %v1855
      %v1857 = vpop.f32.mrf.mxu0
      %v1858 = vpop.f32.mrf.mxu0
      %v1859 = vadd.f32 0.0, %v1858
      %v1860 = vpop.f32.mrf.mxu0
      %1861 = vmatprep.mubr.bf16.mxu0 0
      %1862 = vmatmul.mubr.bf16.gmra.mxu0 %v1791
      %v1863 = vpop.f32.mrf.mxu0
      %v1864 = vadd.f32 0.0, %v1863
      %v1865 = vpop.f32.mrf.mxu0
      %v1866 = vpop.f32.mrf.mxu0
      %v1867 = vadd.f32 0.0, %v1866
      %v1868 = vpop.f32.mrf.mxu0
      %1869 = vmatprep.mubr.bf16.mxu0 0
      %1870 = vmatmul.mubr.bf16.gmra.mxu0 %v1794
      %v1871 = vpop.f32.mrf.mxu0
      %v1872 = vadd.f32 0.0, %v1871
      %v1873 = vpop.f32.mrf.mxu0
      %v1874 = vpop.f32.mrf.mxu0
      %v1875 = vadd.f32 0.0, %v1874
      %v1876 = vpop.f32.mrf.mxu0
      %1877 = vmatprep.mubr.bf16.mxu0 0
      %1878 = vmatmul.mubr.bf16.gmra.mxu0 %v1797
      %v1879 = vpop.f32.mrf.mxu0
      %v1880 = vadd.f32 0.0, %v1879
      %v1881 = vpop.f32.mrf.mxu0
      %v1882 = vpop.f32.mrf.mxu0
      %v1883 = vadd.f32 0.0, %v1882
      %v1884 = vpop.f32.mrf.mxu0
      %1885 = vmatprep.mubr.bf16.mxu0 0
      %1886 = vmatmul.mubr.bf16.gmra.mxu0 %v1800
      %v1887 = vpop.f32.mrf.mxu0
      %v1888 = vadd.f32 0.0, %v1887
      %v1889 = vpop.f32.mrf.mxu0
      %v1890 = vpop.f32.mrf.mxu0
      %v1891 = vadd.f32 0.0, %v1890
      %v1892 = vpop.f32.mrf.mxu0
      %1893 = vmatprep.mubr.bf16.mxu0 0
      %1894 = vmatmul.mubr.bf16.gmra.mxu0 %v1803
      %v1895 = vpop.f32.mrf.mxu0
      %v1896 = vadd.f32 0.0, %v1895
      %v1897 = vpop.f32.mrf.mxu0
      %v1898 = vpop.f32.mrf.mxu0
      %v1899 = vadd.f32 0.0, %v1898
      %v1900 = vpop.f32.mrf.mxu0
      %1901 = vdwg.mxu0
      %v1902 = vadd.f32 %v1732, %v1840
      %v1903 = vadd.f32 %v1733, %v1843
      %v1904 = vadd.f32 %v1734, %v1848
      %v1905 = vadd.f32 %v1735, %v1851
      %v1906 = vadd.f32 %v1736, %v1856
      %v1907 = vadd.f32 %v1737, %v1859
      %v1908 = vadd.f32 %v1738, %v1864
      %v1909 = vadd.f32 %v1739, %v1867
      %v1910 = vadd.f32 %v1740, %v1872
      %v1911 = vadd.f32 %v1741, %v1875
      %v1912 = vadd.f32 %v1742, %v1880
      %v1913 = vadd.f32 %v1743, %v1883
      %v1914 = vadd.f32 %v1744, %v1888
      %v1915 = vadd.f32 %v1745, %v1891
      %v1916 = vadd.f32 %v1746, %v1896
      %v1917 = vadd.f32 %v1747, %v1899
      %v1918 = vld [vmem:[%s4] sm:$0x1]
      %v1920 = vlaneseq
      %v1921 = vshrl.u32 %v1920, 7
      %v1922 = vsub.s32 0, %v1921
      %v1923 = vrot.slane %v1918, %v1922
      %v1925 = vadd.f32 %v1902, %v1923
      %v1926 = vadd.f32 %v1903, %v1923
      %v1927 = vadd.f32 %v1904, %v1923
      %v1928 = vadd.f32 %v1905, %v1923
      %v1929 = vadd.f32 %v1906, %v1923
      %v1930 = vadd.f32 %v1907, %v1923
      %v1931 = vadd.f32 %v1908, %v1923
      %v1932 = vadd.f32 %v1909, %v1923
      %v1933 = vadd.f32 %v1910, %v1923
      %v1934 = vadd.f32 %v1911, %v1923
      %v1935 = vadd.f32 %v1912, %v1923
      %v1936 = vadd.f32 %v1913, %v1923
      %v1937 = vadd.f32 %v1914, %v1923
      %v1938 = vadd.f32 %v1915, %v1923
      %v1939 = vadd.f32 %v1916, %v1923
      %v1940 = vadd.f32 %v1917, %v1923
      %v1941 = vmax.f32 %v1925, 0.0
      %v1942 = vmax.f32 %v1926, 0.0
      %v1943 = vmax.f32 %v1927, 0.0
      %v1944 = vmax.f32 %v1928, 0.0
      %v1945 = vmax.f32 %v1929, 0.0
      %v1946 = vmax.f32 %v1930, 0.0
      %v1947 = vmax.f32 %v1931, 0.0
      %v1948 = vmax.f32 %v1932, 0.0
      %v1949 = vmax.f32 %v1933, 0.0
      %v1950 = vmax.f32 %v1934, 0.0
      %v1951 = vmax.f32 %v1935, 0.0
      %v1952 = vmax.f32 %v1936, 0.0
      %v1953 = vmax.f32 %v1937, 0.0
      %v1954 = vmax.f32 %v1938, 0.0
      %v1955 = vmax.f32 %v1939, 0.0
      %v1956 = vmax.f32 %v1940, 0.0
      %v1957 = vpack.c.bf16 %v1942, %v1941
      %v1958 = vpack.c.bf16 %v1944, %v1943
      %v1959 = vpack.c.bf16 %v1946, %v1945
      %v1960 = vpack.c.bf16 %v1948, %v1947
      %v1961 = vpack.c.bf16 %v1950, %v1949
      %v1962 = vpack.c.bf16 %v1952, %v1951
      %v1963 = vpack.c.bf16 %v1954, %v1953
      %v1964 = vpack.c.bf16 %v1956, %v1955
      %v1973 = vunpack.c.l.b16 %v1957
      %v1974 = vunpack.c.h.b16 %v1957
      %v1975 = vunpack.c.l.b16 %v1958
      %v1976 = vunpack.c.h.b16 %v1958
      %v1977 = vunpack.c.l.b16 %v1959
      %v1978 = vunpack.c.h.b16 %v1959
      %v1979 = vunpack.c.l.b16 %v1960
      %v1980 = vunpack.c.h.b16 %v1960
      %v1981 = vunpack.c.l.b16 %v1961
      %v1982 = vunpack.c.h.b16 %v1961
      %v1983 = vunpack.c.l.b16 %v1962
      %v1984 = vunpack.c.h.b16 %v1962
      %v1985 = vunpack.c.l.b16 %v1963
      %v1986 = vunpack.c.h.b16 %v1963
      %v1987 = vunpack.c.l.b16 %v1964
      %v1988 = vunpack.c.h.b16 %v1964
      %v1989 = vpack.c.b16 %v1973, %v1973
      %v1990 = vpack.c.b16 %v1974, %v1974
      %v1991 = vpack.c.b16 %v1975, %v1975
      %v1992 = vpack.c.b16 %v1976, %v1976
      %v1993 = vpack.c.b16 %v1977, %v1977
      %v1994 = vpack.c.b16 %v1978, %v1978
      %v1995 = vpack.c.b16 %v1979, %v1979
      %v1996 = vpack.c.b16 %v1980, %v1980
      %v1997 = vpack.c.b16 %v1981, %v1981
      %v1998 = vpack.c.b16 %v1982, %v1982
      %v1999 = vpack.c.b16 %v1983, %v1983
      %v2000 = vpack.c.b16 %v1984, %v1984
      %v2001 = vpack.c.b16 %v1985, %v1985
      %v2002 = vpack.c.b16 %v1986, %v1986
      %v2003 = vpack.c.b16 %v1987, %v1987
      %v2004 = vpack.c.b16 %v1988, %v1988
      %vm2021 = vcmask 125952
      %2022 = vst.msk [vmem:[%s333] sm:$0xf] %vm2021, %v1989
      %2023 = vst.msk [vmem:[%s333 + $0x4] sm:$0xf] %vm2021, %v1990
      %2024 = vst.msk [vmem:[%s333 + $0x8] sm:$0xf] %vm2021, %v1991
      %2025 = vst.msk [vmem:[%s333 + $0xc] sm:$0xf] %vm2021, %v1992
      %2026 = vst.msk [vmem:[%s333 + $0x10] sm:$0xf] %vm2021, %v1993
      %2027 = vst.msk [vmem:[%s333 + $0x14] sm:$0xf] %vm2021, %v1994
      %2028 = vst.msk [vmem:[%s333 + $0x18] sm:$0xf] %vm2021, %v1995
      %2029 = vst.msk [vmem:[%s333 + $0x1c] sm:$0xf] %vm2021, %v1996
      %2030 = vst.msk [vmem:[%s333 + $0x20] sm:$0xf] %vm2021, %v1997
      %2031 = vst.msk [vmem:[%s333 + $0x24] sm:$0xf] %vm2021, %v1998
      %2032 = vst.msk [vmem:[%s333 + $0x28] sm:$0xf] %vm2021, %v1999
      %2033 = vst.msk [vmem:[%s333 + $0x2c] sm:$0xf] %vm2021, %v2000
      %2034 = vst.msk [vmem:[%s333 + $0x30] sm:$0xf] %vm2021, %v2001
      %2035 = vst.msk [vmem:[%s333 + $0x34] sm:$0xf] %vm2021, %v2002
      %2036 = vst.msk [vmem:[%s333 + $0x38] sm:$0xf] %vm2021, %v2003
      %2037 = vst.msk [vmem:[%s333 + $0x3c] sm:$0xf] %vm2021, %v2004
      %s2038 = smul.u32 16, %s21
      %p2039 = scmp.lt.s32.totalorder %s20, 1
      %s2040 = scalar_select %p2039, %s20, 1
      %p2041 = scmp.lt.s32.totalorder %s2038, 31
      %s2042 = scalar_select %p2041, %s2038, 31
      %s2043 = smul.addr %s2040, 32
      %s2044 = sadd.s32 %s2042, %s2043
      %s2045 = smul.addr %s2044, 4
      %s2046 = scalar_lea.vmem %s5, %s2045
      // Predicated region
      $region41: #{att_merge_forward.4} parent=39 // pred_check
        %p2047 = pneg %p174
      $region42: #{att_merge_forward.4} parent=39 // pred_check_branch
        %2049 = sbr.rel (%p2047) target = $region44
      $region43: #{att_merge_forward.4} parent=39 // pred_region
        %s2050 = smul.u32 16, %s21
      $region44: #{att_merge_forward.4} parent=39 // pred_fallthru
        _
    $region40: #{att_merge_forward.4} parent=5 // pred_fallthru
      _
    %p2051 = scmp.le.s32.totalorder 2, %s11
    // Predicated region
    $region45: #{att_merge_forward.4} parent=5 // pred_check
      %p2052 = pneg %p2051
    $region46: #{att_merge_forward.4} parent=5 // pred_check_branch
      %2054 = sbr.rel (%p2052) target = $region48
    $region47: #{att_merge_forward.4} parent=5 // pred_region
      %s2055 = ssub.s32 %s11, 2
      // Predicated region
      $region49: #{att_merge_forward.4} parent=47 // pred_check
        %p2056 = pneg %p180
      $region50: #{att_merge_forward.4} parent=47 // pred_check_branch
        %2058 = sbr.rel (%p2056) target = $region52
      $region51: #{att_merge_forward.4} parent=47 // pred_region
        %s2059 = smul.u32 16, %s23
        %p2060 = scmp.lt.s32.totalorder %s22, 1
        %s2061 = scalar_select %p2060, %s22, 1
        %p2062 = scmp.lt.s32.totalorder %s2059, 31
        %s2063 = scalar_select %p2062, %s2059, 31
        %s2064 = smul.addr %s2061, 32
        %s2065 = sadd.s32 %s2063, %s2064
        %s2066 = smul.addr %s2065, 4
        %s2067 = scalar_lea.vmem %s5, %s2066
      $region52: #{att_merge_forward.4} parent=47 // pred_fallthru
        _
    $region48: #{att_merge_forward.4} parent=5 // pred_fallthru
      _
  $region6: #{att_merge_forward.4} parent=0 // loop_footer
    %s15 = sadd.s32 1, %s11
  $region7: #{att_merge_forward.4} parent=0 // loop_footer_branch
    %10 = sbr.rel target = $region3
  $region8: #{att_merge_forward.4} parent=0 // loop_exit
    _

// kernel: att_merge_forward.5
$region0: #{att_merge_forward.5}
  #allocation0 [shape = 'u32[]', space=smem, size = 0x4, offset = 0x4, fixed_abs, tag = 'smem constant byte address 0x4 - core index']
  #allocation1 [shape = 'u32[144,128]{1,0:T(1,128)}', space=vmem, size = 0x12000, scoped, tag = 'internal scratch']
  #allocation2 [shape = 'f32[12,18,16]{2,1,0:T(8,128)}', space=vmem, size = 0x24000, scoped, tag = 'scratch operand']
  #allocation3 [shape = 'f32[12,18,16]{2,1,0:T(8,128)}', space=vmem, size = 0x24000, scoped, tag = 'scratch operand']
  #allocation4 [shape = 'f32[10,18,8]{2,1,0:T(8,128)}', space=vmem, size = 0x1e000, scoped, tag = 'scratch operand']
  #allocation5 [shape = 'f32[1,1]{1,0:T(1,128)S(1)}', space=vmem, size = 0x200, scoped, tag = 'scoped memory for att_merge_forward.5']
  %s0 = inlined_call_operand.vmem [shape: bf16[2,16,16,16], index: 0, kind: input, shape index: {}]
  %s1 = inlined_call_operand.vmem [shape: bf16[2,4,16,16], index: 1, kind: input, shape index: {}]
  %s2 = inlined_call_operand.vmem [shape: bf16[2,4,16,16], index: 2, kind: input, shape index: {}]
  %s3 = inlined_call_operand.vmem [shape: bf16[2,16,16,16], index: 3, kind: input, shape index: {}]
  %s4 = inlined_call_operand.vmem [shape: bf16[2,4,16,16], index: 4, kind: input, shape index: {}]
  %s5 = inlined_call_operand.vmem [shape: bf16[2,4,16,16], index: 5, kind: input, shape index: {}]
  %s6 = inlined_call_operand.vmem [shape: bf16[9,16,8], index: 6, kind: input, shape index: {}]
  %s7 = inlined_call_operand.vmem [shape: bf16[9,16,8], index: 7, kind: input, shape index: {}]
  %s8 = inlined_call_operand.vmem [shape: f32[1,8], index: 8, kind: input, shape index: {}]
  %s9 = inlined_call_operand.vmem [shape: f32[9,1,8], index: 9, kind: input, shape index: {}]
  %s10 = inlined_call_operand.<no memory space> [shape: f32[1,1], index: 10, kind: input, shape index: {}]
  %s11 = inlined_call_operand.vmem [shape: f32[2,256,16], index: 11, kind: output, shape index: {}]
  %s12 = sld [smem:[#allocation0]]
  $region85: #{att_merge_forward.5} parent=0
    _
  %s14 = ssub.s32 1, %s12
  %s15 = scalar_select 0, %s14, %s12
  %v16 = vstv %s10
  %17 = vst [vmem:[#allocation5] sm:$0x1] %v16
  loop: start=0, step=1, limit=6
  $region2: #{att_merge_forward.5} parent=0 // loop_pre_header
    _
  $region3: #{att_merge_forward.5} parent=0 // loop_header
    %s19 = sphi 0, %s23
    %p20 = scmp.ge.s32.totalorder %s19, 6
    %s26 = sphi 0, %s38
    %s27 = sphi 0, %s34
    %s28 = sphi 0, %s26
    %s29 = sphi 0, %s27
    %s30 = sphi 0, %s28
    %s31 = sphi 0, %s29
    %s43 = sphi 0, %s45
    %s46 = sphi 0, %s43
    %s47 = sphi 0, %s46
    %s63 = sphi 0, %s47
    %s71 = sphi 0, %s73
    %s74 = sphi 0, %s71
    %s75 = sphi 0, %s74
    %s91 = sphi 0, %s75
    %s99 = sphi 0, %s101
    %s102 = sphi 0, %s99
    %s103 = sphi 0, %s102
    %s119 = sphi 0, %s103
    %s127 = sphi 0, %s129
    %s130 = sphi 0, %s127
    %s131 = sphi 0, %s130
    %s147 = sphi 0, %s131
    %s155 = sphi 0, %s157
    %s158 = sphi 0, %s155
    %s159 = sphi 0, %s158
    %s175 = sphi 0, %s159
    %s183 = sphi 0, %s185
    %s186 = sphi 0, %s183
    %s187 = sphi 0, %s186
    %s203 = sphi 0, %s187
    %s207 = sphi 0, %s207
    %s209 = sphi 0, %s207
    %s210 = sphi 0, %s209
    %s224 = sphi 0, %s210
    %s228 = sphi 0, %s228
    %s230 = sphi 0, %s228
    %s231 = sphi 0, %s230
    %s245 = sphi 0, %s231
    %s249 = sphi 0, %s249
    %s251 = sphi 0, %s249
    %s252 = sphi 0, %s251
    %s266 = sphi 0, %s252
    %s270 = sphi 0, %s270
    %s272 = sphi 0, %s270
    %s273 = sphi 0, %s272
    %s287 = sphi 0, %s273
    %s291 = sphi 0, %s291
    %s293 = sphi 0, %s291
    %s294 = sphi 0, %s293
    %s308 = sphi 0, %s294
    %s316 = sphi 0, %s318
    %s319 = sphi 0, %s316
    %s320 = sphi 0, %s319
    %s336 = sphi 0, %s320
  $region4: #{att_merge_forward.5} parent=0 // loop_header_branch
    %22 = sbr.rel (%p20) target = $region8
  $region5: #{att_merge_forward.5} parent=0 // loop_body
    %s24 = ssub.s32 %s19, 1
    %s25 = ssub.s32 %s19, 2
    %s32 = sadd.s32 1, %s27
    %p33 = scmp.ge.s32.totalorder %s32, 2
    %s34 = scalar_select %p33, 0, %s32
    %s35 = sadd.s32 1, %s26
    %s36 = scalar_select %p33, %s35, %s26
    %p37 = scmp.ge.s32.totalorder %s36, 2
    %s38 = scalar_select %p37, 0, %s36
    %s39 = ssub.s32 %s26, %s38
    %s40 = ssub.s32 %s27, %s34
    %s41 = sor.u32 %s39, %s40
    %p42 = scmp.eq.s32.totalorder %s41, 0
    %s44 = sadd.s32 %s43, 1
    %s45 = scalar_select %p42, %s43, %s44
    %p48 = pneg %p42
    %p49 = scmp.eq.s32.totalorder %s19, 3
    %p50 = por %p48, %p49
    %p51 = scmp.ne.s32.totalorder %s43, %s46
    %p52 = scmp.eq.s32.totalorder %s19, 0
    %p53 = por %p51, %p52
    %p54 = scmp.ne.s32.totalorder %s43, %s46
    %p55 = scmp.eq.s32.totalorder %s24, 3
    %p56 = por %p54, %p55
    %p57 = scmp.ne.s32.totalorder %s46, %s47
    %p58 = scmp.eq.s32.totalorder %s24, 0
    %p59 = por %p57, %p58
    %p60 = scmp.ne.s32.totalorder %s46, %s47
    %p61 = scmp.eq.s32.totalorder %s25, 3
    %p62 = por %p60, %p61
    %p64 = scmp.ne.s32.totalorder %s47, %s63
    %p65 = scmp.eq.s32.totalorder %s25, 0
    %p66 = por %p64, %p65
    %s67 = ssub.s32 %s26, %s38
    %s68 = ssub.s32 %s27, %s34
    %s69 = sor.u32 %s67, %s68
    %p70 = scmp.eq.s32.totalorder %s69, 0
    %s72 = sadd.s32 %s71, 1
    %s73 = scalar_select %p70, %s71, %s72
    %p76 = pneg %p70
    %p77 = scmp.eq.s32.totalorder %s19, 3
    %p78 = por %p76, %p77
    %p79 = scmp.ne.s32.totalorder %s71, %s74
    %p80 = scmp.eq.s32.totalorder %s19, 0
    %p81 = por %p79, %p80
    %p82 = scmp.ne.s32.totalorder %s71, %s74
    %p83 = scmp.eq.s32.totalorder %s24, 3
    %p84 = por %p82, %p83
    %p85 = scmp.ne.s32.totalorder %s74, %s75
    %p86 = scmp.eq.s32.totalorder %s24, 0
    %p87 = por %p85, %p86
    %p88 = scmp.ne.s32.totalorder %s74, %s75
    %p89 = scmp.eq.s32.totalorder %s25, 3
    %p90 = por %p88, %p89
    %p92 = scmp.ne.s32.totalorder %s75, %s91
    %p93 = scmp.eq.s32.totalorder %s25, 0
    %p94 = por %p92, %p93
    %s95 = ssub.s32 %s26, %s38
    %s96 = ssub.s32 %s27, %s34
    %s97 = sor.u32 %s95, %s96
    %p98 = scmp.eq.s32.totalorder %s97, 0
    %s100 = sadd.s32 %s99, 1
    %s101 = scalar_select %p98, %s99, %s100
    %p104 = pneg %p98
    %p105 = scmp.eq.s32.totalorder %s19, 3
    %p106 = por %p104, %p105
    %p107 = scmp.ne.s32.totalorder %s99, %s102
    %p108 = scmp.eq.s32.totalorder %s19, 0
    %p109 = por %p107, %p108
    %p110 = scmp.ne.s32.totalorder %s99, %s102
    %p111 = scmp.eq.s32.totalorder %s24, 3
    %p112 = por %p110, %p111
    %p113 = scmp.ne.s32.totalorder %s102, %s103
    %p114 = scmp.eq.s32.totalorder %s24, 0
    %p115 = por %p113, %p114
    %p116 = scmp.ne.s32.totalorder %s102, %s103
    %p117 = scmp.eq.s32.totalorder %s25, 3
    %p118 = por %p116, %p117
    %p120 = scmp.ne.s32.totalorder %s103, %s119
    %p121 = scmp.eq.s32.totalorder %s25, 0
    %p122 = por %p120, %p121
    %s123 = ssub.s32 %s26, %s38
    %s124 = ssub.s32 %s27, %s34
    %s125 = sor.u32 %s123, %s124
    %p126 = scmp.eq.s32.totalorder %s125, 0
    %s128 = sadd.s32 %s127, 1
    %s129 = scalar_select %p126, %s127, %s128
    %p132 = pneg %p126
    %p133 = scmp.eq.s32.totalorder %s19, 3
    %p134 = por %p132, %p133
    %p135 = scmp.ne.s32.totalorder %s127, %s130
    %p136 = scmp.eq.s32.totalorder %s19, 0
    %p137 = por %p135, %p136
    %p138 = scmp.ne.s32.totalorder %s127, %s130
    %p139 = scmp.eq.s32.totalorder %s24, 3
    %p140 = por %p138, %p139
    %p141 = scmp.ne.s32.totalorder %s130, %s131
    %p142 = scmp.eq.s32.totalorder %s24, 0
    %p143 = por %p141, %p142
    %p144 = scmp.ne.s32.totalorder %s130, %s131
    %p145 = scmp.eq.s32.totalorder %s25, 3
    %p146 = por %p144, %p145
    %p148 = scmp.ne.s32.totalorder %s131, %s147
    %p149 = scmp.eq.s32.totalorder %s25, 0
    %p150 = por %p148, %p149
    %s151 = ssub.s32 %s26, %s38
    %s152 = ssub.s32 %s27, %s34
    %s153 = sor.u32 %s151, %s152
    %p154 = scmp.eq.s32.totalorder %s153, 0
    %s156 = sadd.s32 %s155, 1
    %s157 = scalar_select %p154, %s155, %s156
    %p160 = pneg %p154
    %p161 = scmp.eq.s32.totalorder %s19, 3
    %p162 = por %p160, %p161
    %p163 = scmp.ne.s32.totalorder %s155, %s158
    %p164 = scmp.eq.s32.totalorder %s19, 0
    %p165 = por %p163, %p164
    %p166 = scmp.ne.s32.totalorder %s155, %s158
    %p167 = scmp.eq.s32.totalorder %s24, 3
    %p168 = por %p166, %p167
    %p169 = scmp.ne.s32.totalorder %s158, %s159
    %p170 = scmp.eq.s32.totalorder %s24, 0
    %p171 = por %p169, %p170
    %p172 = scmp.ne.s32.totalorder %s158, %s159
    %p173 = scmp.eq.s32.totalorder %s25, 3
    %p174 = por %p172, %p173
    %p176 = scmp.ne.s32.totalorder %s159, %s175
    %p177 = scmp.eq.s32.totalorder %s25, 0
    %p178 = por %p176, %p177
    %s179 = ssub.s32 %s26, %s38
    %s180 = ssub.s32 %s27, %s34
    %s181 = sor.u32 %s179, %s180
    %p182 = scmp.eq.s32.totalorder %s181, 0
    %s184 = sadd.s32 %s183, 1
    %s185 = scalar_select %p182, %s183, %s184
    %p188 = pneg %p182
    %p189 = scmp.eq.s32.totalorder %s19, 3
    %p190 = por %p188, %p189
    %p191 = scmp.ne.s32.totalorder %s183, %s186
    %p192 = scmp.eq.s32.totalorder %s19, 0
    %p193 = por %p191, %p192
    %p194 = scmp.ne.s32.totalorder %s183, %s186
    %p195 = scmp.eq.s32.totalorder %s24, 3
    %p196 = por %p194, %p195
    %p197 = scmp.ne.s32.totalorder %s186, %s187
    %p198 = scmp.eq.s32.totalorder %s24, 0
    %p199 = por %p197, %p198
    %p200 = scmp.ne.s32.totalorder %s186, %s187
    %p201 = scmp.eq.s32.totalorder %s25, 3
    %p202 = por %p200, %p201
    %p204 = scmp.ne.s32.totalorder %s187, %s203
    %p205 = scmp.eq.s32.totalorder %s25, 0
    %p206 = por %p204, %p205
    %s208 = sadd.s32 %s207, 1
    %p211 = scmp.eq.s32.totalorder %s19, 3
    %p212 = scmp.ne.s32.totalorder %s207, %s209
    %p213 = scmp.eq.s32.totalorder %s19, 0
    %p214 = por %p212, %p213
    %p215 = scmp.ne.s32.totalorder %s207, %s209
    %p216 = scmp.eq.s32.totalorder %s24, 3
    %p217 = por %p215, %p216
    %p218 = scmp.ne.s32.totalorder %s209, %s210
    %p219 = scmp.eq.s32.totalorder %s24, 0
    %p220 = por %p218, %p219
    %p221 = scmp.ne.s32.totalorder %s209, %s210
    %p222 = scmp.eq.s32.totalorder %s25, 3
    %p223 = por %p221, %p222
    %p225 = scmp.ne.s32.totalorder %s210, %s224
    %p226 = scmp.eq.s32.totalorder %s25, 0
    %p227 = por %p225, %p226
    %s229 = sadd.s32 %s228, 1
    %p232 = scmp.eq.s32.totalorder %s19, 3
    %p233 = scmp.ne.s32.totalorder %s228, %s230
    %p234 = scmp.eq.s32.totalorder %s19, 0
    %p235 = por %p233, %p234
    %p236 = scmp.ne.s32.totalorder %s228, %s230
    %p237 = scmp.eq.s32.totalorder %s24, 3
    %p238 = por %p236, %p237
    %p239 = scmp.ne.s32.totalorder %s230, %s231
    %p240 = scmp.eq.s32.totalorder %s24, 0
    %p241 = por %p239, %p240
    %p242 = scmp.ne.s32.totalorder %s230, %s231
    %p243 = scmp.eq.s32.totalorder %s25, 3
    %p244 = por %p242, %p243
    %p246 = scmp.ne.s32.totalorder %s231, %s245
    %p247 = scmp.eq.s32.totalorder %s25, 0
    %p248 = por %p246, %p247
    %s250 = sadd.s32 %s249, 1
    %p253 = scmp.eq.s32.totalorder %s19, 3
    %p254 = scmp.ne.s32.totalorder %s249, %s251
    %p255 = scmp.eq.s32.totalorder %s19, 0
    %p256 = por %p254, %p255
    %p257 = scmp.ne.s32.totalorder %s249, %s251
    %p258 = scmp.eq.s32.totalorder %s24, 3
    %p259 = por %p257, %p258
    %p260 = scmp.ne.s32.totalorder %s251, %s252
    %p261 = scmp.eq.s32.totalorder %s24, 0
    %p262 = por %p260, %p261
    %p263 = scmp.ne.s32.totalorder %s251, %s252
    %p264 = scmp.eq.s32.totalorder %s25, 3
    %p265 = por %p263, %p264
    %p267 = scmp.ne.s32.totalorder %s252, %s266
    %p268 = scmp.eq.s32.totalorder %s25, 0
    %p269 = por %p267, %p268
    %s271 = sadd.s32 %s270, 1
    %p274 = scmp.eq.s32.totalorder %s19, 3
    %p275 = scmp.ne.s32.totalorder %s270, %s272
    %p276 = scmp.eq.s32.totalorder %s19, 0
    %p277 = por %p275, %p276
    %p278 = scmp.ne.s32.totalorder %s270, %s272
    %p279 = scmp.eq.s32.totalorder %s24, 3
    %p280 = por %p278, %p279
    %p281 = scmp.ne.s32.totalorder %s272, %s273
    %p282 = scmp.eq.s32.totalorder %s24, 0
    %p283 = por %p281, %p282
    %p284 = scmp.ne.s32.totalorder %s272, %s273
    %p285 = scmp.eq.s32.totalorder %s25, 3
    %p286 = por %p284, %p285
    %p288 = scmp.ne.s32.totalorder %s273, %s287
    %p289 = scmp.eq.s32.totalorder %s25, 0
    %p290 = por %p288, %p289
    %s292 = sadd.s32 %s291, 1
    %p295 = scmp.eq.s32.totalorder %s19, 3
    %p296 = scmp.ne.s32.totalorder %s291, %s293
    %p297 = scmp.eq.s32.totalorder %s19, 0
    %p298 = por %p296, %p297
    %p299 = scmp.ne.s32.totalorder %s291, %s293
    %p300 = scmp.eq.s32.totalorder %s24, 3
    %p301 = por %p299, %p300
    %p302 = scmp.ne.s32.totalorder %s293, %s294
    %p303 = scmp.eq.s32.totalorder %s24, 0
    %p304 = por %p302, %p303
    %p305 = scmp.ne.s32.totalorder %s293, %s294
    %p306 = scmp.eq.s32.totalorder %s25, 3
    %p307 = por %p305, %p306
    %p309 = scmp.ne.s32.totalorder %s294, %s308
    %p310 = scmp.eq.s32.totalorder %s25, 0
    %p311 = por %p309, %p310
    %s312 = ssub.s32 %s26, %s38
    %s313 = ssub.s32 %s27, %s34
    %s314 = sor.u32 %s312, %s313
    %p315 = scmp.eq.s32.totalorder %s314, 0
    %s317 = sadd.s32 %s316, 1
    %s318 = scalar_select %p315, %s316, %s317
    %p321 = pneg %p315
    %p322 = scmp.eq.s32.totalorder %s19, 3
    %p323 = por %p321, %p322
    %p324 = scmp.ne.s32.totalorder %s316, %s319
    %p325 = scmp.eq.s32.totalorder %s19, 0
    %p326 = por %p324, %p325
    %p327 = scmp.ne.s32.totalorder %s316, %s319
    %p328 = scmp.eq.s32.totalorder %s24, 3
    %p329 = por %p327, %p328
    %p330 = scmp.ne.s32.totalorder %s319, %s320
    %p331 = scmp.eq.s32.totalorder %s24, 0
    %p332 = por %p330, %p331
    %p333 = scmp.ne.s32.totalorder %s319, %s320
    %p334 = scmp.eq.s32.totalorder %s25, 3
    %p335 = por %p333, %p334
    %p337 = scmp.ne.s32.totalorder %s320, %s336
    %p338 = scmp.eq.s32.totalorder %s25, 0
    %p339 = por %p337, %p338
    %p340 = scmp.le.s32.totalorder 1, %s19
    %p341 = scmp.lt.s32.totalorder %s19, 5
    %p342 = pnand %p340, %p341
    %p343 = pneg %p342
    // Predicated region
    $region9: #{att_merge_forward.5} parent=5 // pred_check
      _
    $region10: #{att_merge_forward.5} parent=5 // pred_check_branch
      %345 = sbr.rel (%p342) target = $region12
    $region11: #{att_merge_forward.5} parent=5 // pred_region
      %s346 = ssub.s32 %s19, 1
      // Predicated region
      $region13: #{att_merge_forward.5} parent=11 // pred_check
        %p347 = pneg %p220
      $region14: #{att_merge_forward.5} parent=11 // pred_check_branch
        %349 = sbr.rel (%p347) target = $region16
      $region15: #{att_merge_forward.5} parent=11 // pred_region
        _
      $region16: #{att_merge_forward.5} parent=11 // pred_fallthru
        _
      // Predicated region
      $region17: #{att_merge_forward.5} parent=11 // pred_check
        %p350 = pneg %p241
      $region18: #{att_merge_forward.5} parent=11 // pred_check_branch
        %352 = sbr.rel (%p350) target = $region20
      $region19: #{att_merge_forward.5} parent=11 // pred_region
        _
      $region20: #{att_merge_forward.5} parent=11 // pred_fallthru
        _
      // Predicated region
      $region21: #{att_merge_forward.5} parent=11 // pred_check
        %p353 = pneg %p262
      $region22: #{att_merge_forward.5} parent=11 // pred_check_branch
        %355 = sbr.rel (%p353) target = $region24
      $region23: #{att_merge_forward.5} parent=11 // pred_region
        _
      $region24: #{att_merge_forward.5} parent=11 // pred_fallthru
        _
      // Predicated region
      $region25: #{att_merge_forward.5} parent=11 // pred_check
        %p356 = pneg %p283
      $region26: #{att_merge_forward.5} parent=11 // pred_check_branch
        %358 = sbr.rel (%p356) target = $region28
      $region27: #{att_merge_forward.5} parent=11 // pred_region
        _
      $region28: #{att_merge_forward.5} parent=11 // pred_fallthru
        _
      // Predicated region
      $region29: #{att_merge_forward.5} parent=11 // pred_check
        %p359 = pneg %p304
      $region30: #{att_merge_forward.5} parent=11 // pred_check_branch
        %361 = sbr.rel (%p359) target = $region32
      $region31: #{att_merge_forward.5} parent=11 // pred_region
        _
      $region32: #{att_merge_forward.5} parent=11 // pred_fallthru
        _
    $region12: #{att_merge_forward.5} parent=5 // pred_fallthru
      _
    %p362 = scmp.lt.s32.totalorder %s19, 4
    // Predicated region
    $region33: #{att_merge_forward.5} parent=5 // pred_check
      %p363 = pneg %p362
    $region34: #{att_merge_forward.5} parent=5 // pred_check_branch
      %365 = sbr.rel (%p363) target = $region36
    $region35: #{att_merge_forward.5} parent=5 // pred_region
      // Predicated region
      $region37: #{att_merge_forward.5} parent=35 // pred_check
        %p366 = pneg %p53
      $region38: #{att_merge_forward.5} parent=35 // pred_check_branch
        %368 = sbr.rel (%p366) target = $region40
      $region39: #{att_merge_forward.5} parent=35 // pred_region
        %s369 = smul.u32 8, %s27
        %p370 = scmp.lt.s32.totalorder %s26, 1
        %s371 = scalar_select %p370, %s26, 1
        %p372 = scmp.lt.s32.totalorder %s369, 15
        %s373 = scalar_select %p372, %s369, 15
        %s374 = smul.addr %s373, 2
        %s375 = smul.addr %s371, 32
        %s376 = sadd.s32 %s374, %s375
        %s377 = smul.addr %s376, 4
        %s378 = scalar_lea.vmem %s0, %s377
        %s379 = smul.u32 8, %s27
      $region40: #{att_merge_forward.5} parent=35 // pred_fallthru
        _
      // Predicated region
      $region41: #{att_merge_forward.5} parent=35 // pred_check
        %p380 = pneg %p81
      $region42: #{att_merge_forward.5} parent=35 // pred_check_branch
        %382 = sbr.rel (%p380) target = $region44
      $region43: #{att_merge_forward.5} parent=35 // pred_region
        %s383 = smul.u32 2, %s27
        %p384 = scmp.lt.s32.totalorder %s26, 1
        %s385 = scalar_select %p384, %s26, 1
        %p386 = scmp.lt.s32.totalorder %s383, 3
        %s387 = scalar_select %p386, %s383, 3
        %s388 = smul.addr %s387, 2
        %s389 = smul.addr %s385, 8
        %s390 = sadd.s32 %s388, %s389
        %s391 = smul.addr %s390, 4
        %s392 = scalar_lea.vmem %s1, %s391
        %s393 = smul.u32 2, %s27
      $region44: #{att_merge_forward.5} parent=35 // pred_fallthru
        _
      // Predicated region
      $region45: #{att_merge_forward.5} parent=35 // pred_check
        %p394 = pneg %p109
      $region46: #{att_merge_forward.5} parent=35 // pred_check_branch
        %396 = sbr.rel (%p394) target = $region48
      $region47: #{att_merge_forward.5} parent=35 // pred_region
        %s397 = smul.u32 2, %s27
        %p398 = scmp.lt.s32.totalorder %s26, 1
        %s399 = scalar_select %p398, %s26, 1
        %p400 = scmp.lt.s32.totalorder %s397, 3
        %s401 = scalar_select %p400, %s397, 3
        %s402 = smul.addr %s401, 2
        %s403 = smul.addr %s399, 8
        %s404 = sadd.s32 %s402, %s403
        %s405 = smul.addr %s404, 4
        %s406 = scalar_lea.vmem %s2, %s405
        %s407 = smul.u32 2, %s27
      $region48: #{att_merge_forward.5} parent=35 // pred_fallthru
        _
      // Predicated region
      $region49: #{att_merge_forward.5} parent=35 // pred_check
        %p408 = pneg %p137
      $region50: #{att_merge_forward.5} parent=35 // pred_check_branch
        %410 = sbr.rel (%p408) target = $region52
      $region51: #{att_merge_forward.5} parent=35 // pred_region
        %s411 = smul.u32 8, %s27
        %p412 = scmp.lt.s32.totalorder %s26, 1
        %s413 = scalar_select %p412, %s26, 1
        %p414 = scmp.lt.s32.totalorder %s411, 15
        %s415 = scalar_select %p414, %s411, 15
        %s416 = smul.addr %s415, 2
        %s417 = smul.addr %s413, 32
        %s418 = sadd.s32 %s416, %s417
        %s419 = smul.addr %s418, 4
        %s420 = scalar_lea.vmem %s3, %s419
        %s421 = smul.u32 8, %s27
      $region52: #{att_merge_forward.5} parent=35 // pred_fallthru
        _
      // Predicated region
      $region53: #{att_merge_forward.5} parent=35 // pred_check
        %p422 = pneg %p165
      $region54: #{att_merge_forward.5} parent=35 // pred_check_branch
        %424 = sbr.rel (%p422) target = $region56
      $region55: #{att_merge_forward.5} parent=35 // pred_region
        %s425 = smul.u32 2, %s27
        %p426 = scmp.lt.s32.totalorder %s26, 1
        %s427 = scalar_select %p426, %s26, 1
        %p428 = scmp.lt.s32.totalorder %s425, 3
        %s429 = scalar_select %p428, %s425, 3
        %s430 = smul.addr %s429, 2
        %s431 = smul.addr %s427, 8
        %s432 = sadd.s32 %s430, %s431
        %s433 = smul.addr %s432, 4
        %s434 = scalar_lea.vmem %s4, %s433
        %s435 = smul.u32 2, %s27
      $region56: #{att_merge_forward.5} parent=35 // pred_fallthru
        _
      // Predicated region
      $region57: #{att_merge_forward.5} parent=35 // pred_check
        %p436 = pneg %p193
      $region58: #{att_merge_forward.5} parent=35 // pred_check_branch
        %438 = sbr.rel (%p436) target = $region60
      $region59: #{att_merge_forward.5} parent=35 // pred_region
        %s439 = smul.u32 2, %s27
        %p440 = scmp.lt.s32.totalorder %s26, 1
        %s441 = scalar_select %p440, %s26, 1
        %p442 = scmp.lt.s32.totalorder %s439, 3
        %s443 = scalar_select %p442, %s439, 3
        %s444 = smul.addr %s443, 2
        %s445 = smul.addr %s441, 8
        %s446 = sadd.s32 %s444, %s445
        %s447 = smul.addr %s446, 4
        %s448 = scalar_lea.vmem %s5, %s447
        %s449 = smul.u32 2, %s27
      $region60: #{att_merge_forward.5} parent=35 // pred_fallthru
        _
    $region36: #{att_merge_forward.5} parent=5 // pred_fallthru
      _
    %p450 = scmp.le.s32.totalorder 1, %s19
    %p451 = scmp.lt.s32.totalorder %s19, 5
    %p452 = pnand %p450, %p451
    %p453 = pneg %p452
    // Predicated region
    $region61: #{att_merge_forward.5} parent=5 // pred_check
      _
    $region62: #{att_merge_forward.5} parent=5 // pred_check_branch
      %455 = sbr.rel (%p452) target = $region64
    $region63: #{att_merge_forward.5} parent=5 // pred_region
      %s456 = ssub.s32 %s19, 1
      %s457 = smul.u32 8, %s29
      %p458 = scmp.lt.s32.totalorder %s28, 1
      %s459 = scalar_select %p458, %s28, 1
      %p460 = scmp.lt.s32.totalorder %s457, 15
      %s461 = scalar_select %p460, %s457, 15
      %s462 = smul.addr %s461, 2
      %s463 = smul.addr %s459, 32
      %s464 = sadd.s32 %s462, %s463
      %s465 = smul.addr %s464, 4
      %s466 = scalar_lea.vmem %s0, %s465
      %p467 = pneg %p59
      %p468 = pneg %p56
      %s469 = smul.u32 2, %s29
      %p470 = scmp.lt.s32.totalorder %s28, 1
      %s471 = scalar_select %p470, %s28, 1
      %p472 = scmp.lt.s32.totalorder %s469, 3
      %s473 = scalar_select %p472, %s469, 3
      %s474 = smul.addr %s473, 2
      %s475 = smul.addr %s471, 8
      %s476 = sadd.s32 %s474, %s475
      %s477 = smul.addr %s476, 4
      %s478 = scalar_lea.vmem %s1, %s477
      %p479 = pneg %p87
      %p480 = pneg %p84
      %s481 = smul.u32 2, %s29
      %p482 = scmp.lt.s32.totalorder %s28, 1
      %s483 = scalar_select %p482, %s28, 1
      %p484 = scmp.lt.s32.totalorder %s481, 3
      %s485 = scalar_select %p484, %s481, 3
      %s486 = smul.addr %s485, 2
      %s487 = smul.addr %s483, 8
      %s488 = sadd.s32 %s486, %s487
      %s489 = smul.addr %s488, 4
      %s490 = scalar_lea.vmem %s2, %s489
      %p491 = pneg %p115
      %p492 = pneg %p112
      %s493 = smul.u32 8, %s29
      %p494 = scmp.lt.s32.totalorder %s28, 1
      %s495 = scalar_select %p494, %s28, 1
      %p496 = scmp.lt.s32.totalorder %s493, 15
      %s497 = scalar_select %p496, %s493, 15
      %s498 = smul.addr %s497, 2
      %s499 = smul.addr %s495, 32
      %s500 = sadd.s32 %s498, %s499
      %s501 = smul.addr %s500, 4
      %s502 = scalar_lea.vmem %s3, %s501
      %p503 = pneg %p143
      %p504 = pneg %p140
      %s505 = smul.u32 2, %s29
      %p506 = scmp.lt.s32.totalorder %s28, 1
      %s507 = scalar_select %p506, %s28, 1
      %p508 = scmp.lt.s32.totalorder %s505, 3
      %s509 = scalar_select %p508, %s505, 3
      %s510 = smul.addr %s509, 2
      %s511 = smul.addr %s507, 8
      %s512 = sadd.s32 %s510, %s511
      %s513 = smul.addr %s512, 4
      %s514 = scalar_lea.vmem %s4, %s513
      %p515 = pneg %p171
      %p516 = pneg %p168
      %s517 = smul.u32 2, %s29
      %p518 = scmp.lt.s32.totalorder %s28, 1
      %s519 = scalar_select %p518, %s28, 1
      %p520 = scmp.lt.s32.totalorder %s517, 3
      %s521 = scalar_select %p520, %s517, 3
      %s522 = smul.addr %s521, 2
      %s523 = smul.addr %s519, 8
      %s524 = sadd.s32 %s522, %s523
      %s525 = smul.addr %s524, 4
      %s526 = scalar_lea.vmem %s5, %s525
      %p527 = pneg %p199
      %p528 = pneg %p196
      %p529 = pneg %p220
      %p530 = pneg %p217
      %p531 = pneg %p241
      %p532 = pneg %p238
      %p533 = pneg %p262
      %p534 = pneg %p259
      %p535 = pneg %p283
      %p536 = pneg %p280
      %p537 = pneg %p304
      %p538 = pneg %p301
      %p539 = pneg %p332
      %p540 = pneg %p329
      %s541 = smul.u32 16, %s29
      %p542 = scmp.lt.s32.totalorder %s28, 1
      %s543 = scalar_select %p542, %s28, 1
      %p544 = scmp.lt.s32.totalorder %s541, 31
      %s545 = scalar_select %p544, %s541, 31
      %s546 = smul.addr %s543, 32
      %s547 = sadd.s32 %s545, %s546
      %s548 = smul.addr %s547, 8
      %s549 = scalar_lea.vmem %s11, %s548
      %s550 = smul.u32 8, %s29
      %p551 = scmp.lt.s32.totalorder %s28, 1
      %s552 = scalar_select %p551, %s28, 1
      %p553 = scmp.lt.s32.totalorder %s550, 15
      %s554 = scalar_select %p553, %s550, 15
      %s555 = smul.addr %s554, 2
      %s556 = smul.addr %s552, 32
      %s557 = sadd.s32 %s555, %s556
      %s558 = smul.addr %s557, 4
      %s559 = scalar_lea.vmem %s0, %s558
      %s560 = smul.u32 8, %s29
      %s561 = smul.u32 2, %s29
      %p562 = scmp.lt.s32.totalorder %s28, 1
      %s563 = scalar_select %p562, %s28, 1
      %p564 = scmp.lt.s32.totalorder %s561, 3
      %s565 = scalar_select %p564, %s561, 3
      %s566 = smul.addr %s565, 2
      %s567 = smul.addr %s563, 8
      %s568 = sadd.s32 %s566, %s567
      %s569 = smul.addr %s568, 4
      %s570 = scalar_lea.vmem %s1, %s569
      %s571 = smul.u32 2, %s29
      %s572 = smul.u32 2, %s29
      %p573 = scmp.lt.s32.totalorder %s28, 1
      %s574 = scalar_select %p573, %s28, 1
      %p575 = scmp.lt.s32.totalorder %s572, 3
      %s576 = scalar_select %p575, %s572, 3
      %s577 = smul.addr %s576, 2
      %s578 = smul.addr %s574, 8
      %s579 = sadd.s32 %s577, %s578
      %s580 = smul.addr %s579, 4
      %s581 = scalar_lea.vmem %s2, %s580
      %s582 = smul.u32 2, %s29
      %s583 = smul.u32 8, %s29
      %p584 = scmp.lt.s32.totalorder %s28, 1
      %s585 = scalar_select %p584, %s28, 1
      %p586 = scmp.lt.s32.totalorder %s583, 15
      %s587 = scalar_select %p586, %s583, 15
      %s588 = smul.addr %s587, 2
      %s589 = smul.addr %s585, 32
      %s590 = sadd.s32 %s588, %s589
      %s591 = smul.addr %s590, 4
      %s592 = scalar_lea.vmem %s3, %s591
      %s593 = smul.u32 8, %s29
      %s594 = smul.u32 2, %s29
      %p595 = scmp.lt.s32.totalorder %s28, 1
      %s596 = scalar_select %p595, %s28, 1
      %p597 = scmp.lt.s32.totalorder %s594, 3
      %s598 = scalar_select %p597, %s594, 3
      %s599 = smul.addr %s598, 2
      %s600 = smul.addr %s596, 8
      %s601 = sadd.s32 %s599, %s600
      %s602 = smul.addr %s601, 4
      %s603 = scalar_lea.vmem %s4, %s602
      %s604 = smul.u32 2, %s29
      %s605 = smul.u32 2, %s29
      %p606 = scmp.lt.s32.totalorder %s28, 1
      %s607 = scalar_select %p606, %s28, 1
      %p608 = scmp.lt.s32.totalorder %s605, 3
      %s609 = scalar_select %p608, %s605, 3
      %s610 = smul.addr %s609, 2
      %s611 = smul.addr %s607, 8
      %s612 = sadd.s32 %s610, %s611
      %s613 = smul.addr %s612, 4
      %s614 = scalar_lea.vmem %s5, %s613
      %s615 = smul.u32 2, %s29
      %s616 = smul.u32 16, %s29
      %p617 = scmp.lt.s32.totalorder %s28, 1
      %s618 = scalar_select %p617, %s28, 1
      %p619 = scmp.lt.s32.totalorder %s616, 31
      %s620 = scalar_select %p619, %s616, 31
      %s621 = smul.addr %s618, 32
      %s622 = sadd.s32 %s620, %s621
      %s623 = smul.addr %s622, 8
      %s624 = scalar_lea.vmem %s11, %s623
      %s625 = smul.u32 16, %s29
      %v627 = vld [vmem:[%s570] sm:$0xf]
      %v628 = vld [vmem:[%s570 + $0x4] sm:$0xf]
      %v629 = vld [vmem:[%s570 + $0x8] sm:$0xf]
      %v630 = vld [vmem:[%s570 + $0xc] sm:$0xf]
      %v631 = vld [vmem:[%s559] sm:$0xf]
      %v632 = vld [vmem:[%s559 + $0x4] sm:$0xf]
      %v633 = vld [vmem:[%s559 + $0x8] sm:$0xf]
      %v634 = vld [vmem:[%s559 + $0xc] sm:$0xf]
      %v635 = vld [vmem:[%s559 + $0x10] sm:$0xf]
      %v636 = vld [vmem:[%s559 + $0x14] sm:$0xf]
      %v637 = vld [vmem:[%s559 + $0x18] sm:$0xf]
      %v638 = vld [vmem:[%s559 + $0x1c] sm:$0xf]
      %v639 = vld [vmem:[%s559 + $0x20] sm:$0xf]
      %v640 = vld [vmem:[%s559 + $0x24] sm:$0xf]
      %v641 = vld [vmem:[%s559 + $0x28] sm:$0xf]
      %v642 = vld [vmem:[%s559 + $0x2c] sm:$0xf]
      %v643 = vld [vmem:[%s559 + $0x30] sm:$0xf]
      %v644 = vld [vmem:[%s559 + $0x34] sm:$0xf]
      %v645 = vld [vmem:[%s559 + $0x38] sm:$0xf]
      %v646 = vld [vmem:[%s559 + $0x3c] sm:$0xf]
      %v647 = vld [vmem:[%s581] sm:$0xf]
      %v648 = vld [vmem:[%s581 + $0x4] sm:$0xf]
      %v649 = vld [vmem:[%s581 + $0x8] sm:$0xf]
      %v650 = vld [vmem:[%s581 + $0xc] sm:$0xf]
      %vm651 = vcmask 122880
      %652 = vst.msk [vmem:[#allocation2] sm:$0x1] %vm651, 0.0
      %653 = vst.msk [vmem:[#allocation2 + $0x18] sm:$0x1] %vm651, 0.0
      %654 = vst.msk [vmem:[#allocation2 + $0x30] sm:$0x1] %vm651, 0.0
      %655 = vst.msk [vmem:[#allocation2 + $0x48] sm:$0x1] %vm651, 0.0
      %656 = vst.msk [vmem:[#allocation2 + $0x60] sm:$0x1] %vm651, 0.0
      %657 = vst.msk [vmem:[#allocation2 + $0x78] sm:$0x1] %vm651, 0.0
      %658 = vst.msk [vmem:[#allocation2 + $0x90] sm:$0x1] %vm651, 0.0
      %659 = vst.msk [vmem:[#allocation2 + $0xa8] sm:$0x1] %vm651, 0.0
      %660 = vst.msk [vmem:[#allocation2 + $0xc0] sm:$0x1] %vm651, 0.0
      %661 = vst.msk [vmem:[#allocation2 + $0xd8] sm:$0x1] %vm651, 0.0
      %662 = vst.msk [vmem:[#allocation2 + $0xf0] sm:$0x1] %vm651, 0.0
      %663 = vst.msk [vmem:[#allocation2 + $0x108] sm:$0x1] %vm651, 0.0
      %664 = vst.msk [vmem:[#allocation2 + $0x11] sm:$0x1] %vm651, 0.0
      %665 = vst.msk [vmem:[#allocation2 + $0x29] sm:$0x1] %vm651, 0.0
      %666 = vst.msk [vmem:[#allocation2 + $0x41] sm:$0x1] %vm651, 0.0
      %667 = vst.msk [vmem:[#allocation2 + $0x59] sm:$0x1] %vm651, 0.0
      %668 = vst.msk [vmem:[#allocation2 + $0x71] sm:$0x1] %vm651, 0.0
      %669 = vst.msk [vmem:[#allocation2 + $0x89] sm:$0x1] %vm651, 0.0
      %670 = vst.msk [vmem:[#allocation2 + $0xa1] sm:$0x1] %vm651, 0.0
      %671 = vst.msk [vmem:[#allocation2 + $0xb9] sm:$0x1] %vm651, 0.0
      %672 = vst.msk [vmem:[#allocation2 + $0xd1] sm:$0x1] %vm651, 0.0
      %673 = vst.msk [vmem:[#allocation2 + $0xe9] sm:$0x1] %vm651, 0.0
      %674 = vst.msk [vmem:[#allocation2 + $0x101] sm:$0x1] %vm651, 0.0
      %675 = vst.msk [vmem:[#allocation2 + $0x119] sm:$0x1] %vm651, 0.0
      %v676 = vunpack.c.l.bf16 %v627
      %v677 = vunpack.c.l.bf16 %v628
      %v678 = vunpack.c.l.bf16 %v629
      %v679 = vunpack.c.l.bf16 %v630
      %vm680 = vcmask 130048
      %681 = vst.msk [vmem:[#allocation2 + $0x1] sm:$0xff] %vm680, %v676
      %682 = vst.msk [vmem:[#allocation2 + $0x9] sm:$0xff] %vm680, %v677
      %683 = vst.msk [vmem:[#allocation2 + $0x19] sm:$0xff] %vm680, %v678
      %684 = vst.msk [vmem:[#allocation2 + $0x21] sm:$0xff] %vm680, %v679
      %v685 = vunpack.c.l.bf16 %v631
      %v686 = vunpack.c.l.bf16 %v632
      %v687 = vunpack.c.l.bf16 %v633
      %v688 = vunpack.c.l.bf16 %v634
      %v689 = vunpack.c.l.bf16 %v635
      %v690 = vunpack.c.l.bf16 %v636
      %v691 = vunpack.c.l.bf16 %v637
      %v692 = vunpack.c.l.bf16 %v638
      %v693 = vunpack.c.l.bf16 %v639
      %v694 = vunpack.c.l.bf16 %v640
      %v695 = vunpack.c.l.bf16 %v641
      %v696 = vunpack.c.l.bf16 %v642
      %v697 = vunpack.c.l.bf16 %v643
      %v698 = vunpack.c.l.bf16 %v644
      %v699 = vunpack.c.l.bf16 %v645
      %v700 = vunpack.c.l.bf16 %v646
      %s701 = scalar_lea.vmem [#allocation2], 48
      %702 = vst.msk [vmem:[%s701 + $0x1] sm:$0xff] %vm680, %v685
      %703 = vst.msk [vmem:[%s701 + $0x9] sm:$0xff] %vm680, %v686
      %704 = vst.msk [vmem:[%s701 + $0x19] sm:$0xff] %vm680, %v687
      %705 = vst.msk [vmem:[%s701 + $0x21] sm:$0xff] %vm680, %v688
      %706 = vst.msk [vmem:[%s701 + $0x31] sm:$0xff] %vm680, %v689
      %707 = vst.msk [vmem:[%s701 + $0x39] sm:$0xff] %vm680, %v690
      %708 = vst.msk [vmem:[%s701 + $0x49] sm:$0xff] %vm680, %v691
      %709 = vst.msk [vmem:[%s701 + $0x51] sm:$0xff] %vm680, %v692
      %710 = vst.msk [vmem:[%s701 + $0x61] sm:$0xff] %vm680, %v693
      %711 = vst.msk [vmem:[%s701 + $0x69] sm:$0xff] %vm680, %v694
      %712 = vst.msk [vmem:[%s701 + $0x79] sm:$0xff] %vm680, %v695
      %713 = vst.msk [vmem:[%s701 + $0x81] sm:$0xff] %vm680, %v696
      %714 = vst.msk [vmem:[%s701 + $0x91] sm:$0xff] %vm680, %v697
      %715 = vst.msk [vmem:[%s701 + $0x99] sm:$0xff] %vm680, %v698
      %716 = vst.msk [vmem:[%s701 + $0xa9] sm:$0xff] %vm680, %v699
      %717 = vst.msk [vmem:[%s701 + $0xb1] sm:$0xff] %vm680, %v700
      %v718 = vunpack.c.l.bf16 %v647
      %v719 = vunpack.c.l.bf16 %v648
      %v720 = vunpack.c.l.bf16 %v649
      %v721 = vunpack.c.l.bf16 %v650
      %s722 = scalar_lea.vmem [#allocation2], 240
      %723 = vst.msk [vmem:[%s722 + $0x1] sm:$0xff] %vm680, %v718
      %724 = vst.msk [vmem:[%s722 + $0x9] sm:$0xff] %vm680, %v719
      %725 = vst.msk [vmem:[%s722 + $0x19] sm:$0xff] %vm680, %v720
      %726 = vst.msk [vmem:[%s722 + $0x21] sm:$0xff] %vm680, %v721
      %v727 = vld [vmem:[%s603] sm:$0xf]
      %v728 = vld [vmem:[%s603 + $0x4] sm:$0xf]
      %v729 = vld [vmem:[%s603 + $0x8] sm:$0xf]
      %v730 = vld [vmem:[%s603 + $0xc] sm:$0xf]
      %v731 = vld [vmem:[%s592] sm:$0xf]
      %v732 = vld [vmem:[%s592 + $0x4] sm:$0xf]
      %v733 = vld [vmem:[%s592 + $0x8] sm:$0xf]
      %v734 = vld [vmem:[%s592 + $0xc] sm:$0xf]
      %v735 = vld [vmem:[%s592 + $0x10] sm:$0xf]
      %v736 = vld [vmem:[%s592 + $0x14] sm:$0xf]
      %v737 = vld [vmem:[%s592 + $0x18] sm:$0xf]
      %v738 = vld [vmem:[%s592 + $0x1c] sm:$0xf]
      %v739 = vld [vmem:[%s592 + $0x20] sm:$0xf]
      %v740 = vld [vmem:[%s592 + $0x24] sm:$0xf]
      %v741 = vld [vmem:[%s592 + $0x28] sm:$0xf]
      %v742 = vld [vmem:[%s592 + $0x2c] sm:$0xf]
      %v743 = vld [vmem:[%s592 + $0x30] sm:$0xf]
      %v744 = vld [vmem:[%s592 + $0x34] sm:$0xf]
      %v745 = vld [vmem:[%s592 + $0x38] sm:$0xf]
      %v746 = vld [vmem:[%s592 + $0x3c] sm:$0xf]
      %v747 = vld [vmem:[%s614] sm:$0xf]
      %v748 = vld [vmem:[%s614 + $0x4] sm:$0xf]
      %v749 = vld [vmem:[%s614 + $0x8] sm:$0xf]
      %v750 = vld [vmem:[%s614 + $0xc] sm:$0xf]
      %751 = vst.msk [vmem:[#allocation3] sm:$0x1] %vm651, 0.0
      %752 = vst.msk [vmem:[#allocation3 + $0x18] sm:$0x1] %vm651, 0.0
      %753 = vst.msk [vmem:[#allocation3 + $0x30] sm:$0x1] %vm651, 0.0
      %754 = vst.msk [vmem:[#allocation3 + $0x48] sm:$0x1] %vm651, 0.0
      %755 = vst.msk [vmem:[#allocation3 + $0x60] sm:$0x1] %vm651, 0.0
      %756 = vst.msk [vmem:[#allocation3 + $0x78] sm:$0x1] %vm651, 0.0
      %757 = vst.msk [vmem:[#allocation3 + $0x90] sm:$0x1] %vm651, 0.0
      %758 = vst.msk [vmem:[#allocation3 + $0xa8] sm:$0x1] %vm651, 0.0
      %759 = vst.msk [vmem:[#allocation3 + $0xc0] sm:$0x1] %vm651, 0.0
      %760 = vst.msk [vmem:[#allocation3 + $0xd8] sm:$0x1] %vm651, 0.0
      %761 = vst.msk [vmem:[#allocation3 + $0xf0] sm:$0x1] %vm651, 0.0
      %762 = vst.msk [vmem:[#allocation3 + $0x108] sm:$0x1] %vm651, 0.0
      %763 = vst.msk [vmem:[#allocation3 + $0x11] sm:$0x1] %vm651, 0.0
      %764 = vst.msk [vmem:[#allocation3 + $0x29] sm:$0x1] %vm651, 0.0
      %765 = vst.msk [vmem:[#allocation3 + $0x41] sm:$0x1] %vm651, 0.0
      %766 = vst.msk [vmem:[#allocation3 + $0x59] sm:$0x1] %vm651, 0.0
      %767 = vst.msk [vmem:[#allocation3 + $0x71] sm:$0x1] %vm651, 0.0
      %768 = vst.msk [vmem:[#allocation3 + $0x89] sm:$0x1] %vm651, 0.0
      %769 = vst.msk [vmem:[#allocation3 + $0xa1] sm:$0x1] %vm651, 0.0
      %770 = vst.msk [vmem:[#allocation3 + $0xb9] sm:$0x1] %vm651, 0.0
      %771 = vst.msk [vmem:[#allocation3 + $0xd1] sm:$0x1] %vm651, 0.0
      %772 = vst.msk [vmem:[#allocation3 + $0xe9] sm:$0x1] %vm651, 0.0
      %773 = vst.msk [vmem:[#allocation3 + $0x101] sm:$0x1] %vm651, 0.0
      %774 = vst.msk [vmem:[#allocation3 + $0x119] sm:$0x1] %vm651, 0.0
      %v775 = vunpack.c.l.bf16 %v727
      %v776 = vunpack.c.l.bf16 %v728
      %v777 = vunpack.c.l.bf16 %v729
      %v778 = vunpack.c.l.bf16 %v730
      %779 = vst.msk [vmem:[#allocation3 + $0x1] sm:$0xff] %vm680, %v775
      %780 = vst.msk [vmem:[#allocation3 + $0x9] sm:$0xff] %vm680, %v776
      %781 = vst.msk [vmem:[#allocation3 + $0x19] sm:$0xff] %vm680, %v777
      %782 = vst.msk [vmem:[#allocation3 + $0x21] sm:$0xff] %vm680, %v778
      %v783 = vunpack.c.l.bf16 %v731
      %v784 = vunpack.c.l.bf16 %v732
      %v785 = vunpack.c.l.bf16 %v733
      %v786 = vunpack.c.l.bf16 %v734
      %v787 = vunpack.c.l.bf16 %v735
      %v788 = vunpack.c.l.bf16 %v736
      %v789 = vunpack.c.l.bf16 %v737
      %v790 = vunpack.c.l.bf16 %v738
      %v791 = vunpack.c.l.bf16 %v739
      %v792 = vunpack.c.l.bf16 %v740
      %v793 = vunpack.c.l.bf16 %v741
      %v794 = vunpack.c.l.bf16 %v742
      %v795 = vunpack.c.l.bf16 %v743
      %v796 = vunpack.c.l.bf16 %v744
      %v797 = vunpack.c.l.bf16 %v745
      %v798 = vunpack.c.l.bf16 %v746
      %s799 = scalar_lea.vmem [#allocation3], 48
      %800 = vst.msk [vmem:[%s799 + $0x1] sm:$0xff] %vm680, %v783
      %801 = vst.msk [vmem:[%s799 + $0x9] sm:$0xff] %vm680, %v784
      %802 = vst.msk [vmem:[%s799 + $0x19] sm:$0xff] %vm680, %v785
      %803 = vst.msk [vmem:[%s799 + $0x21] sm:$0xff] %vm680, %v786
      %804 = vst.msk [vmem:[%s799 + $0x31] sm:$0xff] %vm680, %v787
      %805 = vst.msk [vmem:[%s799 + $0x39] sm:$0xff] %vm680, %v788
      %806 = vst.msk [vmem:[%s799 + $0x49] sm:$0xff] %vm680, %v789
      %807 = vst.msk [vmem:[%s799 + $0x51] sm:$0xff] %vm680, %v790
      %808 = vst.msk [vmem:[%s799 + $0x61] sm:$0xff] %vm680, %v791
      %809 = vst.msk [vmem:[%s799 + $0x69] sm:$0xff] %vm680, %v792
      %810 = vst.msk [vmem:[%s799 + $0x79] sm:$0xff] %vm680, %v793
      %811 = vst.msk [vmem:[%s799 + $0x81] sm:$0xff] %vm680, %v794
      %812 = vst.msk [vmem:[%s799 + $0x91] sm:$0xff] %vm680, %v795
      %813 = vst.msk [vmem:[%s799 + $0x99] sm:$0xff] %vm680, %v796
      %814 = vst.msk [vmem:[%s799 + $0xa9] sm:$0xff] %vm680, %v797
      %815 = vst.msk [vmem:[%s799 + $0xb1] sm:$0xff] %vm680, %v798
      %v816 = vunpack.c.l.bf16 %v747
      %v817 = vunpack.c.l.bf16 %v748
      %v818 = vunpack.c.l.bf16 %v749
      %v819 = vunpack.c.l.bf16 %v750
      %s820 = scalar_lea.vmem [#allocation3], 240
      %821 = vst.msk [vmem:[%s820 + $0x1] sm:$0xff] %vm680, %v816
      %822 = vst.msk [vmem:[%s820 + $0x9] sm:$0xff] %vm680, %v817
      %823 = vst.msk [vmem:[%s820 + $0x19] sm:$0xff] %vm680, %v818
      %824 = vst.msk [vmem:[%s820 + $0x21] sm:$0xff] %vm680, %v819
      %v825 = vld [vmem:[#allocation2] sm:$0xff]
      %v826 = vld [vmem:[#allocation2 + $0x8] sm:$0xff]
      %v827 = vld [vmem:[#allocation2 + $0x18] sm:$0xff]
      %v828 = vld [vmem:[#allocation2 + $0x20] sm:$0xff]
      %v829 = vld [vmem:[#allocation2 + $0x30] sm:$0xff]
      %v830 = vld [vmem:[#allocation2 + $0x38] sm:$0xff]
      %v831 = vld [vmem:[#allocation2 + $0x48] sm:$0xff]
      %v832 = vld [vmem:[#allocation2 + $0x50] sm:$0xff]
      %v833 = vld [vmem:[#allocation2 + $0x60] sm:$0xff]
      %v834 = vld [vmem:[#allocation2 + $0x68] sm:$0xff]
      %v835 = vld [vmem:[#allocation2 + $0x78] sm:$0xff]
      %v836 = vld [vmem:[#allocation2 + $0x80] sm:$0xff]
      %v837 = vld [vmem:[#allocation2 + $0x90] sm:$0xff]
      %v838 = vld [vmem:[#allocation2 + $0x98] sm:$0xff]
      %v839 = vld [vmem:[#allocation2 + $0xa8] sm:$0xff]
      %v840 = vld [vmem:[#allocation2 + $0xb0] sm:$0xff]
      %v841 = vld [vmem:[#allocation2 + $0xc0] sm:$0xff]
      %v842 = vld [vmem:[#allocation2 + $0xc8] sm:$0xff]
      %v843 = vld [vmem:[#allocation2 + $0xd8] sm:$0xff]
      %v844 = vld [vmem:[#allocation2 + $0xe0] sm:$0xff]
      %v845 = vpack.c.bf16 %v826, %v825
      %v846 = vpack.c.bf16 %v828, %v827
      %v847 = vpack.c.bf16 %v830, %v829
      %v848 = vpack.c.bf16 %v832, %v831
      %v849 = vpack.c.bf16 %v834, %v833
      %v850 = vpack.c.bf16 %v836, %v835
      %v851 = vpack.c.bf16 %v838, %v837
      %v852 = vpack.c.bf16 %v840, %v839
      %v853 = vpack.c.bf16 %v842, %v841
      %v854 = vpack.c.bf16 %v844, %v843
      %v855 = vld [vmem:[#allocation3] sm:$0xff]
      %v856 = vld [vmem:[#allocation3 + $0x8] sm:$0xff]
      %v857 = vld [vmem:[#allocation3 + $0x18] sm:$0xff]
      %v858 = vld [vmem:[#allocation3 + $0x20] sm:$0xff]
      %v859 = vld [vmem:[#allocation3 + $0x30] sm:$0xff]
      %v860 = vld [vmem:[#allocation3 + $0x38] sm:$0xff]
      %v861 = vld [vmem:[#allocation3 + $0x48] sm:$0xff]
      %v862 = vld [vmem:[#allocation3 + $0x50] sm:$0xff]
      %v863 = vld [vmem:[#allocation3 + $0x60] sm:$0xff]
      %v864 = vld [vmem:[#allocation3 + $0x68] sm:$0xff]
      %v865 = vld [vmem:[#allocation3 + $0x78] sm:$0xff]
      %v866 = vld [vmem:[#allocation3 + $0x80] sm:$0xff]
      %v867 = vld [vmem:[#allocation3 + $0x90] sm:$0xff]
      %v868 = vld [vmem:[#allocation3 + $0x98] sm:$0xff]
      %v869 = vld [vmem:[#allocation3 + $0xa8] sm:$0xff]
      %v870 = vld [vmem:[#allocation3 + $0xb0] sm:$0xff]
      %v871 = vld [vmem:[#allocation3 + $0xc0] sm:$0xff]
      %v872 = vld [vmem:[#allocation3 + $0xc8] sm:$0xff]
      %v873 = vld [vmem:[#allocation3 + $0xd8] sm:$0xff]
      %v874 = vld [vmem:[#allocation3 + $0xe0] sm:$0xff]
      %v875 = vpack.c.bf16 %v856, %v855
      %v876 = vpack.c.bf16 %v858, %v857
      %v877 = vpack.c.bf16 %v860, %v859
      %v878 = vpack.c.bf16 %v862, %v861
      %v879 = vpack.c.bf16 %v864, %v863
      %v880 = vpack.c.bf16 %v866, %v865
      %v881 = vpack.c.bf16 %v868, %v867
      %v882 = vpack.c.bf16 %v870, %v869
      %v883 = vpack.c.bf16 %v872, %v871
      %v884 = vpack.c.bf16 %v874, %v873
      %v885 = vld [vmem:[%s6] sm:$0xf]
      %v886 = vld [vmem:[%s6 + $0x4] sm:$0xf]
      %v887 = vld [vmem:[%s7] sm:$0xf]
      %v888 = vld [vmem:[%s7 + $0x4] sm:$0xf]
      %v891 = vunpack.c.l.b16 %v887
      %v892 = vunpack.c.l.b16 %v888
      %v893 = vpack.c.b16 %v892, %v891
      %v896 = vsel %vm680, %v875, 0
      %v899 = vsel %vm680, %v876, 0
      %v902 = vsel %vm680, %v877, 0
      %v905 = vsel %vm680, %v878, 0
      %v908 = vsel %vm680, %v879, 0
      %v911 = vsel %vm680, %v880, 0
      %v914 = vsel %vm680, %v881, 0
      %v917 = vsel %vm680, %v882, 0
      %v920 = vsel %vm680, %v883, 0
      %v923 = vsel %vm680, %v884, 0
      %925 = vmatprep.subr.bf16.mxu0 0
      %926 = vmatpush1.bf16.msra.mxu0 0
      %927 = vmatprep.subr.bf16.mxu0 0
      %928 = vmatpush1.bf16.msra.mxu0 0
      %929 = vmatprep.subr.bf16.mxu0 0
      %930 = vmatpush1.bf16.msra.mxu0 0
      %931 = vmatprep.subr.bf16.mxu0 0
      %932 = vmatpush1.bf16.msra.mxu0 0
      %933 = vmatprep.subr.bf16.mxu0 0
      %934 = vmatpush1.bf16.msra.mxu0 0
      %935 = vmatprep.subr.bf16.mxu0 0
      %936 = vmatpush1.bf16.msra.mxu0 0
      %937 = vmatprep.subr.bf16.mxu0 0
      %938 = vmatpush1.bf16.msra.mxu0 0
      %939 = vmatprep.subr.bf16.mxu0 0
      %940 = vmatpush1.bf16.msra.mxu0 %v893
      %941 = vmatprep.subr.bf16.mxu0 0
      %942 = vmatpush2.bf16.msra.mxu0 0
      %943 = vmatprep.subr.bf16.mxu0 0
      %944 = vmatpush2.bf16.msra.mxu0 0
      %945 = vmatprep.subr.bf16.mxu0 0
      %946 = vmatpush2.bf16.msra.mxu0 0
      %947 = vmatprep.subr.bf16.mxu0 0
      %948 = vmatpush2.bf16.msra.mxu0 0
      %949 = vmatprep.subr.bf16.mxu0 0
      %950 = vmatpush2.bf16.msra.mxu0 0
      %951 = vmatprep.subr.bf16.mxu0 0
      %952 = vmatpush2.bf16.msra.mxu0 0
      %953 = vmatprep.subr.bf16.mxu0 0
      %954 = vmatpush2.bf16.msra.mxu0 0
      %955 = vmatprep.subr.bf16.mxu0 0
      %956 = vmatpush2.bf16.msra.mxu0 0
      %957 = vmatprep.mubr.bf16.mxu0 0
      %958 = vmatmul.mubr.bf16.gmra.mxu0 %v896
      %v959 = vpop.f32.mrf.mxu0
      %v960 = vadd.f32 0.0, %v959
      %v961 = vpop.f32.mrf.mxu0
      %v962 = vpop.f32.mrf.mxu0
      %v963 = vadd.f32 0.0, %v962
      %v964 = vpop.f32.mrf.mxu0
      %965 = vmatprep.mubr.bf16.mxu0 0
      %966 = vmatmul.mubr.bf16.gmra.mxu0 %v899
      %v967 = vpop.f32.mrf.mxu0
      %v968 = vadd.f32 0.0, %v967
      %v969 = vpop.f32.mrf.mxu0
      %v970 = vpop.f32.mrf.mxu0
      %v971 = vadd.f32 0.0, %v970
      %v972 = vpop.f32.mrf.mxu0
      %973 = vmatprep.mubr.bf16.mxu0 0
      %974 = vmatmul.mubr.bf16.gmra.mxu0 %v902
      %v975 = vpop.f32.mrf.mxu0
      %v976 = vadd.f32 0.0, %v975
      %v977 = vpop.f32.mrf.mxu0
      %v978 = vpop.f32.mrf.mxu0
      %v979 = vadd.f32 0.0, %v978
      %v980 = vpop.f32.mrf.mxu0
      %981 = vmatprep.mubr.bf16.mxu0 0
      %982 = vmatmul.mubr.bf16.gmra.mxu0 %v905
      %v983 = vpop.f32.mrf.mxu0
      %v984 = vadd.f32 0.0, %v983
      %v985 = vpop.f32.mrf.mxu0
      %v986 = vpop.f32.mrf.mxu0
      %v987 = vadd.f32 0.0, %v986
      %v988 = vpop.f32.mrf.mxu0
      %989 = vmatprep.mubr.bf16.mxu0 0
      %990 = vmatmul.mubr.bf16.gmra.mxu0 %v908
      %v991 = vpop.f32.mrf.mxu0
      %v992 = vadd.f32 0.0, %v991
      %v993 = vpop.f32.mrf.mxu0
      %v994 = vpop.f32.mrf.mxu0
      %v995 = vadd.f32 0.0, %v994
      %v996 = vpop.f32.mrf.mxu0
      %997 = vmatprep.mubr.bf16.mxu0 0
      %998 = vmatmul.mubr.bf16.gmra.mxu0 %v911
      %v999 = vpop.f32.mrf.mxu0
      %v1000 = vadd.f32 0.0, %v999
      %v1001 = vpop.f32.mrf.mxu0
      %v1002 = vpop.f32.mrf.mxu0
      %v1003 = vadd.f32 0.0, %v1002
      %v1004 = vpop.f32.mrf.mxu0
      %1005 = vmatprep.mubr.bf16.mxu0 0
      %1006 = vmatmul.mubr.bf16.gmra.mxu0 %v914
      %v1007 = vpop.f32.mrf.mxu0
      %v1008 = vadd.f32 0.0, %v1007
      %v1009 = vpop.f32.mrf.mxu0
      %v1010 = vpop.f32.mrf.mxu0
      %v1011 = vadd.f32 0.0, %v1010
      %v1012 = vpop.f32.mrf.mxu0
      %1013 = vmatprep.mubr.bf16.mxu0 0
      %1014 = vmatmul.mubr.bf16.gmra.mxu0 %v917
      %v1015 = vpop.f32.mrf.mxu0
      %v1016 = vadd.f32 0.0, %v1015
      %v1017 = vpop.f32.mrf.mxu0
      %v1018 = vpop.f32.mrf.mxu0
      %v1019 = vadd.f32 0.0, %v1018
      %v1020 = vpop.f32.mrf.mxu0
      %1021 = vmatprep.mubr.bf16.mxu0 0
      %1022 = vmatmul.mubr.bf16.gmra.mxu0 %v920
      %v1023 = vpop.f32.mrf.mxu0
      %v1024 = vadd.f32 0.0, %v1023
      %v1025 = vpop.f32.mrf.mxu0
      %v1026 = vpop.f32.mrf.mxu0
      %v1027 = vadd.f32 0.0, %v1026
      %v1028 = vpop.f32.mrf.mxu0
      %1029 = vmatprep.mubr.bf16.mxu0 0
      %1030 = vmatmul.mubr.bf16.gmra.mxu0 %v923
      %v1031 = vpop.f32.mrf.mxu0
      %v1032 = vadd.f32 0.0, %v1031
      %v1033 = vpop.f32.mrf.mxu0
      %v1034 = vpop.f32.mrf.mxu0
      %v1035 = vadd.f32 0.0, %v1034
      %v1036 = vpop.f32.mrf.mxu0
      %1037 = vdwg.mxu0
      %v1040 = vunpack.c.l.b16 %v885
      %v1041 = vunpack.c.l.b16 %v886
      %v1042 = vpack.c.b16 %v1041, %v1040
      %v1045 = vsel %vm680, %v845, 0
      %v1048 = vsel %vm680, %v846, 0
      %v1051 = vsel %vm680, %v847, 0
      %v1054 = vsel %vm680, %v848, 0
      %v1057 = vsel %vm680, %v849, 0
      %v1060 = vsel %vm680, %v850, 0
      %v1063 = vsel %vm680, %v851, 0
      %v1066 = vsel %vm680, %v852, 0
      %v1069 = vsel %vm680, %v853, 0
      %v1072 = vsel %vm680, %v854, 0
      %1074 = vmatprep.subr.bf16.mxu0 0
      %1075 = vmatpush1.bf16.msra.mxu0 0
      %1076 = vmatprep.subr.bf16.mxu0 0
      %1077 = vmatpush1.bf16.msra.mxu0 0
      %1078 = vmatprep.subr.bf16.mxu0 0
      %1079 = vmatpush1.bf16.msra.mxu0 0
      %1080 = vmatprep.subr.bf16.mxu0 0
      %1081 = vmatpush1.bf16.msra.mxu0 0
      %1082 = vmatprep.subr.bf16.mxu0 0
      %1083 = vmatpush1.bf16.msra.mxu0 0
      %1084 = vmatprep.subr.bf16.mxu0 0
      %1085 = vmatpush1.bf16.msra.mxu0 0
      %1086 = vmatprep.subr.bf16.mxu0 0
      %1087 = vmatpush1.bf16.msra.mxu0 0
      %1088 = vmatprep.subr.bf16.mxu0 0
      %1089 = vmatpush1.bf16.msra.mxu0 %v1042
      %1090 = vmatprep.subr.bf16.mxu0 0
      %1091 = vmatpush2.bf16.msra.mxu0 0
      %1092 = vmatprep.subr.bf16.mxu0 0
      %1093 = vmatpush2.bf16.msra.mxu0 0
      %1094 = vmatprep.subr.bf16.mxu0 0
      %1095 = vmatpush2.bf16.msra.mxu0 0
      %1096 = vmatprep.subr.bf16.mxu0 0
      %1097 = vmatpush2.bf16.msra.mxu0 0
      %1098 = vmatprep.subr.bf16.mxu0 0
      %1099 = vmatpush2.bf16.msra.mxu0 0
      %1100 = vmatprep.subr.bf16.mxu0 0
      %1101 = vmatpush2.bf16.msra.mxu0 0
      %1102 = vmatprep.subr.bf16.mxu0 0
      %1103 = vmatpush2.bf16.msra.mxu0 0
      %1104 = vmatprep.subr.bf16.mxu0 0
      %1105 = vmatpush2.bf16.msra.mxu0 0
      %1106 = vmatprep.mubr.bf16.mxu0 0
      %1107 = vmatmul.mubr.bf16.gmra.mxu0 %v1045
      %v1108 = vpop.f32.mrf.mxu0
      %v1109 = vadd.f32 %v960, %v1108
      %v1110 = vpop.f32.mrf.mxu0
      %v1111 = vpop.f32.mrf.mxu0
      %v1112 = vadd.f32 %v963, %v1111
      %v1113 = vpop.f32.mrf.mxu0
      %1114 = vmatprep.mubr.bf16.mxu0 0
      %1115 = vmatmul.mubr.bf16.gmra.mxu0 %v1048
      %v1116 = vpop.f32.mrf.mxu0
      %v1117 = vadd.f32 %v968, %v1116
      %v1118 = vpop.f32.mrf.mxu0
      %v1119 = vpop.f32.mrf.mxu0
      %v1120 = vadd.f32 %v971, %v1119
      %v1121 = vpop.f32.mrf.mxu0
      %1122 = vmatprep.mubr.bf16.mxu0 0
      %1123 = vmatmul.mubr.bf16.gmra.mxu0 %v1051
      %v1124 = vpop.f32.mrf.mxu0
      %v1125 = vadd.f32 %v976, %v1124
      %v1126 = vpop.f32.mrf.mxu0
      %v1127 = vpop.f32.mrf.mxu0
      %v1128 = vadd.f32 %v979, %v1127
      %v1129 = vpop.f32.mrf.mxu0
      %1130 = vmatprep.mubr.bf16.mxu0 0
      %1131 = vmatmul.mubr.bf16.gmra.mxu0 %v1054
      %v1132 = vpop.f32.mrf.mxu0
      %v1133 = vadd.f32 %v984, %v1132
      %v1134 = vpop.f32.mrf.mxu0
      %v1135 = vpop.f32.mrf.mxu0
      %v1136 = vadd.f32 %v987, %v1135
      %v1137 = vpop.f32.mrf.mxu0
      %1138 = vmatprep.mubr.bf16.mxu0 0
      %1139 = vmatmul.mubr.bf16.gmra.mxu0 %v1057
      %v1140 = vpop.f32.mrf.mxu0
      %v1141 = vadd.f32 %v992, %v1140
      %v1142 = vpop.f32.mrf.mxu0
      %v1143 = vpop.f32.mrf.mxu0
      %v1144 = vadd.f32 %v995, %v1143
      %v1145 = vpop.f32.mrf.mxu0
      %1146 = vmatprep.mubr.bf16.mxu0 0
      %1147 = vmatmul.mubr.bf16.gmra.mxu0 %v1060
      %v1148 = vpop.f32.mrf.mxu0
      %v1149 = vadd.f32 %v1000, %v1148
      %v1150 = vpop.f32.mrf.mxu0
      %v1151 = vpop.f32.mrf.mxu0
      %v1152 = vadd.f32 %v1003, %v1151
      %v1153 = vpop.f32.mrf.mxu0
      %1154 = vmatprep.mubr.bf16.mxu0 0
      %1155 = vmatmul.mubr.bf16.gmra.mxu0 %v1063
      %v1156 = vpop.f32.mrf.mxu0
      %v1157 = vadd.f32 %v1008, %v1156
      %v1158 = vpop.f32.mrf.mxu0
      %v1159 = vpop.f32.mrf.mxu0
      %v1160 = vadd.f32 %v1011, %v1159
      %v1161 = vpop.f32.mrf.mxu0
      %1162 = vmatprep.mubr.bf16.mxu0 0
      %1163 = vmatmul.mubr.bf16.gmra.mxu0 %v1066
      %v1164 = vpop.f32.mrf.mxu0
      %v1165 = vadd.f32 %v1016, %v1164
      %v1166 = vpop.f32.mrf.mxu0
      %v1167 = vpop.f32.mrf.mxu0
      %v1168 = vadd.f32 %v1019, %v1167
      %v1169 = vpop.f32.mrf.mxu0
      %1170 = vmatprep.mubr.bf16.mxu0 0
      %1171 = vmatmul.mubr.bf16.gmra.mxu0 %v1069
      %v1172 = vpop.f32.mrf.mxu0
      %v1173 = vadd.f32 %v1024, %v1172
      %v1174 = vpop.f32.mrf.mxu0
      %v1175 = vpop.f32.mrf.mxu0
      %v1176 = vadd.f32 %v1027, %v1175
      %v1177 = vpop.f32.mrf.mxu0
      %1178 = vmatprep.mubr.bf16.mxu0 0
      %1179 = vmatmul.mubr.bf16.gmra.mxu0 %v1072
      %v1180 = vpop.f32.mrf.mxu0
      %v1181 = vadd.f32 %v1032, %v1180
      %v1182 = vpop.f32.mrf.mxu0
      %v1183 = vpop.f32.mrf.mxu0
      %v1184 = vadd.f32 %v1035, %v1183
      %v1185 = vpop.f32.mrf.mxu0
      %1186 = vdwg.mxu0
      %v1187 = vld [vmem:[#allocation2 + $0x1] sm:$0xff]
      %v1188 = vld [vmem:[#allocation2 + $0x9] sm:$0xff]
      %v1189 = vld [vmem:[#allocation2 + $0x19] sm:$0xff]
      %v1190 = vld [vmem:[#allocation2 + $0x21] sm:$0xff]
      %v1191 = vld [vmem:[#allocation2 + $0x31] sm:$0xff]
      %v1192 = vld [vmem:[#allocation2 + $0x39] sm:$0xff]
      %v1193 = vld [vmem:[#allocation2 + $0x49] sm:$0xff]
      %v1194 = vld [vmem:[#allocation2 + $0x51] sm:$0xff]
      %v1195 = vld [vmem:[#allocation2 + $0x61] sm:$0xff]
      %v1196 = vld [vmem:[#allocation2 + $0x69] sm:$0xff]
      %v1197 = vld [vmem:[#allocation2 + $0x79] sm:$0xff]
      %v1198 = vld [vmem:[#allocation2 + $0x81] sm:$0xff]
      %v1199 = vld [vmem:[#allocation2 + $0x91] sm:$0xff]
      %v1200 = vld [vmem:[#allocation2 + $0x99] sm:$0xff]
      %v1201 = vld [vmem:[#allocation2 + $0xa9] sm:$0xff]
      %v1202 = vld [vmem:[#allocation2 + $0xb1] sm:$0xff]
      %v1203 = vld [vmem:[#allocation2 + $0xc1] sm:$0xff]
      %v1204 = vld [vmem:[#allocation2 + $0xc9] sm:$0xff]
      %v1205 = vld [vmem:[#allocation2 + $0xd9] sm:$0xff]
      %v1206 = vld [vmem:[#allocation2 + $0xe1] sm:$0xff]
      %v1207 = vpack.c.bf16 %v1188, %v1187
      %v1208 = vpack.c.bf16 %v1190, %v1189
      %v1209 = vpack.c.bf16 %v1192, %v1191
      %v1210 = vpack.c.bf16 %v1194, %v1193
      %v1211 = vpack.c.bf16 %v1196, %v1195
      %v1212 = vpack.c.bf16 %v1198, %v1197
      %v1213 = vpack.c.bf16 %v1200, %v1199
      %v1214 = vpack.c.bf16 %v1202, %v1201
      %v1215 = vpack.c.bf16 %v1204, %v1203
      %v1216 = vpack.c.bf16 %v1206, %v1205
      %v1217 = vld [vmem:[#allocation3 + $0x1] sm:$0xff]
      %v1218 = vld [vmem:[#allocation3 + $0x9] sm:$0xff]
      %v1219 = vld [vmem:[#allocation3 + $0x19] sm:$0xff]
      %v1220 = vld [vmem:[#allocation3 + $0x21] sm:$0xff]
      %v1221 = vld [vmem:[#allocation3 + $0x31] sm:$0xff]
      %v1222 = vld [vmem:[#allocation3 + $0x39] sm:$0xff]
      %v1223 = vld [vmem:[#allocation3 + $0x49] sm:$0xff]
      %v1224 = vld [vmem:[#allocation3 + $0x51] sm:$0xff]
      %v1225 = vld [vmem:[#allocation3 + $0x61] sm:$0xff]
      %v1226 = vld [vmem:[#allocation3 + $0x69] sm:$0xff]
      %v1227 = vld [vmem:[#allocation3 + $0x79] sm:$0xff]
      %v1228 = vld [vmem:[#allocation3 + $0x81] sm:$0xff]
      %v1229 = vld [vmem:[#allocation3 + $0x91] sm:$0xff]
      %v1230 = vld [vmem:[#allocation3 + $0x99] sm:$0xff]
      %v1231 = vld [vmem:[#allocation3 + $0xa9] sm:$0xff]
      %v1232 = vld [vmem:[#allocation3 + $0xb1] sm:$0xff]
      %v1233 = vld [vmem:[#allocation3 + $0xc1] sm:$0xff]
      %v1234 = vld [vmem:[#allocation3 + $0xc9] sm:$0xff]
      %v1235 = vld [vmem:[#allocation3 + $0xd9] sm:$0xff]
      %v1236 = vld [vmem:[#allocation3 + $0xe1] sm:$0xff]
      %v1237 = vpack.c.bf16 %v1218, %v1217
      %v1238 = vpack.c.bf16 %v1220, %v1219
      %v1239 = vpack.c.bf16 %v1222, %v1221
      %v1240 = vpack.c.bf16 %v1224, %v1223
      %v1241 = vpack.c.bf16 %v1226, %v1225
      %v1242 = vpack.c.bf16 %v1228, %v1227
      %v1243 = vpack.c.bf16 %v1230, %v1229
      %v1244 = vpack.c.bf16 %v1232, %v1231
      %v1245 = vpack.c.bf16 %v1234, %v1233
      %v1246 = vpack.c.bf16 %v1236, %v1235
      %s1247 = scalar_lea.vmem %s6, 8
      %v1248 = vld [vmem:[%s1247] sm:$0xf]
      %v1249 = vld [vmem:[%s1247 + $0x4] sm:$0xf]
      %s1250 = scalar_lea.vmem %s7, 8
      %v1251 = vld [vmem:[%s1250] sm:$0xf]
      %v1252 = vld [vmem:[%s1250 + $0x4] sm:$0xf]
      %v1255 = vunpack.c.l.b16 %v1251
      %v1256 = vunpack.c.l.b16 %v1252
      %v1257 = vpack.c.b16 %v1256, %v1255
      %v1260 = vsel %vm680, %v1237, 0
      %v1263 = vsel %vm680, %v1238, 0
      %v1266 = vsel %vm680, %v1239, 0
      %v1269 = vsel %vm680, %v1240, 0
      %v1272 = vsel %vm680, %v1241, 0
      %v1275 = vsel %vm680, %v1242, 0
      %v1278 = vsel %vm680, %v1243, 0
      %v1281 = vsel %vm680, %v1244, 0
      %v1284 = vsel %vm680, %v1245, 0
      %v1287 = vsel %vm680, %v1246, 0
      %1289 = vmatprep.subr.bf16.mxu0 0
      %1290 = vmatpush1.bf16.msra.mxu0 0
      %1291 = vmatprep.subr.bf16.mxu0 0
      %1292 = vmatpush1.bf16.msra.mxu0 0
      %1293 = vmatprep.subr.bf16.mxu0 0
      %1294 = vmatpush1.bf16.msra.mxu0 0
      %1295 = vmatprep.subr.bf16.mxu0 0
      %1296 = vmatpush1.bf16.msra.mxu0 0
      %1297 = vmatprep.subr.bf16.mxu0 0
      %1298 = vmatpush1.bf16.msra.mxu0 0
      %1299 = vmatprep.subr.bf16.mxu0 0
      %1300 = vmatpush1.bf16.msra.mxu0 0
      %1301 = vmatprep.subr.bf16.mxu0 0
      %1302 = vmatpush1.bf16.msra.mxu0 0
      %1303 = vmatprep.subr.bf16.mxu0 0
      %1304 = vmatpush1.bf16.msra.mxu0 %v1257
      %1305 = vmatprep.subr.bf16.mxu0 0
      %1306 = vmatpush2.bf16.msra.mxu0 0
      %1307 = vmatprep.subr.bf16.mxu0 0
      %1308 = vmatpush2.bf16.msra.mxu0 0
      %1309 = vmatprep.subr.bf16.mxu0 0
      %1310 = vmatpush2.bf16.msra.mxu0 0
      %1311 = vmatprep.subr.bf16.mxu0 0
      %1312 = vmatpush2.bf16.msra.mxu0 0
      %1313 = vmatprep.subr.bf16.mxu0 0
      %1314 = vmatpush2.bf16.msra.mxu0 0
      %1315 = vmatprep.subr.bf16.mxu0 0
      %1316 = vmatpush2.bf16.msra.mxu0 0
      %1317 = vmatprep.subr.bf16.mxu0 0
      %1318 = vmatpush2.bf16.msra.mxu0 0
      %1319 = vmatprep.subr.bf16.mxu0 0
      %1320 = vmatpush2.bf16.msra.mxu0 0
      %1321 = vmatprep.mubr.bf16.mxu0 0
      %1322 = vmatmul.mubr.bf16.gmra.mxu0 %v1260
      %v1323 = vpop.f32.mrf.mxu0
      %v1324 = vadd.f32 0.0, %v1323
      %v1325 = vpop.f32.mrf.mxu0
      %v1326 = vpop.f32.mrf.mxu0
      %v1327 = vadd.f32 0.0, %v1326
      %v1328 = vpop.f32.mrf.mxu0
      %1329 = vmatprep.mubr.bf16.mxu0 0
      %1330 = vmatmul.mubr.bf16.gmra.mxu0 %v1263
      %v1331 = vpop.f32.mrf.mxu0
      %v1332 = vadd.f32 0.0, %v1331
      %v1333 = vpop.f32.mrf.mxu0
      %v1334 = vpop.f32.mrf.mxu0
      %v1335 = vadd.f32 0.0, %v1334
      %v1336 = vpop.f32.mrf.mxu0
      %1337 = vmatprep.mubr.bf16.mxu0 0
      %1338 = vmatmul.mubr.bf16.gmra.mxu0 %v1266
      %v1339 = vpop.f32.mrf.mxu0
      %v1340 = vadd.f32 0.0, %v1339
      %v1341 = vpop.f32.mrf.mxu0
      %v1342 = vpop.f32.mrf.mxu0
      %v1343 = vadd.f32 0.0, %v1342
      %v1344 = vpop.f32.mrf.mxu0
      %1345 = vmatprep.mubr.bf16.mxu0 0
      %1346 = vmatmul.mubr.bf16.gmra.mxu0 %v1269
      %v1347 = vpop.f32.mrf.mxu0
      %v1348 = vadd.f32 0.0, %v1347
      %v1349 = vpop.f32.mrf.mxu0
      %v1350 = vpop.f32.mrf.mxu0
      %v1351 = vadd.f32 0.0, %v1350
      %v1352 = vpop.f32.mrf.mxu0
      %1353 = vmatprep.mubr.bf16.mxu0 0
      %1354 = vmatmul.mubr.bf16.gmra.mxu0 %v1272
      %v1355 = vpop.f32.mrf.mxu0
      %v1356 = vadd.f32 0.0, %v1355
      %v1357 = vpop.f32.mrf.mxu0
      %v1358 = vpop.f32.mrf.mxu0
      %v1359 = vadd.f32 0.0, %v1358
      %v1360 = vpop.f32.mrf.mxu0
      %1361 = vmatprep.mubr.bf16.mxu0 0
      %1362 = vmatmul.mubr.bf16.gmra.mxu0 %v1275
      %v1363 = vpop.f32.mrf.mxu0
      %v1364 = vadd.f32 0.0, %v1363
      %v1365 = vpop.f32.mrf.mxu0
      %v1366 = vpop.f32.mrf.mxu0
      %v1367 = vadd.f32 0.0, %v1366
      %v1368 = vpop.f32.mrf.mxu0
      %1369 = vmatprep.mubr.bf16.mxu0 0
      %1370 = vmatmul.mubr.bf16.gmra.mxu0 %v1278
      %v1371 = vpop.f32.mrf.mxu0
      %v1372 = vadd.f32 0.0, %v1371
      %v1373 = vpop.f32.mrf.mxu0
      %v1374 = vpop.f32.mrf.mxu0
      %v1375 = vadd.f32 0.0, %v1374
      %v1376 = vpop.f32.mrf.mxu0
      %1377 = vmatprep.mubr.bf16.mxu0 0
      %1378 = vmatmul.mubr.bf16.gmra.mxu0 %v1281
      %v1379 = vpop.f32.mrf.mxu0
      %v1380 = vadd.f32 0.0, %v1379
      %v1381 = vpop.f32.mrf.mxu0
      %v1382 = vpop.f32.mrf.mxu0
      %v1383 = vadd.f32 0.0, %v1382
      %v1384 = vpop.f32.mrf.mxu0
      %1385 = vmatprep.mubr.bf16.mxu0 0
      %1386 = vmatmul.mubr.bf16.gmra.mxu0 %v1284
      %v1387 = vpop.f32.mrf.mxu0
      %v1388 = vadd.f32 0.0, %v1387
      %v1389 = vpop.f32.mrf.mxu0
      %v1390 = vpop.f32.mrf.mxu0
      %v1391 = vadd.f32 0.0, %v1390
      %v1392 = vpop.f32.mrf.mxu0
      %1393 = vmatprep.mubr.bf16.mxu0 0
      %1394 = vmatmul.mubr.bf16.gmra.mxu0 %v1287
      %v1395 = vpop.f32.mrf.mxu0
      %v1396 = vadd.f32 0.0, %v1395
      %v1397 = vpop.f32.mrf.mxu0
      %v1398 = vpop.f32.mrf.mxu0
      %v1399 = vadd.f32 0.0, %v1398
      %v1400 = vpop.f32.mrf.mxu0
      %1401 = vdwg.mxu0
      %v1404 = vunpack.c.l.b16 %v1248
      %v1405 = vunpack.c.l.b16 %v1249
      %v1406 = vpack.c.b16 %v1405, %v1404
      %v1409 = vsel %vm680, %v1207, 0
      %v1412 = vsel %vm680, %v1208, 0
      %v1415 = vsel %vm680, %v1209, 0
      %v1418 = vsel %vm680, %v1210, 0
      %v1421 = vsel %vm680, %v1211, 0
      %v1424 = vsel %vm680, %v1212, 0
      %v1427 = vsel %vm680, %v1213, 0
      %v1430 = vsel %vm680, %v1214, 0
      %v1433 = vsel %vm680, %v1215, 0
      %v1436 = vsel %vm680, %v1216, 0
      %1438 = vmatprep.subr.bf16.mxu0 0
      %1439 = vmatpush1.bf16.msra.mxu0 0
      %1440 = vmatprep.subr.bf16.mxu0 0
      %1441 = vmatpush1.bf16.msra.mxu0 0
      %1442 = vmatprep.subr.bf16.mxu0 0
      %1443 = vmatpush1.bf16.msra.mxu0 0
      %1444 = vmatprep.subr.bf16.mxu0 0
      %1445 = vmatpush1.bf16.msra.mxu0 0
      %1446 = vmatprep.subr.bf16.mxu0 0
      %1447 = vmatpush1.bf16.msra.mxu0 0
      %1448 = vmatprep.subr.bf16.mxu0 0
      %1449 = vmatpush1.bf16.msra.mxu0 0
      %1450 = vmatprep.subr.bf16.mxu0 0
      %1451 = vmatpush1.bf16.msra.mxu0 0
      %1452 = vmatprep.subr.bf16.mxu0 0
      %1453 = vmatpush1.bf16.msra.mxu0 %v1406
      %1454 = vmatprep.subr.bf16.mxu0 0
      %1455 = vmatpush2.bf16.msra.mxu0 0
      %1456 = vmatprep.subr.bf16.mxu0 0
      %1457 = vmatpush2.bf16.msra.mxu0 0
      %1458 = vmatprep.subr.bf16.mxu0 0
      %1459 = vmatpush2.bf16.msra.mxu0 0
      %1460 = vmatprep.subr.bf16.mxu0 0
      %1461 = vmatpush2.bf16.msra.mxu0 0
      %1462 = vmatprep.subr.bf16.mxu0 0
      %1463 = vmatpush2.bf16.msra.mxu0 0
      %1464 = vmatprep.subr.bf16.mxu0 0
      %1465 = vmatpush2.bf16.msra.mxu0 0
      %1466 = vmatprep.subr.bf16.mxu0 0
      %1467 = vmatpush2.bf16.msra.mxu0 0
      %1468 = vmatprep.subr.bf16.mxu0 0
      %1469 = vmatpush2.bf16.msra.mxu0 0
      %1470 = vmatprep.mubr.bf16.mxu0 0
      %1471 = vmatmul.mubr.bf16.gmra.mxu0 %v1409
      %v1472 = vpop.f32.mrf.mxu0
      %v1473 = vadd.f32 %v1324, %v1472
      %v1474 = vpop.f32.mrf.mxu0
      %v1475 = vpop.f32.mrf.mxu0
      %v1476 = vadd.f32 %v1327, %v1475
      %v1477 = vpop.f32.mrf.mxu0
      %1478 = vmatprep.mubr.bf16.mxu0 0
      %1479 = vmatmul.mubr.bf16.gmra.mxu0 %v1412
      %v1480 = vpop.f32.mrf.mxu0
      %v1481 = vadd.f32 %v1332, %v1480
      %v1482 = vpop.f32.mrf.mxu0
      %v1483 = vpop.f32.mrf.mxu0
      %v1484 = vadd.f32 %v1335, %v1483
      %v1485 = vpop.f32.mrf.mxu0
      %1486 = vmatprep.mubr.bf16.mxu0 0
      %1487 = vmatmul.mubr.bf16.gmra.mxu0 %v1415
      %v1488 = vpop.f32.mrf.mxu0
      %v1489 = vadd.f32 %v1340, %v1488
      %v1490 = vpop.f32.mrf.mxu0
      %v1491 = vpop.f32.mrf.mxu0
      %v1492 = vadd.f32 %v1343, %v1491
      %v1493 = vpop.f32.mrf.mxu0
      %1494 = vmatprep.mubr.bf16.mxu0 0
      %1495 = vmatmul.mubr.bf16.gmra.mxu0 %v1418
      %v1496 = vpop.f32.mrf.mxu0
      %v1497 = vadd.f32 %v1348, %v1496
      %v1498 = vpop.f32.mrf.mxu0
      %v1499 = vpop.f32.mrf.mxu0
      %v1500 = vadd.f32 %v1351, %v1499
      %v1501 = vpop.f32.mrf.mxu0
      %1502 = vmatprep.mubr.bf16.mxu0 0
      %1503 = vmatmul.mubr.bf16.gmra.mxu0 %v1421
      %v1504 = vpop.f32.mrf.mxu0
      %v1505 = vadd.f32 %v1356, %v1504
      %v1506 = vpop.f32.mrf.mxu0
      %v1507 = vpop.f32.mrf.mxu0
      %v1508 = vadd.f32 %v1359, %v1507
      %v1509 = vpop.f32.mrf.mxu0
      %1510 = vmatprep.mubr.bf16.mxu0 0
      %1511 = vmatmul.mubr.bf16.gmra.mxu0 %v1424
      %v1512 = vpop.f32.mrf.mxu0
      %v1513 = vadd.f32 %v1364, %v1512
      %v1514 = vpop.f32.mrf.mxu0
      %v1515 = vpop.f32.mrf.mxu0
      %v1516 = vadd.f32 %v1367, %v1515
      %v1517 = vpop.f32.mrf.mxu0
      %1518 = vmatprep.mubr.bf16.mxu0 0
      %1519 = vmatmul.mubr.bf16.gmra.mxu0 %v1427
      %v1520 = vpop.f32.mrf.mxu0
      %v1521 = vadd.f32 %v1372, %v1520
      %v1522 = vpop.f32.mrf.mxu0
      %v1523 = vpop.f32.mrf.mxu0
      %v1524 = vadd.f32 %v1375, %v1523
      %v1525 = vpop.f32.mrf.mxu0
      %1526 = vmatprep.mubr.bf16.mxu0 0
      %1527 = vmatmul.mubr.bf16.gmra.mxu0 %v1430
      %v1528 = vpop.f32.mrf.mxu0
      %v1529 = vadd.f32 %v1380, %v1528
      %v1530 = vpop.f32.mrf.mxu0
      %v1531 = vpop.f32.mrf.mxu0
      %v1532 = vadd.f32 %v1383, %v1531
      %v1533 = vpop.f32.mrf.mxu0
      %1534 = vmatprep.mubr.bf16.mxu0 0
      %1535 = vmatmul.mubr.bf16.gmra.mxu0 %v1433
      %v1536 = vpop.f32.mrf.mxu0
      %v1537 = vadd.f32 %v1388, %v1536
      %v1538 = vpop.f32.mrf.mxu0
      %v1539 = vpop.f32.mrf.mxu0
      %v1540 = vadd.f32 %v1391, %v1539
      %v1541 = vpop.f32.mrf.mxu0
      %1542 = vmatprep.mubr.bf16.mxu0 0
      %1543 = vmatmul.mubr.bf16.gmra.mxu0 %v1436
      %v1544 = vpop.f32.mrf.mxu0
      %v1545 = vadd.f32 %v1396, %v1544
      %v1546 = vpop.f32.mrf.mxu0
      %v1547 = vpop.f32.mrf.mxu0
      %v1548 = vadd.f32 %v1399, %v1547
      %v1549 = vpop.f32.mrf.mxu0
      %1550 = vdwg.mxu0
      %v1551 = vadd.f32 %v1109, %v1473
      %v1552 = vadd.f32 %v1112, %v1476
      %v1553 = vadd.f32 %v1117, %v1481
      %v1554 = vadd.f32 %v1120, %v1484
      %v1555 = vadd.f32 %v1125, %v1489
      %v1556 = vadd.f32 %v1128, %v1492
      %v1557 = vadd.f32 %v1133, %v1497
      %v1558 = vadd.f32 %v1136, %v1500
      %v1559 = vadd.f32 %v1141, %v1505
      %v1560 = vadd.f32 %v1144, %v1508
      %v1561 = vadd.f32 %v1149, %v1513
      %v1562 = vadd.f32 %v1152, %v1516
      %v1563 = vadd.f32 %v1157, %v1521
      %v1564 = vadd.f32 %v1160, %v1524
      %v1565 = vadd.f32 %v1165, %v1529
      %v1566 = vadd.f32 %v1168, %v1532
      %v1567 = vadd.f32 %v1173, %v1537
      %v1568 = vadd.f32 %v1176, %v1540
      %v1569 = vadd.f32 %v1181, %v1545
      %v1570 = vadd.f32 %v1184, %v1548
      %v1571 = vld [vmem:[#allocation2 + $0x2] sm:$0xff]
      %v1572 = vld [vmem:[#allocation2 + $0xa] sm:$0xff]
      %v1573 = vld [vmem:[#allocation2 + $0x1a] sm:$0xff]
      %v1574 = vld [vmem:[#allocation2 + $0x22] sm:$0xff]
      %v1575 = vld [vmem:[#allocation2 + $0x32] sm:$0xff]
      %v1576 = vld [vmem:[#allocation2 + $0x3a] sm:$0xff]
      %v1577 = vld [vmem:[#allocation2 + $0x4a] sm:$0xff]
      %v1578 = vld [vmem:[#allocation2 + $0x52] sm:$0xff]
      %v1579 = vld [vmem:[#allocation2 + $0x62] sm:$0xff]
      %v1580 = vld [vmem:[#allocation2 + $0x6a] sm:$0xff]
      %v1581 = vld [vmem:[#allocation2 + $0x7a] sm:$0xff]
      %v1582 = vld [vmem:[#allocation2 + $0x82] sm:$0xff]
      %v1583 = vld [vmem:[#allocation2 + $0x92] sm:$0xff]
      %v1584 = vld [vmem:[#allocation2 + $0x9a] sm:$0xff]
      %v1585 = vld [vmem:[#allocation2 + $0xaa] sm:$0xff]
      %v1586 = vld [vmem:[#allocation2 + $0xb2] sm:$0xff]
      %v1587 = vld [vmem:[#allocation2 + $0xc2] sm:$0xff]
      %v1588 = vld [vmem:[#allocation2 + $0xca] sm:$0xff]
      %v1589 = vld [vmem:[#allocation2 + $0xda] sm:$0xff]
      %v1590 = vld [vmem:[#allocation2 + $0xe2] sm:$0xff]
      %v1591 = vpack.c.bf16 %v1572, %v1571
      %v1592 = vpack.c.bf16 %v1574, %v1573
      %v1593 = vpack.c.bf16 %v1576, %v1575
      %v1594 = vpack.c.bf16 %v1578, %v1577
      %v1595 = vpack.c.bf16 %v1580, %v1579
      %v1596 = vpack.c.bf16 %v1582, %v1581
      %v1597 = vpack.c.bf16 %v1584, %v1583
      %v1598 = vpack.c.bf16 %v1586, %v1585
      %v1599 = vpack.c.bf16 %v1588, %v1587
      %v1600 = vpack.c.bf16 %v1590, %v1589
      %v1601 = vld [vmem:[#allocation3 + $0x2] sm:$0xff]
      %v1602 = vld [vmem:[#allocation3 + $0xa] sm:$0xff]
      %v1603 = vld [vmem:[#allocation3 + $0x1a] sm:$0xff]
      %v1604 = vld [vmem:[#allocation3 + $0x22] sm:$0xff]
      %v1605 = vld [vmem:[#allocation3 + $0x32] sm:$0xff]
      %v1606 = vld [vmem:[#allocation3 + $0x3a] sm:$0xff]
      %v1607 = vld [vmem:[#allocation3 + $0x4a] sm:$0xff]
      %v1608 = vld [vmem:[#allocation3 + $0x52] sm:$0xff]
      %v1609 = vld [vmem:[#allocation3 + $0x62] sm:$0xff]
      %v1610 = vld [vmem:[#allocation3 + $0x6a] sm:$0xff]
      %v1611 = vld [vmem:[#allocation3 + $0x7a] sm:$0xff]
      %v1612 = vld [vmem:[#allocation3 + $0x82] sm:$0xff]
      %v1613 = vld [vmem:[#allocation3 + $0x92] sm:$0xff]
      %v1614 = vld [vmem:[#allocation3 + $0x9a] sm:$0xff]
      %v1615 = vld [vmem:[#allocation3 + $0xaa] sm:$0xff]
      %v1616 = vld [vmem:[#allocation3 + $0xb2] sm:$0xff]
      %v1617 = vld [vmem:[#allocation3 + $0xc2] sm:$0xff]
      %v1618 = vld [vmem:[#allocation3 + $0xca] sm:$0xff]
      %v1619 = vld [vmem:[#allocation3 + $0xda] sm:$0xff]
      %v1620 = vld [vmem:[#allocation3 + $0xe2] sm:$0xff]
      %v1621 = vpack.c.bf16 %v1602, %v1601
      %v1622 = vpack.c.bf16 %v1604, %v1603
      %v1623 = vpack.c.bf16 %v1606, %v1605
      %v1624 = vpack.c.bf16 %v1608, %v1607
      %v1625 = vpack.c.bf16 %v1610, %v1609
      %v1626 = vpack.c.bf16 %v1612, %v1611
      %v1627 = vpack.c.bf16 %v1614, %v1613
      %v1628 = vpack.c.bf16 %v1616, %v1615
      %v1629 = vpack.c.bf16 %v1618, %v1617
      %v1630 = vpack.c.bf16 %v1620, %v1619
      %s1631 = scalar_lea.vmem %s6, 16
      %v1632 = vld [vmem:[%s1631] sm:$0xf]
      %v1633 = vld [vmem:[%s1631 + $0x4] sm:$0xf]
      %s1634 = scalar_lea.vmem %s7, 16
      %v1635 = vld [vmem:[%s1634] sm:$0xf]
      %v1636 = vld [vmem:[%s1634 + $0x4] sm:$0xf]
      %v1639 = vunpack.c.l.b16 %v1635
      %v1640 = vunpack.c.l.b16 %v1636
      %v1641 = vpack.c.b16 %v1640, %v1639
      %v1644 = vsel %vm680, %v1621, 0
      %v1647 = vsel %vm680, %v1622, 0
      %v1650 = vsel %vm680, %v1623, 0
      %v1653 = vsel %vm680, %v1624, 0
      %v1656 = vsel %vm680, %v1625, 0
      %v1659 = vsel %vm680, %v1626, 0
      %v1662 = vsel %vm680, %v1627, 0
      %v1665 = vsel %vm680, %v1628, 0
      %v1668 = vsel %vm680, %v1629, 0
      %v1671 = vsel %vm680, %v1630, 0
      %1673 = vmatprep.subr.bf16.mxu0 0
      %1674 = vmatpush1.bf16.msra.mxu0 0
      %1675 = vmatprep.subr.bf16.mxu0 0
      %1676 = vmatpush1.bf16.msra.mxu0 0
      %1677 = vmatprep.subr.bf16.mxu0 0
      %1678 = vmatpush1.bf16.msra.mxu0 0
      %1679 = vmatprep.subr.bf16.mxu0 0
      %1680 = vmatpush1.bf16.msra.mxu0 0
      %1681 = vmatprep.subr.bf16.mxu0 0
      %1682 = vmatpush1.bf16.msra.mxu0 0
      %1683 = vmatprep.subr.bf16.mxu0 0
      %1684 = vmatpush1.bf16.msra.mxu0 0
      %1685 = vmatprep.subr.bf16.mxu0 0
      %1686 = vmatpush1.bf16.msra.mxu0 0
      %1687 = vmatprep.subr.bf16.mxu0 0
      %1688 = vmatpush1.bf16.msra.mxu0 %v1641
      %1689 = vmatprep.subr.bf16.mxu0 0
      %1690 = vmatpush2.bf16.msra.mxu0 0
      %1691 = vmatprep.subr.bf16.mxu0 0
      %1692 = vmatpush2.bf16.msra.mxu0 0
      %1693 = vmatprep.subr.bf16.mxu0 0
      %1694 = vmatpush2.bf16.msra.mxu0 0
      %1695 = vmatprep.subr.bf16.mxu0 0
      %1696 = vmatpush2.bf16.msra.mxu0 0
      %1697 = vmatprep.subr.bf16.mxu0 0
      %1698 = vmatpush2.bf16.msra.mxu0 0
      %1699 = vmatprep.subr.bf16.mxu0 0
      %1700 = vmatpush2.bf16.msra.mxu0 0
      %1701 = vmatprep.subr.bf16.mxu0 0
      %1702 = vmatpush2.bf16.msra.mxu0 0
      %1703 = vmatprep.subr.bf16.mxu0 0
      %1704 = vmatpush2.bf16.msra.mxu0 0
      %1705 = vmatprep.mubr.bf16.mxu0 0
      %1706 = vmatmul.mubr.bf16.gmra.mxu0 %v1644
      %v1707 = vpop.f32.mrf.mxu0
      %v1708 = vadd.f32 0.0, %v1707
      %v1709 = vpop.f32.mrf.mxu0
      %v1710 = vpop.f32.mrf.mxu0
      %v1711 = vadd.f32 0.0, %v1710
      %v1712 = vpop.f32.mrf.mxu0
      %1713 = vmatprep.mubr.bf16.mxu0 0
      %1714 = vmatmul.mubr.bf16.gmra.mxu0 %v1647
      %v1715 = vpop.f32.mrf.mxu0
      %v1716 = vadd.f32 0.0, %v1715
      %v1717 = vpop.f32.mrf.mxu0
      %v1718 = vpop.f32.mrf.mxu0
      %v1719 = vadd.f32 0.0, %v1718
      %v1720 = vpop.f32.mrf.mxu0
      %1721 = vmatprep.mubr.bf16.mxu0 0
      %1722 = vmatmul.mubr.bf16.gmra.mxu0 %v1650
      %v1723 = vpop.f32.mrf.mxu0
      %v1724 = vadd.f32 0.0, %v1723
      %v1725 = vpop.f32.mrf.mxu0
      %v1726 = vpop.f32.mrf.mxu0
      %v1727 = vadd.f32 0.0, %v1726
      %v1728 = vpop.f32.mrf.mxu0
      %1729 = vmatprep.mubr.bf16.mxu0 0
      %1730 = vmatmul.mubr.bf16.gmra.mxu0 %v1653
      %v1731 = vpop.f32.mrf.mxu0
      %v1732 = vadd.f32 0.0, %v1731
      %v1733 = vpop.f32.mrf.mxu0
      %v1734 = vpop.f32.mrf.mxu0
      %v1735 = vadd.f32 0.0, %v1734
      %v1736 = vpop.f32.mrf.mxu0
      %1737 = vmatprep.mubr.bf16.mxu0 0
      %1738 = vmatmul.mubr.bf16.gmra.mxu0 %v1656
      %v1739 = vpop.f32.mrf.mxu0
      %v1740 = vadd.f32 0.0, %v1739
      %v1741 = vpop.f32.mrf.mxu0
      %v1742 = vpop.f32.mrf.mxu0
      %v1743 = vadd.f32 0.0, %v1742
      %v1744 = vpop.f32.mrf.mxu0
      %1745 = vmatprep.mubr.bf16.mxu0 0
      %1746 = vmatmul.mubr.bf16.gmra.mxu0 %v1659
      %v1747 = vpop.f32.mrf.mxu0
      %v1748 = vadd.f32 0.0, %v1747
      %v1749 = vpop.f32.mrf.mxu0
      %v1750 = vpop.f32.mrf.mxu0
      %v1751 = vadd.f32 0.0, %v1750
      %v1752 = vpop.f32.mrf.mxu0
      %1753 = vmatprep.mubr.bf16.mxu0 0
      %1754 = vmatmul.mubr.bf16.gmra.mxu0 %v1662
      %v1755 = vpop.f32.mrf.mxu0
      %v1756 = vadd.f32 0.0, %v1755
      %v1757 = vpop.f32.mrf.mxu0
      %v1758 = vpop.f32.mrf.mxu0
      %v1759 = vadd.f32 0.0, %v1758
      %v1760 = vpop.f32.mrf.mxu0
      %1761 = vmatprep.mubr.bf16.mxu0 0
      %1762 = vmatmul.mubr.bf16.gmra.mxu0 %v1665
      %v1763 = vpop.f32.mrf.mxu0
      %v1764 = vadd.f32 0.0, %v1763
      %v1765 = vpop.f32.mrf.mxu0
      %v1766 = vpop.f32.mrf.mxu0
      %v1767 = vadd.f32 0.0, %v1766
      %v1768 = vpop.f32.mrf.mxu0
      %1769 = vmatprep.mubr.bf16.mxu0 0
      %1770 = vmatmul.mubr.bf16.gmra.mxu0 %v1668
      %v1771 = vpop.f32.mrf.mxu0
      %v1772 = vadd.f32 0.0, %v1771
      %v1773 = vpop.f32.mrf.mxu0
      %v1774 = vpop.f32.mrf.mxu0
      %v1775 = vadd.f32 0.0, %v1774
      %v1776 = vpop.f32.mrf.mxu0
      %1777 = vmatprep.mubr.bf16.mxu0 0
      %1778 = vmatmul.mubr.bf16.gmra.mxu0 %v1671
      %v1779 = vpop.f32.mrf.mxu0
      %v1780 = vadd.f32 0.0, %v1779
      %v1781 = vpop.f32.mrf.mxu0
      %v1782 = vpop.f32.mrf.mxu0
      %v1783 = vadd.f32 0.0, %v1782
      %v1784 = vpop.f32.mrf.mxu0
      %1785 = vdwg.mxu0
      %v1788 = vunpack.c.l.b16 %v1632
      %v1789 = vunpack.c.l.b16 %v1633
      %v1790 = vpack.c.b16 %v1789, %v1788
      %v1793 = vsel %vm680, %v1591, 0
      %v1796 = vsel %vm680, %v1592, 0
      %v1799 = vsel %vm680, %v1593, 0
      %v1802 = vsel %vm680, %v1594, 0
      %v1805 = vsel %vm680, %v1595, 0
      %v1808 = vsel %vm680, %v1596, 0
      %v1811 = vsel %vm680, %v1597, 0
      %v1814 = vsel %vm680, %v1598, 0
      %v1817 = vsel %vm680, %v1599, 0
      %v1820 = vsel %vm680, %v1600, 0
      %1822 = vmatprep.subr.bf16.mxu0 0
      %1823 = vmatpush1.bf16.msra.mxu0 0
      %1824 = vmatprep.subr.bf16.mxu0 0
      %1825 = vmatpush1.bf16.msra.mxu0 0
      %1826 = vmatprep.subr.bf16.mxu0 0
      %1827 = vmatpush1.bf16.msra.mxu0 0
      %1828 = vmatprep.subr.bf16.mxu0 0
      %1829 = vmatpush1.bf16.msra.mxu0 0
      %1830 = vmatprep.subr.bf16.mxu0 0
      %1831 = vmatpush1.bf16.msra.mxu0 0
      %1832 = vmatprep.subr.bf16.mxu0 0
      %1833 = vmatpush1.bf16.msra.mxu0 0
      %1834 = vmatprep.subr.bf16.mxu0 0
      %1835 = vmatpush1.bf16.msra.mxu0 0
      %1836 = vmatprep.subr.bf16.mxu0 0
      %1837 = vmatpush1.bf16.msra.mxu0 %v1790
      %1838 = vmatprep.subr.bf16.mxu0 0
      %1839 = vmatpush2.bf16.msra.mxu0 0
      %1840 = vmatprep.subr.bf16.mxu0 0
      %1841 = vmatpush2.bf16.msra.mxu0 0
      %1842 = vmatprep.subr.bf16.mxu0 0
      %1843 = vmatpush2.bf16.msra.mxu0 0
      %1844 = vmatprep.subr.bf16.mxu0 0
      %1845 = vmatpush2.bf16.msra.mxu0 0
      %1846 = vmatprep.subr.bf16.mxu0 0
      %1847 = vmatpush2.bf16.msra.mxu0 0
      %1848 = vmatprep.subr.bf16.mxu0 0
      %1849 = vmatpush2.bf16.msra.mxu0 0
      %1850 = vmatprep.subr.bf16.mxu0 0
      %1851 = vmatpush2.bf16.msra.mxu0 0
      %1852 = vmatprep.subr.bf16.mxu0 0
      %1853 = vmatpush2.bf16.msra.mxu0 0
      %1854 = vmatprep.mubr.bf16.mxu0 0
      %1855 = vmatmul.mubr.bf16.gmra.mxu0 %v1793
      %v1856 = vpop.f32.mrf.mxu0
      %v1857 = vadd.f32 %v1708, %v1856
      %v1858 = vpop.f32.mrf.mxu0
      %v1859 = vpop.f32.mrf.mxu0
      %v1860 = vadd.f32 %v1711, %v1859
      %v1861 = vpop.f32.mrf.mxu0
      %1862 = vmatprep.mubr.bf16.mxu0 0
      %1863 = vmatmul.mubr.bf16.gmra.mxu0 %v1796
      %v1864 = vpop.f32.mrf.mxu0
      %v1865 = vadd.f32 %v1716, %v1864
      %v1866 = vpop.f32.mrf.mxu0
      %v1867 = vpop.f32.mrf.mxu0
      %v1868 = vadd.f32 %v1719, %v1867
      %v1869 = vpop.f32.mrf.mxu0
      %1870 = vmatprep.mubr.bf16.mxu0 0
      %1871 = vmatmul.mubr.bf16.gmra.mxu0 %v1799
      %v1872 = vpop.f32.mrf.mxu0
      %v1873 = vadd.f32 %v1724, %v1872
      %v1874 = vpop.f32.mrf.mxu0
      %v1875 = vpop.f32.mrf.mxu0
      %v1876 = vadd.f32 %v1727, %v1875
      %v1877 = vpop.f32.mrf.mxu0
      %1878 = vmatprep.mubr.bf16.mxu0 0
      %1879 = vmatmul.mubr.bf16.gmra.mxu0 %v1802
      %v1880 = vpop.f32.mrf.mxu0
      %v1881 = vadd.f32 %v1732, %v1880
      %v1882 = vpop.f32.mrf.mxu0
      %v1883 = vpop.f32.mrf.mxu0
      %v1884 = vadd.f32 %v1735, %v1883
      %v1885 = vpop.f32.mrf.mxu0
      %1886 = vmatprep.mubr.bf16.mxu0 0
      %1887 = vmatmul.mubr.bf16.gmra.mxu0 %v1805
      %v1888 = vpop.f32.mrf.mxu0
      %v1889 = vadd.f32 %v1740, %v1888
      %v1890 = vpop.f32.mrf.mxu0
      %v1891 = vpop.f32.mrf.mxu0
      %v1892 = vadd.f32 %v1743, %v1891
      %v1893 = vpop.f32.mrf.mxu0
      %1894 = vmatprep.mubr.bf16.mxu0 0
      %1895 = vmatmul.mubr.bf16.gmra.mxu0 %v1808
      %v1896 = vpop.f32.mrf.mxu0
      %v1897 = vadd.f32 %v1748, %v1896
      %v1898 = vpop.f32.mrf.mxu0
      %v1899 = vpop.f32.mrf.mxu0
      %v1900 = vadd.f32 %v1751, %v1899
      %v1901 = vpop.f32.mrf.mxu0
      %1902 = vmatprep.mubr.bf16.mxu0 0
      %1903 = vmatmul.mubr.bf16.gmra.mxu0 %v1811
      %v1904 = vpop.f32.mrf.mxu0
      %v1905 = vadd.f32 %v1756, %v1904
      %v1906 = vpop.f32.mrf.mxu0
      %v1907 = vpop.f32.mrf.mxu0
      %v1908 = vadd.f32 %v1759, %v1907
      %v1909 = vpop.f32.mrf.mxu0
      %1910 = vmatprep.mubr.bf16.mxu0 0
      %1911 = vmatmul.mubr.bf16.gmra.mxu0 %v1814
      %v1912 = vpop.f32.mrf.mxu0
      %v1913 = vadd.f32 %v1764, %v1912
      %v1914 = vpop.f32.mrf.mxu0
      %v1915 = vpop.f32.mrf.mxu0
      %v1916 = vadd.f32 %v1767, %v1915
      %v1917 = vpop.f32.mrf.mxu0
      %1918 = vmatprep.mubr.bf16.mxu0 0
      %1919 = vmatmul.mubr.bf16.gmra.mxu0 %v1817
      %v1920 = vpop.f32.mrf.mxu0
      %v1921 = vadd.f32 %v1772, %v1920
      %v1922 = vpop.f32.mrf.mxu0
      %v1923 = vpop.f32.mrf.mxu0
      %v1924 = vadd.f32 %v1775, %v1923
      %v1925 = vpop.f32.mrf.mxu0
      %1926 = vmatprep.mubr.bf16.mxu0 0
      %1927 = vmatmul.mubr.bf16.gmra.mxu0 %v1820
      %v1928 = vpop.f32.mrf.mxu0
      %v1929 = vadd.f32 %v1780, %v1928
      %v1930 = vpop.f32.mrf.mxu0
      %v1931 = vpop.f32.mrf.mxu0
      %v1932 = vadd.f32 %v1783, %v1931
      %v1933 = vpop.f32.mrf.mxu0
      %1934 = vdwg.mxu0
      %v1935 = vadd.f32 %v1551, %v1857
      %v1936 = vadd.f32 %v1552, %v1860
      %v1937 = vadd.f32 %v1553, %v1865
      %v1938 = vadd.f32 %v1554, %v1868
      %v1939 = vadd.f32 %v1555, %v1873
      %v1940 = vadd.f32 %v1556, %v1876
      %v1941 = vadd.f32 %v1557, %v1881
      %v1942 = vadd.f32 %v1558, %v1884
      %v1943 = vadd.f32 %v1559, %v1889
      %v1944 = vadd.f32 %v1560, %v1892
      %v1945 = vadd.f32 %v1561, %v1897
      %v1946 = vadd.f32 %v1562, %v1900
      %v1947 = vadd.f32 %v1563, %v1905
      %v1948 = vadd.f32 %v1564, %v1908
      %v1949 = vadd.f32 %v1565, %v1913
      %v1950 = vadd.f32 %v1566, %v1916
      %v1951 = vadd.f32 %v1567, %v1921
      %v1952 = vadd.f32 %v1568, %v1924
      %v1953 = vadd.f32 %v1569, %v1929
      %v1954 = vadd.f32 %v1570, %v1932
      %s1955 = scalar_lea.vmem [#allocation2], 24
      %v1956 = vld [vmem:[%s1955] sm:$0xff]
      %v1957 = vld [vmem:[%s1955 + $0x8] sm:$0xff]
      %v1958 = vld [vmem:[%s1955 + $0x18] sm:$0xff]
      %v1959 = vld [vmem:[%s1955 + $0x20] sm:$0xff]
      %v1960 = vld [vmem:[%s1955 + $0x30] sm:$0xff]
      %v1961 = vld [vmem:[%s1955 + $0x38] sm:$0xff]
      %v1962 = vld [vmem:[%s1955 + $0x48] sm:$0xff]
      %v1963 = vld [vmem:[%s1955 + $0x50] sm:$0xff]
      %v1964 = vld [vmem:[%s1955 + $0x60] sm:$0xff]
      %v1965 = vld [vmem:[%s1955 + $0x68] sm:$0xff]
      %v1966 = vld [vmem:[%s1955 + $0x78] sm:$0xff]
      %v1967 = vld [vmem:[%s1955 + $0x80] sm:$0xff]
      %v1968 = vld [vmem:[%s1955 + $0x90] sm:$0xff]
      %v1969 = vld [vmem:[%s1955 + $0x98] sm:$0xff]
      %v1970 = vld [vmem:[%s1955 + $0xa8] sm:$0xff]
      %v1971 = vld [vmem:[%s1955 + $0xb0] sm:$0xff]
      %v1972 = vld [vmem:[%s1955 + $0xc0] sm:$0xff]
      %v1973 = vld [vmem:[%s1955 + $0xc8] sm:$0xff]
      %v1974 = vld [vmem:[%s1955 + $0xd8] sm:$0xff]
      %v1975 = vld [vmem:[%s1955 + $0xe0] sm:$0xff]
      %v1976 = vpack.c.bf16 %v1957, %v1956
      %v1977 = vpack.c.bf16 %v1959, %v1958
      %v1978 = vpack.c.bf16 %v1961, %v1960
      %v1979 = vpack.c.bf16 %v1963, %v1962
      %v1980 = vpack.c.bf16 %v1965, %v1964
      %v1981 = vpack.c.bf16 %v1967, %v1966
      %v1982 = vpack.c.bf16 %v1969, %v1968
      %v1983 = vpack.c.bf16 %v1971, %v1970
      %v1984 = vpack.c.bf16 %v1973, %v1972
      %v1985 = vpack.c.bf16 %v1975, %v1974
      %s1986 = scalar_lea.vmem [#allocation3], 24
      %v1987 = vld [vmem:[%s1986] sm:$0xff]
      %v1988 = vld [vmem:[%s1986 + $0x8] sm:$0xff]
      %v1989 = vld [vmem:[%s1986 + $0x18] sm:$0xff]
      %v1990 = vld [vmem:[%s1986 + $0x20] sm:$0xff]
      %v1991 = vld [vmem:[%s1986 + $0x30] sm:$0xff]
      %v1992 = vld [vmem:[%s1986 + $0x38] sm:$0xff]
      %v1993 = vld [vmem:[%s1986 + $0x48] sm:$0xff]
      %v1994 = vld [vmem:[%s1986 + $0x50] sm:$0xff]
      %v1995 = vld [vmem:[%s1986 + $0x60] sm:$0xff]
      %v1996 = vld [vmem:[%s1986 + $0x68] sm:$0xff]
      %v1997 = vld [vmem:[%s1986 + $0x78] sm:$0xff]
      %v1998 = vld [vmem:[%s1986 + $0x80] sm:$0xff]
      %v1999 = vld [vmem:[%s1986 + $0x90] sm:$0xff]
      %v2000 = vld [vmem:[%s1986 + $0x98] sm:$0xff]
      %v2001 = vld [vmem:[%s1986 + $0xa8] sm:$0xff]
      %v2002 = vld [vmem:[%s1986 + $0xb0] sm:$0xff]
      %v2003 = vld [vmem:[%s1986 + $0xc0] sm:$0xff]
      %v2004 = vld [vmem:[%s1986 + $0xc8] sm:$0xff]
      %v2005 = vld [vmem:[%s1986 + $0xd8] sm:$0xff]
      %v2006 = vld [vmem:[%s1986 + $0xe0] sm:$0xff]
      %v2007 = vpack.c.bf16 %v1988, %v1987
      %v2008 = vpack.c.bf16 %v1990, %v1989
      %v2009 = vpack.c.bf16 %v1992, %v1991
      %v2010 = vpack.c.bf16 %v1994, %v1993
      %v2011 = vpack.c.bf16 %v1996, %v1995
      %v2012 = vpack.c.bf16 %v1998, %v1997
      %v2013 = vpack.c.bf16 %v2000, %v1999
      %v2014 = vpack.c.bf16 %v2002, %v2001
      %v2015 = vpack.c.bf16 %v2004, %v2003
      %v2016 = vpack.c.bf16 %v2006, %v2005
      %s2017 = scalar_lea.vmem %s6, 24
      %v2018 = vld [vmem:[%s2017] sm:$0xf]
      %v2019 = vld [vmem:[%s2017 + $0x4] sm:$0xf]
      %s2020 = scalar_lea.vmem %s7, 24
      %v2021 = vld [vmem:[%s2020] sm:$0xf]
      %v2022 = vld [vmem:[%s2020 + $0x4] sm:$0xf]
      %v2025 = vunpack.c.l.b16 %v2021
      %v2026 = vunpack.c.l.b16 %v2022
      %v2027 = vpack.c.b16 %v2026, %v2025
      %v2030 = vsel %vm680, %v2007, 0
      %v2033 = vsel %vm680, %v2008, 0
      %v2036 = vsel %vm680, %v2009, 0
      %v2039 = vsel %vm680, %v2010, 0
      %v2042 = vsel %vm680, %v2011, 0
      %v2045 = vsel %vm680, %v2012, 0
      %v2048 = vsel %vm680, %v2013, 0
      %v2051 = vsel %vm680, %v2014, 0
      %v2054 = vsel %vm680, %v2015, 0
      %v2057 = vsel %vm680, %v2016, 0
      %2059 = vmatprep.subr.bf16.mxu0 0
      %2060 = vmatpush1.bf16.msra.mxu0 0
      %2061 = vmatprep.subr.bf16.mxu0 0
      %2062 = vmatpush1.bf16.msra.mxu0 0
      %2063 = vmatprep.subr.bf16.mxu0 0
      %2064 = vmatpush1.bf16.msra.mxu0 0
      %2065 = vmatprep.subr.bf16.mxu0 0
      %2066 = vmatpush1.bf16.msra.mxu0 0
      %2067 = vmatprep.subr.bf16.mxu0 0
      %2068 = vmatpush1.bf16.msra.mxu0 0
      %2069 = vmatprep.subr.bf16.mxu0 0
      %2070 = vmatpush1.bf16.msra.mxu0 0
      %2071 = vmatprep.subr.bf16.mxu0 0
      %2072 = vmatpush1.bf16.msra.mxu0 0
      %2073 = vmatprep.subr.bf16.mxu0 0
      %2074 = vmatpush1.bf16.msra.mxu0 %v2027
      %2075 = vmatprep.subr.bf16.mxu0 0
      %2076 = vmatpush2.bf16.msra.mxu0 0
      %2077 = vmatprep.subr.bf16.mxu0 0
      %2078 = vmatpush2.bf16.msra.mxu0 0
      %2079 = vmatprep.subr.bf16.mxu0 0
      %2080 = vmatpush2.bf16.msra.mxu0 0
      %2081 = vmatprep.subr.bf16.mxu0 0
      %2082 = vmatpush2.bf16.msra.mxu0 0
      %2083 = vmatprep.subr.bf16.mxu0 0
      %2084 = vmatpush2.bf16.msra.mxu0 0
      %2085 = vmatprep.subr.bf16.mxu0 0
      %2086 = vmatpush2.bf16.msra.mxu0 0
      %2087 = vmatprep.subr.bf16.mxu0 0
      %2088 = vmatpush2.bf16.msra.mxu0 0
      %2089 = vmatprep.subr.bf16.mxu0 0
      %2090 = vmatpush2.bf16.msra.mxu0 0
      %2091 = vmatprep.mubr.bf16.mxu0 0
      %2092 = vmatmul.mubr.bf16.gmra.mxu0 %v2030
      %v2093 = vpop.f32.mrf.mxu0
      %v2094 = vadd.f32 0.0, %v2093
      %v2095 = vpop.f32.mrf.mxu0
      %v2096 = vpop.f32.mrf.mxu0
      %v2097 = vadd.f32 0.0, %v2096
      %v2098 = vpop.f32.mrf.mxu0
      %2099 = vmatprep.mubr.bf16.mxu0 0
      %2100 = vmatmul.mubr.bf16.gmra.mxu0 %v2033
      %v2101 = vpop.f32.mrf.mxu0
      %v2102 = vadd.f32 0.0, %v2101
      %v2103 = vpop.f32.mrf.mxu0
      %v2104 = vpop.f32.mrf.mxu0
      %v2105 = vadd.f32 0.0, %v2104
      %v2106 = vpop.f32.mrf.mxu0
      %2107 = vmatprep.mubr.bf16.mxu0 0
      %2108 = vmatmul.mubr.bf16.gmra.mxu0 %v2036
      %v2109 = vpop.f32.mrf.mxu0
      %v2110 = vadd.f32 0.0, %v2109
      %v2111 = vpop.f32.mrf.mxu0
      %v2112 = vpop.f32.mrf.mxu0
      %v2113 = vadd.f32 0.0, %v2112
      %v2114 = vpop.f32.mrf.mxu0
      %2115 = vmatprep.mubr.bf16.mxu0 0
      %2116 = vmatmul.mubr.bf16.gmra.mxu0 %v2039
      %v2117 = vpop.f32.mrf.mxu0
      %v2118 = vadd.f32 0.0, %v2117
      %v2119 = vpop.f32.mrf.mxu0
      %v2120 = vpop.f32.mrf.mxu0
      %v2121 = vadd.f32 0.0, %v2120
      %v2122 = vpop.f32.mrf.mxu0
      %2123 = vmatprep.mubr.bf16.mxu0 0
      %2124 = vmatmul.mubr.bf16.gmra.mxu0 %v2042
      %v2125 = vpop.f32.mrf.mxu0
      %v2126 = vadd.f32 0.0, %v2125
      %v2127 = vpop.f32.mrf.mxu0
      %v2128 = vpop.f32.mrf.mxu0
      %v2129 = vadd.f32 0.0, %v2128
      %v2130 = vpop.f32.mrf.mxu0
      %2131 = vmatprep.mubr.bf16.mxu0 0
      %2132 = vmatmul.mubr.bf16.gmra.mxu0 %v2045
      %v2133 = vpop.f32.mrf.mxu0
      %v2134 = vadd.f32 0.0, %v2133
      %v2135 = vpop.f32.mrf.mxu0
      %v2136 = vpop.f32.mrf.mxu0
      %v2137 = vadd.f32 0.0, %v2136
      %v2138 = vpop.f32.mrf.mxu0
      %2139 = vmatprep.mubr.bf16.mxu0 0
      %2140 = vmatmul.mubr.bf16.gmra.mxu0 %v2048
      %v2141 = vpop.f32.mrf.mxu0
      %v2142 = vadd.f32 0.0, %v2141
      %v2143 = vpop.f32.mrf.mxu0
      %v2144 = vpop.f32.mrf.mxu0
      %v2145 = vadd.f32 0.0, %v2144
      %v2146 = vpop.f32.mrf.mxu0
      %2147 = vmatprep.mubr.bf16.mxu0 0
      %2148 = vmatmul.mubr.bf16.gmra.mxu0 %v2051
      %v2149 = vpop.f32.mrf.mxu0
      %v2150 = vadd.f32 0.0, %v2149
      %v2151 = vpop.f32.mrf.mxu0
      %v2152 = vpop.f32.mrf.mxu0
      %v2153 = vadd.f32 0.0, %v2152
      %v2154 = vpop.f32.mrf.mxu0
      %2155 = vmatprep.mubr.bf16.mxu0 0
      %2156 = vmatmul.mubr.bf16.gmra.mxu0 %v2054
      %v2157 = vpop.f32.mrf.mxu0
      %v2158 = vadd.f32 0.0, %v2157
      %v2159 = vpop.f32.mrf.mxu0
      %v2160 = vpop.f32.mrf.mxu0
      %v2161 = vadd.f32 0.0, %v2160
      %v2162 = vpop.f32.mrf.mxu0
      %2163 = vmatprep.mubr.bf16.mxu0 0
      %2164 = vmatmul.mubr.bf16.gmra.mxu0 %v2057
      %v2165 = vpop.f32.mrf.mxu0
      %v2166 = vadd.f32 0.0, %v2165
      %v2167 = vpop.f32.mrf.mxu0
      %v2168 = vpop.f32.mrf.mxu0
      %v2169 = vadd.f32 0.0, %v2168
      %v2170 = vpop.f32.mrf.mxu0
      %2171 = vdwg.mxu0
      %v2174 = vunpack.c.l.b16 %v2018
      %v2175 = vunpack.c.l.b16 %v2019
      %v2176 = vpack.c.b16 %v2175, %v2174
      %v2179 = vsel %vm680, %v1976, 0
      %v2182 = vsel %vm680, %v1977, 0
      %v2185 = vsel %vm680, %v1978, 0
      %v2188 = vsel %vm680, %v1979, 0
      %v2191 = vsel %vm680, %v1980, 0
      %v2194 = vsel %vm680, %v1981, 0
      %v2197 = vsel %vm680, %v1982, 0
      %v2200 = vsel %vm680, %v1983, 0
      %v2203 = vsel %vm680, %v1984, 0
      %v2206 = vsel %vm680, %v1985, 0
      %2208 = vmatprep.subr.bf16.mxu0 0
      %2209 = vmatpush1.bf16.msra.mxu0 0
      %2210 = vmatprep.subr.bf16.mxu0 0
      %2211 = vmatpush1.bf16.msra.mxu0 0
      %2212 = vmatprep.subr.bf16.mxu0 0
      %2213 = vmatpush1.bf16.msra.mxu0 0
      %2214 = vmatprep.subr.bf16.mxu0 0
      %2215 = vmatpush1.bf16.msra.mxu0 0
      %2216 = vmatprep.subr.bf16.mxu0 0
      %2217 = vmatpush1.bf16.msra.mxu0 0
      %2218 = vmatprep.subr.bf16.mxu0 0
      %2219 = vmatpush1.bf16.msra.mxu0 0
      %2220 = vmatprep.subr.bf16.mxu0 0
      %2221 = vmatpush1.bf16.msra.mxu0 0
      %2222 = vmatprep.subr.bf16.mxu0 0
      %2223 = vmatpush1.bf16.msra.mxu0 %v2176
      %2224 = vmatprep.subr.bf16.mxu0 0
      %2225 = vmatpush2.bf16.msra.mxu0 0
      %2226 = vmatprep.subr.bf16.mxu0 0
      %2227 = vmatpush2.bf16.msra.mxu0 0
      %2228 = vmatprep.subr.bf16.mxu0 0
      %2229 = vmatpush2.bf16.msra.mxu0 0
      %2230 = vmatprep.subr.bf16.mxu0 0
      %2231 = vmatpush2.bf16.msra.mxu0 0
      %2232 = vmatprep.subr.bf16.mxu0 0
      %2233 = vmatpush2.bf16.msra.mxu0 0
      %2234 = vmatprep.subr.bf16.mxu0 0
      %2235 = vmatpush2.bf16.msra.mxu0 0
      %2236 = vmatprep.subr.bf16.mxu0 0
      %2237 = vmatpush2.bf16.msra.mxu0 0
      %2238 = vmatprep.subr.bf16.mxu0 0
      %2239 = vmatpush2.bf16.msra.mxu0 0
      %2240 = vmatprep.mubr.bf16.mxu0 0
      %2241 = vmatmul.mubr.bf16.gmra.mxu0 %v2179
      %v2242 = vpop.f32.mrf.mxu0
      %v2243 = vadd.f32 %v2094, %v2242
      %v2244 = vpop.f32.mrf.mxu0
      %v2245 = vpop.f32.mrf.mxu0
      %v2246 = vadd.f32 %v2097, %v2245
      %v2247 = vpop.f32.mrf.mxu0
      %2248 = vmatprep.mubr.bf16.mxu0 0
      %2249 = vmatmul.mubr.bf16.gmra.mxu0 %v2182
      %v2250 = vpop.f32.mrf.mxu0
      %v2251 = vadd.f32 %v2102, %v2250
      %v2252 = vpop.f32.mrf.mxu0
      %v2253 = vpop.f32.mrf.mxu0
      %v2254 = vadd.f32 %v2105, %v2253
      %v2255 = vpop.f32.mrf.mxu0
      %2256 = vmatprep.mubr.bf16.mxu0 0
      %2257 = vmatmul.mubr.bf16.gmra.mxu0 %v2185
      %v2258 = vpop.f32.mrf.mxu0
      %v2259 = vadd.f32 %v2110, %v2258
      %v2260 = vpop.f32.mrf.mxu0
      %v2261 = vpop.f32.mrf.mxu0
      %v2262 = vadd.f32 %v2113, %v2261
      %v2263 = vpop.f32.mrf.mxu0
      %2264 = vmatprep.mubr.bf16.mxu0 0
      %2265 = vmatmul.mubr.bf16.gmra.mxu0 %v2188
      %v2266 = vpop.f32.mrf.mxu0
      %v2267 = vadd.f32 %v2118, %v2266
      %v2268 = vpop.f32.mrf.mxu0
      %v2269 = vpop.f32.mrf.mxu0
      %v2270 = vadd.f32 %v2121, %v2269
      %v2271 = vpop.f32.mrf.mxu0
      %2272 = vmatprep.mubr.bf16.mxu0 0
      %2273 = vmatmul.mubr.bf16.gmra.mxu0 %v2191
      %v2274 = vpop.f32.mrf.mxu0
      %v2275 = vadd.f32 %v2126, %v2274
      %v2276 = vpop.f32.mrf.mxu0
      %v2277 = vpop.f32.mrf.mxu0
      %v2278 = vadd.f32 %v2129, %v2277
      %v2279 = vpop.f32.mrf.mxu0
      %2280 = vmatprep.mubr.bf16.mxu0 0
      %2281 = vmatmul.mubr.bf16.gmra.mxu0 %v2194
      %v2282 = vpop.f32.mrf.mxu0
      %v2283 = vadd.f32 %v2134, %v2282
      %v2284 = vpop.f32.mrf.mxu0
      %v2285 = vpop.f32.mrf.mxu0
      %v2286 = vadd.f32 %v2137, %v2285
      %v2287 = vpop.f32.mrf.mxu0
      %2288 = vmatprep.mubr.bf16.mxu0 0
      %2289 = vmatmul.mubr.bf16.gmra.mxu0 %v2197
      %v2290 = vpop.f32.mrf.mxu0
      %v2291 = vadd.f32 %v2142, %v2290
      %v2292 = vpop.f32.mrf.mxu0
      %v2293 = vpop.f32.mrf.mxu0
      %v2294 = vadd.f32 %v2145, %v2293
      %v2295 = vpop.f32.mrf.mxu0
      %2296 = vmatprep.mubr.bf16.mxu0 0
      %2297 = vmatmul.mubr.bf16.gmra.mxu0 %v2200
      %v2298 = vpop.f32.mrf.mxu0
      %v2299 = vadd.f32 %v2150, %v2298
      %v2300 = vpop.f32.mrf.mxu0
      %v2301 = vpop.f32.mrf.mxu0
      %v2302 = vadd.f32 %v2153, %v2301
      %v2303 = vpop.f32.mrf.mxu0
      %2304 = vmatprep.mubr.bf16.mxu0 0
      %2305 = vmatmul.mubr.bf16.gmra.mxu0 %v2203
      %v2306 = vpop.f32.mrf.mxu0
      %v2307 = vadd.f32 %v2158, %v2306
      %v2308 = vpop.f32.mrf.mxu0
      %v2309 = vpop.f32.mrf.mxu0
      %v2310 = vadd.f32 %v2161, %v2309
      %v2311 = vpop.f32.mrf.mxu0
      %2312 = vmatprep.mubr.bf16.mxu0 0
      %2313 = vmatmul.mubr.bf16.gmra.mxu0 %v2206
      %v2314 = vpop.f32.mrf.mxu0
      %v2315 = vadd.f32 %v2166, %v2314
      %v2316 = vpop.f32.mrf.mxu0
      %v2317 = vpop.f32.mrf.mxu0
      %v2318 = vadd.f32 %v2169, %v2317
      %v2319 = vpop.f32.mrf.mxu0
      %2320 = vdwg.mxu0
      %v2321 = vadd.f32 %v1935, %v2243
      %v2322 = vadd.f32 %v1936, %v2246
      %v2323 = vadd.f32 %v1937, %v2251
      %v2324 = vadd.f32 %v1938, %v2254
      %v2325 = vadd.f32 %v1939, %v2259
      %v2326 = vadd.f32 %v1940, %v2262
      %v2327 = vadd.f32 %v1941, %v2267
      %v2328 = vadd.f32 %v1942, %v2270
      %v2329 = vadd.f32 %v1943, %v2275
      %v2330 = vadd.f32 %v1944, %v2278
      %v2331 = vadd.f32 %v1945, %v2283
      %v2332 = vadd.f32 %v1946, %v2286
      %v2333 = vadd.f32 %v1947, %v2291
      %v2334 = vadd.f32 %v1948, %v2294
      %v2335 = vadd.f32 %v1949, %v2299
      %v2336 = vadd.f32 %v1950, %v2302
      %v2337 = vadd.f32 %v1951, %v2307
      %v2338 = vadd.f32 %v1952, %v2310
      %v2339 = vadd.f32 %v1953, %v2315
      %v2340 = vadd.f32 %v1954, %v2318
      %v2341 = vld [vmem:[%s1955 + $0x1] sm:$0xff]
      %v2342 = vld [vmem:[%s1955 + $0x9] sm:$0xff]
      %v2343 = vld [vmem:[%s1955 + $0x19] sm:$0xff]
      %v2344 = vld [vmem:[%s1955 + $0x21] sm:$0xff]
      %v2345 = vld [vmem:[%s1955 + $0x31] sm:$0xff]
      %v2346 = vld [vmem:[%s1955 + $0x39] sm:$0xff]
      %v2347 = vld [vmem:[%s1955 + $0x49] sm:$0xff]
      %v2348 = vld [vmem:[%s1955 + $0x51] sm:$0xff]
      %v2349 = vld [vmem:[%s1955 + $0x61] sm:$0xff]
      %v2350 = vld [vmem:[%s1955 + $0x69] sm:$0xff]
      %v2351 = vld [vmem:[%s1955 + $0x79] sm:$0xff]
      %v2352 = vld [vmem:[%s1955 + $0x81] sm:$0xff]
      %v2353 = vld [vmem:[%s1955 + $0x91] sm:$0xff]
      %v2354 = vld [vmem:[%s1955 + $0x99] sm:$0xff]
      %v2355 = vld [vmem:[%s1955 + $0xa9] sm:$0xff]
      %v2356 = vld [vmem:[%s1955 + $0xb1] sm:$0xff]
      %v2357 = vld [vmem:[%s1955 + $0xc1] sm:$0xff]
      %v2358 = vld [vmem:[%s1955 + $0xc9] sm:$0xff]
      %v2359 = vld [vmem:[%s1955 + $0xd9] sm:$0xff]
      %v2360 = vld [vmem:[%s1955 + $0xe1] sm:$0xff]
      %v2361 = vpack.c.bf16 %v2342, %v2341
      %v2362 = vpack.c.bf16 %v2344, %v2343
      %v2363 = vpack.c.bf16 %v2346, %v2345
      %v2364 = vpack.c.bf16 %v2348, %v2347
      %v2365 = vpack.c.bf16 %v2350, %v2349
      %v2366 = vpack.c.bf16 %v2352, %v2351
      %v2367 = vpack.c.bf16 %v2354, %v2353
      %v2368 = vpack.c.bf16 %v2356, %v2355
      %v2369 = vpack.c.bf16 %v2358, %v2357
      %v2370 = vpack.c.bf16 %v2360, %v2359
      %v2371 = vld [vmem:[%s1986 + $0x1] sm:$0xff]
      %v2372 = vld [vmem:[%s1986 + $0x9] sm:$0xff]
      %v2373 = vld [vmem:[%s1986 + $0x19] sm:$0xff]
      %v2374 = vld [vmem:[%s1986 + $0x21] sm:$0xff]
      %v2375 = vld [vmem:[%s1986 + $0x31] sm:$0xff]
      %v2376 = vld [vmem:[%s1986 + $0x39] sm:$0xff]
      %v2377 = vld [vmem:[%s1986 + $0x49] sm:$0xff]
      %v2378 = vld [vmem:[%s1986 + $0x51] sm:$0xff]
      %v2379 = vld [vmem:[%s1986 + $0x61] sm:$0xff]
      %v2380 = vld [vmem:[%s1986 + $0x69] sm:$0xff]
      %v2381 = vld [vmem:[%s1986 + $0x79] sm:$0xff]
      %v2382 = vld [vmem:[%s1986 + $0x81] sm:$0xff]
      %v2383 = vld [vmem:[%s1986 + $0x91] sm:$0xff]
      %v2384 = vld [vmem:[%s1986 + $0x99] sm:$0xff]
      %v2385 = vld [vmem:[%s1986 + $0xa9] sm:$0xff]
      %v2386 = vld [vmem:[%s1986 + $0xb1] sm:$0xff]
      %v2387 = vld [vmem:[%s1986 + $0xc1] sm:$0xff]
      %v2388 = vld [vmem:[%s1986 + $0xc9] sm:$0xff]
      %v2389 = vld [vmem:[%s1986 + $0xd9] sm:$0xff]
      %v2390 = vld [vmem:[%s1986 + $0xe1] sm:$0xff]
      %v2391 = vpack.c.bf16 %v2372, %v2371
      %v2392 = vpack.c.bf16 %v2374, %v2373
      %v2393 = vpack.c.bf16 %v2376, %v2375
      %v2394 = vpack.c.bf16 %v2378, %v2377
      %v2395 = vpack.c.bf16 %v2380, %v2379
      %v2396 = vpack.c.bf16 %v2382, %v2381
      %v2397 = vpack.c.bf16 %v2384, %v2383
      %v2398 = vpack.c.bf16 %v2386, %v2385
      %v2399 = vpack.c.bf16 %v2388, %v2387
      %v2400 = vpack.c.bf16 %v2390, %v2389
      %s2401 = scalar_lea.vmem %s6, 32
      %v2402 = vld [vmem:[%s2401] sm:$0xf]
      %v2403 = vld [vmem:[%s2401 + $0x4] sm:$0xf]
      %s2404 = scalar_lea.vmem %s7, 32
      %v2405 = vld [vmem:[%s2404] sm:$0xf]
      %v2406 = vld [vmem:[%s2404 + $0x4] sm:$0xf]
      %v2409 = vunpack.c.l.b16 %v2405
      %v2410 = vunpack.c.l.b16 %v2406
      %v2411 = vpack.c.b16 %v2410, %v2409
      %v2414 = vsel %vm680, %v2391, 0
      %v2417 = vsel %vm680, %v2392, 0
      %v2420 = vsel %vm680, %v2393, 0
      %v2423 = vsel %vm680, %v2394, 0
      %v2426 = vsel %vm680, %v2395, 0
      %v2429 = vsel %vm680, %v2396, 0
      %v2432 = vsel %vm680, %v2397, 0
      %v2435 = vsel %vm680, %v2398, 0
      %v2438 = vsel %vm680, %v2399, 0
      %v2441 = vsel %vm680, %v2400, 0
      %2443 = vmatprep.subr.bf16.mxu0 0
      %2444 = vmatpush1.bf16.msra.mxu0 0
      %2445 = vmatprep.subr.bf16.mxu0 0
      %2446 = vmatpush1.bf16.msra.mxu0 0
      %2447 = vmatprep.subr.bf16.mxu0 0
      %2448 = vmatpush1.bf16.msra.mxu0 0
      %2449 = vmatprep.subr.bf16.mxu0 0
      %2450 = vmatpush1.bf16.msra.mxu0 0
      %2451 = vmatprep.subr.bf16.mxu0 0
      %2452 = vmatpush1.bf16.msra.mxu0 0
      %2453 = vmatprep.subr.bf16.mxu0 0
      %2454 = vmatpush1.bf16.msra.mxu0 0
      %2455 = vmatprep.subr.bf16.mxu0 0
      %2456 = vmatpush1.bf16.msra.mxu0 0
      %2457 = vmatprep.subr.bf16.mxu0 0
      %2458 = vmatpush1.bf16.msra.mxu0 %v2411
      %2459 = vmatprep.subr.bf16.mxu0 0
      %2460 = vmatpush2.bf16.msra.mxu0 0
      %2461 = vmatprep.subr.bf16.mxu0 0
      %2462 = vmatpush2.bf16.msra.mxu0 0
      %2463 = vmatprep.subr.bf16.mxu0 0
      %2464 = vmatpush2.bf16.msra.mxu0 0
      %2465 = vmatprep.subr.bf16.mxu0 0
      %2466 = vmatpush2.bf16.msra.mxu0 0
      %2467 = vmatprep.subr.bf16.mxu0 0
      %2468 = vmatpush2.bf16.msra.mxu0 0
      %2469 = vmatprep.subr.bf16.mxu0 0
      %2470 = vmatpush2.bf16.msra.mxu0 0
      %2471 = vmatprep.subr.bf16.mxu0 0
      %2472 = vmatpush2.bf16.msra.mxu0 0
      %2473 = vmatprep.subr.bf16.mxu0 0
      %2474 = vmatpush2.bf16.msra.mxu0 0
      %2475 = vmatprep.mubr.bf16.mxu0 0
      %2476 = vmatmul.mubr.bf16.gmra.mxu0 %v2414
      %v2477 = vpop.f32.mrf.mxu0
      %v2478 = vadd.f32 0.0, %v2477
      %v2479 = vpop.f32.mrf.mxu0
      %v2480 = vpop.f32.mrf.mxu0
      %v2481 = vadd.f32 0.0, %v2480
      %v2482 = vpop.f32.mrf.mxu0
      %2483 = vmatprep.mubr.bf16.mxu0 0
      %2484 = vmatmul.mubr.bf16.gmra.mxu0 %v2417
      %v2485 = vpop.f32.mrf.mxu0
      %v2486 = vadd.f32 0.0, %v2485
      %v2487 = vpop.f32.mrf.mxu0
      %v2488 = vpop.f32.mrf.mxu0
      %v2489 = vadd.f32 0.0, %v2488
      %v2490 = vpop.f32.mrf.mxu0
      %2491 = vmatprep.mubr.bf16.mxu0 0
      %2492 = vmatmul.mubr.bf16.gmra.mxu0 %v2420
      %v2493 = vpop.f32.mrf.mxu0
      %v2494 = vadd.f32 0.0, %v2493
      %v2495 = vpop.f32.mrf.mxu0
      %v2496 = vpop.f32.mrf.mxu0
      %v2497 = vadd.f32 0.0, %v2496
      %v2498 = vpop.f32.mrf.mxu0
      %2499 = vmatprep.mubr.bf16.mxu0 0
      %2500 = vmatmul.mubr.bf16.gmra.mxu0 %v2423
      %v2501 = vpop.f32.mrf.mxu0
      %v2502 = vadd.f32 0.0, %v2501
      %v2503 = vpop.f32.mrf.mxu0
      %v2504 = vpop.f32.mrf.mxu0
      %v2505 = vadd.f32 0.0, %v2504
      %v2506 = vpop.f32.mrf.mxu0
      %2507 = vmatprep.mubr.bf16.mxu0 0
      %2508 = vmatmul.mubr.bf16.gmra.mxu0 %v2426
      %v2509 = vpop.f32.mrf.mxu0
      %v2510 = vadd.f32 0.0, %v2509
      %v2511 = vpop.f32.mrf.mxu0
      %v2512 = vpop.f32.mrf.mxu0
      %v2513 = vadd.f32 0.0, %v2512
      %v2514 = vpop.f32.mrf.mxu0
      %2515 = vmatprep.mubr.bf16.mxu0 0
      %2516 = vmatmul.mubr.bf16.gmra.mxu0 %v2429
      %v2517 = vpop.f32.mrf.mxu0
      %v2518 = vadd.f32 0.0, %v2517
      %v2519 = vpop.f32.mrf.mxu0
      %v2520 = vpop.f32.mrf.mxu0
      %v2521 = vadd.f32 0.0, %v2520
      %v2522 = vpop.f32.mrf.mxu0
      %2523 = vmatprep.mubr.bf16.mxu0 0
      %2524 = vmatmul.mubr.bf16.gmra.mxu0 %v2432
      %v2525 = vpop.f32.mrf.mxu0
      %v2526 = vadd.f32 0.0, %v2525
      %v2527 = vpop.f32.mrf.mxu0
      %v2528 = vpop.f32.mrf.mxu0
      %v2529 = vadd.f32 0.0, %v2528
      %v2530 = vpop.f32.mrf.mxu0
      %2531 = vmatprep.mubr.bf16.mxu0 0
      %2532 = vmatmul.mubr.bf16.gmra.mxu0 %v2435
      %v2533 = vpop.f32.mrf.mxu0
      %v2534 = vadd.f32 0.0, %v2533
      %v2535 = vpop.f32.mrf.mxu0
      %v2536 = vpop.f32.mrf.mxu0
      %v2537 = vadd.f32 0.0, %v2536
      %v2538 = vpop.f32.mrf.mxu0
      %2539 = vmatprep.mubr.bf16.mxu0 0
      %2540 = vmatmul.mubr.bf16.gmra.mxu0 %v2438
      %v2541 = vpop.f32.mrf.mxu0
      %v2542 = vadd.f32 0.0, %v2541
      %v2543 = vpop.f32.mrf.mxu0
      %v2544 = vpop.f32.mrf.mxu0
      %v2545 = vadd.f32 0.0, %v2544
      %v2546 = vpop.f32.mrf.mxu0
      %2547 = vmatprep.mubr.bf16.mxu0 0
      %2548 = vmatmul.mubr.bf16.gmra.mxu0 %v2441
      %v2549 = vpop.f32.mrf.mxu0
      %v2550 = vadd.f32 0.0, %v2549
      %v2551 = vpop.f32.mrf.mxu0
      %v2552 = vpop.f32.mrf.mxu0
      %v2553 = vadd.f32 0.0, %v2552
      %v2554 = vpop.f32.mrf.mxu0
      %2555 = vdwg.mxu0
      %v2558 = vunpack.c.l.b16 %v2402
      %v2559 = vunpack.c.l.b16 %v2403
      %v2560 = vpack.c.b16 %v2559, %v2558
      %v2563 = vsel %vm680, %v2361, 0
      %v2566 = vsel %vm680, %v2362, 0
      %v2569 = vsel %vm680, %v2363, 0
      %v2572 = vsel %vm680, %v2364, 0
      %v2575 = vsel %vm680, %v2365, 0
      %v2578 = vsel %vm680, %v2366, 0
      %v2581 = vsel %vm680, %v2367, 0
      %v2584 = vsel %vm680, %v2368, 0
      %v2587 = vsel %vm680, %v2369, 0
      %v2590 = vsel %vm680, %v2370, 0
      %2592 = vmatprep.subr.bf16.mxu0 0
      %2593 = vmatpush1.bf16.msra.mxu0 0
      %2594 = vmatprep.subr.bf16.mxu0 0
      %2595 = vmatpush1.bf16.msra.mxu0 0
      %2596 = vmatprep.subr.bf16.mxu0 0
      %2597 = vmatpush1.bf16.msra.mxu0 0
      %2598 = vmatprep.subr.bf16.mxu0 0
      %2599 = vmatpush1.bf16.msra.mxu0 0
      %2600 = vmatprep.subr.bf16.mxu0 0
      %2601 = vmatpush1.bf16.msra.mxu0 0
      %2602 = vmatprep.subr.bf16.mxu0 0
      %2603 = vmatpush1.bf16.msra.mxu0 0
      %2604 = vmatprep.subr.bf16.mxu0 0
      %2605 = vmatpush1.bf16.msra.mxu0 0
      %2606 = vmatprep.subr.bf16.mxu0 0
      %2607 = vmatpush1.bf16.msra.mxu0 %v2560
      %2608 = vmatprep.subr.bf16.mxu0 0
      %2609 = vmatpush2.bf16.msra.mxu0 0
      %2610 = vmatprep.subr.bf16.mxu0 0
      %2611 = vmatpush2.bf16.msra.mxu0 0
      %2612 = vmatprep.subr.bf16.mxu0 0
      %2613 = vmatpush2.bf16.msra.mxu0 0
      %2614 = vmatprep.subr.bf16.mxu0 0
      %2615 = vmatpush2.bf16.msra.mxu0 0
      %2616 = vmatprep.subr.bf16.mxu0 0
      %2617 = vmatpush2.bf16.msra.mxu0 0
      %2618 = vmatprep.subr.bf16.mxu0 0
      %2619 = vmatpush2.bf16.msra.mxu0 0
      %2620 = vmatprep.subr.bf16.mxu0 0
      %2621 = vmatpush2.bf16.msra.mxu0 0
      %2622 = vmatprep.subr.bf16.mxu0 0
      %2623 = vmatpush2.bf16.msra.mxu0 0
      %2624 = vmatprep.mubr.bf16.mxu0 0
      %2625 = vmatmul.mubr.bf16.gmra.mxu0 %v2563
      %v2626 = vpop.f32.mrf.mxu0
      %v2627 = vadd.f32 %v2478, %v2626
      %v2628 = vpop.f32.mrf.mxu0
      %v2629 = vpop.f32.mrf.mxu0
      %v2630 = vadd.f32 %v2481, %v2629
      %v2631 = vpop.f32.mrf.mxu0
      %2632 = vmatprep.mubr.bf16.mxu0 0
      %2633 = vmatmul.mubr.bf16.gmra.mxu0 %v2566
      %v2634 = vpop.f32.mrf.mxu0
      %v2635 = vadd.f32 %v2486, %v2634
      %v2636 = vpop.f32.mrf.mxu0
      %v2637 = vpop.f32.mrf.mxu0
      %v2638 = vadd.f32 %v2489, %v2637
      %v2639 = vpop.f32.mrf.mxu0
      %2640 = vmatprep.mubr.bf16.mxu0 0
      %2641 = vmatmul.mubr.bf16.gmra.mxu0 %v2569
      %v2642 = vpop.f32.mrf.mxu0
      %v2643 = vadd.f32 %v2494, %v2642
      %v2644 = vpop.f32.mrf.mxu0
      %v2645 = vpop.f32.mrf.mxu0
      %v2646 = vadd.f32 %v2497, %v2645
      %v2647 = vpop.f32.mrf.mxu0
      %2648 = vmatprep.mubr.bf16.mxu0 0
      %2649 = vmatmul.mubr.bf16.gmra.mxu0 %v2572
      %v2650 = vpop.f32.mrf.mxu0
      %v2651 = vadd.f32 %v2502, %v2650
      %v2652 = vpop.f32.mrf.mxu0
      %v2653 = vpop.f32.mrf.mxu0
      %v2654 = vadd.f32 %v2505, %v2653
      %v2655 = vpop.f32.mrf.mxu0
      %2656 = vmatprep.mubr.bf16.mxu0 0
      %2657 = vmatmul.mubr.bf16.gmra.mxu0 %v2575
      %v2658 = vpop.f32.mrf.mxu0
      %v2659 = vadd.f32 %v2510, %v2658
      %v2660 = vpop.f32.mrf.mxu0
      %v2661 = vpop.f32.mrf.mxu0
      %v2662 = vadd.f32 %v2513, %v2661
      %v2663 = vpop.f32.mrf.mxu0
      %2664 = vmatprep.mubr.bf16.mxu0 0
      %2665 = vmatmul.mubr.bf16.gmra.mxu0 %v2578
      %v2666 = vpop.f32.mrf.mxu0
      %v2667 = vadd.f32 %v2518, %v2666
      %v2668 = vpop.f32.mrf.mxu0
      %v2669 = vpop.f32.mrf.mxu0
      %v2670 = vadd.f32 %v2521, %v2669
      %v2671 = vpop.f32.mrf.mxu0
      %2672 = vmatprep.mubr.bf16.mxu0 0
      %2673 = vmatmul.mubr.bf16.gmra.mxu0 %v2581
      %v2674 = vpop.f32.mrf.mxu0
      %v2675 = vadd.f32 %v2526, %v2674
      %v2676 = vpop.f32.mrf.mxu0
      %v2677 = vpop.f32.mrf.mxu0
      %v2678 = vadd.f32 %v2529, %v2677
      %v2679 = vpop.f32.mrf.mxu0
      %2680 = vmatprep.mubr.bf16.mxu0 0
      %2681 = vmatmul.mubr.bf16.gmra.mxu0 %v2584
      %v2682 = vpop.f32.mrf.mxu0
      %v2683 = vadd.f32 %v2534, %v2682
      %v2684 = vpop.f32.mrf.mxu0
      %v2685 = vpop.f32.mrf.mxu0
      %v2686 = vadd.f32 %v2537, %v2685
      %v2687 = vpop.f32.mrf.mxu0
      %2688 = vmatprep.mubr.bf16.mxu0 0
      %2689 = vmatmul.mubr.bf16.gmra.mxu0 %v2587
      %v2690 = vpop.f32.mrf.mxu0
      %v2691 = vadd.f32 %v2542, %v2690
      %v2692 = vpop.f32.mrf.mxu0
      %v2693 = vpop.f32.mrf.mxu0
      %v2694 = vadd.f32 %v2545, %v2693
      %v2695 = vpop.f32.mrf.mxu0
      %2696 = vmatprep.mubr.bf16.mxu0 0
      %2697 = vmatmul.mubr.bf16.gmra.mxu0 %v2590
      %v2698 = vpop.f32.mrf.mxu0
      %v2699 = vadd.f32 %v2550, %v2698
      %v2700 = vpop.f32.mrf.mxu0
      %v2701 = vpop.f32.mrf.mxu0
      %v2702 = vadd.f32 %v2553, %v2701
      %v2703 = vpop.f32.mrf.mxu0
      %2704 = vdwg.mxu0
      %v2705 = vadd.f32 %v2321, %v2627
      %v2706 = vadd.f32 %v2322, %v2630
      %v2707 = vadd.f32 %v2323, %v2635
      %v2708 = vadd.f32 %v2324, %v2638
      %v2709 = vadd.f32 %v2325, %v2643
      %v2710 = vadd.f32 %v2326, %v2646
      %v2711 = vadd.f32 %v2327, %v2651
      %v2712 = vadd.f32 %v2328, %v2654
      %v2713 = vadd.f32 %v2329, %v2659
      %v2714 = vadd.f32 %v2330, %v2662
      %v2715 = vadd.f32 %v2331, %v2667
      %v2716 = vadd.f32 %v2332, %v2670
      %v2717 = vadd.f32 %v2333, %v2675
      %v2718 = vadd.f32 %v2334, %v2678
      %v2719 = vadd.f32 %v2335, %v2683
      %v2720 = vadd.f32 %v2336, %v2686
      %v2721 = vadd.f32 %v2337, %v2691
      %v2722 = vadd.f32 %v2338, %v2694
      %v2723 = vadd.f32 %v2339, %v2699
      %v2724 = vadd.f32 %v2340, %v2702
      %v2725 = vld [vmem:[%s1955 + $0x2] sm:$0xff]
      %v2726 = vld [vmem:[%s1955 + $0xa] sm:$0xff]
      %v2727 = vld [vmem:[%s1955 + $0x1a] sm:$0xff]
      %v2728 = vld [vmem:[%s1955 + $0x22] sm:$0xff]
      %v2729 = vld [vmem:[%s1955 + $0x32] sm:$0xff]
      %v2730 = vld [vmem:[%s1955 + $0x3a] sm:$0xff]
      %v2731 = vld [vmem:[%s1955 + $0x4a] sm:$0xff]
      %v2732 = vld [vmem:[%s1955 + $0x52] sm:$0xff]
      %v2733 = vld [vmem:[%s1955 + $0x62] sm:$0xff]
      %v2734 = vld [vmem:[%s1955 + $0x6a] sm:$0xff]
      %v2735 = vld [vmem:[%s1955 + $0x7a] sm:$0xff]
      %v2736 = vld [vmem:[%s1955 + $0x82] sm:$0xff]
      %v2737 = vld [vmem:[%s1955 + $0x92] sm:$0xff]
      %v2738 = vld [vmem:[%s1955 + $0x9a] sm:$0xff]
      %v2739 = vld [vmem:[%s1955 + $0xaa] sm:$0xff]
      %v2740 = vld [vmem:[%s1955 + $0xb2] sm:$0xff]
      %v2741 = vld [vmem:[%s1955 + $0xc2] sm:$0xff]
      %v2742 = vld [vmem:[%s1955 + $0xca] sm:$0xff]
      %v2743 = vld [vmem:[%s1955 + $0xda] sm:$0xff]
      %v2744 = vld [vmem:[%s1955 + $0xe2] sm:$0xff]
      %v2745 = vpack.c.bf16 %v2726, %v2725
      %v2746 = vpack.c.bf16 %v2728, %v2727
      %v2747 = vpack.c.bf16 %v2730, %v2729
      %v2748 = vpack.c.bf16 %v2732, %v2731
      %v2749 = vpack.c.bf16 %v2734, %v2733
      %v2750 = vpack.c.bf16 %v2736, %v2735
      %v2751 = vpack.c.bf16 %v2738, %v2737
      %v2752 = vpack.c.bf16 %v2740, %v2739
      %v2753 = vpack.c.bf16 %v2742, %v2741
      %v2754 = vpack.c.bf16 %v2744, %v2743
      %v2755 = vld [vmem:[%s1986 + $0x2] sm:$0xff]
      %v2756 = vld [vmem:[%s1986 + $0xa] sm:$0xff]
      %v2757 = vld [vmem:[%s1986 + $0x1a] sm:$0xff]
      %v2758 = vld [vmem:[%s1986 + $0x22] sm:$0xff]
      %v2759 = vld [vmem:[%s1986 + $0x32] sm:$0xff]
      %v2760 = vld [vmem:[%s1986 + $0x3a] sm:$0xff]
      %v2761 = vld [vmem:[%s1986 + $0x4a] sm:$0xff]
      %v2762 = vld [vmem:[%s1986 + $0x52] sm:$0xff]
      %v2763 = vld [vmem:[%s1986 + $0x62] sm:$0xff]
      %v2764 = vld [vmem:[%s1986 + $0x6a] sm:$0xff]
      %v2765 = vld [vmem:[%s1986 + $0x7a] sm:$0xff]
      %v2766 = vld [vmem:[%s1986 + $0x82] sm:$0xff]
      %v2767 = vld [vmem:[%s1986 + $0x92] sm:$0xff]
      %v2768 = vld [vmem:[%s1986 + $0x9a] sm:$0xff]
      %v2769 = vld [vmem:[%s1986 + $0xaa] sm:$0xff]
      %v2770 = vld [vmem:[%s1986 + $0xb2] sm:$0xff]
      %v2771 = vld [vmem:[%s1986 + $0xc2] sm:$0xff]
      %v2772 = vld [vmem:[%s1986 + $0xca] sm:$0xff]
      %v2773 = vld [vmem:[%s1986 + $0xda] sm:$0xff]
      %v2774 = vld [vmem:[%s1986 + $0xe2] sm:$0xff]
      %v2775 = vpack.c.bf16 %v2756, %v2755
      %v2776 = vpack.c.bf16 %v2758, %v2757
      %v2777 = vpack.c.bf16 %v2760, %v2759
      %v2778 = vpack.c.bf16 %v2762, %v2761
      %v2779 = vpack.c.bf16 %v2764, %v2763
      %v2780 = vpack.c.bf16 %v2766, %v2765
      %v2781 = vpack.c.bf16 %v2768, %v2767
      %v2782 = vpack.c.bf16 %v2770, %v2769
      %v2783 = vpack.c.bf16 %v2772, %v2771
      %v2784 = vpack.c.bf16 %v2774, %v2773
      %s2785 = scalar_lea.vmem %s6, 40
      %v2786 = vld [vmem:[%s2785] sm:$0xf]
      %v2787 = vld [vmem:[%s2785 + $0x4] sm:$0xf]
      %s2788 = scalar_lea.vmem %s7, 40
      %v2789 = vld [vmem:[%s2788] sm:$0xf]
      %v2790 = vld [vmem:[%s2788 + $0x4] sm:$0xf]
      %v2793 = vunpack.c.l.b16 %v2789
      %v2794 = vunpack.c.l.b16 %v2790
      %v2795 = vpack.c.b16 %v2794, %v2793
      %v2798 = vsel %vm680, %v2775, 0
      %v2801 = vsel %vm680, %v2776, 0
      %v2804 = vsel %vm680, %v2777, 0
      %v2807 = vsel %vm680, %v2778, 0
      %v2810 = vsel %vm680, %v2779, 0
      %v2813 = vsel %vm680, %v2780, 0
      %v2816 = vsel %vm680, %v2781, 0
      %v2819 = vsel %vm680, %v2782, 0
      %v2822 = vsel %vm680, %v2783, 0
      %v2825 = vsel %vm680, %v2784, 0
      %2827 = vmatprep.subr.bf16.mxu0 0
      %2828 = vmatpush1.bf16.msra.mxu0 0
      %2829 = vmatprep.subr.bf16.mxu0 0
      %2830 = vmatpush1.bf16.msra.mxu0 0
      %2831 = vmatprep.subr.bf16.mxu0 0
      %2832 = vmatpush1.bf16.msra.mxu0 0
      %2833 = vmatprep.subr.bf16.mxu0 0
      %2834 = vmatpush1.bf16.msra.mxu0 0
      %2835 = vmatprep.subr.bf16.mxu0 0
      %2836 = vmatpush1.bf16.msra.mxu0 0
      %2837 = vmatprep.subr.bf16.mxu0 0
      %2838 = vmatpush1.bf16.msra.mxu0 0
      %2839 = vmatprep.subr.bf16.mxu0 0
      %2840 = vmatpush1.bf16.msra.mxu0 0
      %2841 = vmatprep.subr.bf16.mxu0 0
      %2842 = vmatpush1.bf16.msra.mxu0 %v2795
      %2843 = vmatprep.subr.bf16.mxu0 0
      %2844 = vmatpush2.bf16.msra.mxu0 0
      %2845 = vmatprep.subr.bf16.mxu0 0
      %2846 = vmatpush2.bf16.msra.mxu0 0
      %2847 = vmatprep.subr.bf16.mxu0 0
      %2848 = vmatpush2.bf16.msra.mxu0 0
      %2849 = vmatprep.subr.bf16.mxu0 0
      %2850 = vmatpush2.bf16.msra.mxu0 0
      %2851 = vmatprep.subr.bf16.mxu0 0
      %2852 = vmatpush2.bf16.msra.mxu0 0
      %2853 = vmatprep.subr.bf16.mxu0 0
      %2854 = vmatpush2.bf16.msra.mxu0 0
      %2855 = vmatprep.subr.bf16.mxu0 0
      %2856 = vmatpush2.bf16.msra.mxu0 0
      %2857 = vmatprep.subr.bf16.mxu0 0
      %2858 = vmatpush2.bf16.msra.mxu0 0
      %2859 = vmatprep.mubr.bf16.mxu0 0
      %2860 = vmatmul.mubr.bf16.gmra.mxu0 %v2798
      %v2861 = vpop.f32.mrf.mxu0
      %v2862 = vadd.f32 0.0, %v2861
      %v2863 = vpop.f32.mrf.mxu0
      %v2864 = vpop.f32.mrf.mxu0
      %v2865 = vadd.f32 0.0, %v2864
      %v2866 = vpop.f32.mrf.mxu0
      %2867 = vmatprep.mubr.bf16.mxu0 0
      %2868 = vmatmul.mubr.bf16.gmra.mxu0 %v2801
      %v2869 = vpop.f32.mrf.mxu0
      %v2870 = vadd.f32 0.0, %v2869
      %v2871 = vpop.f32.mrf.mxu0
      %v2872 = vpop.f32.mrf.mxu0
      %v2873 = vadd.f32 0.0, %v2872
      %v2874 = vpop.f32.mrf.mxu0
      %2875 = vmatprep.mubr.bf16.mxu0 0
      %2876 = vmatmul.mubr.bf16.gmra.mxu0 %v2804
      %v2877 = vpop.f32.mrf.mxu0
      %v2878 = vadd.f32 0.0, %v2877
      %v2879 = vpop.f32.mrf.mxu0
      %v2880 = vpop.f32.mrf.mxu0
      %v2881 = vadd.f32 0.0, %v2880
      %v2882 = vpop.f32.mrf.mxu0
      %2883 = vmatprep.mubr.bf16.mxu0 0
      %2884 = vmatmul.mubr.bf16.gmra.mxu0 %v2807
      %v2885 = vpop.f32.mrf.mxu0
      %v2886 = vadd.f32 0.0, %v2885
      %v2887 = vpop.f32.mrf.mxu0
      %v2888 = vpop.f32.mrf.mxu0
      %v2889 = vadd.f32 0.0, %v2888
      %v2890 = vpop.f32.mrf.mxu0
      %2891 = vmatprep.mubr.bf16.mxu0 0
      %2892 = vmatmul.mubr.bf16.gmra.mxu0 %v2810
      %v2893 = vpop.f32.mrf.mxu0
      %v2894 = vadd.f32 0.0, %v2893
      %v2895 = vpop.f32.mrf.mxu0
      %v2896 = vpop.f32.mrf.mxu0
      %v2897 = vadd.f32 0.0, %v2896
      %v2898 = vpop.f32.mrf.mxu0
      %2899 = vmatprep.mubr.bf16.mxu0 0
      %2900 = vmatmul.mubr.bf16.gmra.mxu0 %v2813
      %v2901 = vpop.f32.mrf.mxu0
      %v2902 = vadd.f32 0.0, %v2901
      %v2903 = vpop.f32.mrf.mxu0
      %v2904 = vpop.f32.mrf.mxu0
      %v2905 = vadd.f32 0.0, %v2904
      %v2906 = vpop.f32.mrf.mxu0
      %2907 = vmatprep.mubr.bf16.mxu0 0
      %2908 = vmatmul.mubr.bf16.gmra.mxu0 %v2816
      %v2909 = vpop.f32.mrf.mxu0
      %v2910 = vadd.f32 0.0, %v2909
      %v2911 = vpop.f32.mrf.mxu0
      %v2912 = vpop.f32.mrf.mxu0
      %v2913 = vadd.f32 0.0, %v2912
      %v2914 = vpop.f32.mrf.mxu0
      %2915 = vmatprep.mubr.bf16.mxu0 0
      %2916 = vmatmul.mubr.bf16.gmra.mxu0 %v2819
      %v2917 = vpop.f32.mrf.mxu0
      %v2918 = vadd.f32 0.0, %v2917
      %v2919 = vpop.f32.mrf.mxu0
      %v2920 = vpop.f32.mrf.mxu0
      %v2921 = vadd.f32 0.0, %v2920
      %v2922 = vpop.f32.mrf.mxu0
      %2923 = vmatprep.mubr.bf16.mxu0 0
      %2924 = vmatmul.mubr.bf16.gmra.mxu0 %v2822
      %v2925 = vpop.f32.mrf.mxu0
      %v2926 = vadd.f32 0.0, %v2925
      %v2927 = vpop.f32.mrf.mxu0
      %v2928 = vpop.f32.mrf.mxu0
      %v2929 = vadd.f32 0.0, %v2928
      %v2930 = vpop.f32.mrf.mxu0
      %2931 = vmatprep.mubr.bf16.mxu0 0
      %2932 = vmatmul.mubr.bf16.gmra.mxu0 %v2825
      %v2933 = vpop.f32.mrf.mxu0
      %v2934 = vadd.f32 0.0, %v2933
      %v2935 = vpop.f32.mrf.mxu0
      %v2936 = vpop.f32.mrf.mxu0
      %v2937 = vadd.f32 0.0, %v2936
      %v2938 = vpop.f32.mrf.mxu0
      %2939 = vdwg.mxu0
      %v2942 = vunpack.c.l.b16 %v2786
      %v2943 = vunpack.c.l.b16 %v2787
      %v2944 = vpack.c.b16 %v2943, %v2942
      %v2947 = vsel %vm680, %v2745, 0
      %v2950 = vsel %vm680, %v2746, 0
      %v2953 = vsel %vm680, %v2747, 0
      %v2956 = vsel %vm680, %v2748, 0
      %v2959 = vsel %vm680, %v2749, 0
      %v2962 = vsel %vm680, %v2750, 0
      %v2965 = vsel %vm680, %v2751, 0
      %v2968 = vsel %vm680, %v2752, 0
      %v2971 = vsel %vm680, %v2753, 0
      %v2974 = vsel %vm680, %v2754, 0
      %2976 = vmatprep.subr.bf16.mxu0 0
      %2977 = vmatpush1.bf16.msra.mxu0 0
      %2978 = vmatprep.subr.bf16.mxu0 0
      %2979 = vmatpush1.bf16.msra.mxu0 0
      %2980 = vmatprep.subr.bf16.mxu0 0
      %2981 = vmatpush1.bf16.msra.mxu0 0
      %2982 = vmatprep.subr.bf16.mxu0 0
      %2983 = vmatpush1.bf16.msra.mxu0 0
      %2984 = vmatprep.subr.bf16.mxu0 0
      %2985 = vmatpush1.bf16.msra.mxu0 0
      %2986 = vmatprep.subr.bf16.mxu0 0
      %2987 = vmatpush1.bf16.msra.mxu0 0
      %2988 = vmatprep.subr.bf16.mxu0 0
      %2989 = vmatpush1.bf16.msra.mxu0 0
      %2990 = vmatprep.subr.bf16.mxu0 0
      %2991 = vmatpush1.bf16.msra.mxu0 %v2944
      %2992 = vmatprep.subr.bf16.mxu0 0
      %2993 = vmatpush2.bf16.msra.mxu0 0
      %2994 = vmatprep.subr.bf16.mxu0 0
      %2995 = vmatpush2.bf16.msra.mxu0 0
      %2996 = vmatprep.subr.bf16.mxu0 0
      %2997 = vmatpush2.bf16.msra.mxu0 0
      %2998 = vmatprep.subr.bf16.mxu0 0
      %2999 = vmatpush2.bf16.msra.mxu0 0
      %3000 = vmatprep.subr.bf16.mxu0 0
      %3001 = vmatpush2.bf16.msra.mxu0 0
      %3002 = vmatprep.subr.bf16.mxu0 0
      %3003 = vmatpush2.bf16.msra.mxu0 0
      %3004 = vmatprep.subr.bf16.mxu0 0
      %3005 = vmatpush2.bf16.msra.mxu0 0
      %3006 = vmatprep.subr.bf16.mxu0 0
      %3007 = vmatpush2.bf16.msra.mxu0 0
      %3008 = vmatprep.mubr.bf16.mxu0 0
      %3009 = vmatmul.mubr.bf16.gmra.mxu0 %v2947
      %v3010 = vpop.f32.mrf.mxu0
      %v3011 = vadd.f32 %v2862, %v3010
      %v3012 = vpop.f32.mrf.mxu0
      %v3013 = vpop.f32.mrf.mxu0
      %v3014 = vadd.f32 %v2865, %v3013
      %v3015 = vpop.f32.mrf.mxu0
      %3016 = vmatprep.mubr.bf16.mxu0 0
      %3017 = vmatmul.mubr.bf16.gmra.mxu0 %v2950
      %v3018 = vpop.f32.mrf.mxu0
      %v3019 = vadd.f32 %v2870, %v3018
      %v3020 = vpop.f32.mrf.mxu0
      %v3021 = vpop.f32.mrf.mxu0
      %v3022 = vadd.f32 %v2873, %v3021
      %v3023 = vpop.f32.mrf.mxu0
      %3024 = vmatprep.mubr.bf16.mxu0 0
      %3025 = vmatmul.mubr.bf16.gmra.mxu0 %v2953
      %v3026 = vpop.f32.mrf.mxu0
      %v3027 = vadd.f32 %v2878, %v3026
      %v3028 = vpop.f32.mrf.mxu0
      %v3029 = vpop.f32.mrf.mxu0
      %v3030 = vadd.f32 %v2881, %v3029
      %v3031 = vpop.f32.mrf.mxu0
      %3032 = vmatprep.mubr.bf16.mxu0 0
      %3033 = vmatmul.mubr.bf16.gmra.mxu0 %v2956
      %v3034 = vpop.f32.mrf.mxu0
      %v3035 = vadd.f32 %v2886, %v3034
      %v3036 = vpop.f32.mrf.mxu0
      %v3037 = vpop.f32.mrf.mxu0
      %v3038 = vadd.f32 %v2889, %v3037
      %v3039 = vpop.f32.mrf.mxu0
      %3040 = vmatprep.mubr.bf16.mxu0 0
      %3041 = vmatmul.mubr.bf16.gmra.mxu0 %v2959
      %v3042 = vpop.f32.mrf.mxu0
      %v3043 = vadd.f32 %v2894, %v3042
      %v3044 = vpop.f32.mrf.mxu0
      %v3045 = vpop.f32.mrf.mxu0
      %v3046 = vadd.f32 %v2897, %v3045
      %v3047 = vpop.f32.mrf.mxu0
      %3048 = vmatprep.mubr.bf16.mxu0 0
      %3049 = vmatmul.mubr.bf16.gmra.mxu0 %v2962
      %v3050 = vpop.f32.mrf.mxu0
      %v3051 = vadd.f32 %v2902, %v3050
      %v3052 = vpop.f32.mrf.mxu0
      %v3053 = vpop.f32.mrf.mxu0
      %v3054 = vadd.f32 %v2905, %v3053
      %v3055 = vpop.f32.mrf.mxu0
      %3056 = vmatprep.mubr.bf16.mxu0 0
      %3057 = vmatmul.mubr.bf16.gmra.mxu0 %v2965
      %v3058 = vpop.f32.mrf.mxu0
      %v3059 = vadd.f32 %v2910, %v3058
      %v3060 = vpop.f32.mrf.mxu0
      %v3061 = vpop.f32.mrf.mxu0
      %v3062 = vadd.f32 %v2913, %v3061
      %v3063 = vpop.f32.mrf.mxu0
      %3064 = vmatprep.mubr.bf16.mxu0 0
      %3065 = vmatmul.mubr.bf16.gmra.mxu0 %v2968
      %v3066 = vpop.f32.mrf.mxu0
      %v3067 = vadd.f32 %v2918, %v3066
      %v3068 = vpop.f32.mrf.mxu0
      %v3069 = vpop.f32.mrf.mxu0
      %v3070 = vadd.f32 %v2921, %v3069
      %v3071 = vpop.f32.mrf.mxu0
      %3072 = vmatprep.mubr.bf16.mxu0 0
      %3073 = vmatmul.mubr.bf16.gmra.mxu0 %v2971
      %v3074 = vpop.f32.mrf.mxu0
      %v3075 = vadd.f32 %v2926, %v3074
      %v3076 = vpop.f32.mrf.mxu0
      %v3077 = vpop.f32.mrf.mxu0
      %v3078 = vadd.f32 %v2929, %v3077
      %v3079 = vpop.f32.mrf.mxu0
      %3080 = vmatprep.mubr.bf16.mxu0 0
      %3081 = vmatmul.mubr.bf16.gmra.mxu0 %v2974
      %v3082 = vpop.f32.mrf.mxu0
      %v3083 = vadd.f32 %v2934, %v3082
      %v3084 = vpop.f32.mrf.mxu0
      %v3085 = vpop.f32.mrf.mxu0
      %v3086 = vadd.f32 %v2937, %v3085
      %v3087 = vpop.f32.mrf.mxu0
      %3088 = vdwg.mxu0
      %v3089 = vadd.f32 %v2705, %v3011
      %v3090 = vadd.f32 %v2706, %v3014
      %v3091 = vadd.f32 %v2707, %v3019
      %v3092 = vadd.f32 %v2708, %v3022
      %v3093 = vadd.f32 %v2709, %v3027
      %v3094 = vadd.f32 %v2710, %v3030
      %v3095 = vadd.f32 %v2711, %v3035
      %v3096 = vadd.f32 %v2712, %v3038
      %v3097 = vadd.f32 %v2713, %v3043
      %v3098 = vadd.f32 %v2714, %v3046
      %v3099 = vadd.f32 %v2715, %v3051
      %v3100 = vadd.f32 %v2716, %v3054
      %v3101 = vadd.f32 %v2717, %v3059
      %v3102 = vadd.f32 %v2718, %v3062
      %v3103 = vadd.f32 %v2719, %v3067
      %v3104 = vadd.f32 %v2720, %v3070
      %v3105 = vadd.f32 %v2721, %v3075
      %v3106 = vadd.f32 %v2722, %v3078
      %v3107 = vadd.f32 %v2723, %v3083
      %v3108 = vadd.f32 %v2724, %v3086
      %v3109 = vld [vmem:[%s701] sm:$0xff]
      %v3110 = vld [vmem:[%s701 + $0x8] sm:$0xff]
      %v3111 = vld [vmem:[%s701 + $0x18] sm:$0xff]
      %v3112 = vld [vmem:[%s701 + $0x20] sm:$0xff]
      %v3113 = vld [vmem:[%s701 + $0x30] sm:$0xff]
      %v3114 = vld [vmem:[%s701 + $0x38] sm:$0xff]
      %v3115 = vld [vmem:[%s701 + $0x48] sm:$0xff]
      %v3116 = vld [vmem:[%s701 + $0x50] sm:$0xff]
      %v3117 = vld [vmem:[%s701 + $0x60] sm:$0xff]
      %v3118 = vld [vmem:[%s701 + $0x68] sm:$0xff]
      %v3119 = vld [vmem:[%s701 + $0x78] sm:$0xff]
      %v3120 = vld [vmem:[%s701 + $0x80] sm:$0xff]
      %v3121 = vld [vmem:[%s701 + $0x90] sm:$0xff]
      %v3122 = vld [vmem:[%s701 + $0x98] sm:$0xff]
      %v3123 = vld [vmem:[%s701 + $0xa8] sm:$0xff]
      %v3124 = vld [vmem:[%s701 + $0xb0] sm:$0xff]
      %v3125 = vld [vmem:[%s701 + $0xc0] sm:$0xff]
      %v3126 = vld [vmem:[%s701 + $0xc8] sm:$0xff]
      %v3127 = vld [vmem:[%s701 + $0xd8] sm:$0xff]
      %v3128 = vld [vmem:[%s701 + $0xe0] sm:$0xff]
      %v3129 = vpack.c.bf16 %v3110, %v3109
      %v3130 = vpack.c.bf16 %v3112, %v3111
      %v3131 = vpack.c.bf16 %v3114, %v3113
      %v3132 = vpack.c.bf16 %v3116, %v3115
      %v3133 = vpack.c.bf16 %v3118, %v3117
      %v3134 = vpack.c.bf16 %v3120, %v3119
      %v3135 = vpack.c.bf16 %v3122, %v3121
      %v3136 = vpack.c.bf16 %v3124, %v3123
      %v3137 = vpack.c.bf16 %v3126, %v3125
      %v3138 = vpack.c.bf16 %v3128, %v3127
      %v3139 = vld [vmem:[%s799] sm:$0xff]
      %v3140 = vld [vmem:[%s799 + $0x8] sm:$0xff]
      %v3141 = vld [vmem:[%s799 + $0x18] sm:$0xff]
      %v3142 = vld [vmem:[%s799 + $0x20] sm:$0xff]
      %v3143 = vld [vmem:[%s799 + $0x30] sm:$0xff]
      %v3144 = vld [vmem:[%s799 + $0x38] sm:$0xff]
      %v3145 = vld [vmem:[%s799 + $0x48] sm:$0xff]
      %v3146 = vld [vmem:[%s799 + $0x50] sm:$0xff]
      %v3147 = vld [vmem:[%s799 + $0x60] sm:$0xff]
      %v3148 = vld [vmem:[%s799 + $0x68] sm:$0xff]
      %v3149 = vld [vmem:[%s799 + $0x78] sm:$0xff]
      %v3150 = vld [vmem:[%s799 + $0x80] sm:$0xff]
      %v3151 = vld [vmem:[%s799 + $0x90] sm:$0xff]
      %v3152 = vld [vmem:[%s799 + $0x98] sm:$0xff]
      %v3153 = vld [vmem:[%s799 + $0xa8] sm:$0xff]
      %v3154 = vld [vmem:[%s799 + $0xb0] sm:$0xff]
      %v3155 = vld [vmem:[%s799 + $0xc0] sm:$0xff]
      %v3156 = vld [vmem:[%s799 + $0xc8] sm:$0xff]
      %v3157 = vld [vmem:[%s799 + $0xd8] sm:$0xff]
      %v3158 = vld [vmem:[%s799 + $0xe0] sm:$0xff]
      %v3159 = vpack.c.bf16 %v3140, %v3139
      %v3160 = vpack.c.bf16 %v3142, %v3141
      %v3161 = vpack.c.bf16 %v3144, %v3143
      %v3162 = vpack.c.bf16 %v3146, %v3145
      %v3163 = vpack.c.bf16 %v3148, %v3147
      %v3164 = vpack.c.bf16 %v3150, %v3149
      %v3165 = vpack.c.bf16 %v3152, %v3151
      %v3166 = vpack.c.bf16 %v3154, %v3153
      %v3167 = vpack.c.bf16 %v3156, %v3155
      %v3168 = vpack.c.bf16 %v3158, %v3157
      %s3169 = scalar_lea.vmem %s6, 48
      %v3170 = vld [vmem:[%s3169] sm:$0xf]
      %v3171 = vld [vmem:[%s3169 + $0x4] sm:$0xf]
      %s3172 = scalar_lea.vmem %s7, 48
      %v3173 = vld [vmem:[%s3172] sm:$0xf]
      %v3174 = vld [vmem:[%s3172 + $0x4] sm:$0xf]
      %v3177 = vunpack.c.l.b16 %v3173
      %v3178 = vunpack.c.l.b16 %v3174
      %v3179 = vpack.c.b16 %v3178, %v3177
      %v3182 = vsel %vm680, %v3159, 0
      %v3185 = vsel %vm680, %v3160, 0
      %v3188 = vsel %vm680, %v3161, 0
      %v3191 = vsel %vm680, %v3162, 0
      %v3194 = vsel %vm680, %v3163, 0
      %v3197 = vsel %vm680, %v3164, 0
      %v3200 = vsel %vm680, %v3165, 0
      %v3203 = vsel %vm680, %v3166, 0
      %v3206 = vsel %vm680, %v3167, 0
      %v3209 = vsel %vm680, %v3168, 0
      %3211 = vmatprep.subr.bf16.mxu0 0
      %3212 = vmatpush1.bf16.msra.mxu0 0
      %3213 = vmatprep.subr.bf16.mxu0 0
      %3214 = vmatpush1.bf16.msra.mxu0 0
      %3215 = vmatprep.subr.bf16.mxu0 0
      %3216 = vmatpush1.bf16.msra.mxu0 0
      %3217 = vmatprep.subr.bf16.mxu0 0
      %3218 = vmatpush1.bf16.msra.mxu0 0
      %3219 = vmatprep.subr.bf16.mxu0 0
      %3220 = vmatpush1.bf16.msra.mxu0 0
      %3221 = vmatprep.subr.bf16.mxu0 0
      %3222 = vmatpush1.bf16.msra.mxu0 0
      %3223 = vmatprep.subr.bf16.mxu0 0
      %3224 = vmatpush1.bf16.msra.mxu0 0
      %3225 = vmatprep.subr.bf16.mxu0 0
      %3226 = vmatpush1.bf16.msra.mxu0 %v3179
      %3227 = vmatprep.subr.bf16.mxu0 0
      %3228 = vmatpush2.bf16.msra.mxu0 0
      %3229 = vmatprep.subr.bf16.mxu0 0
      %3230 = vmatpush2.bf16.msra.mxu0 0
      %3231 = vmatprep.subr.bf16.mxu0 0
      %3232 = vmatpush2.bf16.msra.mxu0 0
      %3233 = vmatprep.subr.bf16.mxu0 0
      %3234 = vmatpush2.bf16.msra.mxu0 0
      %3235 = vmatprep.subr.bf16.mxu0 0
      %3236 = vmatpush2.bf16.msra.mxu0 0
      %3237 = vmatprep.subr.bf16.mxu0 0
      %3238 = vmatpush2.bf16.msra.mxu0 0
      %3239 = vmatprep.subr.bf16.mxu0 0
      %3240 = vmatpush2.bf16.msra.mxu0 0
      %3241 = vmatprep.subr.bf16.mxu0 0
      %3242 = vmatpush2.bf16.msra.mxu0 0
      %3243 = vmatprep.mubr.bf16.mxu0 0
      %3244 = vmatmul.mubr.bf16.gmra.mxu0 %v3182
      %v3245 = vpop.f32.mrf.mxu0
      %v3246 = vadd.f32 0.0, %v3245
      %v3247 = vpop.f32.mrf.mxu0
      %v3248 = vpop.f32.mrf.mxu0
      %v3249 = vadd.f32 0.0, %v3248
      %v3250 = vpop.f32.mrf.mxu0
      %3251 = vmatprep.mubr.bf16.mxu0 0
      %3252 = vmatmul.mubr.bf16.gmra.mxu0 %v3185
      %v3253 = vpop.f32.mrf.mxu0
      %v3254 = vadd.f32 0.0, %v3253
      %v3255 = vpop.f32.mrf.mxu0
      %v3256 = vpop.f32.mrf.mxu0
      %v3257 = vadd.f32 0.0, %v3256
      %v3258 = vpop.f32.mrf.mxu0
      %3259 = vmatprep.mubr.bf16.mxu0 0
      %3260 = vmatmul.mubr.bf16.gmra.mxu0 %v3188
      %v3261 = vpop.f32.mrf.mxu0
      %v3262 = vadd.f32 0.0, %v3261
      %v3263 = vpop.f32.mrf.mxu0
      %v3264 = vpop.f32.mrf.mxu0
      %v3265 = vadd.f32 0.0, %v3264
      %v3266 = vpop.f32.mrf.mxu0
      %3267 = vmatprep.mubr.bf16.mxu0 0
      %3268 = vmatmul.mubr.bf16.gmra.mxu0 %v3191
      %v3269 = vpop.f32.mrf.mxu0
      %v3270 = vadd.f32 0.0, %v3269
      %v3271 = vpop.f32.mrf.mxu0
      %v3272 = vpop.f32.mrf.mxu0
      %v3273 = vadd.f32 0.0, %v3272
      %v3274 = vpop.f32.mrf.mxu0
      %3275 = vmatprep.mubr.bf16.mxu0 0
      %3276 = vmatmul.mubr.bf16.gmra.mxu0 %v3194
      %v3277 = vpop.f32.mrf.mxu0
      %v3278 = vadd.f32 0.0, %v3277
      %v3279 = vpop.f32.mrf.mxu0
      %v3280 = vpop.f32.mrf.mxu0
      %v3281 = vadd.f32 0.0, %v3280
      %v3282 = vpop.f32.mrf.mxu0
      %3283 = vmatprep.mubr.bf16.mxu0 0
      %3284 = vmatmul.mubr.bf16.gmra.mxu0 %v3197
      %v3285 = vpop.f32.mrf.mxu0
      %v3286 = vadd.f32 0.0, %v3285
      %v3287 = vpop.f32.mrf.mxu0
      %v3288 = vpop.f32.mrf.mxu0
      %v3289 = vadd.f32 0.0, %v3288
      %v3290 = vpop.f32.mrf.mxu0
      %3291 = vmatprep.mubr.bf16.mxu0 0
      %3292 = vmatmul.mubr.bf16.gmra.mxu0 %v3200
      %v3293 = vpop.f32.mrf.mxu0
      %v3294 = vadd.f32 0.0, %v3293
      %v3295 = vpop.f32.mrf.mxu0
      %v3296 = vpop.f32.mrf.mxu0
      %v3297 = vadd.f32 0.0, %v3296
      %v3298 = vpop.f32.mrf.mxu0
      %3299 = vmatprep.mubr.bf16.mxu0 0
      %3300 = vmatmul.mubr.bf16.gmra.mxu0 %v3203
      %v3301 = vpop.f32.mrf.mxu0
      %v3302 = vadd.f32 0.0, %v3301
      %v3303 = vpop.f32.mrf.mxu0
      %v3304 = vpop.f32.mrf.mxu0
      %v3305 = vadd.f32 0.0, %v3304
      %v3306 = vpop.f32.mrf.mxu0
      %3307 = vmatprep.mubr.bf16.mxu0 0
      %3308 = vmatmul.mubr.bf16.gmra.mxu0 %v3206
      %v3309 = vpop.f32.mrf.mxu0
      %v3310 = vadd.f32 0.0, %v3309
      %v3311 = vpop.f32.mrf.mxu0
      %v3312 = vpop.f32.mrf.mxu0
      %v3313 = vadd.f32 0.0, %v3312
      %v3314 = vpop.f32.mrf.mxu0
      %3315 = vmatprep.mubr.bf16.mxu0 0
      %3316 = vmatmul.mubr.bf16.gmra.mxu0 %v3209
      %v3317 = vpop.f32.mrf.mxu0
      %v3318 = vadd.f32 0.0, %v3317
      %v3319 = vpop.f32.mrf.mxu0
      %v3320 = vpop.f32.mrf.mxu0
      %v3321 = vadd.f32 0.0, %v3320
      %v3322 = vpop.f32.mrf.mxu0
      %3323 = vdwg.mxu0
      %v3326 = vunpack.c.l.b16 %v3170
      %v3327 = vunpack.c.l.b16 %v3171
      %v3328 = vpack.c.b16 %v3327, %v3326
      %v3331 = vsel %vm680, %v3129, 0
      %v3334 = vsel %vm680, %v3130, 0
      %v3337 = vsel %vm680, %v3131, 0
      %v3340 = vsel %vm680, %v3132, 0
      %v3343 = vsel %vm680, %v3133, 0
      %v3346 = vsel %vm680, %v3134, 0
      %v3349 = vsel %vm680, %v3135, 0
      %v3352 = vsel %vm680, %v3136, 0
      %v3355 = vsel %vm680, %v3137, 0
      %v3358 = vsel %vm680, %v3138, 0
      %3360 = vmatprep.subr.bf16.mxu0 0
      %3361 = vmatpush1.bf16.msra.mxu0 0
      %3362 = vmatprep.subr.bf16.mxu0 0
      %3363 = vmatpush1.bf16.msra.mxu0 0
      %3364 = vmatprep.subr.bf16.mxu0 0
      %3365 = vmatpush1.bf16.msra.mxu0 0
      %3366 = vmatprep.subr.bf16.mxu0 0
      %3367 = vmatpush1.bf16.msra.mxu0 0
      %3368 = vmatprep.subr.bf16.mxu0 0
      %3369 = vmatpush1.bf16.msra.mxu0 0
      %3370 = vmatprep.subr.bf16.mxu0 0
      %3371 = vmatpush1.bf16.msra.mxu0 0
      %3372 = vmatprep.subr.bf16.mxu0 0
      %3373 = vmatpush1.bf16.msra.mxu0 0
      %3374 = vmatprep.subr.bf16.mxu0 0
      %3375 = vmatpush1.bf16.msra.mxu0 %v3328
      %3376 = vmatprep.subr.bf16.mxu0 0
      %3377 = vmatpush2.bf16.msra.mxu0 0
      %3378 = vmatprep.subr.bf16.mxu0 0
      %3379 = vmatpush2.bf16.msra.mxu0 0
      %3380 = vmatprep.subr.bf16.mxu0 0
      %3381 = vmatpush2.bf16.msra.mxu0 0
      %3382 = vmatprep.subr.bf16.mxu0 0
      %3383 = vmatpush2.bf16.msra.mxu0 0
      %3384 = vmatprep.subr.bf16.mxu0 0
      %3385 = vmatpush2.bf16.msra.mxu0 0
      %3386 = vmatprep.subr.bf16.mxu0 0
      %3387 = vmatpush2.bf16.msra.mxu0 0
      %3388 = vmatprep.subr.bf16.mxu0 0
      %3389 = vmatpush2.bf16.msra.mxu0 0
      %3390 = vmatprep.subr.bf16.mxu0 0
      %3391 = vmatpush2.bf16.msra.mxu0 0
      %3392 = vmatprep.mubr.bf16.mxu0 0
      %3393 = vmatmul.mubr.bf16.gmra.mxu0 %v3331
      %v3394 = vpop.f32.mrf.mxu0
      %v3395 = vadd.f32 %v3246, %v3394
      %v3396 = vpop.f32.mrf.mxu0
      %v3397 = vpop.f32.mrf.mxu0
      %v3398 = vadd.f32 %v3249, %v3397
      %v3399 = vpop.f32.mrf.mxu0
      %3400 = vmatprep.mubr.bf16.mxu0 0
      %3401 = vmatmul.mubr.bf16.gmra.mxu0 %v3334
      %v3402 = vpop.f32.mrf.mxu0
      %v3403 = vadd.f32 %v3254, %v3402
      %v3404 = vpop.f32.mrf.mxu0
      %v3405 = vpop.f32.mrf.mxu0
      %v3406 = vadd.f32 %v3257, %v3405
      %v3407 = vpop.f32.mrf.mxu0
      %3408 = vmatprep.mubr.bf16.mxu0 0
      %3409 = vmatmul.mubr.bf16.gmra.mxu0 %v3337
      %v3410 = vpop.f32.mrf.mxu0
      %v3411 = vadd.f32 %v3262, %v3410
      %v3412 = vpop.f32.mrf.mxu0
      %v3413 = vpop.f32.mrf.mxu0
      %v3414 = vadd.f32 %v3265, %v3413
      %v3415 = vpop.f32.mrf.mxu0
      %3416 = vmatprep.mubr.bf16.mxu0 0
      %3417 = vmatmul.mubr.bf16.gmra.mxu0 %v3340
      %v3418 = vpop.f32.mrf.mxu0
      %v3419 = vadd.f32 %v3270, %v3418
      %v3420 = vpop.f32.mrf.mxu0
      %v3421 = vpop.f32.mrf.mxu0
      %v3422 = vadd.f32 %v3273, %v3421
      %v3423 = vpop.f32.mrf.mxu0
      %3424 = vmatprep.mubr.bf16.mxu0 0
      %3425 = vmatmul.mubr.bf16.gmra.mxu0 %v3343
      %v3426 = vpop.f32.mrf.mxu0
      %v3427 = vadd.f32 %v3278, %v3426
      %v3428 = vpop.f32.mrf.mxu0
      %v3429 = vpop.f32.mrf.mxu0
      %v3430 = vadd.f32 %v3281, %v3429
      %v3431 = vpop.f32.mrf.mxu0
      %3432 = vmatprep.mubr.bf16.mxu0 0
      %3433 = vmatmul.mubr.bf16.gmra.mxu0 %v3346
      %v3434 = vpop.f32.mrf.mxu0
      %v3435 = vadd.f32 %v3286, %v3434
      %v3436 = vpop.f32.mrf.mxu0
      %v3437 = vpop.f32.mrf.mxu0
      %v3438 = vadd.f32 %v3289, %v3437
      %v3439 = vpop.f32.mrf.mxu0
      %3440 = vmatprep.mubr.bf16.mxu0 0
      %3441 = vmatmul.mubr.bf16.gmra.mxu0 %v3349
      %v3442 = vpop.f32.mrf.mxu0
      %v3443 = vadd.f32 %v3294, %v3442
      %v3444 = vpop.f32.mrf.mxu0
      %v3445 = vpop.f32.mrf.mxu0
      %v3446 = vadd.f32 %v3297, %v3445
      %v3447 = vpop.f32.mrf.mxu0
      %3448 = vmatprep.mubr.bf16.mxu0 0
      %3449 = vmatmul.mubr.bf16.gmra.mxu0 %v3352
      %v3450 = vpop.f32.mrf.mxu0
      %v3451 = vadd.f32 %v3302, %v3450
      %v3452 = vpop.f32.mrf.mxu0
      %v3453 = vpop.f32.mrf.mxu0
      %v3454 = vadd.f32 %v3305, %v3453
      %v3455 = vpop.f32.mrf.mxu0
      %3456 = vmatprep.mubr.bf16.mxu0 0
      %3457 = vmatmul.mubr.bf16.gmra.mxu0 %v3355
      %v3458 = vpop.f32.mrf.mxu0
      %v3459 = vadd.f32 %v3310, %v3458
      %v3460 = vpop.f32.mrf.mxu0
      %v3461 = vpop.f32.mrf.mxu0
      %v3462 = vadd.f32 %v3313, %v3461
      %v3463 = vpop.f32.mrf.mxu0
      %3464 = vmatprep.mubr.bf16.mxu0 0
      %3465 = vmatmul.mubr.bf16.gmra.mxu0 %v3358
      %v3466 = vpop.f32.mrf.mxu0
      %v3467 = vadd.f32 %v3318, %v3466
      %v3468 = vpop.f32.mrf.mxu0
      %v3469 = vpop.f32.mrf.mxu0
      %v3470 = vadd.f32 %v3321, %v3469
      %v3471 = vpop.f32.mrf.mxu0
      %3472 = vdwg.mxu0
      %v3473 = vadd.f32 %v3089, %v3395
      %v3474 = vadd.f32 %v3090, %v3398
      %v3475 = vadd.f32 %v3091, %v3403
      %v3476 = vadd.f32 %v3092, %v3406
      %v3477 = vadd.f32 %v3093, %v3411
      %v3478 = vadd.f32 %v3094, %v3414
      %v3479 = vadd.f32 %v3095, %v3419
      %v3480 = vadd.f32 %v3096, %v3422
      %v3481 = vadd.f32 %v3097, %v3427
      %v3482 = vadd.f32 %v3098, %v3430
      %v3483 = vadd.f32 %v3099, %v3435
      %v3484 = vadd.f32 %v3100, %v3438
      %v3485 = vadd.f32 %v3101, %v3443
      %v3486 = vadd.f32 %v3102, %v3446
      %v3487 = vadd.f32 %v3103, %v3451
      %v3488 = vadd.f32 %v3104, %v3454
      %v3489 = vadd.f32 %v3105, %v3459
      %v3490 = vadd.f32 %v3106, %v3462
      %v3491 = vadd.f32 %v3107, %v3467
      %v3492 = vadd.f32 %v3108, %v3470
      %v3493 = vld [vmem:[%s701 + $0x1] sm:$0xff]
      %v3494 = vld [vmem:[%s701 + $0x9] sm:$0xff]
      %v3495 = vld [vmem:[%s701 + $0x19] sm:$0xff]
      %v3496 = vld [vmem:[%s701 + $0x21] sm:$0xff]
      %v3497 = vld [vmem:[%s701 + $0x31] sm:$0xff]
      %v3498 = vld [vmem:[%s701 + $0x39] sm:$0xff]
      %v3499 = vld [vmem:[%s701 + $0x49] sm:$0xff]
      %v3500 = vld [vmem:[%s701 + $0x51] sm:$0xff]
      %v3501 = vld [vmem:[%s701 + $0x61] sm:$0xff]
      %v3502 = vld [vmem:[%s701 + $0x69] sm:$0xff]
      %v3503 = vld [vmem:[%s701 + $0x79] sm:$0xff]
      %v3504 = vld [vmem:[%s701 + $0x81] sm:$0xff]
      %v3505 = vld [vmem:[%s701 + $0x91] sm:$0xff]
      %v3506 = vld [vmem:[%s701 + $0x99] sm:$0xff]
      %v3507 = vld [vmem:[%s701 + $0xa9] sm:$0xff]
      %v3508 = vld [vmem:[%s701 + $0xb1] sm:$0xff]
      %v3509 = vld [vmem:[%s701 + $0xc1] sm:$0xff]
      %v3510 = vld [vmem:[%s701 + $0xc9] sm:$0xff]
      %v3511 = vld [vmem:[%s701 + $0xd9] sm:$0xff]
      %v3512 = vld [vmem:[%s701 + $0xe1] sm:$0xff]
      %v3513 = vpack.c.bf16 %v3494, %v3493
      %v3514 = vpack.c.bf16 %v3496, %v3495
      %v3515 = vpack.c.bf16 %v3498, %v3497
      %v3516 = vpack.c.bf16 %v3500, %v3499
      %v3517 = vpack.c.bf16 %v3502, %v3501
      %v3518 = vpack.c.bf16 %v3504, %v3503
      %v3519 = vpack.c.bf16 %v3506, %v3505
      %v3520 = vpack.c.bf16 %v3508, %v3507
      %v3521 = vpack.c.bf16 %v3510, %v3509
      %v3522 = vpack.c.bf16 %v3512, %v3511
      %v3523 = vld [vmem:[%s799 + $0x1] sm:$0xff]
      %v3524 = vld [vmem:[%s799 + $0x9] sm:$0xff]
      %v3525 = vld [vmem:[%s799 + $0x19] sm:$0xff]
      %v3526 = vld [vmem:[%s799 + $0x21] sm:$0xff]
      %v3527 = vld [vmem:[%s799 + $0x31] sm:$0xff]
      %v3528 = vld [vmem:[%s799 + $0x39] sm:$0xff]
      %v3529 = vld [vmem:[%s799 + $0x49] sm:$0xff]
      %v3530 = vld [vmem:[%s799 + $0x51] sm:$0xff]
      %v3531 = vld [vmem:[%s799 + $0x61] sm:$0xff]
      %v3532 = vld [vmem:[%s799 + $0x69] sm:$0xff]
      %v3533 = vld [vmem:[%s799 + $0x79] sm:$0xff]
      %v3534 = vld [vmem:[%s799 + $0x81] sm:$0xff]
      %v3535 = vld [vmem:[%s799 + $0x91] sm:$0xff]
      %v3536 = vld [vmem:[%s799 + $0x99] sm:$0xff]
      %v3537 = vld [vmem:[%s799 + $0xa9] sm:$0xff]
      %v3538 = vld [vmem:[%s799 + $0xb1] sm:$0xff]
      %v3539 = vld [vmem:[%s799 + $0xc1] sm:$0xff]
      %v3540 = vld [vmem:[%s799 + $0xc9] sm:$0xff]
      %v3541 = vld [vmem:[%s799 + $0xd9] sm:$0xff]
      %v3542 = vld [vmem:[%s799 + $0xe1] sm:$0xff]
      %v3543 = vpack.c.bf16 %v3524, %v3523
      %v3544 = vpack.c.bf16 %v3526, %v3525
      %v3545 = vpack.c.bf16 %v3528, %v3527
      %v3546 = vpack.c.bf16 %v3530, %v3529
      %v3547 = vpack.c.bf16 %v3532, %v3531
      %v3548 = vpack.c.bf16 %v3534, %v3533
      %v3549 = vpack.c.bf16 %v3536, %v3535
      %v3550 = vpack.c.bf16 %v3538, %v3537
      %v3551 = vpack.c.bf16 %v3540, %v3539
      %v3552 = vpack.c.bf16 %v3542, %v3541
      %s3553 = scalar_lea.vmem %s6, 56
      %v3554 = vld [vmem:[%s3553] sm:$0xf]
      %v3555 = vld [vmem:[%s3553 + $0x4] sm:$0xf]
      %s3556 = scalar_lea.vmem %s7, 56
      %v3557 = vld [vmem:[%s3556] sm:$0xf]
      %v3558 = vld [vmem:[%s3556 + $0x4] sm:$0xf]
      %v3561 = vunpack.c.l.b16 %v3557
      %v3562 = vunpack.c.l.b16 %v3558
      %v3563 = vpack.c.b16 %v3562, %v3561
      %v3566 = vsel %vm680, %v3543, 0
      %v3569 = vsel %vm680, %v3544, 0
      %v3572 = vsel %vm680, %v3545, 0
      %v3575 = vsel %vm680, %v3546, 0
      %v3578 = vsel %vm680, %v3547, 0
      %v3581 = vsel %vm680, %v3548, 0
      %v3584 = vsel %vm680, %v3549, 0
      %v3587 = vsel %vm680, %v3550, 0
      %v3590 = vsel %vm680, %v3551, 0
      %v3593 = vsel %vm680, %v3552, 0
      %3595 = vmatprep.subr.bf16.mxu0 0
      %3596 = vmatpush1.bf16.msra.mxu0 0
      %3597 = vmatprep.subr.bf16.mxu0 0
      %3598 = vmatpush1.bf16.msra.mxu0 0
      %3599 = vmatprep.subr.bf16.mxu0 0
      %3600 = vmatpush1.bf16.msra.mxu0 0
      %3601 = vmatprep.subr.bf16.mxu0 0
      %3602 = vmatpush1.bf16.msra.mxu0 0
      %3603 = vmatprep.subr.bf16.mxu0 0
      %3604 = vmatpush1.bf16.msra.mxu0 0
      %3605 = vmatprep.subr.bf16.mxu0 0
      %3606 = vmatpush1.bf16.msra.mxu0 0
      %3607 = vmatprep.subr.bf16.mxu0 0
      %3608 = vmatpush1.bf16.msra.mxu0 0
      %3609 = vmatprep.subr.bf16.mxu0 0
      %3610 = vmatpush1.bf16.msra.mxu0 %v3563
      %3611 = vmatprep.subr.bf16.mxu0 0
      %3612 = vmatpush2.bf16.msra.mxu0 0
      %3613 = vmatprep.subr.bf16.mxu0 0
      %3614 = vmatpush2.bf16.msra.mxu0 0
      %3615 = vmatprep.subr.bf16.mxu0 0
      %3616 = vmatpush2.bf16.msra.mxu0 0
      %3617 = vmatprep.subr.bf16.mxu0 0
      %3618 = vmatpush2.bf16.msra.mxu0 0
      %3619 = vmatprep.subr.bf16.mxu0 0
      %3620 = vmatpush2.bf16.msra.mxu0 0
      %3621 = vmatprep.subr.bf16.mxu0 0
      %3622 = vmatpush2.bf16.msra.mxu0 0
      %3623 = vmatprep.subr.bf16.mxu0 0
      %3624 = vmatpush2.bf16.msra.mxu0 0
      %3625 = vmatprep.subr.bf16.mxu0 0
      %3626 = vmatpush2.bf16.msra.mxu0 0
      %3627 = vmatprep.mubr.bf16.mxu0 0
      %3628 = vmatmul.mubr.bf16.gmra.mxu0 %v3566
      %v3629 = vpop.f32.mrf.mxu0
      %v3630 = vadd.f32 0.0, %v3629
      %v3631 = vpop.f32.mrf.mxu0
      %v3632 = vpop.f32.mrf.mxu0
      %v3633 = vadd.f32 0.0, %v3632
      %v3634 = vpop.f32.mrf.mxu0
      %3635 = vmatprep.mubr.bf16.mxu0 0
      %3636 = vmatmul.mubr.bf16.gmra.mxu0 %v3569
      %v3637 = vpop.f32.mrf.mxu0
      %v3638 = vadd.f32 0.0, %v3637
      %v3639 = vpop.f32.mrf.mxu0
      %v3640 = vpop.f32.mrf.mxu0
      %v3641 = vadd.f32 0.0, %v3640
      %v3642 = vpop.f32.mrf.mxu0
      %3643 = vmatprep.mubr.bf16.mxu0 0
      %3644 = vmatmul.mubr.bf16.gmra.mxu0 %v3572
      %v3645 = vpop.f32.mrf.mxu0
      %v3646 = vadd.f32 0.0, %v3645
      %v3647 = vpop.f32.mrf.mxu0
      %v3648 = vpop.f32.mrf.mxu0
      %v3649 = vadd.f32 0.0, %v3648
      %v3650 = vpop.f32.mrf.mxu0
      %3651 = vmatprep.mubr.bf16.mxu0 0
      %3652 = vmatmul.mubr.bf16.gmra.mxu0 %v3575
      %v3653 = vpop.f32.mrf.mxu0
      %v3654 = vadd.f32 0.0, %v3653
      %v3655 = vpop.f32.mrf.mxu0
      %v3656 = vpop.f32.mrf.mxu0
      %v3657 = vadd.f32 0.0, %v3656
      %v3658 = vpop.f32.mrf.mxu0
      %3659 = vmatprep.mubr.bf16.mxu0 0
      %3660 = vmatmul.mubr.bf16.gmra.mxu0 %v3578
      %v3661 = vpop.f32.mrf.mxu0
      %v3662 = vadd.f32 0.0, %v3661
      %v3663 = vpop.f32.mrf.mxu0
      %v3664 = vpop.f32.mrf.mxu0
      %v3665 = vadd.f32 0.0, %v3664
      %v3666 = vpop.f32.mrf.mxu0
      %3667 = vmatprep.mubr.bf16.mxu0 0
      %3668 = vmatmul.mubr.bf16.gmra.mxu0 %v3581
      %v3669 = vpop.f32.mrf.mxu0
      %v3670 = vadd.f32 0.0, %v3669
      %v3671 = vpop.f32.mrf.mxu0
      %v3672 = vpop.f32.mrf.mxu0
      %v3673 = vadd.f32 0.0, %v3672
      %v3674 = vpop.f32.mrf.mxu0
      %3675 = vmatprep.mubr.bf16.mxu0 0
      %3676 = vmatmul.mubr.bf16.gmra.mxu0 %v3584
      %v3677 = vpop.f32.mrf.mxu0
      %v3678 = vadd.f32 0.0, %v3677
      %v3679 = vpop.f32.mrf.mxu0
      %v3680 = vpop.f32.mrf.mxu0
      %v3681 = vadd.f32 0.0, %v3680
      %v3682 = vpop.f32.mrf.mxu0
      %3683 = vmatprep.mubr.bf16.mxu0 0
      %3684 = vmatmul.mubr.bf16.gmra.mxu0 %v3587
      %v3685 = vpop.f32.mrf.mxu0
      %v3686 = vadd.f32 0.0, %v3685
      %v3687 = vpop.f32.mrf.mxu0
      %v3688 = vpop.f32.mrf.mxu0
      %v3689 = vadd.f32 0.0, %v3688
      %v3690 = vpop.f32.mrf.mxu0
      %3691 = vmatprep.mubr.bf16.mxu0 0
      %3692 = vmatmul.mubr.bf16.gmra.mxu0 %v3590
      %v3693 = vpop.f32.mrf.mxu0
      %v3694 = vadd.f32 0.0, %v3693
      %v3695 = vpop.f32.mrf.mxu0
      %v3696 = vpop.f32.mrf.mxu0
      %v3697 = vadd.f32 0.0, %v3696
      %v3698 = vpop.f32.mrf.mxu0
      %3699 = vmatprep.mubr.bf16.mxu0 0
      %3700 = vmatmul.mubr.bf16.gmra.mxu0 %v3593
      %v3701 = vpop.f32.mrf.mxu0
      %v3702 = vadd.f32 0.0, %v3701
      %v3703 = vpop.f32.mrf.mxu0
      %v3704 = vpop.f32.mrf.mxu0
      %v3705 = vadd.f32 0.0, %v3704
      %v3706 = vpop.f32.mrf.mxu0
      %3707 = vdwg.mxu0
      %v3710 = vunpack.c.l.b16 %v3554
      %v3711 = vunpack.c.l.b16 %v3555
      %v3712 = vpack.c.b16 %v3711, %v3710
      %v3715 = vsel %vm680, %v3513, 0
      %v3718 = vsel %vm680, %v3514, 0
      %v3721 = vsel %vm680, %v3515, 0
      %v3724 = vsel %vm680, %v3516, 0
      %v3727 = vsel %vm680, %v3517, 0
      %v3730 = vsel %vm680, %v3518, 0
      %v3733 = vsel %vm680, %v3519, 0
      %v3736 = vsel %vm680, %v3520, 0
      %v3739 = vsel %vm680, %v3521, 0
      %v3742 = vsel %vm680, %v3522, 0
      %3744 = vmatprep.subr.bf16.mxu0 0
      %3745 = vmatpush1.bf16.msra.mxu0 0
      %3746 = vmatprep.subr.bf16.mxu0 0
      %3747 = vmatpush1.bf16.msra.mxu0 0
      %3748 = vmatprep.subr.bf16.mxu0 0
      %3749 = vmatpush1.bf16.msra.mxu0 0
      %3750 = vmatprep.subr.bf16.mxu0 0
      %3751 = vmatpush1.bf16.msra.mxu0 0
      %3752 = vmatprep.subr.bf16.mxu0 0
      %3753 = vmatpush1.bf16.msra.mxu0 0
      %3754 = vmatprep.subr.bf16.mxu0 0
      %3755 = vmatpush1.bf16.msra.mxu0 0
      %3756 = vmatprep.subr.bf16.mxu0 0
      %3757 = vmatpush1.bf16.msra.mxu0 0
      %3758 = vmatprep.subr.bf16.mxu0 0
      %3759 = vmatpush1.bf16.msra.mxu0 %v3712
      %3760 = vmatprep.subr.bf16.mxu0 0
      %3761 = vmatpush2.bf16.msra.mxu0 0
      %3762 = vmatprep.subr.bf16.mxu0 0
      %3763 = vmatpush2.bf16.msra.mxu0 0
      %3764 = vmatprep.subr.bf16.mxu0 0
      %3765 = vmatpush2.bf16.msra.mxu0 0
      %3766 = vmatprep.subr.bf16.mxu0 0
      %3767 = vmatpush2.bf16.msra.mxu0 0
      %3768 = vmatprep.subr.bf16.mxu0 0
      %3769 = vmatpush2.bf16.msra.mxu0 0
      %3770 = vmatprep.subr.bf16.mxu0 0
      %3771 = vmatpush2.bf16.msra.mxu0 0
      %3772 = vmatprep.subr.bf16.mxu0 0
      %3773 = vmatpush2.bf16.msra.mxu0 0
      %3774 = vmatprep.subr.bf16.mxu0 0
      %3775 = vmatpush2.bf16.msra.mxu0 0
      %3776 = vmatprep.mubr.bf16.mxu0 0
      %3777 = vmatmul.mubr.bf16.gmra.mxu0 %v3715
      %v3778 = vpop.f32.mrf.mxu0
      %v3779 = vadd.f32 %v3630, %v3778
      %v3780 = vpop.f32.mrf.mxu0
      %v3781 = vpop.f32.mrf.mxu0
      %v3782 = vadd.f32 %v3633, %v3781
      %v3783 = vpop.f32.mrf.mxu0
      %3784 = vmatprep.mubr.bf16.mxu0 0
      %3785 = vmatmul.mubr.bf16.gmra.mxu0 %v3718
      %v3786 = vpop.f32.mrf.mxu0
      %v3787 = vadd.f32 %v3638, %v3786
      %v3788 = vpop.f32.mrf.mxu0
      %v3789 = vpop.f32.mrf.mxu0
      %v3790 = vadd.f32 %v3641, %v3789
      %v3791 = vpop.f32.mrf.mxu0
      %3792 = vmatprep.mubr.bf16.mxu0 0
      %3793 = vmatmul.mubr.bf16.gmra.mxu0 %v3721
      %v3794 = vpop.f32.mrf.mxu0
      %v3795 = vadd.f32 %v3646, %v3794
      %v3796 = vpop.f32.mrf.mxu0
      %v3797 = vpop.f32.mrf.mxu0
      %v3798 = vadd.f32 %v3649, %v3797
      %v3799 = vpop.f32.mrf.mxu0
      %3800 = vmatprep.mubr.bf16.mxu0 0
      %3801 = vmatmul.mubr.bf16.gmra.mxu0 %v3724
      %v3802 = vpop.f32.mrf.mxu0
      %v3803 = vadd.f32 %v3654, %v3802
      %v3804 = vpop.f32.mrf.mxu0
      %v3805 = vpop.f32.mrf.mxu0
      %v3806 = vadd.f32 %v3657, %v3805
      %v3807 = vpop.f32.mrf.mxu0
      %3808 = vmatprep.mubr.bf16.mxu0 0
      %3809 = vmatmul.mubr.bf16.gmra.mxu0 %v3727
      %v3810 = vpop.f32.mrf.mxu0
      %v3811 = vadd.f32 %v3662, %v3810
      %v3812 = vpop.f32.mrf.mxu0
      %v3813 = vpop.f32.mrf.mxu0
      %v3814 = vadd.f32 %v3665, %v3813
      %v3815 = vpop.f32.mrf.mxu0
      %3816 = vmatprep.mubr.bf16.mxu0 0
      %3817 = vmatmul.mubr.bf16.gmra.mxu0 %v3730
      %v3818 = vpop.f32.mrf.mxu0
      %v3819 = vadd.f32 %v3670, %v3818
      %v3820 = vpop.f32.mrf.mxu0
      %v3821 = vpop.f32.mrf.mxu0
      %v3822 = vadd.f32 %v3673, %v3821
      %v3823 = vpop.f32.mrf.mxu0
      %3824 = vmatprep.mubr.bf16.mxu0 0
      %3825 = vmatmul.mubr.bf16.gmra.mxu0 %v3733
      %v3826 = vpop.f32.mrf.mxu0
      %v3827 = vadd.f32 %v3678, %v3826
      %v3828 = vpop.f32.mrf.mxu0
      %v3829 = vpop.f32.mrf.mxu0
      %v3830 = vadd.f32 %v3681, %v3829
      %v3831 = vpop.f32.mrf.mxu0
      %3832 = vmatprep.mubr.bf16.mxu0 0
      %3833 = vmatmul.mubr.bf16.gmra.mxu0 %v3736
      %v3834 = vpop.f32.mrf.mxu0
      %v3835 = vadd.f32 %v3686, %v3834
      %v3836 = vpop.f32.mrf.mxu0
      %v3837 = vpop.f32.mrf.mxu0
      %v3838 = vadd.f32 %v3689, %v3837
      %v3839 = vpop.f32.mrf.mxu0
      %3840 = vmatprep.mubr.bf16.mxu0 0
      %3841 = vmatmul.mubr.bf16.gmra.mxu0 %v3739
      %v3842 = vpop.f32.mrf.mxu0
      %v3843 = vadd.f32 %v3694, %v3842
      %v3844 = vpop.f32.mrf.mxu0
      %v3845 = vpop.f32.mrf.mxu0
      %v3846 = vadd.f32 %v3697, %v3845
      %v3847 = vpop.f32.mrf.mxu0
      %3848 = vmatprep.mubr.bf16.mxu0 0
      %3849 = vmatmul.mubr.bf16.gmra.mxu0 %v3742
      %v3850 = vpop.f32.mrf.mxu0
      %v3851 = vadd.f32 %v3702, %v3850
      %v3852 = vpop.f32.mrf.mxu0
      %v3853 = vpop.f32.mrf.mxu0
      %v3854 = vadd.f32 %v3705, %v3853
      %v3855 = vpop.f32.mrf.mxu0
      %3856 = vdwg.mxu0
      %v3857 = vadd.f32 %v3473, %v3779
      %v3858 = vadd.f32 %v3474, %v3782
      %v3859 = vadd.f32 %v3475, %v3787
      %v3860 = vadd.f32 %v3476, %v3790
      %v3861 = vadd.f32 %v3477, %v3795
      %v3862 = vadd.f32 %v3478, %v3798
      %v3863 = vadd.f32 %v3479, %v3803
      %v3864 = vadd.f32 %v3480, %v3806
      %v3865 = vadd.f32 %v3481, %v3811
      %v3866 = vadd.f32 %v3482, %v3814
      %v3867 = vadd.f32 %v3483, %v3819
      %v3868 = vadd.f32 %v3484, %v3822
      %v3869 = vadd.f32 %v3485, %v3827
      %v3870 = vadd.f32 %v3486, %v3830
      %v3871 = vadd.f32 %v3487, %v3835
      %v3872 = vadd.f32 %v3488, %v3838
      %v3873 = vadd.f32 %v3489, %v3843
      %v3874 = vadd.f32 %v3490, %v3846
      %v3875 = vadd.f32 %v3491, %v3851
      %v3876 = vadd.f32 %v3492, %v3854
      %v3877 = vld [vmem:[%s701 + $0x2] sm:$0xff]
      %v3878 = vld [vmem:[%s701 + $0xa] sm:$0xff]
      %v3879 = vld [vmem:[%s701 + $0x1a] sm:$0xff]
      %v3880 = vld [vmem:[%s701 + $0x22] sm:$0xff]
      %v3881 = vld [vmem:[%s701 + $0x32] sm:$0xff]
      %v3882 = vld [vmem:[%s701 + $0x3a] sm:$0xff]
      %v3883 = vld [vmem:[%s701 + $0x4a] sm:$0xff]
      %v3884 = vld [vmem:[%s701 + $0x52] sm:$0xff]
      %v3885 = vld [vmem:[%s701 + $0x62] sm:$0xff]
      %v3886 = vld [vmem:[%s701 + $0x6a] sm:$0xff]
      %v3887 = vld [vmem:[%s701 + $0x7a] sm:$0xff]
      %v3888 = vld [vmem:[%s701 + $0x82] sm:$0xff]
      %v3889 = vld [vmem:[%s701 + $0x92] sm:$0xff]
      %v3890 = vld [vmem:[%s701 + $0x9a] sm:$0xff]
      %v3891 = vld [vmem:[%s701 + $0xaa] sm:$0xff]
      %v3892 = vld [vmem:[%s701 + $0xb2] sm:$0xff]
      %v3893 = vld [vmem:[%s701 + $0xc2] sm:$0xff]
      %v3894 = vld [vmem:[%s701 + $0xca] sm:$0xff]
      %v3895 = vld [vmem:[%s701 + $0xda] sm:$0xff]
      %v3896 = vld [vmem:[%s701 + $0xe2] sm:$0xff]
      %v3897 = vpack.c.bf16 %v3878, %v3877
      %v3898 = vpack.c.bf16 %v3880, %v3879
      %v3899 = vpack.c.bf16 %v3882, %v3881
      %v3900 = vpack.c.bf16 %v3884, %v3883
      %v3901 = vpack.c.bf16 %v3886, %v3885
      %v3902 = vpack.c.bf16 %v3888, %v3887
      %v3903 = vpack.c.bf16 %v3890, %v3889
      %v3904 = vpack.c.bf16 %v3892, %v3891
      %v3905 = vpack.c.bf16 %v3894, %v3893
      %v3906 = vpack.c.bf16 %v3896, %v3895
      %v3907 = vld [vmem:[%s799 + $0x2] sm:$0xff]
      %v3908 = vld [vmem:[%s799 + $0xa] sm:$0xff]
      %v3909 = vld [vmem:[%s799 + $0x1a] sm:$0xff]
      %v3910 = vld [vmem:[%s799 + $0x22] sm:$0xff]
      %v3911 = vld [vmem:[%s799 + $0x32] sm:$0xff]
      %v3912 = vld [vmem:[%s799 + $0x3a] sm:$0xff]
      %v3913 = vld [vmem:[%s799 + $0x4a] sm:$0xff]
      %v3914 = vld [vmem:[%s799 + $0x52] sm:$0xff]
      %v3915 = vld [vmem:[%s799 + $0x62] sm:$0xff]
      %v3916 = vld [vmem:[%s799 + $0x6a] sm:$0xff]
      %v3917 = vld [vmem:[%s799 + $0x7a] sm:$0xff]
      %v3918 = vld [vmem:[%s799 + $0x82] sm:$0xff]
      %v3919 = vld [vmem:[%s799 + $0x92] sm:$0xff]
      %v3920 = vld [vmem:[%s799 + $0x9a] sm:$0xff]
      %v3921 = vld [vmem:[%s799 + $0xaa] sm:$0xff]
      %v3922 = vld [vmem:[%s799 + $0xb2] sm:$0xff]
      %v3923 = vld [vmem:[%s799 + $0xc2] sm:$0xff]
      %v3924 = vld [vmem:[%s799 + $0xca] sm:$0xff]
      %v3925 = vld [vmem:[%s799 + $0xda] sm:$0xff]
      %v3926 = vld [vmem:[%s799 + $0xe2] sm:$0xff]
      %v3927 = vpack.c.bf16 %v3908, %v3907
      %v3928 = vpack.c.bf16 %v3910, %v3909
      %v3929 = vpack.c.bf16 %v3912, %v3911
      %v3930 = vpack.c.bf16 %v3914, %v3913
      %v3931 = vpack.c.bf16 %v3916, %v3915
      %v3932 = vpack.c.bf16 %v3918, %v3917
      %v3933 = vpack.c.bf16 %v3920, %v3919
      %v3934 = vpack.c.bf16 %v3922, %v3921
      %v3935 = vpack.c.bf16 %v3924, %v3923
      %v3936 = vpack.c.bf16 %v3926, %v3925
      %s3937 = scalar_lea.vmem %s6, 64
      %v3938 = vld [vmem:[%s3937] sm:$0xf]
      %v3939 = vld [vmem:[%s3937 + $0x4] sm:$0xf]
      %s3940 = scalar_lea.vmem %s7, 64
      %v3941 = vld [vmem:[%s3940] sm:$0xf]
      %v3942 = vld [vmem:[%s3940 + $0x4] sm:$0xf]
      %v3945 = vunpack.c.l.b16 %v3941
      %v3946 = vunpack.c.l.b16 %v3942
      %v3947 = vpack.c.b16 %v3946, %v3945
      %v3950 = vsel %vm680, %v3927, 0
      %v3953 = vsel %vm680, %v3928, 0
      %v3956 = vsel %vm680, %v3929, 0
      %v3959 = vsel %vm680, %v3930, 0
      %v3962 = vsel %vm680, %v3931, 0
      %v3965 = vsel %vm680, %v3932, 0
      %v3968 = vsel %vm680, %v3933, 0
      %v3971 = vsel %vm680, %v3934, 0
      %v3974 = vsel %vm680, %v3935, 0
      %v3977 = vsel %vm680, %v3936, 0
      %3979 = vmatprep.subr.bf16.mxu0 0
      %3980 = vmatpush1.bf16.msra.mxu0 0
      %3981 = vmatprep.subr.bf16.mxu0 0
      %3982 = vmatpush1.bf16.msra.mxu0 0
      %3983 = vmatprep.subr.bf16.mxu0 0
      %3984 = vmatpush1.bf16.msra.mxu0 0
      %3985 = vmatprep.subr.bf16.mxu0 0
      %3986 = vmatpush1.bf16.msra.mxu0 0
      %3987 = vmatprep.subr.bf16.mxu0 0
      %3988 = vmatpush1.bf16.msra.mxu0 0
      %3989 = vmatprep.subr.bf16.mxu0 0
      %3990 = vmatpush1.bf16.msra.mxu0 0
      %3991 = vmatprep.subr.bf16.mxu0 0
      %3992 = vmatpush1.bf16.msra.mxu0 0
      %3993 = vmatprep.subr.bf16.mxu0 0
      %3994 = vmatpush1.bf16.msra.mxu0 %v3947
      %3995 = vmatprep.subr.bf16.mxu0 0
      %3996 = vmatpush2.bf16.msra.mxu0 0
      %3997 = vmatprep.subr.bf16.mxu0 0
      %3998 = vmatpush2.bf16.msra.mxu0 0
      %3999 = vmatprep.subr.bf16.mxu0 0
      %4000 = vmatpush2.bf16.msra.mxu0 0
      %4001 = vmatprep.subr.bf16.mxu0 0
      %4002 = vmatpush2.bf16.msra.mxu0 0
      %4003 = vmatprep.subr.bf16.mxu0 0
      %4004 = vmatpush2.bf16.msra.mxu0 0
      %4005 = vmatprep.subr.bf16.mxu0 0
      %4006 = vmatpush2.bf16.msra.mxu0 0
      %4007 = vmatprep.subr.bf16.mxu0 0
      %4008 = vmatpush2.bf16.msra.mxu0 0
      %4009 = vmatprep.subr.bf16.mxu0 0
      %4010 = vmatpush2.bf16.msra.mxu0 0
      %4011 = vmatprep.mubr.bf16.mxu0 0
      %4012 = vmatmul.mubr.bf16.gmra.mxu0 %v3950
      %v4013 = vpop.f32.mrf.mxu0
      %v4014 = vadd.f32 0.0, %v4013
      %v4015 = vpop.f32.mrf.mxu0
      %v4016 = vpop.f32.mrf.mxu0
      %v4017 = vadd.f32 0.0, %v4016
      %v4018 = vpop.f32.mrf.mxu0
      %4019 = vmatprep.mubr.bf16.mxu0 0
      %4020 = vmatmul.mubr.bf16.gmra.mxu0 %v3953
      %v4021 = vpop.f32.mrf.mxu0
      %v4022 = vadd.f32 0.0, %v4021
      %v4023 = vpop.f32.mrf.mxu0
      %v4024 = vpop.f32.mrf.mxu0
      %v4025 = vadd.f32 0.0, %v4024
      %v4026 = vpop.f32.mrf.mxu0
      %4027 = vmatprep.mubr.bf16.mxu0 0
      %4028 = vmatmul.mubr.bf16.gmra.mxu0 %v3956
      %v4029 = vpop.f32.mrf.mxu0
      %v4030 = vadd.f32 0.0, %v4029
      %v4031 = vpop.f32.mrf.mxu0
      %v4032 = vpop.f32.mrf.mxu0
      %v4033 = vadd.f32 0.0, %v4032
      %v4034 = vpop.f32.mrf.mxu0
      %4035 = vmatprep.mubr.bf16.mxu0 0
      %4036 = vmatmul.mubr.bf16.gmra.mxu0 %v3959
      %v4037 = vpop.f32.mrf.mxu0
      %v4038 = vadd.f32 0.0, %v4037
      %v4039 = vpop.f32.mrf.mxu0
      %v4040 = vpop.f32.mrf.mxu0
      %v4041 = vadd.f32 0.0, %v4040
      %v4042 = vpop.f32.mrf.mxu0
      %4043 = vmatprep.mubr.bf16.mxu0 0
      %4044 = vmatmul.mubr.bf16.gmra.mxu0 %v3962
      %v4045 = vpop.f32.mrf.mxu0
      %v4046 = vadd.f32 0.0, %v4045
      %v4047 = vpop.f32.mrf.mxu0
      %v4048 = vpop.f32.mrf.mxu0
      %v4049 = vadd.f32 0.0, %v4048
      %v4050 = vpop.f32.mrf.mxu0
      %4051 = vmatprep.mubr.bf16.mxu0 0
      %4052 = vmatmul.mubr.bf16.gmra.mxu0 %v3965
      %v4053 = vpop.f32.mrf.mxu0
      %v4054 = vadd.f32 0.0, %v4053
      %v4055 = vpop.f32.mrf.mxu0
      %v4056 = vpop.f32.mrf.mxu0
      %v4057 = vadd.f32 0.0, %v4056
      %v4058 = vpop.f32.mrf.mxu0
      %4059 = vmatprep.mubr.bf16.mxu0 0
      %4060 = vmatmul.mubr.bf16.gmra.mxu0 %v3968
      %v4061 = vpop.f32.mrf.mxu0
      %v4062 = vadd.f32 0.0, %v4061
      %v4063 = vpop.f32.mrf.mxu0
      %v4064 = vpop.f32.mrf.mxu0
      %v4065 = vadd.f32 0.0, %v4064
      %v4066 = vpop.f32.mrf.mxu0
      %4067 = vmatprep.mubr.bf16.mxu0 0
      %4068 = vmatmul.mubr.bf16.gmra.mxu0 %v3971
      %v4069 = vpop.f32.mrf.mxu0
      %v4070 = vadd.f32 0.0, %v4069
      %v4071 = vpop.f32.mrf.mxu0
      %v4072 = vpop.f32.mrf.mxu0
      %v4073 = vadd.f32 0.0, %v4072
      %v4074 = vpop.f32.mrf.mxu0
      %4075 = vmatprep.mubr.bf16.mxu0 0
      %4076 = vmatmul.mubr.bf16.gmra.mxu0 %v3974
      %v4077 = vpop.f32.mrf.mxu0
      %v4078 = vadd.f32 0.0, %v4077
      %v4079 = vpop.f32.mrf.mxu0
      %v4080 = vpop.f32.mrf.mxu0
      %v4081 = vadd.f32 0.0, %v4080
      %v4082 = vpop.f32.mrf.mxu0
      %4083 = vmatprep.mubr.bf16.mxu0 0
      %4084 = vmatmul.mubr.bf16.gmra.mxu0 %v3977
      %v4085 = vpop.f32.mrf.mxu0
      %v4086 = vadd.f32 0.0, %v4085
      %v4087 = vpop.f32.mrf.mxu0
      %v4088 = vpop.f32.mrf.mxu0
      %v4089 = vadd.f32 0.0, %v4088
      %v4090 = vpop.f32.mrf.mxu0
      %4091 = vdwg.mxu0
      %v4094 = vunpack.c.l.b16 %v3938
      %v4095 = vunpack.c.l.b16 %v3939
      %v4096 = vpack.c.b16 %v4095, %v4094
      %v4099 = vsel %vm680, %v3897, 0
      %v4102 = vsel %vm680, %v3898, 0
      %v4105 = vsel %vm680, %v3899, 0
      %v4108 = vsel %vm680, %v3900, 0
      %v4111 = vsel %vm680, %v3901, 0
      %v4114 = vsel %vm680, %v3902, 0
      %v4117 = vsel %vm680, %v3903, 0
      %v4120 = vsel %vm680, %v3904, 0
      %v4123 = vsel %vm680, %v3905, 0
      %v4126 = vsel %vm680, %v3906, 0
      %4128 = vmatprep.subr.bf16.mxu0 0
      %4129 = vmatpush1.bf16.msra.mxu0 0
      %4130 = vmatprep.subr.bf16.mxu0 0
      %4131 = vmatpush1.bf16.msra.mxu0 0
      %4132 = vmatprep.subr.bf16.mxu0 0
      %4133 = vmatpush1.bf16.msra.mxu0 0
      %4134 = vmatprep.subr.bf16.mxu0 0
      %4135 = vmatpush1.bf16.msra.mxu0 0
      %4136 = vmatprep.subr.bf16.mxu0 0
      %4137 = vmatpush1.bf16.msra.mxu0 0
      %4138 = vmatprep.subr.bf16.mxu0 0
      %4139 = vmatpush1.bf16.msra.mxu0 0
      %4140 = vmatprep.subr.bf16.mxu0 0
      %4141 = vmatpush1.bf16.msra.mxu0 0
      %4142 = vmatprep.subr.bf16.mxu0 0
      %4143 = vmatpush1.bf16.msra.mxu0 %v4096
      %4144 = vmatprep.subr.bf16.mxu0 0
      %4145 = vmatpush2.bf16.msra.mxu0 0
      %4146 = vmatprep.subr.bf16.mxu0 0
      %4147 = vmatpush2.bf16.msra.mxu0 0
      %4148 = vmatprep.subr.bf16.mxu0 0
      %4149 = vmatpush2.bf16.msra.mxu0 0
      %4150 = vmatprep.subr.bf16.mxu0 0
      %4151 = vmatpush2.bf16.msra.mxu0 0
      %4152 = vmatprep.subr.bf16.mxu0 0
      %4153 = vmatpush2.bf16.msra.mxu0 0
      %4154 = vmatprep.subr.bf16.mxu0 0
      %4155 = vmatpush2.bf16.msra.mxu0 0
      %4156 = vmatprep.subr.bf16.mxu0 0
      %4157 = vmatpush2.bf16.msra.mxu0 0
      %4158 = vmatprep.subr.bf16.mxu0 0
      %4159 = vmatpush2.bf16.msra.mxu0 0
      %4160 = vmatprep.mubr.bf16.mxu0 0
      %4161 = vmatmul.mubr.bf16.gmra.mxu0 %v4099
      %v4162 = vpop.f32.mrf.mxu0
      %v4163 = vadd.f32 %v4014, %v4162
      %v4164 = vpop.f32.mrf.mxu0
      %v4165 = vpop.f32.mrf.mxu0
      %v4166 = vadd.f32 %v4017, %v4165
      %v4167 = vpop.f32.mrf.mxu0
      %4168 = vmatprep.mubr.bf16.mxu0 0
      %4169 = vmatmul.mubr.bf16.gmra.mxu0 %v4102
      %v4170 = vpop.f32.mrf.mxu0
      %v4171 = vadd.f32 %v4022, %v4170
      %v4172 = vpop.f32.mrf.mxu0
      %v4173 = vpop.f32.mrf.mxu0
      %v4174 = vadd.f32 %v4025, %v4173
      %v4175 = vpop.f32.mrf.mxu0
      %4176 = vmatprep.mubr.bf16.mxu0 0
      %4177 = vmatmul.mubr.bf16.gmra.mxu0 %v4105
      %v4178 = vpop.f32.mrf.mxu0
      %v4179 = vadd.f32 %v4030, %v4178
      %v4180 = vpop.f32.mrf.mxu0
      %v4181 = vpop.f32.mrf.mxu0
      %v4182 = vadd.f32 %v4033, %v4181
      %v4183 = vpop.f32.mrf.mxu0
      %4184 = vmatprep.mubr.bf16.mxu0 0
      %4185 = vmatmul.mubr.bf16.gmra.mxu0 %v4108
      %v4186 = vpop.f32.mrf.mxu0
      %v4187 = vadd.f32 %v4038, %v4186
      %v4188 = vpop.f32.mrf.mxu0
      %v4189 = vpop.f32.mrf.mxu0
      %v4190 = vadd.f32 %v4041, %v4189
      %v4191 = vpop.f32.mrf.mxu0
      %4192 = vmatprep.mubr.bf16.mxu0 0
      %4193 = vmatmul.mubr.bf16.gmra.mxu0 %v4111
      %v4194 = vpop.f32.mrf.mxu0
      %v4195 = vadd.f32 %v4046, %v4194
      %v4196 = vpop.f32.mrf.mxu0
      %v4197 = vpop.f32.mrf.mxu0
      %v4198 = vadd.f32 %v4049, %v4197
      %v4199 = vpop.f32.mrf.mxu0
      %4200 = vmatprep.mubr.bf16.mxu0 0
      %4201 = vmatmul.mubr.bf16.gmra.mxu0 %v4114
      %v4202 = vpop.f32.mrf.mxu0
      %v4203 = vadd.f32 %v4054, %v4202
      %v4204 = vpop.f32.mrf.mxu0
      %v4205 = vpop.f32.mrf.mxu0
      %v4206 = vadd.f32 %v4057, %v4205
      %v4207 = vpop.f32.mrf.mxu0
      %4208 = vmatprep.mubr.bf16.mxu0 0
      %4209 = vmatmul.mubr.bf16.gmra.mxu0 %v4117
      %v4210 = vpop.f32.mrf.mxu0
      %v4211 = vadd.f32 %v4062, %v4210
      %v4212 = vpop.f32.mrf.mxu0
      %v4213 = vpop.f32.mrf.mxu0
      %v4214 = vadd.f32 %v4065, %v4213
      %v4215 = vpop.f32.mrf.mxu0
      %4216 = vmatprep.mubr.bf16.mxu0 0
      %4217 = vmatmul.mubr.bf16.gmra.mxu0 %v4120
      %v4218 = vpop.f32.mrf.mxu0
      %v4219 = vadd.f32 %v4070, %v4218
      %v4220 = vpop.f32.mrf.mxu0
      %v4221 = vpop.f32.mrf.mxu0
      %v4222 = vadd.f32 %v4073, %v4221
      %v4223 = vpop.f32.mrf.mxu0
      %4224 = vmatprep.mubr.bf16.mxu0 0
      %4225 = vmatmul.mubr.bf16.gmra.mxu0 %v4123
      %v4226 = vpop.f32.mrf.mxu0
      %v4227 = vadd.f32 %v4078, %v4226
      %v4228 = vpop.f32.mrf.mxu0
      %v4229 = vpop.f32.mrf.mxu0
      %v4230 = vadd.f32 %v4081, %v4229
      %v4231 = vpop.f32.mrf.mxu0
      %4232 = vmatprep.mubr.bf16.mxu0 0
      %4233 = vmatmul.mubr.bf16.gmra.mxu0 %v4126
      %v4234 = vpop.f32.mrf.mxu0
      %v4235 = vadd.f32 %v4086, %v4234
      %v4236 = vpop.f32.mrf.mxu0
      %v4237 = vpop.f32.mrf.mxu0
      %v4238 = vadd.f32 %v4089, %v4237
      %v4239 = vpop.f32.mrf.mxu0
      %4240 = vdwg.mxu0
      %v4241 = vadd.f32 %v3857, %v4163
      %v4242 = vadd.f32 %v3858, %v4166
      %v4243 = vadd.f32 %v3859, %v4171
      %v4244 = vadd.f32 %v3860, %v4174
      %v4245 = vadd.f32 %v3861, %v4179
      %v4246 = vadd.f32 %v3862, %v4182
      %v4247 = vadd.f32 %v3863, %v4187
      %v4248 = vadd.f32 %v3864, %v4190
      %v4249 = vadd.f32 %v3865, %v4195
      %v4250 = vadd.f32 %v3866, %v4198
      %v4251 = vadd.f32 %v3867, %v4203
      %v4252 = vadd.f32 %v3868, %v4206
      %v4253 = vadd.f32 %v3869, %v4211
      %v4254 = vadd.f32 %v3870, %v4214
      %v4255 = vadd.f32 %v3871, %v4219
      %v4256 = vadd.f32 %v3872, %v4222
      %v4257 = vadd.f32 %v3873, %v4227
      %v4258 = vadd.f32 %v3874, %v4230
      %v4259 = vadd.f32 %v3875, %v4235
      %v4260 = vadd.f32 %v3876, %v4238
      %v4261 = vld [vmem:[%s8] sm:$0x1]
      %v4263 = vlaneseq
      %v4264 = vshrl.u32 %v4263, 7
      %v4265 = vsub.s32 0, %v4264
      %v4266 = vrot.slane %v4261, %v4265
      %v4268 = vadd.f32 %v4241, %v4266
      %v4269 = vadd.f32 %v4242, %v4266
      %v4270 = vadd.f32 %v4243, %v4266
      %v4271 = vadd.f32 %v4244, %v4266
      %v4272 = vadd.f32 %v4245, %v4266
      %v4273 = vadd.f32 %v4246, %v4266
      %v4274 = vadd.f32 %v4247, %v4266
      %v4275 = vadd.f32 %v4248, %v4266
      %v4276 = vadd.f32 %v4249, %v4266
      %v4277 = vadd.f32 %v4250, %v4266
      %v4278 = vadd.f32 %v4251, %v4266
      %v4279 = vadd.f32 %v4252, %v4266
      %v4280 = vadd.f32 %v4253, %v4266
      %v4281 = vadd.f32 %v4254, %v4266
      %v4282 = vadd.f32 %v4255, %v4266
      %v4283 = vadd.f32 %v4256, %v4266
      %v4284 = vadd.f32 %v4257, %v4266
      %v4285 = vadd.f32 %v4258, %v4266
      %v4286 = vadd.f32 %v4259, %v4266
      %v4287 = vadd.f32 %v4260, %v4266
      %v4288 = vmax.f32 %v4268, 0.0
      %v4289 = vmax.f32 %v4269, 0.0
      %v4290 = vmax.f32 %v4270, 0.0
      %v4291 = vmax.f32 %v4271, 0.0
      %v4292 = vmax.f32 %v4272, 0.0
      %v4293 = vmax.f32 %v4273, 0.0
      %v4294 = vmax.f32 %v4274, 0.0
      %v4295 = vmax.f32 %v4275, 0.0
      %v4296 = vmax.f32 %v4276, 0.0
      %v4297 = vmax.f32 %v4277, 0.0
      %v4298 = vmax.f32 %v4278, 0.0
      %v4299 = vmax.f32 %v4279, 0.0
      %v4300 = vmax.f32 %v4280, 0.0
      %v4301 = vmax.f32 %v4281, 0.0
      %v4302 = vmax.f32 %v4282, 0.0
      %v4303 = vmax.f32 %v4283, 0.0
      %v4304 = vmax.f32 %v4284, 0.0
      %v4305 = vmax.f32 %v4285, 0.0
      %v4306 = vmax.f32 %v4286, 0.0
      %v4307 = vmax.f32 %v4287, 0.0
      %vm4308 = vcmask 57344
      %4309 = vst.msk [vmem:[#allocation4] sm:$0x1] %vm4308, 0.0
      %4310 = vst.msk [vmem:[#allocation4 + $0x18] sm:$0x1] %vm4308, 0.0
      %4311 = vst.msk [vmem:[#allocation4 + $0x30] sm:$0x1] %vm4308, 0.0
      %4312 = vst.msk [vmem:[#allocation4 + $0x48] sm:$0x1] %vm4308, 0.0
      %4313 = vst.msk [vmem:[#allocation4 + $0x60] sm:$0x1] %vm4308, 0.0
      %4314 = vst.msk [vmem:[#allocation4 + $0x78] sm:$0x1] %vm4308, 0.0
      %4315 = vst.msk [vmem:[#allocation4 + $0x90] sm:$0x1] %vm4308, 0.0
      %4316 = vst.msk [vmem:[#allocation4 + $0xa8] sm:$0x1] %vm4308, 0.0
      %4317 = vst.msk [vmem:[#allocation4 + $0xc0] sm:$0x1] %vm4308, 0.0
      %4318 = vst.msk [vmem:[#allocation4 + $0xd8] sm:$0x1] %vm4308, 0.0
      %4319 = vst.msk [vmem:[#allocation4 + $0x11] sm:$0x1] %vm4308, 0.0
      %4320 = vst.msk [vmem:[#allocation4 + $0x29] sm:$0x1] %vm4308, 0.0
      %4321 = vst.msk [vmem:[#allocation4 + $0x41] sm:$0x1] %vm4308, 0.0
      %4322 = vst.msk [vmem:[#allocation4 + $0x59] sm:$0x1] %vm4308, 0.0
      %4323 = vst.msk [vmem:[#allocation4 + $0x71] sm:$0x1] %vm4308, 0.0
      %4324 = vst.msk [vmem:[#allocation4 + $0x89] sm:$0x1] %vm4308, 0.0
      %4325 = vst.msk [vmem:[#allocation4 + $0xa1] sm:$0x1] %vm4308, 0.0
      %4326 = vst.msk [vmem:[#allocation4 + $0xb9] sm:$0x1] %vm4308, 0.0
      %4327 = vst.msk [vmem:[#allocation4 + $0xd1] sm:$0x1] %vm4308, 0.0
      %4328 = vst.msk [vmem:[#allocation4 + $0xe9] sm:$0x1] %vm4308, 0.0
      %vm4329 = vcmask 64512
      %4330 = vst.msk [vmem:[#allocation4 + $0x1] sm:$0xff] %vm4329, %v4288
      %4331 = vst.msk [vmem:[#allocation4 + $0x9] sm:$0xff] %vm4329, %v4289
      %4332 = vst.msk [vmem:[#allocation4 + $0x19] sm:$0xff] %vm4329, %v4290
      %4333 = vst.msk [vmem:[#allocation4 + $0x21] sm:$0xff] %vm4329, %v4291
      %4334 = vst.msk [vmem:[#allocation4 + $0x31] sm:$0xff] %vm4329, %v4292
      %4335 = vst.msk [vmem:[#allocation4 + $0x39] sm:$0xff] %vm4329, %v4293
      %4336 = vst.msk [vmem:[#allocation4 + $0x49] sm:$0xff] %vm4329, %v4294
      %4337 = vst.msk [vmem:[#allocation4 + $0x51] sm:$0xff] %vm4329, %v4295
      %4338 = vst.msk [vmem:[#allocation4 + $0x61] sm:$0xff] %vm4329, %v4296
      %4339 = vst.msk [vmem:[#allocation4 + $0x69] sm:$0xff] %vm4329, %v4297
      %4340 = vst.msk [vmem:[#allocation4 + $0x79] sm:$0xff] %vm4329, %v4298
      %4341 = vst.msk [vmem:[#allocation4 + $0x81] sm:$0xff] %vm4329, %v4299
      %4342 = vst.msk [vmem:[#allocation4 + $0x91] sm:$0xff] %vm4329, %v4300
      %4343 = vst.msk [vmem:[#allocation4 + $0x99] sm:$0xff] %vm4329, %v4301
      %4344 = vst.msk [vmem:[#allocation4 + $0xa9] sm:$0xff] %vm4329, %v4302
      %4345 = vst.msk [vmem:[#allocation4 + $0xb1] sm:$0xff] %vm4329, %v4303
      %4346 = vst.msk [vmem:[#allocation4 + $0xc1] sm:$0xff] %vm4329, %v4304
      %4347 = vst.msk [vmem:[#allocation4 + $0xc9] sm:$0xff] %vm4329, %v4305
      %4348 = vst.msk [vmem:[#allocation4 + $0xd9] sm:$0xff] %vm4329, %v4306
      %4349 = vst.msk [vmem:[#allocation4 + $0xe1] sm:$0xff] %vm4329, %v4307
      %p4350 = scmp.eq.s32.totalorder %s29, 0
      // Predicated region
      $region65: #{att_merge_forward.5} parent=63 // pred_check
        %p4351 = pneg %p4350
      $region66: #{att_merge_forward.5} parent=63 // pred_check_branch
        %4353 = sbr.rel (%p4351) target = $region68
      $region67: #{att_merge_forward.5} parent=63 // pred_region
        %4354 = vst.msk [vmem:[#allocation4] sm:$0xff] %vm4329, 0.0
        %4355 = vst.msk [vmem:[#allocation4 + $0x8] sm:$0xff] %vm4329, 0.0
        %vm4356 = vcmask 58368
        %4357 = vst.msk [vmem:[#allocation4 + $0x10] sm:$0x3] %vm4356, 0.0
      $region68: #{att_merge_forward.5} parent=63 // pred_fallthru
        _
      %p4358 = scmp.eq.s32.totalorder %s29, 1
      // Predicated region
      $region69: #{att_merge_forward.5} parent=63 // pred_check
        %p4359 = pneg %p4358
      $region70: #{att_merge_forward.5} parent=63 // pred_check_branch
        %4361 = sbr.rel (%p4359) target = $region72
      $region71: #{att_merge_forward.5} parent=63 // pred_region
        %s4362 = scalar_lea.vmem [#allocation4], 216
        %4363 = vst.msk [vmem:[%s4362] sm:$0xff] %vm4329, 0.0
        %4364 = vst.msk [vmem:[%s4362 + $0x8] sm:$0xff] %vm4329, 0.0
        %vm4365 = vcmask 58368
        %4366 = vst.msk [vmem:[%s4362 + $0x10] sm:$0x3] %vm4365, 0.0
      $region72: #{att_merge_forward.5} parent=63 // pred_fallthru
        _
      %v4367 = vld [vmem:[#allocation4] sm:$0xff]
      %v4368 = vld [vmem:[#allocation4 + $0x8] sm:$0xff]
      %v4369 = vld [vmem:[#allocation4 + $0x18] sm:$0xff]
      %v4370 = vld [vmem:[#allocation4 + $0x20] sm:$0xff]
      %v4371 = vld [vmem:[#allocation4 + $0x30] sm:$0xff]
      %v4372 = vld [vmem:[#allocation4 + $0x38] sm:$0xff]
      %v4373 = vld [vmem:[#allocation4 + $0x48] sm:$0xff]
      %v4374 = vld [vmem:[#allocation4 + $0x50] sm:$0xff]
      %v4375 = vld [vmem:[#allocation4 + $0x60] sm:$0xff]
      %v4376 = vld [vmem:[#allocation4 + $0x68] sm:$0xff]
      %v4377 = vld [vmem:[#allocation4 + $0x78] sm:$0xff]
      %v4378 = vld [vmem:[#allocation4 + $0x80] sm:$0xff]
      %v4379 = vld [vmem:[#allocation4 + $0x90] sm:$0xff]
      %v4380 = vld [vmem:[#allocation4 + $0x98] sm:$0xff]
      %v4381 = vld [vmem:[#allocation4 + $0xa8] sm:$0xff]
      %v4382 = vld [vmem:[#allocation4 + $0xb0] sm:$0xff]
      %v4383 = vld [vmem:[%s9] sm:$0x1]
      %v4385 = vlaneseq
      %v4386 = vshrl.u32 %v4385, 7
      %v4387 = vsub.s32 0, %v4386
      %v4388 = vrot.slane %v4383, %v4387
      %v4390 = vmul.f32 %v4367, %v4388
      %v4391 = vmul.f32 %v4368, %v4388
      %v4392 = vmul.f32 %v4369, %v4388
      %v4393 = vmul.f32 %v4370, %v4388
      %v4394 = vmul.f32 %v4371, %v4388
      %v4395 = vmul.f32 %v4372, %v4388
      %v4396 = vmul.f32 %v4373, %v4388
      %v4397 = vmul.f32 %v4374, %v4388
      %v4398 = vmul.f32 %v4375, %v4388
      %v4399 = vmul.f32 %v4376, %v4388
      %v4400 = vmul.f32 %v4377, %v4388
      %v4401 = vmul.f32 %v4378, %v4388
      %v4402 = vmul.f32 %v4379, %v4388
      %v4403 = vmul.f32 %v4380, %v4388
      %v4404 = vmul.f32 %v4381, %v4388
      %v4405 = vmul.f32 %v4382, %v4388
      %v4406 = vld [vmem:[#allocation4 + $0x1] sm:$0xff]
      %v4407 = vld [vmem:[#allocation4 + $0x9] sm:$0xff]
      %v4408 = vld [vmem:[#allocation4 + $0x19] sm:$0xff]
      %v4409 = vld [vmem:[#allocation4 + $0x21] sm:$0xff]
      %v4410 = vld [vmem:[#allocation4 + $0x31] sm:$0xff]
      %v4411 = vld [vmem:[#allocation4 + $0x39] sm:$0xff]
      %v4412 = vld [vmem:[#allocation4 + $0x49] sm:$0xff]
      %v4413 = vld [vmem:[#allocation4 + $0x51] sm:$0xff]
      %v4414 = vld [vmem:[#allocation4 + $0x61] sm:$0xff]
      %v4415 = vld [vmem:[#allocation4 + $0x69] sm:$0xff]
      %v4416 = vld [vmem:[#allocation4 + $0x79] sm:$0xff]
      %v4417 = vld [vmem:[#allocation4 + $0x81] sm:$0xff]
      %v4418 = vld [vmem:[#allocation4 + $0x91] sm:$0xff]
      %v4419 = vld [vmem:[#allocation4 + $0x99] sm:$0xff]
      %v4420 = vld [vmem:[#allocation4 + $0xa9] sm:$0xff]
      %v4421 = vld [vmem:[#allocation4 + $0xb1] sm:$0xff]
      %s4422 = scalar_lea.vmem %s9, 1
      %v4423 = vld [vmem:[%s4422] sm:$0x1]
      %v4425 = vlaneseq
      %v4426 = vshrl.u32 %v4425, 7
      %v4427 = vsub.s32 0, %v4426
      %v4428 = vrot.slane %v4423, %v4427
      %v4430 = vmul.f32 %v4406, %v4428
      %v4431 = vmul.f32 %v4407, %v4428
      %v4432 = vmul.f32 %v4408, %v4428
      %v4433 = vmul.f32 %v4409, %v4428
      %v4434 = vmul.f32 %v4410, %v4428
      %v4435 = vmul.f32 %v4411, %v4428
      %v4436 = vmul.f32 %v4412, %v4428
      %v4437 = vmul.f32 %v4413, %v4428
      %v4438 = vmul.f32 %v4414, %v4428
      %v4439 = vmul.f32 %v4415, %v4428
      %v4440 = vmul.f32 %v4416, %v4428
      %v4441 = vmul.f32 %v4417, %v4428
      %v4442 = vmul.f32 %v4418, %v4428
      %v4443 = vmul.f32 %v4419, %v4428
      %v4444 = vmul.f32 %v4420, %v4428
      %v4445 = vmul.f32 %v4421, %v4428
      %v4446 = vadd.f32 %v4390, %v4430
      %v4447 = vadd.f32 %v4391, %v4431
      %v4448 = vadd.f32 %v4392, %v4432
      %v4449 = vadd.f32 %v4393, %v4433
      %v4450 = vadd.f32 %v4394, %v4434
      %v4451 = vadd.f32 %v4395, %v4435
      %v4452 = vadd.f32 %v4396, %v4436
      %v4453 = vadd.f32 %v4397, %v4437
      %v4454 = vadd.f32 %v4398, %v4438
      %v4455 = vadd.f32 %v4399, %v4439
      %v4456 = vadd.f32 %v4400, %v4440
      %v4457 = vadd.f32 %v4401, %v4441
      %v4458 = vadd.f32 %v4402, %v4442
      %v4459 = vadd.f32 %v4403, %v4443
      %v4460 = vadd.f32 %v4404, %v4444
      %v4461 = vadd.f32 %v4405, %v4445
      %v4462 = vld [vmem:[#allocation4 + $0x2] sm:$0xff]
      %v4463 = vld [vmem:[#allocation4 + $0xa] sm:$0xff]
      %v4464 = vld [vmem:[#allocation4 + $0x1a] sm:$0xff]
      %v4465 = vld [vmem:[#allocation4 + $0x22] sm:$0xff]
      %v4466 = vld [vmem:[#allocation4 + $0x32] sm:$0xff]
      %v4467 = vld [vmem:[#allocation4 + $0x3a] sm:$0xff]
      %v4468 = vld [vmem:[#allocation4 + $0x4a] sm:$0xff]
      %v4469 = vld [vmem:[#allocation4 + $0x52] sm:$0xff]
      %v4470 = vld [vmem:[#allocation4 + $0x62] sm:$0xff]
      %v4471 = vld [vmem:[#allocation4 + $0x6a] sm:$0xff]
      %v4472 = vld [vmem:[#allocation4 + $0x7a] sm:$0xff]
      %v4473 = vld [vmem:[#allocation4 + $0x82] sm:$0xff]
      %v4474 = vld [vmem:[#allocation4 + $0x92] sm:$0xff]
      %v4475 = vld [vmem:[#allocation4 + $0x9a] sm:$0xff]
      %v4476 = vld [vmem:[#allocation4 + $0xaa] sm:$0xff]
      %v4477 = vld [vmem:[#allocation4 + $0xb2] sm:$0xff]
      %s4478 = scalar_lea.vmem %s9, 2
      %v4479 = vld [vmem:[%s4478] sm:$0x1]
      %v4481 = vlaneseq
      %v4482 = vshrl.u32 %v4481, 7
      %v4483 = vsub.s32 0, %v4482
      %v4484 = vrot.slane %v4479, %v4483
      %v4486 = vmul.f32 %v4462, %v4484
      %v4487 = vmul.f32 %v4463, %v4484
      %v4488 = vmul.f32 %v4464, %v4484
      %v4489 = vmul.f32 %v4465, %v4484
      %v4490 = vmul.f32 %v4466, %v4484
      %v4491 = vmul.f32 %v4467, %v4484
      %v4492 = vmul.f32 %v4468, %v4484
      %v4493 = vmul.f32 %v4469, %v4484
      %v4494 = vmul.f32 %v4470, %v4484
      %v4495 = vmul.f32 %v4471, %v4484
      %v4496 = vmul.f32 %v4472, %v4484
      %v4497 = vmul.f32 %v4473, %v4484
      %v4498 = vmul.f32 %v4474, %v4484
      %v4499 = vmul.f32 %v4475, %v4484
      %v4500 = vmul.f32 %v4476, %v4484
      %v4501 = vmul.f32 %v4477, %v4484
      %v4502 = vadd.f32 %v4446, %v4486
      %v4503 = vadd.f32 %v4447, %v4487
      %v4504 = vadd.f32 %v4448, %v4488
      %v4505 = vadd.f32 %v4449, %v4489
      %v4506 = vadd.f32 %v4450, %v4490
      %v4507 = vadd.f32 %v4451, %v4491
      %v4508 = vadd.f32 %v4452, %v4492
      %v4509 = vadd.f32 %v4453, %v4493
      %v4510 = vadd.f32 %v4454, %v4494
      %v4511 = vadd.f32 %v4455, %v4495
      %v4512 = vadd.f32 %v4456, %v4496
      %v4513 = vadd.f32 %v4457, %v4497
      %v4514 = vadd.f32 %v4458, %v4498
      %v4515 = vadd.f32 %v4459, %v4499
      %v4516 = vadd.f32 %v4460, %v4500
      %v4517 = vadd.f32 %v4461, %v4501
      %s4518 = scalar_lea.vmem [#allocation4], 24
      %v4519 = vld [vmem:[%s4518] sm:$0xff]
      %v4520 = vld [vmem:[%s4518 + $0x8] sm:$0xff]
      %v4521 = vld [vmem:[%s4518 + $0x18] sm:$0xff]
      %v4522 = vld [vmem:[%s4518 + $0x20] sm:$0xff]
      %v4523 = vld [vmem:[%s4518 + $0x30] sm:$0xff]
      %v4524 = vld [vmem:[%s4518 + $0x38] sm:$0xff]
      %v4525 = vld [vmem:[%s4518 + $0x48] sm:$0xff]
      %v4526 = vld [vmem:[%s4518 + $0x50] sm:$0xff]
      %v4527 = vld [vmem:[%s4518 + $0x60] sm:$0xff]
      %v4528 = vld [vmem:[%s4518 + $0x68] sm:$0xff]
      %v4529 = vld [vmem:[%s4518 + $0x78] sm:$0xff]
      %v4530 = vld [vmem:[%s4518 + $0x80] sm:$0xff]
      %v4531 = vld [vmem:[%s4518 + $0x90] sm:$0xff]
      %v4532 = vld [vmem:[%s4518 + $0x98] sm:$0xff]
      %v4533 = vld [vmem:[%s4518 + $0xa8] sm:$0xff]
      %v4534 = vld [vmem:[%s4518 + $0xb0] sm:$0xff]
      %s4535 = scalar_lea.vmem %s9, 3
      %v4536 = vld [vmem:[%s4535] sm:$0x1]
      %v4538 = vlaneseq
      %v4539 = vshrl.u32 %v4538, 7
      %v4540 = vsub.s32 0, %v4539
      %v4541 = vrot.slane %v4536, %v4540
      %v4543 = vmul.f32 %v4519, %v4541
      %v4544 = vmul.f32 %v4520, %v4541
      %v4545 = vmul.f32 %v4521, %v4541
      %v4546 = vmul.f32 %v4522, %v4541
      %v4547 = vmul.f32 %v4523, %v4541
      %v4548 = vmul.f32 %v4524, %v4541
      %v4549 = vmul.f32 %v4525, %v4541
      %v4550 = vmul.f32 %v4526, %v4541
      %v4551 = vmul.f32 %v4527, %v4541
      %v4552 = vmul.f32 %v4528, %v4541
      %v4553 = vmul.f32 %v4529, %v4541
      %v4554 = vmul.f32 %v4530, %v4541
      %v4555 = vmul.f32 %v4531, %v4541
      %v4556 = vmul.f32 %v4532, %v4541
      %v4557 = vmul.f32 %v4533, %v4541
      %v4558 = vmul.f32 %v4534, %v4541
      %v4559 = vadd.f32 %v4502, %v4543
      %v4560 = vadd.f32 %v4503, %v4544
      %v4561 = vadd.f32 %v4504, %v4545
      %v4562 = vadd.f32 %v4505, %v4546
      %v4563 = vadd.f32 %v4506, %v4547
      %v4564 = vadd.f32 %v4507, %v4548
      %v4565 = vadd.f32 %v4508, %v4549
      %v4566 = vadd.f32 %v4509, %v4550
      %v4567 = vadd.f32 %v4510, %v4551
      %v4568 = vadd.f32 %v4511, %v4552
      %v4569 = vadd.f32 %v4512, %v4553
      %v4570 = vadd.f32 %v4513, %v4554
      %v4571 = vadd.f32 %v4514, %v4555
      %v4572 = vadd.f32 %v4515, %v4556
      %v4573 = vadd.f32 %v4516, %v4557
      %v4574 = vadd.f32 %v4517, %v4558
      %v4575 = vld [vmem:[%s4518 + $0x1] sm:$0xff]
      %v4576 = vld [vmem:[%s4518 + $0x9] sm:$0xff]
      %v4577 = vld [vmem:[%s4518 + $0x19] sm:$0xff]
      %v4578 = vld [vmem:[%s4518 + $0x21] sm:$0xff]
      %v4579 = vld [vmem:[%s4518 + $0x31] sm:$0xff]
      %v4580 = vld [vmem:[%s4518 + $0x39] sm:$0xff]
      %v4581 = vld [vmem:[%s4518 + $0x49] sm:$0xff]
      %v4582 = vld [vmem:[%s4518 + $0x51] sm:$0xff]
      %v4583 = vld [vmem:[%s4518 + $0x61] sm:$0xff]
      %v4584 = vld [vmem:[%s4518 + $0x69] sm:$0xff]
      %v4585 = vld [vmem:[%s4518 + $0x79] sm:$0xff]
      %v4586 = vld [vmem:[%s4518 + $0x81] sm:$0xff]
      %v4587 = vld [vmem:[%s4518 + $0x91] sm:$0xff]
      %v4588 = vld [vmem:[%s4518 + $0x99] sm:$0xff]
      %v4589 = vld [vmem:[%s4518 + $0xa9] sm:$0xff]
      %v4590 = vld [vmem:[%s4518 + $0xb1] sm:$0xff]
      %s4591 = scalar_lea.vmem %s9, 4
      %v4592 = vld [vmem:[%s4591] sm:$0x1]
      %v4594 = vlaneseq
      %v4595 = vshrl.u32 %v4594, 7
      %v4596 = vsub.s32 0, %v4595
      %v4597 = vrot.slane %v4592, %v4596
      %v4599 = vmul.f32 %v4575, %v4597
      %v4600 = vmul.f32 %v4576, %v4597
      %v4601 = vmul.f32 %v4577, %v4597
      %v4602 = vmul.f32 %v4578, %v4597
      %v4603 = vmul.f32 %v4579, %v4597
      %v4604 = vmul.f32 %v4580, %v4597
      %v4605 = vmul.f32 %v4581, %v4597
      %v4606 = vmul.f32 %v4582, %v4597
      %v4607 = vmul.f32 %v4583, %v4597
      %v4608 = vmul.f32 %v4584, %v4597
      %v4609 = vmul.f32 %v4585, %v4597
      %v4610 = vmul.f32 %v4586, %v4597
      %v4611 = vmul.f32 %v4587, %v4597
      %v4612 = vmul.f32 %v4588, %v4597
      %v4613 = vmul.f32 %v4589, %v4597
      %v4614 = vmul.f32 %v4590, %v4597
      %v4615 = vadd.f32 %v4559, %v4599
      %v4616 = vadd.f32 %v4560, %v4600
      %v4617 = vadd.f32 %v4561, %v4601
      %v4618 = vadd.f32 %v4562, %v4602
      %v4619 = vadd.f32 %v4563, %v4603
      %v4620 = vadd.f32 %v4564, %v4604
      %v4621 = vadd.f32 %v4565, %v4605
      %v4622 = vadd.f32 %v4566, %v4606
      %v4623 = vadd.f32 %v4567, %v4607
      %v4624 = vadd.f32 %v4568, %v4608
      %v4625 = vadd.f32 %v4569, %v4609
      %v4626 = vadd.f32 %v4570, %v4610
      %v4627 = vadd.f32 %v4571, %v4611
      %v4628 = vadd.f32 %v4572, %v4612
      %v4629 = vadd.f32 %v4573, %v4613
      %v4630 = vadd.f32 %v4574, %v4614
      %v4631 = vld [vmem:[%s4518 + $0x2] sm:$0xff]
      %v4632 = vld [vmem:[%s4518 + $0xa] sm:$0xff]
      %v4633 = vld [vmem:[%s4518 + $0x1a] sm:$0xff]
      %v4634 = vld [vmem:[%s4518 + $0x22] sm:$0xff]
      %v4635 = vld [vmem:[%s4518 + $0x32] sm:$0xff]
      %v4636 = vld [vmem:[%s4518 + $0x3a] sm:$0xff]
      %v4637 = vld [vmem:[%s4518 + $0x4a] sm:$0xff]
      %v4638 = vld [vmem:[%s4518 + $0x52] sm:$0xff]
      %v4639 = vld [vmem:[%s4518 + $0x62] sm:$0xff]
      %v4640 = vld [vmem:[%s4518 + $0x6a] sm:$0xff]
      %v4641 = vld [vmem:[%s4518 + $0x7a] sm:$0xff]
      %v4642 = vld [vmem:[%s4518 + $0x82] sm:$0xff]
      %v4643 = vld [vmem:[%s4518 + $0x92] sm:$0xff]
      %v4644 = vld [vmem:[%s4518 + $0x9a] sm:$0xff]
      %v4645 = vld [vmem:[%s4518 + $0xaa] sm:$0xff]
      %v4646 = vld [vmem:[%s4518 + $0xb2] sm:$0xff]
      %s4647 = scalar_lea.vmem %s9, 5
      %v4648 = vld [vmem:[%s4647] sm:$0x1]
      %v4650 = vlaneseq
      %v4651 = vshrl.u32 %v4650, 7
      %v4652 = vsub.s32 0, %v4651
      %v4653 = vrot.slane %v4648, %v4652
      %v4655 = vmul.f32 %v4631, %v4653
      %v4656 = vmul.f32 %v4632, %v4653
      %v4657 = vmul.f32 %v4633, %v4653
      %v4658 = vmul.f32 %v4634, %v4653
      %v4659 = vmul.f32 %v4635, %v4653
      %v4660 = vmul.f32 %v4636, %v4653
      %v4661 = vmul.f32 %v4637, %v4653
      %v4662 = vmul.f32 %v4638, %v4653
      %v4663 = vmul.f32 %v4639, %v4653
      %v4664 = vmul.f32 %v4640, %v4653
      %v4665 = vmul.f32 %v4641, %v4653
      %v4666 = vmul.f32 %v4642, %v4653
      %v4667 = vmul.f32 %v4643, %v4653
      %v4668 = vmul.f32 %v4644, %v4653
      %v4669 = vmul.f32 %v4645, %v4653
      %v4670 = vmul.f32 %v4646, %v4653
      %v4671 = vadd.f32 %v4615, %v4655
      %v4672 = vadd.f32 %v4616, %v4656
      %v4673 = vadd.f32 %v4617, %v4657
      %v4674 = vadd.f32 %v4618, %v4658
      %v4675 = vadd.f32 %v4619, %v4659
      %v4676 = vadd.f32 %v4620, %v4660
      %v4677 = vadd.f32 %v4621, %v4661
      %v4678 = vadd.f32 %v4622, %v4662
      %v4679 = vadd.f32 %v4623, %v4663
      %v4680 = vadd.f32 %v4624, %v4664
      %v4681 = vadd.f32 %v4625, %v4665
      %v4682 = vadd.f32 %v4626, %v4666
      %v4683 = vadd.f32 %v4627, %v4667
      %v4684 = vadd.f32 %v4628, %v4668
      %v4685 = vadd.f32 %v4629, %v4669
      %v4686 = vadd.f32 %v4630, %v4670
      %s4687 = scalar_lea.vmem [#allocation4], 48
      %v4688 = vld [vmem:[%s4687] sm:$0xff]
      %v4689 = vld [vmem:[%s4687 + $0x8] sm:$0xff]
      %v4690 = vld [vmem:[%s4687 + $0x18] sm:$0xff]
      %v4691 = vld [vmem:[%s4687 + $0x20] sm:$0xff]
      %v4692 = vld [vmem:[%s4687 + $0x30] sm:$0xff]
      %v4693 = vld [vmem:[%s4687 + $0x38] sm:$0xff]
      %v4694 = vld [vmem:[%s4687 + $0x48] sm:$0xff]
      %v4695 = vld [vmem:[%s4687 + $0x50] sm:$0xff]
      %v4696 = vld [vmem:[%s4687 + $0x60] sm:$0xff]
      %v4697 = vld [vmem:[%s4687 + $0x68] sm:$0xff]
      %v4698 = vld [vmem:[%s4687 + $0x78] sm:$0xff]
      %v4699 = vld [vmem:[%s4687 + $0x80] sm:$0xff]
      %v4700 = vld [vmem:[%s4687 + $0x90] sm:$0xff]
      %v4701 = vld [vmem:[%s4687 + $0x98] sm:$0xff]
      %v4702 = vld [vmem:[%s4687 + $0xa8] sm:$0xff]
      %v4703 = vld [vmem:[%s4687 + $0xb0] sm:$0xff]
      %s4704 = scalar_lea.vmem %s9, 6
      %v4705 = vld [vmem:[%s4704] sm:$0x1]
      %v4707 = vlaneseq
      %v4708 = vshrl.u32 %v4707, 7
      %v4709 = vsub.s32 0, %v4708
      %v4710 = vrot.slane %v4705, %v4709
      %v4712 = vmul.f32 %v4688, %v4710
      %v4713 = vmul.f32 %v4689, %v4710
      %v4714 = vmul.f32 %v4690, %v4710
      %v4715 = vmul.f32 %v4691, %v4710
      %v4716 = vmul.f32 %v4692, %v4710
      %v4717 = vmul.f32 %v4693, %v4710
      %v4718 = vmul.f32 %v4694, %v4710
      %v4719 = vmul.f32 %v4695, %v4710
      %v4720 = vmul.f32 %v4696, %v4710
      %v4721 = vmul.f32 %v4697, %v4710
      %v4722 = vmul.f32 %v4698, %v4710
      %v4723 = vmul.f32 %v4699, %v4710
      %v4724 = vmul.f32 %v4700, %v4710
      %v4725 = vmul.f32 %v4701, %v4710
      %v4726 = vmul.f32 %v4702, %v4710
      %v4727 = vmul.f32 %v4703, %v4710
      %v4728 = vadd.f32 %v4671, %v4712
      %v4729 = vadd.f32 %v4672, %v4713
      %v4730 = vadd.f32 %v4673, %v4714
      %v4731 = vadd.f32 %v4674, %v4715
      %v4732 = vadd.f32 %v4675, %v4716
      %v4733 = vadd.f32 %v4676, %v4717
      %v4734 = vadd.f32 %v4677, %v4718
      %v4735 = vadd.f32 %v4678, %v4719
      %v4736 = vadd.f32 %v4679, %v4720
      %v4737 = vadd.f32 %v4680, %v4721
      %v4738 = vadd.f32 %v4681, %v4722
      %v4739 = vadd.f32 %v4682, %v4723
      %v4740 = vadd.f32 %v4683, %v4724
      %v4741 = vadd.f32 %v4684, %v4725
      %v4742 = vadd.f32 %v4685, %v4726
      %v4743 = vadd.f32 %v4686, %v4727
      %v4744 = vld [vmem:[%s4687 + $0x1] sm:$0xff]
      %v4745 = vld [vmem:[%s4687 + $0x9] sm:$0xff]
      %v4746 = vld [vmem:[%s4687 + $0x19] sm:$0xff]
      %v4747 = vld [vmem:[%s4687 + $0x21] sm:$0xff]
      %v4748 = vld [vmem:[%s4687 + $0x31] sm:$0xff]
      %v4749 = vld [vmem:[%s4687 + $0x39] sm:$0xff]
      %v4750 = vld [vmem:[%s4687 + $0x49] sm:$0xff]
      %v4751 = vld [vmem:[%s4687 + $0x51] sm:$0xff]
      %v4752 = vld [vmem:[%s4687 + $0x61] sm:$0xff]
      %v4753 = vld [vmem:[%s4687 + $0x69] sm:$0xff]
      %v4754 = vld [vmem:[%s4687 + $0x79] sm:$0xff]
      %v4755 = vld [vmem:[%s4687 + $0x81] sm:$0xff]
      %v4756 = vld [vmem:[%s4687 + $0x91] sm:$0xff]
      %v4757 = vld [vmem:[%s4687 + $0x99] sm:$0xff]
      %v4758 = vld [vmem:[%s4687 + $0xa9] sm:$0xff]
      %v4759 = vld [vmem:[%s4687 + $0xb1] sm:$0xff]
      %s4760 = scalar_lea.vmem %s9, 7
      %v4761 = vld [vmem:[%s4760] sm:$0x1]
      %v4763 = vlaneseq
      %v4764 = vshrl.u32 %v4763, 7
      %v4765 = vsub.s32 0, %v4764
      %v4766 = vrot.slane %v4761, %v4765
      %v4768 = vmul.f32 %v4744, %v4766
      %v4769 = vmul.f32 %v4745, %v4766
      %v4770 = vmul.f32 %v4746, %v4766
      %v4771 = vmul.f32 %v4747, %v4766
      %v4772 = vmul.f32 %v4748, %v4766
      %v4773 = vmul.f32 %v4749, %v4766
      %v4774 = vmul.f32 %v4750, %v4766
      %v4775 = vmul.f32 %v4751, %v4766
      %v4776 = vmul.f32 %v4752, %v4766
      %v4777 = vmul.f32 %v4753, %v4766
      %v4778 = vmul.f32 %v4754, %v4766
      %v4779 = vmul.f32 %v4755, %v4766
      %v4780 = vmul.f32 %v4756, %v4766
      %v4781 = vmul.f32 %v4757, %v4766
      %v4782 = vmul.f32 %v4758, %v4766
      %v4783 = vmul.f32 %v4759, %v4766
      %v4784 = vadd.f32 %v4728, %v4768
      %v4785 = vadd.f32 %v4729, %v4769
      %v4786 = vadd.f32 %v4730, %v4770
      %v4787 = vadd.f32 %v4731, %v4771
      %v4788 = vadd.f32 %v4732, %v4772
      %v4789 = vadd.f32 %v4733, %v4773
      %v4790 = vadd.f32 %v4734, %v4774
      %v4791 = vadd.f32 %v4735, %v4775
      %v4792 = vadd.f32 %v4736, %v4776
      %v4793 = vadd.f32 %v4737, %v4777
      %v4794 = vadd.f32 %v4738, %v4778
      %v4795 = vadd.f32 %v4739, %v4779
      %v4796 = vadd.f32 %v4740, %v4780
      %v4797 = vadd.f32 %v4741, %v4781
      %v4798 = vadd.f32 %v4742, %v4782
      %v4799 = vadd.f32 %v4743, %v4783
      %v4800 = vld [vmem:[%s4687 + $0x2] sm:$0xff]
      %v4801 = vld [vmem:[%s4687 + $0xa] sm:$0xff]
      %v4802 = vld [vmem:[%s4687 + $0x1a] sm:$0xff]
      %v4803 = vld [vmem:[%s4687 + $0x22] sm:$0xff]
      %v4804 = vld [vmem:[%s4687 + $0x32] sm:$0xff]
      %v4805 = vld [vmem:[%s4687 + $0x3a] sm:$0xff]
      %v4806 = vld [vmem:[%s4687 + $0x4a] sm:$0xff]
      %v4807 = vld [vmem:[%s4687 + $0x52] sm:$0xff]
      %v4808 = vld [vmem:[%s4687 + $0x62] sm:$0xff]
      %v4809 = vld [vmem:[%s4687 + $0x6a] sm:$0xff]
      %v4810 = vld [vmem:[%s4687 + $0x7a] sm:$0xff]
      %v4811 = vld [vmem:[%s4687 + $0x82] sm:$0xff]
      %v4812 = vld [vmem:[%s4687 + $0x92] sm:$0xff]
      %v4813 = vld [vmem:[%s4687 + $0x9a] sm:$0xff]
      %v4814 = vld [vmem:[%s4687 + $0xaa] sm:$0xff]
      %v4815 = vld [vmem:[%s4687 + $0xb2] sm:$0xff]
      %s4816 = scalar_lea.vmem %s9, 8
      %v4817 = vld [vmem:[%s4816] sm:$0x1]
      %v4819 = vlaneseq
      %v4820 = vshrl.u32 %v4819, 7
      %v4821 = vsub.s32 0, %v4820
      %v4822 = vrot.slane %v4817, %v4821
      %v4824 = vmul.f32 %v4800, %v4822
      %v4825 = vmul.f32 %v4801, %v4822
      %v4826 = vmul.f32 %v4802, %v4822
      %v4827 = vmul.f32 %v4803, %v4822
      %v4828 = vmul.f32 %v4804, %v4822
      %v4829 = vmul.f32 %v4805, %v4822
      %v4830 = vmul.f32 %v4806, %v4822
      %v4831 = vmul.f32 %v4807, %v4822
      %v4832 = vmul.f32 %v4808, %v4822
      %v4833 = vmul.f32 %v4809, %v4822
      %v4834 = vmul.f32 %v4810, %v4822
      %v4835 = vmul.f32 %v4811, %v4822
      %v4836 = vmul.f32 %v4812, %v4822
      %v4837 = vmul.f32 %v4813, %v4822
      %v4838 = vmul.f32 %v4814, %v4822
      %v4839 = vmul.f32 %v4815, %v4822
      %v4840 = vadd.f32 %v4784, %v4824
      %v4841 = vadd.f32 %v4785, %v4825
      %v4842 = vadd.f32 %v4786, %v4826
      %v4843 = vadd.f32 %v4787, %v4827
      %v4844 = vadd.f32 %v4788, %v4828
      %v4845 = vadd.f32 %v4789, %v4829
      %v4846 = vadd.f32 %v4790, %v4830
      %v4847 = vadd.f32 %v4791, %v4831
      %v4848 = vadd.f32 %v4792, %v4832
      %v4849 = vadd.f32 %v4793, %v4833
      %v4850 = vadd.f32 %v4794, %v4834
      %v4851 = vadd.f32 %v4795, %v4835
      %v4852 = vadd.f32 %v4796, %v4836
      %v4853 = vadd.f32 %v4797, %v4837
      %v4854 = vadd.f32 %v4798, %v4838
      %v4855 = vadd.f32 %v4799, %v4839
      %v4856 = vsel %vm4329, %v4840, 0.0
      %4857 = vadd.xlane.f32.xlu0 %v4856
      %v4858 = vpop.xlane.xlu0 %4857
      %v4859 = vsel %vm4329, %v4841, 0.0
      %4860 = vadd.xlane.f32.xlu0 %v4859
      %v4861 = vpop.xlane.xlu0 %4860
      %v4862 = vsel %vm4329, %v4842, 0.0
      %4863 = vadd.xlane.f32.xlu0 %v4862
      %v4864 = vpop.xlane.xlu0 %4863
      %v4865 = vsel %vm4329, %v4843, 0.0
      %4866 = vadd.xlane.f32.xlu0 %v4865
      %v4867 = vpop.xlane.xlu0 %4866
      %v4868 = vsel %vm4329, %v4844, 0.0
      %4869 = vadd.xlane.f32.xlu0 %v4868
      %v4870 = vpop.xlane.xlu0 %4869
      %v4871 = vsel %vm4329, %v4845, 0.0
      %4872 = vadd.xlane.f32.xlu0 %v4871
      %v4873 = vpop.xlane.xlu0 %4872
      %v4874 = vsel %vm4329, %v4846, 0.0
      %4875 = vadd.xlane.f32.xlu0 %v4874
      %v4876 = vpop.xlane.xlu0 %4875
      %v4877 = vsel %vm4329, %v4847, 0.0
      %4878 = vadd.xlane.f32.xlu0 %v4877
      %v4879 = vpop.xlane.xlu0 %4878
      %v4880 = vsel %vm4329, %v4848, 0.0
      %4881 = vadd.xlane.f32.xlu0 %v4880
      %v4882 = vpop.xlane.xlu0 %4881
      %v4883 = vsel %vm4329, %v4849, 0.0
      %4884 = vadd.xlane.f32.xlu0 %v4883
      %v4885 = vpop.xlane.xlu0 %4884
      %v4886 = vsel %vm4329, %v4850, 0.0
      %4887 = vadd.xlane.f32.xlu0 %v4886
      %v4888 = vpop.xlane.xlu0 %4887
      %v4889 = vsel %vm4329, %v4851, 0.0
      %4890 = vadd.xlane.f32.xlu0 %v4889
      %v4891 = vpop.xlane.xlu0 %4890
      %v4892 = vsel %vm4329, %v4852, 0.0
      %4893 = vadd.xlane.f32.xlu0 %v4892
      %v4894 = vpop.xlane.xlu0 %4893
      %v4895 = vsel %vm4329, %v4853, 0.0
      %4896 = vadd.xlane.f32.xlu0 %v4895
      %v4897 = vpop.xlane.xlu0 %4896
      %v4898 = vsel %vm4329, %v4854, 0.0
      %4899 = vadd.xlane.f32.xlu0 %v4898
      %v4900 = vpop.xlane.xlu0 %4899
      %v4901 = vsel %vm4329, %v4855, 0.0
      %4902 = vadd.xlane.f32.xlu0 %v4901
      %v4903 = vpop.xlane.xlu0 %4902
      %v4904 = vld [vmem:[#allocation5] sm:$0x1]
      %v4906 = vlaneseq
      %v4907 = vshrl.u32 %v4906, 7
      %v4908 = vsub.s32 0, %v4907
      %v4909 = vrot.slane %v4904, %v4908
      %v4911 = vadd.f32 %v4858, %v4909
      %v4912 = vadd.f32 %v4861, %v4909
      %v4913 = vadd.f32 %v4864, %v4909
      %v4914 = vadd.f32 %v4867, %v4909
      %v4915 = vadd.f32 %v4870, %v4909
      %v4916 = vadd.f32 %v4873, %v4909
      %v4917 = vadd.f32 %v4876, %v4909
      %v4918 = vadd.f32 %v4879, %v4909
      %v4919 = vadd.f32 %v4882, %v4909
      %v4920 = vadd.f32 %v4885, %v4909
      %v4921 = vadd.f32 %v4888, %v4909
      %v4922 = vadd.f32 %v4891, %v4909
      %v4923 = vadd.f32 %v4894, %v4909
      %v4924 = vadd.f32 %v4897, %v4909
      %v4925 = vadd.f32 %v4900, %v4909
      %v4926 = vadd.f32 %v4903, %v4909
      %v4927 = vmul.f32 %v4911, 0.5
      %v4928 = vmul.f32 %v4912, 0.5
      %v4929 = vmul.f32 %v4913, 0.5
      %v4930 = vmul.f32 %v4914, 0.5
      %v4931 = vmul.f32 %v4915, 0.5
      %v4932 = vmul.f32 %v4916, 0.5
      %v4933 = vmul.f32 %v4917, 0.5
      %v4934 = vmul.f32 %v4918, 0.5
      %v4935 = vmul.f32 %v4919, 0.5
      %v4936 = vmul.f32 %v4920, 0.5
      %v4937 = vmul.f32 %v4921, 0.5
      %v4938 = vmul.f32 %v4922, 0.5
      %v4939 = vmul.f32 %v4923, 0.5
      %v4940 = vmul.f32 %v4924, 0.5
      %v4941 = vmul.f32 %v4925, 0.5
      %v4942 = vmul.f32 %v4926, 0.5
      %v4943 = vtanh.pop %v4927
      %v4944 = vtanh.pop %v4928
      %v4945 = vtanh.pop %v4929
      %v4946 = vtanh.pop %v4930
      %v4947 = vtanh.pop %v4931
      %v4948 = vtanh.pop %v4932
      %v4949 = vtanh.pop %v4933
      %v4950 = vtanh.pop %v4934
      %v4951 = vtanh.pop %v4935
      %v4952 = vtanh.pop %v4936
      %v4953 = vtanh.pop %v4937
      %v4954 = vtanh.pop %v4938
      %v4955 = vtanh.pop %v4939
      %v4956 = vtanh.pop %v4940
      %v4957 = vtanh.pop %v4941
      %v4958 = vtanh.pop %v4942
      %v4959 = vadd.f32 %v4943, 1.0
      %v4960 = vadd.f32 %v4944, 1.0
      %v4961 = vadd.f32 %v4945, 1.0
      %v4962 = vadd.f32 %v4946, 1.0
      %v4963 = vadd.f32 %v4947, 1.0
      %v4964 = vadd.f32 %v4948, 1.0
      %v4965 = vadd.f32 %v4949, 1.0
      %v4966 = vadd.f32 %v4950, 1.0
      %v4967 = vadd.f32 %v4951, 1.0
      %v4968 = vadd.f32 %v4952, 1.0
      %v4969 = vadd.f32 %v4953, 1.0
      %v4970 = vadd.f32 %v4954, 1.0
      %v4971 = vadd.f32 %v4955, 1.0
      %v4972 = vadd.f32 %v4956, 1.0
      %v4973 = vadd.f32 %v4957, 1.0
      %v4974 = vadd.f32 %v4958, 1.0
      %v4975 = vmul.f32 %v4959, 0.5
      %v4976 = vmul.f32 %v4960, 0.5
      %v4977 = vmul.f32 %v4961, 0.5
      %v4978 = vmul.f32 %v4962, 0.5
      %v4979 = vmul.f32 %v4963, 0.5
      %v4980 = vmul.f32 %v4964, 0.5
      %v4981 = vmul.f32 %v4965, 0.5
      %v4982 = vmul.f32 %v4966, 0.5
      %v4983 = vmul.f32 %v4967, 0.5
      %v4984 = vmul.f32 %v4968, 0.5
      %v4985 = vmul.f32 %v4969, 0.5
      %v4986 = vmul.f32 %v4970, 0.5
      %v4987 = vmul.f32 %v4971, 0.5
      %v4988 = vmul.f32 %v4972, 0.5
      %v4989 = vmul.f32 %v4973, 0.5
      %v4990 = vmul.f32 %v4974, 0.5
      %v4991 = vld [vmem:[%s559] sm:$0xf]
      %v4992 = vld [vmem:[%s559 + $0x4] sm:$0xf]
      %v4993 = vld [vmem:[%s559 + $0x8] sm:$0xf]
      %v4994 = vld [vmem:[%s559 + $0xc] sm:$0xf]
      %v4995 = vld [vmem:[%s559 + $0x10] sm:$0xf]
      %v4996 = vld [vmem:[%s559 + $0x14] sm:$0xf]
      %v4997 = vld [vmem:[%s559 + $0x18] sm:$0xf]
      %v4998 = vld [vmem:[%s559 + $0x1c] sm:$0xf]
      %v4999 = vld [vmem:[%s559 + $0x20] sm:$0xf]
      %v5000 = vld [vmem:[%s559 + $0x24] sm:$0xf]
      %v5001 = vld [vmem:[%s559 + $0x28] sm:$0xf]
      %v5002 = vld [vmem:[%s559 + $0x2c] sm:$0xf]
      %v5003 = vld [vmem:[%s559 + $0x30] sm:$0xf]
      %v5004 = vld [vmem:[%s559 + $0x34] sm:$0xf]
      %v5005 = vld [vmem:[%s559 + $0x38] sm:$0xf]
      %v5006 = vld [vmem:[%s559 + $0x3c] sm:$0xf]
      %v5007 = vunpack.c.l.bf16 %v4991
      %v5008 = vunpack.c.l.bf16 %v4992
      %v5009 = vunpack.c.l.bf16 %v4993
      %v5010 = vunpack.c.l.bf16 %v4994
      %v5011 = vunpack.c.l.bf16 %v4995
      %v5012 = vunpack.c.l.bf16 %v4996
      %v5013 = vunpack.c.l.bf16 %v4997
      %v5014 = vunpack.c.l.bf16 %v4998
      %v5015 = vunpack.c.l.bf16 %v4999
      %v5016 = vunpack.c.l.bf16 %v5000
      %v5017 = vunpack.c.l.bf16 %v5001
      %v5018 = vunpack.c.l.bf16 %v5002
      %v5019 = vunpack.c.l.bf16 %v5003
      %v5020 = vunpack.c.l.bf16 %v5004
      %v5021 = vunpack.c.l.bf16 %v5005
      %v5022 = vunpack.c.l.bf16 %v5006
      %v5023 = vld [vmem:[%s592] sm:$0xf]
      %v5024 = vld [vmem:[%s592 + $0x4] sm:$0xf]
      %v5025 = vld [vmem:[%s592 + $0x8] sm:$0xf]
      %v5026 = vld [vmem:[%s592 + $0xc] sm:$0xf]
      %v5027 = vld [vmem:[%s592 + $0x10] sm:$0xf]
      %v5028 = vld [vmem:[%s592 + $0x14] sm:$0xf]
      %v5029 = vld [vmem:[%s592 + $0x18] sm:$0xf]
      %v5030 = vld [vmem:[%s592 + $0x1c] sm:$0xf]
      %v5031 = vld [vmem:[%s592 + $0x20] sm:$0xf]
      %v5032 = vld [vmem:[%s592 + $0x24] sm:$0xf]
      %v5033 = vld [vmem:[%s592 + $0x28] sm:$0xf]
      %v5034 = vld [vmem:[%s592 + $0x2c] sm:$0xf]
      %v5035 = vld [vmem:[%s592 + $0x30] sm:$0xf]
      %v5036 = vld [vmem:[%s592 + $0x34] sm:$0xf]
      %v5037 = vld [vmem:[%s592 + $0x38] sm:$0xf]
      %v5038 = vld [vmem:[%s592 + $0x3c] sm:$0xf]
      %v5039 = vunpack.c.l.bf16 %v5023
      %v5040 = vunpack.c.l.bf16 %v5024
      %v5041 = vunpack.c.l.bf16 %v5025
      %v5042 = vunpack.c.l.bf16 %v5026
      %v5043 = vunpack.c.l.bf16 %v5027
      %v5044 = vunpack.c.l.bf16 %v5028
      %v5045 = vunpack.c.l.bf16 %v5029
      %v5046 = vunpack.c.l.bf16 %v5030
      %v5047 = vunpack.c.l.bf16 %v5031
      %v5048 = vunpack.c.l.bf16 %v5032
      %v5049 = vunpack.c.l.bf16 %v5033
      %v5050 = vunpack.c.l.bf16 %v5034
      %v5051 = vunpack.c.l.bf16 %v5035
      %v5052 = vunpack.c.l.bf16 %v5036
      %v5053 = vunpack.c.l.bf16 %v5037
      %v5054 = vunpack.c.l.bf16 %v5038
      %5056 = vset.pattern.permute.xlu0 0
      %5057 = vperm.xlu0 %5056, %v4975
      %v5058 = vpop.permute.xlu0 %5057
      %5061 = vset.pattern.permute.xlu0 0
      %5062 = vperm.xlu0 %5061, %v4976
      %v5063 = vpop.permute.xlu0 %5062
      %5066 = vset.pattern.permute.xlu0 0
      %5067 = vperm.xlu0 %5066, %v4977
      %v5068 = vpop.permute.xlu0 %5067
      %5071 = vset.pattern.permute.xlu0 0
      %5072 = vperm.xlu0 %5071, %v4978
      %v5073 = vpop.permute.xlu0 %5072
      %5076 = vset.pattern.permute.xlu0 0
      %5077 = vperm.xlu0 %5076, %v4979
      %v5078 = vpop.permute.xlu0 %5077
      %5081 = vset.pattern.permute.xlu0 0
      %5082 = vperm.xlu0 %5081, %v4980
      %v5083 = vpop.permute.xlu0 %5082
      %5086 = vset.pattern.permute.xlu0 0
      %5087 = vperm.xlu0 %5086, %v4981
      %v5088 = vpop.permute.xlu0 %5087
      %5091 = vset.pattern.permute.xlu0 0
      %5092 = vperm.xlu0 %5091, %v4982
      %v5093 = vpop.permute.xlu0 %5092
      %5096 = vset.pattern.permute.xlu0 0
      %5097 = vperm.xlu0 %5096, %v4983
      %v5098 = vpop.permute.xlu0 %5097
      %5101 = vset.pattern.permute.xlu0 0
      %5102 = vperm.xlu0 %5101, %v4984
      %v5103 = vpop.permute.xlu0 %5102
      %5106 = vset.pattern.permute.xlu0 0
      %5107 = vperm.xlu0 %5106, %v4985
      %v5108 = vpop.permute.xlu0 %5107
      %5111 = vset.pattern.permute.xlu0 0
      %5112 = vperm.xlu0 %5111, %v4986
      %v5113 = vpop.permute.xlu0 %5112
      %5116 = vset.pattern.permute.xlu0 0
      %5117 = vperm.xlu0 %5116, %v4987
      %v5118 = vpop.permute.xlu0 %5117
      %5121 = vset.pattern.permute.xlu0 0
      %5122 = vperm.xlu0 %5121, %v4988
      %v5123 = vpop.permute.xlu0 %5122
      %5126 = vset.pattern.permute.xlu0 0
      %5127 = vperm.xlu0 %5126, %v4989
      %v5128 = vpop.permute.xlu0 %5127
      %5131 = vset.pattern.permute.xlu0 0
      %5132 = vperm.xlu0 %5131, %v4990
      %v5133 = vpop.permute.xlu0 %5132
      %v5135 = vmul.f32 %v5058, %v5007
      %v5136 = vmul.f32 %v5063, %v5008
      %v5137 = vmul.f32 %v5068, %v5009
      %v5138 = vmul.f32 %v5073, %v5010
      %v5139 = vmul.f32 %v5078, %v5011
      %v5140 = vmul.f32 %v5083, %v5012
      %v5141 = vmul.f32 %v5088, %v5013
      %v5142 = vmul.f32 %v5093, %v5014
      %v5143 = vmul.f32 %v5098, %v5015
      %v5144 = vmul.f32 %v5103, %v5016
      %v5145 = vmul.f32 %v5108, %v5017
      %v5146 = vmul.f32 %v5113, %v5018
      %v5147 = vmul.f32 %v5118, %v5019
      %v5148 = vmul.f32 %v5123, %v5020
      %v5149 = vmul.f32 %v5128, %v5021
      %v5150 = vmul.f32 %v5133, %v5022
      %v5151 = vsub.f32 1.0, %v4975
      %v5152 = vsub.f32 1.0, %v4976
      %v5153 = vsub.f32 1.0, %v4977
      %v5154 = vsub.f32 1.0, %v4978
      %v5155 = vsub.f32 1.0, %v4979
      %v5156 = vsub.f32 1.0, %v4980
      %v5157 = vsub.f32 1.0, %v4981
      %v5158 = vsub.f32 1.0, %v4982
      %v5159 = vsub.f32 1.0, %v4983
      %v5160 = vsub.f32 1.0, %v4984
      %v5161 = vsub.f32 1.0, %v4985
      %v5162 = vsub.f32 1.0, %v4986
      %v5163 = vsub.f32 1.0, %v4987
      %v5164 = vsub.f32 1.0, %v4988
      %v5165 = vsub.f32 1.0, %v4989
      %v5166 = vsub.f32 1.0, %v4990
      %5168 = vset.pattern.permute.xlu0 0
      %5169 = vperm.xlu0 %5168, %v5151
      %v5170 = vpop.permute.xlu0 %5169
      %5173 = vset.pattern.permute.xlu0 0
      %5174 = vperm.xlu0 %5173, %v5152
      %v5175 = vpop.permute.xlu0 %5174
      %5178 = vset.pattern.permute.xlu0 0
      %5179 = vperm.xlu0 %5178, %v5153
      %v5180 = vpop.permute.xlu0 %5179
      %5183 = vset.pattern.permute.xlu0 0
      %5184 = vperm.xlu0 %5183, %v5154
      %v5185 = vpop.permute.xlu0 %5184
      %5188 = vset.pattern.permute.xlu0 0
      %5189 = vperm.xlu0 %5188, %v5155
      %v5190 = vpop.permute.xlu0 %5189
      %5193 = vset.pattern.permute.xlu0 0
      %5194 = vperm.xlu0 %5193, %v5156
      %v5195 = vpop.permute.xlu0 %5194
      %5198 = vset.pattern.permute.xlu0 0
      %5199 = vperm.xlu0 %5198, %v5157
      %v5200 = vpop.permute.xlu0 %5199
      %5203 = vset.pattern.permute.xlu0 0
      %5204 = vperm.xlu0 %5203, %v5158
      %v5205 = vpop.permute.xlu0 %5204
      %5208 = vset.pattern.permute.xlu0 0
      %5209 = vperm.xlu0 %5208, %v5159
      %v5210 = vpop.permute.xlu0 %5209
      %5213 = vset.pattern.permute.xlu0 0
      %5214 = vperm.xlu0 %5213, %v5160
      %v5215 = vpop.permute.xlu0 %5214
      %5218 = vset.pattern.permute.xlu0 0
      %5219 = vperm.xlu0 %5218, %v5161
      %v5220 = vpop.permute.xlu0 %5219
      %5223 = vset.pattern.permute.xlu0 0
      %5224 = vperm.xlu0 %5223, %v5162
      %v5225 = vpop.permute.xlu0 %5224
      %5228 = vset.pattern.permute.xlu0 0
      %5229 = vperm.xlu0 %5228, %v5163
      %v5230 = vpop.permute.xlu0 %5229
      %5233 = vset.pattern.permute.xlu0 0
      %5234 = vperm.xlu0 %5233, %v5164
      %v5235 = vpop.permute.xlu0 %5234
      %5238 = vset.pattern.permute.xlu0 0
      %5239 = vperm.xlu0 %5238, %v5165
      %v5240 = vpop.permute.xlu0 %5239
      %5243 = vset.pattern.permute.xlu0 0
      %5244 = vperm.xlu0 %5243, %v5166
      %v5245 = vpop.permute.xlu0 %5244
      %v5247 = vmul.f32 %v5170, %v5039
      %v5248 = vmul.f32 %v5175, %v5040
      %v5249 = vmul.f32 %v5180, %v5041
      %v5250 = vmul.f32 %v5185, %v5042
      %v5251 = vmul.f32 %v5190, %v5043
      %v5252 = vmul.f32 %v5195, %v5044
      %v5253 = vmul.f32 %v5200, %v5045
      %v5254 = vmul.f32 %v5205, %v5046
      %v5255 = vmul.f32 %v5210, %v5047
      %v5256 = vmul.f32 %v5215, %v5048
      %v5257 = vmul.f32 %v5220, %v5049
      %v5258 = vmul.f32 %v5225, %v5050
      %v5259 = vmul.f32 %v5230, %v5051
      %v5260 = vmul.f32 %v5235, %v5052
      %v5261 = vmul.f32 %v5240, %v5053
      %v5262 = vmul.f32 %v5245, %v5054
      %v5263 = vadd.f32 %v5135, %v5247
      %v5264 = vadd.f32 %v5136, %v5248
      %v5265 = vadd.f32 %v5137, %v5249
      %v5266 = vadd.f32 %v5138, %v5250
      %v5267 = vadd.f32 %v5139, %v5251
      %v5268 = vadd.f32 %v5140, %v5252
      %v5269 = vadd.f32 %v5141, %v5253
      %v5270 = vadd.f32 %v5142, %v5254
      %v5271 = vadd.f32 %v5143, %v5255
      %v5272 = vadd.f32 %v5144, %v5256
      %v5273 = vadd.f32 %v5145, %v5257
      %v5274 = vadd.f32 %v5146, %v5258
      %v5275 = vadd.f32 %v5147, %v5259
      %v5276 = vadd.f32 %v5148, %v5260
      %v5277 = vadd.f32 %v5149, %v5261
      %v5278 = vadd.f32 %v5150, %v5262
      %5279 = vst.msk [vmem:[%s624] sm:$0xff] %vm680, %v5263
      %5280 = vst.msk [vmem:[%s624 + $0x8] sm:$0xff] %vm680, %v5264
      %5281 = vst.msk [vmem:[%s624 + $0x10] sm:$0xff] %vm680, %v5265
      %5282 = vst.msk [vmem:[%s624 + $0x18] sm:$0xff] %vm680, %v5266
      %5283 = vst.msk [vmem:[%s624 + $0x20] sm:$0xff] %vm680, %v5267
      %5284 = vst.msk [vmem:[%s624 + $0x28] sm:$0xff] %vm680, %v5268
      %5285 = vst.msk [vmem:[%s624 + $0x30] sm:$0xff] %vm680, %v5269
      %5286 = vst.msk [vmem:[%s624 + $0x38] sm:$0xff] %vm680, %v5270
      %5287 = vst.msk [vmem:[%s624 + $0x40] sm:$0xff] %vm680, %v5271
      %5288 = vst.msk [vmem:[%s624 + $0x48] sm:$0xff] %vm680, %v5272
      %5289 = vst.msk [vmem:[%s624 + $0x50] sm:$0xff] %vm680, %v5273
      %5290 = vst.msk [vmem:[%s624 + $0x58] sm:$0xff] %vm680, %v5274
      %5291 = vst.msk [vmem:[%s624 + $0x60] sm:$0xff] %vm680, %v5275
      %5292 = vst.msk [vmem:[%s624 + $0x68] sm:$0xff] %vm680, %v5276
      %5293 = vst.msk [vmem:[%s624 + $0x70] sm:$0xff] %vm680, %v5277
      %5294 = vst.msk [vmem:[%s624 + $0x78] sm:$0xff] %vm680, %v5278
      %s5295 = smul.u32 16, %s29
      %p5296 = scmp.lt.s32.totalorder %s28, 1
      %s5297 = scalar_select %p5296, %s28, 1
      %p5298 = scmp.lt.s32.totalorder %s5295, 31
      %s5299 = scalar_select %p5298, %s5295, 31
      %s5300 = smul.addr %s5297, 32
      %s5301 = sadd.s32 %s5299, %s5300
      %s5302 = smul.addr %s5301, 8
      %s5303 = scalar_lea.vmem %s11, %s5302
      // Predicated region
      $region73: #{att_merge_forward.5} parent=63 // pred_check
        %p5304 = pneg %p329
      $region74: #{att_merge_forward.5} parent=63 // pred_check_branch
        %5306 = sbr.rel (%p5304) target = $region76
      $region75: #{att_merge_forward.5} parent=63 // pred_region
        %s5307 = smul.u32 16, %s29
      $region76: #{att_merge_forward.5} parent=63 // pred_fallthru
        _
    $region64: #{att_merge_forward.5} parent=5 // pred_fallthru
      _
    %p5308 = scmp.le.s32.totalorder 2, %s19
    // Predicated region
    $region77: #{att_merge_forward.5} parent=5 // pred_check
      %p5309 = pneg %p5308
    $region78: #{att_merge_forward.5} parent=5 // pred_check_branch
      %5311 = sbr.rel (%p5309) target = $region80
    $region79: #{att_merge_forward.5} parent=5 // pred_region
      %s5312 = ssub.s32 %s19, 2
      // Predicated region
      $region81: #{att_merge_forward.5} parent=79 // pred_check
        %p5313 = pneg %p335
      $region82: #{att_merge_forward.5} parent=79 // pred_check_branch
        %5315 = sbr.rel (%p5313) target = $region84
      $region83: #{att_merge_forward.5} parent=79 // pred_region
        %s5316 = smul.u32 16, %s31
        %p5317 = scmp.lt.s32.totalorder %s30, 1
        %s5318 = scalar_select %p5317, %s30, 1
        %p5319 = scmp.lt.s32.totalorder %s5316, 31
        %s5320 = scalar_select %p5319, %s5316, 31
        %s5321 = smul.addr %s5318, 32
        %s5322 = sadd.s32 %s5320, %s5321
        %s5323 = smul.addr %s5322, 8
        %s5324 = scalar_lea.vmem %s11, %s5323
      $region84: #{att_merge_forward.5} parent=79 // pred_fallthru
        _
    $region80: #{att_merge_forward.5} parent=5 // pred_fallthru
      _
  $region6: #{att_merge_forward.5} parent=0 // loop_footer
    %s23 = sadd.s32 1, %s19
  $region7: #{att_merge_forward.5} parent=0 // loop_footer_branch
    %18 = sbr.rel target = $region3
  $region8: #{att_merge_forward.5} parent=0 // loop_exit
    _

</llo_original>
